<compile_context>
chip_gen: v5e
topology: v5e:2x2
jax: 0.10.0
libtpu: 0.0.40
codegen_flags: <defaults>
</compile_context>

<pallas_src>
import math

import jax
import jax.numpy as jnp
from jax.experimental import pallas as pl
from jax.experimental.pallas import tpu as pltpu


# ----------------------------------------------------------------------------
# Helpers
# ----------------------------------------------------------------------------
def _pick_tile(m, cap):
    """Largest multiple-of-8 divisor of m that is <= cap, preferring tiles
    that leave >=2 grid steps (v7x megacore)."""
    cands = [t for t in (1024, 512, 256, 128, 64, 32, 16, 8)
             if t <= cap and t <= m and m % t == 0]
    multi = [t for t in cands if m // t >= 2]
    if multi:
        return multi[0]
    if cands:
        return cands[0]
    return m


def im2col(x_nhwc, kh, kw, stride, pad):
    """Pure data movement (XLA): (N,H,W,C) -> (N*Ho*Wo, kh*kw*C)."""
    N, H, W, C = x_nhwc.shape
    xp = jnp.pad(x_nhwc, ((0, 0), (pad, pad), (pad, pad), (0, 0)))
    Ho = (H + 2 * pad - kh) // stride + 1
    Wo = (W + 2 * pad - kw) // stride + 1
    patches = []
    for i in range(kh):
        for j in range(kw):
            patches.append(
                xp[:, i:i + stride * Ho:stride, j:j + stride * Wo:stride, :])
    cols = jnp.stack(patches, axis=3)                 # (N, Ho, Wo, kh*kw, C)
    return cols.reshape(N * Ho * Wo, kh * kw * C), Ho, Wo


_COMPILER_PARAMS = pltpu.CompilerParams(
    dimension_semantics=("parallel",),
    vmem_limit_bytes=48 << 20)   # safe on v5e/v6e (128 MiB) and v7x (64 MiB)


# ----------------------------------------------------------------------------
# Kernel 1: matmul + bias + ReLU (conv1, conv2 via im2col), M-tiled, bf16.
# ----------------------------------------------------------------------------
def _conv_mm_kernel(x_ref, w_ref, b_ref, o_ref):
    acc = jnp.dot(x_ref[...], w_ref[...], preferred_element_type=jnp.float32)
    o_ref[...] = jnp.maximum(acc + b_ref[...], 0.0).astype(o_ref.dtype)


def conv_mm_relu(x, w, b):
    """x: (M, K) bf16, w: (K, C) bf16, b: (1, C) f32 -> relu(x@w+b) bf16."""
    M, K = x.shape
    Kw, C = w.shape
    assert K == Kw
    tm = _pick_tile(M, 1024)
    grid = (M // tm,)
    flops = 2 * M * K * C
    bytes_accessed = 2 * (M * K + K * C + M * C) + 4 * C
    return pl.pallas_call(
        _conv_mm_kernel,
        out_shape=jax.ShapeDtypeStruct((M, C), jnp.bfloat16),
        grid=grid,
        in_specs=[
            pl.BlockSpec((tm, K), lambda i: (i, 0)),
            pl.BlockSpec((K, C), lambda i: (0, 0)),
            pl.BlockSpec((1, C), lambda i: (0, 0)),
        ],
        out_specs=pl.BlockSpec((tm, C), lambda i: (i, 0)),
        compiler_params=_COMPILER_PARAMS,
        cost_estimate=pl.CostEstimate(
            flops=int(flops), transcendentals=0,
            bytes_accessed=int(bytes_accessed)),
    )(x, w, b)


# ----------------------------------------------------------------------------
# Kernel 2: fused tail = conv3 (in-kernel patch gather) + conv4(1x1)
#           + NCHW flatten + fc1..fc5.
#
# zp_ref block is (12, nb, 768) = (padded_H, batch, padded_W*64) bf16.
# For output position (ho, wo) (4x4 grid):
#   a3 = relu( sum_{di=0..4} zp[2*ho+di, :, 128*wo : 128*wo+384] @ w3[di] + b3 )
# (w3[di] is the (dj, c_in)-ordered tap rows, zero-padded 320->384 so every
#  lane slice starts 128-aligned and is exactly 3 vregs wide; the extra 64
#  lanes hit zero weight rows and contribute nothing.)
#   a4 = relu(a3 @ w4 + b4)                        # conv4 1x1, (nb, 32)
# a4[n, c] equals torch's z[n, c, ho, wo], so
#   fc1(z.view(N,512)) = sum_hw a4_hw @ fc1_w_regrouped[hw] + b1
# with fc1_w_regrouped[hw, c, :] = fc1_w[c*16 + hw, :] (done once at init).
# fc2..fc5 chain on the VMEM-resident activation; only (nb, 5) is stored.
# ----------------------------------------------------------------------------
def _tail_kernel(zp_ref, w3_ref, b3_ref, w4_ref, b4_ref,
                 fw1_ref, fb1_ref, fw2_ref, fb2_ref, fw3_ref, fb3_ref,
                 fw4_ref, fb4_ref, fw5_ref, fb5_ref, o_ref):
    nb = zp_ref.shape[1]
    n_fc1 = fw1_ref.shape[2]          # 256

    b3 = b3_ref[...]
    w4 = w4_ref[...]
    b4 = b4_ref[...]

    fc_acc = jnp.zeros((nb, n_fc1), jnp.float32)
    # Static unroll over the 4x4 spatial output of conv3 (indices stay static
    # so all ref slices are 128-lane-aligned constant-offset loads).
    for ho in range(4):
        for wo in range(4):
            acc3 = jnp.zeros((nb, 128), jnp.float32)
            for di in range(5):
                x = zp_ref[2 * ho + di, :, 128 * wo:128 * wo + 384]  # (nb,384)
                acc3 = acc3 + jnp.dot(x, w3_ref[di],
                                      preferred_element_type=jnp.float32)
            a3 = jnp.maximum(acc3 + b3, 0.0).astype(w4.dtype)        # (nb,128)
            a4 = jnp.maximum(
                jnp.dot(a3, w4, preferred_element_type=jnp.float32) + b4,
                0.0).astype(fw1_ref.dtype)                           # (nb,32)
            fc_acc = fc_acc + jnp.dot(a4, fw1_ref[ho * 4 + wo],
                                      preferred_element_type=jnp.float32)

    z = jnp.maximum(fc_acc + fb1_ref[...], 0.0).astype(fw2_ref.dtype)   # fc1
    z = jnp.maximum(
        jnp.dot(z, fw2_ref[...], preferred_element_type=jnp.float32)
        + fb2_ref[...], 0.0).astype(fw3_ref.dtype)                      # fc2
    z = jnp.maximum(
        jnp.dot(z, fw3_ref[...], preferred_element_type=jnp.float32)
        + fb3_ref[...], 0.0).astype(fw4_ref.dtype)                      # fc3
    z = jnp.maximum(
        jnp.dot(z, fw4_ref[...], preferred_element_type=jnp.float32)
        + fb4_ref[...], 0.0).astype(fw5_ref.dtype)                      # fc4
    z = (jnp.dot(z, fw5_ref[...], preferred_element_type=jnp.float32)
         + fb5_ref[...])                                                # fc5
    o_ref[...] = z.astype(o_ref.dtype)


def tail_fused(zp, p):
    """zp: (12, N, 768) bf16 padded conv2 activation -> logits (N, 5) f32."""
    Hp, N, WC = zp.shape
    nb = _pick_tile(N, 128)
    grid = (N // nb,)

    weights = [p["conv3_w3d"], p["conv3_b"], p["conv4_w2d"], p["conv4_b"],
               p["fc1_w_r"], p["fc1_b"], p["fc2_w"], p["fc2_b"],
               p["fc3_w"], p["fc3_b"], p["fc4_w"], p["fc4_b"],
               p["fc5_w"], p["fc5_b"]]
    w_specs = [pl.BlockSpec(w.shape, (lambda i, _nd=w.ndim: (0,) * _nd))
               for w in weights]

    flops_per_n = (16 * (2 * 5 * 384 * 128 + 2 * 128 * 32 + 2 * 32 * 256)
                   + 2 * (256 * 128 + 128 * 64 + 64 * 32 + 32 * 5))
    wbytes = sum(int(w.size) * w.dtype.itemsize for w in weights)
    bytes_accessed = (int(zp.size) * zp.dtype.itemsize + 4 * N * 5 + wbytes)

    return pl.pallas_call(
        _tail_kernel,
        out_shape=jax.ShapeDtypeStruct((N, 5), jnp.float32),
        grid=grid,
        in_specs=[pl.BlockSpec((Hp, nb, WC), lambda i: (0, i, 0))] + w_specs,
        out_specs=pl.BlockSpec((nb, 5), lambda i: (i, 0)),
        compiler_params=_COMPILER_PARAMS,
        cost_estimate=pl.CostEstimate(
            flops=int(N * flops_per_n), transcendentals=0,
            bytes_accessed=int(bytes_accessed)),
    )(zp, *weights)


# ----------------------------------------------------------------------------
# Deterministic parameter init (shapes mirror Challenge.init_weights).  All
# weight transposes / regrouping / zero-padding / bias reshapes + the bf16
# cast are hoisted here (run once).
# ----------------------------------------------------------------------------
def init_params(key):
    ks = jax.random.split(key, 9)

    def conv_w(k, cout, cin, kh, kw):
        std = 1.0 / math.sqrt(kh * kw * cin)
        return std * jax.random.normal(k, (cout, cin, kh, kw), jnp.float32)

    def fc_w(k, fin, fout):
        std = 1.0 / math.sqrt(fin)
        return std * jax.random.normal(k, (fin, fout), jnp.float32)

    def w2d(w_oihw):
        # (O, I, kh, kw) -> (kh*kw*I, O); matches im2col K ordering (i, j, c).
        O, I, kh, kw = w_oihw.shape
        return jnp.transpose(w_oihw, (2, 3, 1, 0)).reshape(kh * kw * I, O)

    bf16 = jnp.bfloat16
    p = {}
    p["conv1_w2d"] = w2d(conv_w(ks[0], 16, 3, 5, 5)).astype(bf16)
    p["conv1_b"] = jnp.zeros((1, 16), jnp.float32)
    p["conv2_w2d"] = w2d(conv_w(ks[1], 64, 16, 5, 5)).astype(bf16)
    p["conv2_b"] = jnp.zeros((1, 64), jnp.float32)

    # conv3 weight: (1600,128) rows ordered (di, dj, c); split per di-tap and
    # zero-pad 320 -> 384 rows so the in-kernel lane slices are 3 full vregs.
    w3 = w2d(conv_w(ks[2], 128, 64, 5, 5)).reshape(5, 320, 128)
    p["conv3_w3d"] = jnp.pad(w3, ((0, 0), (0, 64), (0, 0))).astype(bf16)
    p["conv3_b"] = jnp.zeros((1, 128), jnp.float32)

    # conv4 keeps PyTorch default init in the reference; deterministic normal
    # of the same shape here (synthetic weights).
    p["conv4_w2d"] = w2d(conv_w(ks[3], 32, 128, 1, 1)).astype(bf16)
    p["conv4_b"] = jnp.zeros((1, 32), jnp.float32)

    fc1 = fc_w(ks[4], 512, 256)
    # torch flatten order is k = c*16 + hw (NCHW view).  Regroup fc1 rows to
    # (hw, c, out) so the fused tail kernel needs no in-kernel transpose.
    p["fc1_w_r"] = fc1.reshape(32, 16, 256).transpose(1, 0, 2).astype(bf16)
    p["fc1_b"] = jnp.zeros((1, 256), jnp.float32)
    p["fc2_w"] = fc_w(ks[5], 256, 128).astype(bf16)
    p["fc2_b"] = jnp.zeros((1, 128), jnp.float32)
    p["fc3_w"] = fc_w(ks[6], 128, 64).astype(bf16)
    p["fc3_b"] = jnp.zeros((1, 64), jnp.float32)
    p["fc4_w"] = fc_w(ks[7], 64, 32).astype(bf16)
    p["fc4_b"] = jnp.zeros((1, 32), jnp.float32)
    p["fc5_w"] = fc_w(ks[8], 32, 5).astype(bf16)
    p["fc5_b"] = jnp.zeros((1, 5), jnp.float32)
    return p


# ----------------------------------------------------------------------------
# Forward pass (matches Challenge.forward; dropout = identity at inference).
# ----------------------------------------------------------------------------
@jax.jit
def forward(params, x_nchw):
    N = x_nchw.shape[0]
    z = jnp.transpose(x_nchw, (0, 2, 3, 1)).astype(jnp.bfloat16)  # NCHW->NHWC

    cols1, Ho, Wo = im2col(z, 5, 5, 2, 2)                       # (N*256, 75)
    z = conv_mm_relu(cols1, params["conv1_w2d"], params["conv1_b"])
    z = z.reshape(N, Ho, Wo, 16)                                # (N,16,16,16)

    cols2, Ho, Wo = im2col(z, 5, 5, 2, 2)                       # (N*64, 400)
    z = conv_mm_relu(cols2, params["conv2_w2d"], params["conv2_b"])
    z = z.reshape(N, Ho, Wo, 64)                                # (N, 8, 8, 64)

    # conv3 padding + layout change for the fused tail: (12, N, 12*64) bf16.
    # This is a tiny (~18 KB/sample) copy; the 25x im2col expansion is gone.
    zp = jnp.pad(z, ((0, 0), (2, 2), (2, 2), (0, 0)))           # (N,12,12,64)
    zp = jnp.transpose(zp, (1, 0, 2, 3)).reshape(12, N, 12 * 64)

    # Fused conv3 + conv4 + NCHW flatten + fc1..fc5 -> (N, 5) f32.
    return tail_fused(zp, params)


if __name__ == "__main__":
    key = jax.random.PRNGKey(0)
    pkey, xkey = jax.random.split(key)
    params = init_params(pkey)

    N = 2
    # The z.view(N, 512) in the reference forces 3x32x32 input.
    x = jax.random.normal(xkey, (N, 3, 32, 32), jnp.float32)

    out = forward(params, x)
    out = jax.block_until_ready(out)
    assert out.shape == (N, 5), out.shape
    assert bool(jnp.all(jnp.isfinite(out)))
    print("KERNEL_OK")
</pallas_src>

<mosaic_0001>
module attributes {stable_mosaic.version = 11 : i64} {
  func.func @_conv_mm_kernel(%arg0: i32, %arg1: memref<256x75xbf16, #tpu.memory_space<vmem>>, %arg2: memref<75x16xbf16, #tpu.memory_space<vmem>>, %arg3: memref<1x16xf32, #tpu.memory_space<vmem>>, %arg4: memref<256x16xbf16, #tpu.memory_space<vmem>>) attributes {dimension_semantics = [#tpu.dimension_semantics<parallel>], iteration_bounds = array<i64: 2>, scalar_prefetch = 0 : i64, scratch_operands = 0 : i64, tpu.core_type = #tpu.core_type<tc>, window_params = [{transform_indices = @transform_0, window_bounds = array<i64: 256, 75>}, {pipeline_mode = #tpu.pipeline_mode<synchronous>, transform_indices = @transform_1, window_bounds = array<i64: 75, 16>}, {pipeline_mode = #tpu.pipeline_mode<synchronous>, transform_indices = @transform_2, window_bounds = array<i64: 1, 16>}, {transform_indices = @transform_3, window_bounds = array<i64: 256, 16>}]} {
    %c0 = arith.constant 0 : index
    %c0_0 = arith.constant 0 : index
    %0 = vector.load %arg1[%c0, %c0_0] : memref<256x75xbf16, #tpu.memory_space<vmem>>, vector<256x75xbf16>
    %c0_1 = arith.constant 0 : index
    %c0_2 = arith.constant 0 : index
    %1 = vector.load %arg2[%c0_1, %c0_2] : memref<75x16xbf16, #tpu.memory_space<vmem>>, vector<75x16xbf16>
    %cst = arith.constant dense<0.000000e+00> : vector<256x16xf32>
    %2 = tpu.matmul %0, %1, %cst {dimension_numbers = #tpu.dot_dimension_numbers<[1], [0], [0], [1], [0, 0, 1, 1], [], []>} : vector<256x75xbf16>, vector<75x16xbf16>, vector<256x16xf32> -> vector<256x16xf32>
    %c0_3 = arith.constant 0 : index
    %c0_4 = arith.constant 0 : index
    %3 = vector.load %arg3[%c0_3, %c0_4] : memref<1x16xf32, #tpu.memory_space<vmem>>, vector<1x16xf32>
    %4 = vector.broadcast %3 : vector<1x16xf32> to vector<256x16xf32>
    %5 = arith.addf %2, %4 : vector<256x16xf32>
    %cst_5 = arith.constant 0.000000e+00 : f32
    %6 = vector.broadcast %cst_5 : f32 to vector<256x16xf32>
    %7 = arith.maximumf %5, %6 : vector<256x16xf32>
    %8 = arith.truncf %7 : vector<256x16xf32> to vector<256x16xbf16>
    %c0_6 = arith.constant 0 : index
    %c0_7 = arith.constant 0 : index
    %9 = vector.load %arg4[%c0_6, %c0_7] : memref<256x16xbf16, #tpu.memory_space<vmem>>, vector<256x16xbf16>
    tpu.vector_store %arg4[%c0_6, %c0_7], %8 {strides = array<i32>} : memref<256x16xbf16, #tpu.memory_space<vmem>>, vector<256x16xbf16>,
    return
  }
  func.func @transform_0(%arg0: i32) -> (i32, i32) {
    %c0_i32 = arith.constant 0 : i32
    %c0_i32_0 = arith.constant 0 : i32
    return %arg0, %c0_i32 : i32, i32
  }
  func.func @transform_1(%arg0: i32) -> (i32, i32) {
    %c0_i32 = arith.constant 0 : i32
    %c0_i32_0 = arith.constant 0 : i32
    %c0_i32_1 = arith.constant 0 : i32
    return %c0_i32, %c0_i32_0 : i32, i32
  }
  func.func @transform_2(%arg0: i32) -> (i32, i32) {
    %c0_i32 = arith.constant 0 : i32
    %c0_i32_0 = arith.constant 0 : i32
    %c0_i32_1 = arith.constant 0 : i32
    return %c0_i32, %c0_i32_0 : i32, i32
  }
  func.func @transform_3(%arg0: i32) -> (i32, i32) {
    %c0_i32 = arith.constant 0 : i32
    %c0_i32_0 = arith.constant 0 : i32
    return %arg0, %c0_i32 : i32, i32
  }
}

module attributes {stable_mosaic.version = 11 : i64} {
  func.func @_conv_mm_kernel(%arg0: i32, %arg1: memref<64x400xbf16, #tpu.memory_space<vmem>>, %arg2: memref<400x64xbf16, #tpu.memory_space<vmem>>, %arg3: memref<1x64xf32, #tpu.memory_space<vmem>>, %arg4: memref<64x64xbf16, #tpu.memory_space<vmem>>) attributes {dimension_semantics = [#tpu.dimension_semantics<parallel>], iteration_bounds = array<i64: 2>, scalar_prefetch = 0 : i64, scratch_operands = 0 : i64, tpu.core_type = #tpu.core_type<tc>, window_params = [{transform_indices = @transform_0, window_bounds = array<i64: 64, 400>}, {pipeline_mode = #tpu.pipeline_mode<synchronous>, transform_indices = @transform_1, window_bounds = array<i64: 400, 64>}, {pipeline_mode = #tpu.pipeline_mode<synchronous>, transform_indices = @transform_2, window_bounds = array<i64: 1, 64>}, {transform_indices = @transform_3, window_bounds = array<i64: 64, 64>}]} {
    %c0 = arith.constant 0 : index
    %c0_0 = arith.constant 0 : index
    %0 = vector.load %arg1[%c0, %c0_0] : memref<64x400xbf16, #tpu.memory_space<vmem>>, vector<64x400xbf16>
    %c0_1 = arith.constant 0 : index
    %c0_2 = arith.constant 0 : index
    %1 = vector.load %arg2[%c0_1, %c0_2] : memref<400x64xbf16, #tpu.memory_space<vmem>>, vector<400x64xbf16>
    %cst = arith.constant dense<0.000000e+00> : vector<64x64xf32>
    %2 = tpu.matmul %0, %1, %cst {dimension_numbers = #tpu.dot_dimension_numbers<[1], [0], [0], [1], [0, 0, 1, 1], [], []>} : vector<64x400xbf16>, vector<400x64xbf16>, vector<64x64xf32> -> vector<64x64xf32>
    %c0_3 = arith.constant 0 : index
    %c0_4 = arith.constant 0 : index
    %3 = vector.load %arg3[%c0_3, %c0_4] : memref<1x64xf32, #tpu.memory_space<vmem>>, vector<1x64xf32>
    %4 = vector.broadcast %3 : vector<1x64xf32> to vector<64x64xf32>
    %5 = arith.addf %2, %4 : vector<64x64xf32>
    %cst_5 = arith.constant 0.000000e+00 : f32
    %6 = vector.broadcast %cst_5 : f32 to vector<64x64xf32>
    %7 = arith.maximumf %5, %6 : vector<64x64xf32>
    %8 = arith.truncf %7 : vector<64x64xf32> to vector<64x64xbf16>
    %c0_6 = arith.constant 0 : index
    %c0_7 = arith.constant 0 : index
    %9 = vector.load %arg4[%c0_6, %c0_7] : memref<64x64xbf16, #tpu.memory_space<vmem>>, vector<64x64xbf16>
    tpu.vector_store %arg4[%c0_6, %c0_7], %8 {strides = array<i32>} : memref<64x64xbf16, #tpu.memory_space<vmem>>, vector<64x64xbf16>,
    return
  }
  func.func @transform_0(%arg0: i32) -> (i32, i32) {
    %c0_i32 = arith.constant 0 : i32
    %c0_i32_0 = arith.constant 0 : i32
    return %arg0, %c0_i32 : i32, i32
  }
  func.func @transform_1(%arg0: i32) -> (i32, i32) {
    %c0_i32 = arith.constant 0 : i32
    %c0_i32_0 = arith.constant 0 : i32
    %c0_i32_1 = arith.constant 0 : i32
    return %c0_i32, %c0_i32_0 : i32, i32
  }
  func.func @transform_2(%arg0: i32) -> (i32, i32) {
    %c0_i32 = arith.constant 0 : i32
    %c0_i32_0 = arith.constant 0 : i32
    %c0_i32_1 = arith.constant 0 : i32
    return %c0_i32, %c0_i32_0 : i32, i32
  }
  func.func @transform_3(%arg0: i32) -> (i32, i32) {
    %c0_i32 = arith.constant 0 : i32
    %c0_i32_0 = arith.constant 0 : i32
    return %arg0, %c0_i32 : i32, i32
  }
}

module attributes {stable_mosaic.version = 11 : i64} {
  func.func @_tail_kernel(%arg0: i32, %arg1: memref<12x2x768xbf16, #tpu.memory_space<vmem>>, %arg2: memref<5x384x128xbf16, #tpu.memory_space<vmem>>, %arg3: memref<1x128xf32, #tpu.memory_space<vmem>>, %arg4: memref<128x32xbf16, #tpu.memory_space<vmem>>, %arg5: memref<1x32xf32, #tpu.memory_space<vmem>>, %arg6: memref<16x32x256xbf16, #tpu.memory_space<vmem>>, %arg7: memref<1x256xf32, #tpu.memory_space<vmem>>, %arg8: memref<256x128xbf16, #tpu.memory_space<vmem>>, %arg9: memref<1x128xf32, #tpu.memory_space<vmem>>, %arg10: memref<128x64xbf16, #tpu.memory_space<vmem>>, %arg11: memref<1x64xf32, #tpu.memory_space<vmem>>, %arg12: memref<64x32xbf16, #tpu.memory_space<vmem>>, %arg13: memref<1x32xf32, #tpu.memory_space<vmem>>, %arg14: memref<32x5xbf16, #tpu.memory_space<vmem>>, %arg15: memref<1x5xf32, #tpu.memory_space<vmem>>, %arg16: memref<2x5xf32, #tpu.memory_space<vmem>>) attributes {dimension_semantics = [#tpu.dimension_semantics<parallel>], iteration_bounds = array<i64: 1>, scalar_prefetch = 0 : i64, scratch_operands = 0 : i64, tpu.core_type = #tpu.core_type<tc>, window_params = [{transform_indices = @transform_0, window_bounds = array<i64: 12, 2, 768>}, {pipeline_mode = #tpu.pipeline_mode<synchronous>, transform_indices = @transform_1, window_bounds = array<i64: 5, 384, 128>}, {pipeline_mode = #tpu.pipeline_mode<synchronous>, transform_indices = @transform_2, window_bounds = array<i64: 1, 128>}, {pipeline_mode = #tpu.pipeline_mode<synchronous>, transform_indices = @transform_3, window_bounds = array<i64: 128, 32>}, {pipeline_mode = #tpu.pipeline_mode<synchronous>, transform_indices = @transform_4, window_bounds = array<i64: 1, 32>}, {pipeline_mode = #tpu.pipeline_mode<synchronous>, transform_indices = @transform_5, window_bounds = array<i64: 16, 32, 256>}, {pipeline_mode = #tpu.pipeline_mode<synchronous>, transform_indices = @transform_6, window_bounds = array<i64: 1, 256>}, {pipeline_mode = #tpu.pipeline_mode<synchronous>, transform_indices = @transform_7, window_bounds = array<i64: 256, 128>}, {pipeline_mode = #tpu.pipeline_mode<synchronous>, transform_indices = @transform_8, window_bounds = array<i64: 1, 128>}, {pipeline_mode = #tpu.pipeline_mode<synchronous>, transform_indices = @transform_9, window_bounds = array<i64: 128, 64>}, {pipeline_mode = #tpu.pipeline_mode<synchronous>, transform_indices = @transform_10, window_bounds = array<i64: 1, 64>}, {pipeline_mode = #tpu.pipeline_mode<synchronous>, transform_indices = @transform_11, window_bounds = array<i64: 64, 32>}, {pipeline_mode = #tpu.pipeline_mode<synchronous>, transform_indices = @transform_12, window_bounds = array<i64: 1, 32>}, {pipeline_mode = #tpu.pipeline_mode<synchronous>, transform_indices = @transform_13, window_bounds = array<i64: 32, 5>}, {pipeline_mode = #tpu.pipeline_mode<synchronous>, transform_indices = @transform_14, window_bounds = array<i64: 1, 5>}, {transform_indices = @transform_15, window_bounds = array<i64: 2, 5>}]} {
    %c0 = arith.constant 0 : index
    %c0_0 = arith.constant 0 : index
    %0 = vector.load %arg3[%c0, %c0_0] : memref<1x128xf32, #tpu.memory_space<vmem>>, vector<1x128xf32>
    %c0_1 = arith.constant 0 : index
    %c0_2 = arith.constant 0 : index
    %1 = vector.load %arg4[%c0_1, %c0_2] : memref<128x32xbf16, #tpu.memory_space<vmem>>, vector<128x32xbf16>
    %c0_3 = arith.constant 0 : index
    %c0_4 = arith.constant 0 : index
    %2 = vector.load %arg5[%c0_3, %c0_4] : memref<1x32xf32, #tpu.memory_space<vmem>>, vector<1x32xf32>
    %cst = arith.constant 0.000000e+00 : f32
    %3 = vector.broadcast %cst : f32 to vector<2x256xf32>
    %cst_5 = arith.constant 0.000000e+00 : f32
    %4 = vector.broadcast %cst_5 : f32 to vector<2x128xf32>
    %c0_6 = arith.constant 0 : index
    %c0_7 = arith.constant 0 : index
    %c0_8 = arith.constant 0 : index
    %5 = vector.load %arg1[%c0_6, %c0_7, %c0_8] : memref<12x2x768xbf16, #tpu.memory_space<vmem>>, vector<1x2x384xbf16>
    %6 = vector.shape_cast %5 : vector<1x2x384xbf16> to vector<2x384xbf16>
    %c0_9 = arith.constant 0 : index
    %c0_10 = arith.constant 0 : index
    %c0_11 = arith.constant 0 : index
    %7 = vector.load %arg2[%c0_9, %c0_10, %c0_11] : memref<5x384x128xbf16, #tpu.memory_space<vmem>>, vector<1x384x128xbf16>
    %8 = vector.shape_cast %7 : vector<1x384x128xbf16> to vector<384x128xbf16>
    %cst_12 = arith.constant dense<0.000000e+00> : vector<2x128xf32>
    %9 = tpu.matmul %6, %8, %cst_12 {dimension_numbers = #tpu.dot_dimension_numbers<[1], [0], [0], [1], [0, 0, 1, 1], [], []>} : vector<2x384xbf16>, vector<384x128xbf16>, vector<2x128xf32> -> vector<2x128xf32>
    %10 = arith.addf %4, %9 : vector<2x128xf32>
    %c1 = arith.constant 1 : index
    %c0_13 = arith.constant 0 : index
    %c0_14 = arith.constant 0 : index
    %11 = vector.load %arg1[%c1, %c0_13, %c0_14] : memref<12x2x768xbf16, #tpu.memory_space<vmem>>, vector<1x2x384xbf16>
    %12 = vector.shape_cast %11 : vector<1x2x384xbf16> to vector<2x384xbf16>
    %c1_15 = arith.constant 1 : index
    %c0_16 = arith.constant 0 : index
    %c0_17 = arith.constant 0 : index
    %13 = vector.load %arg2[%c1_15, %c0_16, %c0_17] : memref<5x384x128xbf16, #tpu.memory_space<vmem>>, vector<1x384x128xbf16>
    %14 = vector.shape_cast %13 : vector<1x384x128xbf16> to vector<384x128xbf16>
    %cst_18 = arith.constant dense<0.000000e+00> : vector<2x128xf32>
    %15 = tpu.matmul %12, %14, %cst_18 {dimension_numbers = #tpu.dot_dimension_numbers<[1], [0], [0], [1], [0, 0, 1, 1], [], []>} : vector<2x384xbf16>, vector<384x128xbf16>, vector<2x128xf32> -> vector<2x128xf32>
    %16 = arith.addf %10, %15 : vector<2x128xf32>
    %c2 = arith.constant 2 : index
    %c0_19 = arith.constant 0 : index
    %c0_20 = arith.constant 0 : index
    %17 = vector.load %arg1[%c2, %c0_19, %c0_20] : memref<12x2x768xbf16, #tpu.memory_space<vmem>>, vector<1x2x384xbf16>
    %18 = vector.shape_cast %17 : vector<1x2x384xbf16> to vector<2x384xbf16>
    %c2_21 = arith.constant 2 : index
    %c0_22 = arith.constant 0 : index
    %c0_23 = arith.constant 0 : index
    %19 = vector.load %arg2[%c2_21, %c0_22, %c0_23] : memref<5x384x128xbf16, #tpu.memory_space<vmem>>, vector<1x384x128xbf16>
    %20 = vector.shape_cast %19 : vector<1x384x128xbf16> to vector<384x128xbf16>
    %cst_24 = arith.constant dense<0.000000e+00> : vector<2x128xf32>
    %21 = tpu.matmul %18, %20, %cst_24 {dimension_numbers = #tpu.dot_dimension_numbers<[1], [0], [0], [1], [0, 0, 1, 1], [], []>} : vector<2x384xbf16>, vector<384x128xbf16>, vector<2x128xf32> -> vector<2x128xf32>
    %22 = arith.addf %16, %21 : vector<2x128xf32>
    %c3 = arith.constant 3 : index
    %c0_25 = arith.constant 0 : index
    %c0_26 = arith.constant 0 : index
    %23 = vector.load %arg1[%c3, %c0_25, %c0_26] : memref<12x2x768xbf16, #tpu.memory_space<vmem>>, vector<1x2x384xbf16>
    %24 = vector.shape_cast %23 : vector<1x2x384xbf16> to vector<2x384xbf16>
    %c3_27 = arith.constant 3 : index
    %c0_28 = arith.constant 0 : index
    %c0_29 = arith.constant 0 : index
    %25 = vector.load %arg2[%c3_27, %c0_28, %c0_29] : memref<5x384x128xbf16, #tpu.memory_space<vmem>>, vector<1x384x128xbf16>
    %26 = vector.shape_cast %25 : vector<1x384x128xbf16> to vector<384x128xbf16>
    %cst_30 = arith.constant dense<0.000000e+00> : vector<2x128xf32>
    %27 = tpu.matmul %24, %26, %cst_30 {dimension_numbers = #tpu.dot_dimension_numbers<[1], [0], [0], [1], [0, 0, 1, 1], [], []>} : vector<2x384xbf16>, vector<384x128xbf16>, vector<2x128xf32> -> vector<2x128xf32>
    %28 = arith.addf %22, %27 : vector<2x128xf32>
    %c4 = arith.constant 4 : index
    %c0_31 = arith.constant 0 : index
    %c0_32 = arith.constant 0 : index
    %29 = vector.load %arg1[%c4, %c0_31, %c0_32] : memref<12x2x768xbf16, #tpu.memory_space<vmem>>, vector<1x2x384xbf16>
    %30 = vector.shape_cast %29 : vector<1x2x384xbf16> to vector<2x384xbf16>
    %c4_33 = arith.constant 4 : index
    %c0_34 = arith.constant 0 : index
    %c0_35 = arith.constant 0 : index
    %31 = vector.load %arg2[%c4_33, %c0_34, %c0_35] : memref<5x384x128xbf16, #tpu.memory_space<vmem>>, vector<1x384x128xbf16>
    %32 = vector.shape_cast %31 : vector<1x384x128xbf16> to vector<384x128xbf16>
    %cst_36 = arith.constant dense<0.000000e+00> : vector<2x128xf32>
    %33 = tpu.matmul %30, %32, %cst_36 {dimension_numbers = #tpu.dot_dimension_numbers<[1], [0], [0], [1], [0, 0, 1, 1], [], []>} : vector<2x384xbf16>, vector<384x128xbf16>, vector<2x128xf32> -> vector<2x128xf32>
    %34 = arith.addf %28, %33 : vector<2x128xf32>
    %35 = vector.broadcast %0 : vector<1x128xf32> to vector<2x128xf32>
    %36 = arith.addf %34, %35 : vector<2x128xf32>
    %cst_37 = arith.constant 0.000000e+00 : f32
    %37 = vector.broadcast %cst_37 : f32 to vector<2x128xf32>
    %38 = arith.maximumf %36, %37 : vector<2x128xf32>
    %39 = arith.truncf %38 : vector<2x128xf32> to vector<2x128xbf16>
    %cst_38 = arith.constant dense<0.000000e+00> : vector<2x32xf32>
    %40 = tpu.matmul %39, %1, %cst_38 {dimension_numbers = #tpu.dot_dimension_numbers<[1], [0], [0], [1], [0, 0, 1, 1], [], []>} : vector<2x128xbf16>, vector<128x32xbf16>, vector<2x32xf32> -> vector<2x32xf32>
    %41 = vector.broadcast %2 : vector<1x32xf32> to vector<2x32xf32>
    %42 = arith.addf %40, %41 : vector<2x32xf32>
    %cst_39 = arith.constant 0.000000e+00 : f32
    %43 = vector.broadcast %cst_39 : f32 to vector<2x32xf32>
    %44 = arith.maximumf %42, %43 : vector<2x32xf32>
    %45 = arith.truncf %44 : vector<2x32xf32> to vector<2x32xbf16>
    %c0_40 = arith.constant 0 : index
    %c0_41 = arith.constant 0 : index
    %c0_42 = arith.constant 0 : index
    %46 = vector.load %arg6[%c0_40, %c0_41, %c0_42] : memref<16x32x256xbf16, #tpu.memory_space<vmem>>, vector<1x32x256xbf16>
    %47 = vector.shape_cast %46 : vector<1x32x256xbf16> to vector<32x256xbf16>
    %cst_43 = arith.constant dense<0.000000e+00> : vector<2x256xf32>
    %48 = tpu.matmul %45, %47, %cst_43 {dimension_numbers = #tpu.dot_dimension_numbers<[1], [0], [0], [1], [0, 0, 1, 1], [], []>} : vector<2x32xbf16>, vector<32x256xbf16>, vector<2x256xf32> -> vector<2x256xf32>
    %49 = arith.addf %3, %48 : vector<2x256xf32>
    %cst_44 = arith.constant 0.000000e+00 : f32
    %50 = vector.broadcast %cst_44 : f32 to vector<2x128xf32>
    %c0_45 = arith.constant 0 : index
    %c0_46 = arith.constant 0 : index
    %c128 = arith.constant 128 : index
    %51 = vector.load %arg1[%c0_45, %c0_46, %c128] : memref<12x2x768xbf16, #tpu.memory_space<vmem>>, vector<1x2x384xbf16>
    %52 = vector.shape_cast %51 : vector<1x2x384xbf16> to vector<2x384xbf16>
    %c0_47 = arith.constant 0 : index
    %c0_48 = arith.constant 0 : index
    %c0_49 = arith.constant 0 : index
    %53 = vector.load %arg2[%c0_47, %c0_48, %c0_49] : memref<5x384x128xbf16, #tpu.memory_space<vmem>>, vector<1x384x128xbf16>
    %54 = vector.shape_cast %53 : vector<1x384x128xbf16> to vector<384x128xbf16>
    %cst_50 = arith.constant dense<0.000000e+00> : vector<2x128xf32>
    %55 = tpu.matmul %52, %54, %cst_50 {dimension_numbers = #tpu.dot_dimension_numbers<[1], [0], [0], [1], [0, 0, 1, 1], [], []>} : vector<2x384xbf16>, vector<384x128xbf16>, vector<2x128xf32> -> vector<2x128xf32>
    %56 = arith.addf %50, %55 : vector<2x128xf32>
    %c1_51 = arith.constant 1 : index
    %c0_52 = arith.constant 0 : index
    %c128_53 = arith.constant 128 : index
    %57 = vector.load %arg1[%c1_51, %c0_52, %c128_53] : memref<12x2x768xbf16, #tpu.memory_space<vmem>>, vector<1x2x384xbf16>
    %58 = vector.shape_cast %57 : vector<1x2x384xbf16> to vector<2x384xbf16>
    %c1_54 = arith.constant 1 : index
    %c0_55 = arith.constant 0 : index
    %c0_56 = arith.constant 0 : index
    %59 = vector.load %arg2[%c1_54, %c0_55, %c0_56] : memref<5x384x128xbf16, #tpu.memory_space<vmem>>, vector<1x384x128xbf16>
    %60 = vector.shape_cast %59 : vector<1x384x128xbf16> to vector<384x128xbf16>
    %cst_57 = arith.constant dense<0.000000e+00> : vector<2x128xf32>
    %61 = tpu.matmul %58, %60, %cst_57 {dimension_numbers = #tpu.dot_dimension_numbers<[1], [0], [0], [1], [0, 0, 1, 1], [], []>} : vector<2x384xbf16>, vector<384x128xbf16>, vector<2x128xf32> -> vector<2x128xf32>
    %62 = arith.addf %56, %61 : vector<2x128xf32>
    %c2_58 = arith.constant 2 : index
    %c0_59 = arith.constant 0 : index
    %c128_60 = arith.constant 128 : index
    %63 = vector.load %arg1[%c2_58, %c0_59, %c128_60] : memref<12x2x768xbf16, #tpu.memory_space<vmem>>, vector<1x2x384xbf16>
    %64 = vector.shape_cast %63 : vector<1x2x384xbf16> to vector<2x384xbf16>
    %c2_61 = arith.constant 2 : index
    %c0_62 = arith.constant 0 : index
    %c0_63 = arith.constant 0 : index
    %65 = vector.load %arg2[%c2_61, %c0_62, %c0_63] : memref<5x384x128xbf16, #tpu.memory_space<vmem>>, vector<1x384x128xbf16>
    %66 = vector.shape_cast %65 : vector<1x384x128xbf16> to vector<384x128xbf16>
    %cst_64 = arith.constant dense<0.000000e+00> : vector<2x128xf32>
    %67 = tpu.matmul %64, %66, %cst_64 {dimension_numbers = #tpu.dot_dimension_numbers<[1], [0], [0], [1], [0, 0, 1, 1], [], []>} : vector<2x384xbf16>, vector<384x128xbf16>, vector<2x128xf32> -> vector<2x128xf32>
    %68 = arith.addf %62, %67 : vector<2x128xf32>
    %c3_65 = arith.constant 3 : index
    %c0_66 = arith.constant 0 : index
    %c128_67 = arith.constant 128 : index
    %69 = vector.load %arg1[%c3_65, %c0_66, %c128_67] : memref<12x2x768xbf16, #tpu.memory_space<vmem>>, vector<1x2x384xbf16>
    %70 = vector.shape_cast %69 : vector<1x2x384xbf16> to vector<2x384xbf16>
    %c3_68 = arith.constant 3 : index
    %c0_69 = arith.constant 0 : index
    %c0_70 = arith.constant 0 : index
    %71 = vector.load %arg2[%c3_68, %c0_69, %c0_70] : memref<5x384x128xbf16, #tpu.memory_space<vmem>>, vector<1x384x128xbf16>
    %72 = vector.shape_cast %71 : vector<1x384x128xbf16> to vector<384x128xbf16>
    %cst_71 = arith.constant dense<0.000000e+00> : vector<2x128xf32>
    %73 = tpu.matmul %70, %72, %cst_71 {dimension_numbers = #tpu.dot_dimension_numbers<[1], [0], [0], [1], [0, 0, 1, 1], [], []>} : vector<2x384xbf16>, vector<384x128xbf16>, vector<2x128xf32> -> vector<2x128xf32>
    %74 = arith.addf %68, %73 : vector<2x128xf32>
    %c4_72 = arith.constant 4 : index
    %c0_73 = arith.constant 0 : index
    %c128_74 = arith.constant 128 : index
    %75 = vector.load %arg1[%c4_72, %c0_73, %c128_74] : memref<12x2x768xbf16, #tpu.memory_space<vmem>>, vector<1x2x384xbf16>
    %76 = vector.shape_cast %75 : vector<1x2x384xbf16> to vector<2x384xbf16>
    %c4_75 = arith.constant 4 : index
    %c0_76 = arith.constant 0 : index
    %c0_77 = arith.constant 0 : index
    %77 = vector.load %arg2[%c4_75, %c0_76, %c0_77] : memref<5x384x128xbf16, #tpu.memory_space<vmem>>, vector<1x384x128xbf16>
    %78 = vector.shape_cast %77 : vector<1x384x128xbf16> to vector<384x128xbf16>
    %cst_78 = arith.constant dense<0.000000e+00> : vector<2x128xf32>
    %79 = tpu.matmul %76, %78, %cst_78 {dimension_numbers = #tpu.dot_dimension_numbers<[1], [0], [0], [1], [0, 0, 1, 1], [], []>} : vector<2x384xbf16>, vector<384x128xbf16>, vector<2x128xf32> -> vector<2x128xf32>
    %80 = arith.addf %74, %79 : vector<2x128xf32>
    %81 = vector.broadcast %0 : vector<1x128xf32> to vector<2x128xf32>
    %82 = arith.addf %80, %81 : vector<2x128xf32>
    %cst_79 = arith.constant 0.000000e+00 : f32
    %83 = vector.broadcast %cst_79 : f32 to vector<2x128xf32>
    %84 = arith.maximumf %82, %83 : vector<2x128xf32>
    %85 = arith.truncf %84 : vector<2x128xf32> to vector<2x128xbf16>
    %cst_80 = arith.constant dense<0.000000e+00> : vector<2x32xf32>
    %86 = tpu.matmul %85, %1, %cst_80 {dimension_numbers = #tpu.dot_dimension_numbers<[1], [0], [0], [1], [0, 0, 1, 1], [], []>} : vector<2x128xbf16>, vector<128x32xbf16>, vector<2x32xf32> -> vector<2x32xf32>
    %87 = vector.broadcast %2 : vector<1x32xf32> to vector<2x32xf32>
    %88 = arith.addf %86, %87 : vector<2x32xf32>
    %cst_81 = arith.constant 0.000000e+00 : f32
    %89 = vector.broadcast %cst_81 : f32 to vector<2x32xf32>
    %90 = arith.maximumf %88, %89 : vector<2x32xf32>
    %91 = arith.truncf %90 : vector<2x32xf32> to vector<2x32xbf16>
    %c1_82 = arith.constant 1 : index
    %c0_83 = arith.constant 0 : index
    %c0_84 = arith.constant 0 : index
    %92 = vector.load %arg6[%c1_82, %c0_83, %c0_84] : memref<16x32x256xbf16, #tpu.memory_space<vmem>>, vector<1x32x256xbf16>
    %93 = vector.shape_cast %92 : vector<1x32x256xbf16> to vector<32x256xbf16>
    %cst_85 = arith.constant dense<0.000000e+00> : vector<2x256xf32>
    %94 = tpu.matmul %91, %93, %cst_85 {dimension_numbers = #tpu.dot_dimension_numbers<[1], [0], [0], [1], [0, 0, 1, 1], [], []>} : vector<2x32xbf16>, vector<32x256xbf16>, vector<2x256xf32> -> vector<2x256xf32>
    %95 = arith.addf %49, %94 : vector<2x256xf32>
    %cst_86 = arith.constant 0.000000e+00 : f32
    %96 = vector.broadcast %cst_86 : f32 to vector<2x128xf32>
    %c0_87 = arith.constant 0 : index
    %c0_88 = arith.constant 0 : index
    %c256 = arith.constant 256 : index
    %97 = vector.load %arg1[%c0_87, %c0_88, %c256] : memref<12x2x768xbf16, #tpu.memory_space<vmem>>, vector<1x2x384xbf16>
    %98 = vector.shape_cast %97 : vector<1x2x384xbf16> to vector<2x384xbf16>
    %c0_89 = arith.constant 0 : index
    %c0_90 = arith.constant 0 : index
    %c0_91 = arith.constant 0 : index
    %99 = vector.load %arg2[%c0_89, %c0_90, %c0_91] : memref<5x384x128xbf16, #tpu.memory_space<vmem>>, vector<1x384x128xbf16>
    %100 = vector.shape_cast %99 : vector<1x384x128xbf16> to vector<384x128xbf16>
    %cst_92 = arith.constant dense<0.000000e+00> : vector<2x128xf32>
    %101 = tpu.matmul %98, %100, %cst_92 {dimension_numbers = #tpu.dot_dimension_numbers<[1], [0], [0], [1], [0, 0, 1, 1], [], []>} : vector<2x384xbf16>, vector<384x128xbf16>, vector<2x128xf32> -> vector<2x128xf32>
    %102 = arith.addf %96, %101 : vector<2x128xf32>
    %c1_93 = arith.constant 1 : index
    %c0_94 = arith.constant 0 : index
    %c256_95 = arith.constant 256 : index
    %103 = vector.load %arg1[%c1_93, %c0_94, %c256_95] : memref<12x2x768xbf16, #tpu.memory_space<vmem>>, vector<1x2x384xbf16>
    %104 = vector.shape_cast %103 : vector<1x2x384xbf16> to vector<2x384xbf16>
    %c1_96 = arith.constant 1 : index
    %c0_97 = arith.constant 0 : index
    %c0_98 = arith.constant 0 : index
    %105 = vector.load %arg2[%c1_96, %c0_97, %c0_98] : memref<5x384x128xbf16, #tpu.memory_space<vmem>>, vector<1x384x128xbf16>
    %106 = vector.shape_cast %105 : vector<1x384x128xbf16> to vector<384x128xbf16>
    %cst_99 = arith.constant dense<0.000000e+00> : vector<2x128xf32>
    %107 = tpu.matmul %104, %106, %cst_99 {dimension_numbers = #tpu.dot_dimension_numbers<[1], [0], [0], [1], [0, 0, 1, 1], [], []>} : vector<2x384xbf16>, vector<384x128xbf16>, vector<2x128xf32> -> vector<2x128xf32>
    %108 = arith.addf %102, %107 : vector<2x128xf32>
    %c2_100 = arith.constant 2 : index
    %c0_101 = arith.constant 0 : index
    %c256_102 = arith.constant 256 : index
    %109 = vector.load %arg1[%c2_100, %c0_101, %c256_102] : memref<12x2x768xbf16, #tpu.memory_space<vmem>>, vector<1x2x384xbf16>
    %110 = vector.shape_cast %109 : vector<1x2x384xbf16> to vector<2x384xbf16>
    %c2_103 = arith.constant 2 : index
    %c0_104 = arith.constant 0 : index
    %c0_105 = arith.constant 0 : index
    %111 = vector.load %arg2[%c2_103, %c0_104, %c0_105] : memref<5x384x128xbf16, #tpu.memory_space<vmem>>, vector<1x384x128xbf16>
    %112 = vector.shape_cast %111 : vector<1x384x128xbf16> to vector<384x128xbf16>
    %cst_106 = arith.constant dense<0.000000e+00> : vector<2x128xf32>
    %113 = tpu.matmul %110, %112, %cst_106 {dimension_numbers = #tpu.dot_dimension_numbers<[1], [0], [0], [1], [0, 0, 1, 1], [], []>} : vector<2x384xbf16>, vector<384x128xbf16>, vector<2x128xf32> -> vector<2x128xf32>
    %114 = arith.addf %108, %113 : vector<2x128xf32>
    %c3_107 = arith.constant 3 : index
    %c0_108 = arith.constant 0 : index
    %c256_109 = arith.constant 256 : index
    %115 = vector.load %arg1[%c3_107, %c0_108, %c256_109] : memref<12x2x768xbf16, #tpu.memory_space<vmem>>, vector<1x2x384xbf16>
    %116 = vector.shape_cast %115 : vector<1x2x384xbf16> to vector<2x384xbf16>
    %c3_110 = arith.constant 3 : index
    %c0_111 = arith.constant 0 : index
    %c0_112 = arith.constant 0 : index
    %117 = vector.load %arg2[%c3_110, %c0_111, %c0_112] : memref<5x384x128xbf16, #tpu.memory_space<vmem>>, vector<1x384x128xbf16>
    %118 = vector.shape_cast %117 : vector<1x384x128xbf16> to vector<384x128xbf16>
    %cst_113 = arith.constant dense<0.000000e+00> : vector<2x128xf32>
    %119 = tpu.matmul %116, %118, %cst_113 {dimension_numbers = #tpu.dot_dimension_numbers<[1], [0], [0], [1], [0, 0, 1, 1], [], []>} : vector<2x384xbf16>, vector<384x128xbf16>, vector<2x128xf32> -> vector<2x128xf32>
    %120 = arith.addf %114, %119 : vector<2x128xf32>
    %c4_114 = arith.constant 4 : index
    %c0_115 = arith.constant 0 : index
    %c256_116 = arith.constant 256 : index
    %121 = vector.load %arg1[%c4_114, %c0_115, %c256_116] : memref<12x2x768xbf16, #tpu.memory_space<vmem>>, vector<1x2x384xbf16>
    %122 = vector.shape_cast %121 : vector<1x2x384xbf16> to vector<2x384xbf16>
    %c4_117 = arith.constant 4 : index
    %c0_118 = arith.constant 0 : index
    %c0_119 = arith.constant 0 : index
    %123 = vector.load %arg2[%c4_117, %c0_118, %c0_119] : memref<5x384x128xbf16, #tpu.memory_space<vmem>>, vector<1x384x128xbf16>
    %124 = vector.shape_cast %123 : vector<1x384x128xbf16> to vector<384x128xbf16>
    %cst_120 = arith.constant dense<0.000000e+00> : vector<2x128xf32>
    %125 = tpu.matmul %122, %124, %cst_120 {dimension_numbers = #tpu.dot_dimension_numbers<[1], [0], [0], [1], [0, 0, 1, 1], [], []>} : vector<2x384xbf16>, vector<384x128xbf16>, vector<2x128xf32> -> vector<2x128xf32>
    %126 = arith.addf %120, %125 : vector<2x128xf32>
    %127 = vector.broadcast %0 : vector<1x128xf32> to vector<2x128xf32>
    %128 = arith.addf %126, %127 : vector<2x128xf32>
    %cst_121 = arith.constant 0.000000e+00 : f32
    %129 = vector.broadcast %cst_121 : f32 to vector<2x128xf32>
    %130 = arith.maximumf %128, %129 : vector<2x128xf32>
    %131 = arith.truncf %130 : vector<2x128xf32> to vector<2x128xbf16>
    %cst_122 = arith.constant dense<0.000000e+00> : vector<2x32xf32>
    %132 = tpu.matmul %131, %1, %cst_122 {dimension_numbers = #tpu.dot_dimension_numbers<[1], [0], [0], [1], [0, 0, 1, 1], [], []>} : vector<2x128xbf16>, vector<128x32xbf16>, vector<2x32xf32> -> vector<2x32xf32>
    %133 = vector.broadcast %2 : vector<1x32xf32> to vector<2x32xf32>
    %134 = arith.addf %132, %133 : vector<2x32xf32>
    %cst_123 = arith.constant 0.000000e+00 : f32
    %135 = vector.broadcast %cst_123 : f32 to vector<2x32xf32>
    %136 = arith.maximumf %134, %135 : vector<2x32xf32>
    %137 = arith.truncf %136 : vector<2x32xf32> to vector<2x32xbf16>
    %c2_124 = arith.constant 2 : index
    %c0_125 = arith.constant 0 : index
    %c0_126 = arith.constant 0 : index
    %138 = vector.load %arg6[%c2_124, %c0_125, %c0_126] : memref<16x32x256xbf16, #tpu.memory_space<vmem>>, vector<1x32x256xbf16>
    %139 = vector.shape_cast %138 : vector<1x32x256xbf16> to vector<32x256xbf16>
    %cst_127 = arith.constant dense<0.000000e+00> : vector<2x256xf32>
    %140 = tpu.matmul %137, %139, %cst_127 {dimension_numbers = #tpu.dot_dimension_numbers<[1], [0], [0], [1], [0, 0, 1, 1], [], []>} : vector<2x32xbf16>, vector<32x256xbf16>, vector<2x256xf32> -> vector<2x256xf32>
    %141 = arith.addf %95, %140 : vector<2x256xf32>
    %cst_128 = arith.constant 0.000000e+00 : f32
    %142 = vector.broadcast %cst_128 : f32 to vector<2x128xf32>
    %c0_129 = arith.constant 0 : index
    %c0_130 = arith.constant 0 : index
    %c384 = arith.constant 384 : index
    %143 = vector.load %arg1[%c0_129, %c0_130, %c384] : memref<12x2x768xbf16, #tpu.memory_space<vmem>>, vector<1x2x384xbf16>
    %144 = vector.shape_cast %143 : vector<1x2x384xbf16> to vector<2x384xbf16>
    %c0_131 = arith.constant 0 : index
    %c0_132 = arith.constant 0 : index
    %c0_133 = arith.constant 0 : index
    %145 = vector.load %arg2[%c0_131, %c0_132, %c0_133] : memref<5x384x128xbf16, #tpu.memory_space<vmem>>, vector<1x384x128xbf16>
    %146 = vector.shape_cast %145 : vector<1x384x128xbf16> to vector<384x128xbf16>
    %cst_134 = arith.constant dense<0.000000e+00> : vector<2x128xf32>
    %147 = tpu.matmul %144, %146, %cst_134 {dimension_numbers = #tpu.dot_dimension_numbers<[1], [0], [0], [1], [0, 0, 1, 1], [], []>} : vector<2x384xbf16>, vector<384x128xbf16>, vector<2x128xf32> -> vector<2x128xf32>
    %148 = arith.addf %142, %147 : vector<2x128xf32>
    %c1_135 = arith.constant 1 : index
    %c0_136 = arith.constant 0 : index
    %c384_137 = arith.constant 384 : index
    %149 = vector.load %arg1[%c1_135, %c0_136, %c384_137] : memref<12x2x768xbf16, #tpu.memory_space<vmem>>, vector<1x2x384xbf16>
    %150 = vector.shape_cast %149 : vector<1x2x384xbf16> to vector<2x384xbf16>
    %c1_138 = arith.constant 1 : index
    %c0_139 = arith.constant 0 : index
    %c0_140 = arith.constant 0 : index
    %151 = vector.load %arg2[%c1_138, %c0_139, %c0_140] : memref<5x384x128xbf16, #tpu.memory_space<vmem>>, vector<1x384x128xbf16>
    %152 = vector.shape_cast %151 : vector<1x384x128xbf16> to vector<384x128xbf16>
    %cst_141 = arith.constant dense<0.000000e+00> : vector<2x128xf32>
    %153 = tpu.matmul %150, %152, %cst_141 {dimension_numbers = #tpu.dot_dimension_numbers<[1], [0], [0], [1], [0, 0, 1, 1], [], []>} : vector<2x384xbf16>, vector<384x128xbf16>, vector<2x128xf32> -> vector<2x128xf32>
    %154 = arith.addf %148, %153 : vector<2x128xf32>
    %c2_142 = arith.constant 2 : index
    %c0_143 = arith.constant 0 : index
    %c384_144 = arith.constant 384 : index
    %155 = vector.load %arg1[%c2_142, %c0_143, %c384_144] : memref<12x2x768xbf16, #tpu.memory_space<vmem>>, vector<1x2x384xbf16>
    %156 = vector.shape_cast %155 : vector<1x2x384xbf16> to vector<2x384xbf16>
    %c2_145 = arith.constant 2 : index
    %c0_146 = arith.constant 0 : index
    %c0_147 = arith.constant 0 : index
    %157 = vector.load %arg2[%c2_145, %c0_146, %c0_147] : memref<5x384x128xbf16, #tpu.memory_space<vmem>>, vector<1x384x128xbf16>
    %158 = vector.shape_cast %157 : vector<1x384x128xbf16> to vector<384x128xbf16>
    %cst_148 = arith.constant dense<0.000000e+00> : vector<2x128xf32>
    %159 = tpu.matmul %156, %158, %cst_148 {dimension_numbers = #tpu.dot_dimension_numbers<[1], [0], [0], [1], [0, 0, 1, 1], [], []>} : vector<2x384xbf16>, vector<384x128xbf16>, vector<2x128xf32> -> vector<2x128xf32>
    %160 = arith.addf %154, %159 : vector<2x128xf32>
    %c3_149 = arith.constant 3 : index
    %c0_150 = arith.constant 0 : index
    %c384_151 = arith.constant 384 : index
    %161 = vector.load %arg1[%c3_149, %c0_150, %c384_151] : memref<12x2x768xbf16, #tpu.memory_space<vmem>>, vector<1x2x384xbf16>
    %162 = vector.shape_cast %161 : vector<1x2x384xbf16> to vector<2x384xbf16>
    %c3_152 = arith.constant 3 : index
    %c0_153 = arith.constant 0 : index
    %c0_154 = arith.constant 0 : index
    %163 = vector.load %arg2[%c3_152, %c0_153, %c0_154] : memref<5x384x128xbf16, #tpu.memory_space<vmem>>, vector<1x384x128xbf16>
    %164 = vector.shape_cast %163 : vector<1x384x128xbf16> to vector<384x128xbf16>
    %cst_155 = arith.constant dense<0.000000e+00> : vector<2x128xf32>
    %165 = tpu.matmul %162, %164, %cst_155 {dimension_numbers = #tpu.dot_dimension_numbers<[1], [0], [0], [1], [0, 0, 1, 1], [], []>} : vector<2x384xbf16>, vector<384x128xbf16>, vector<2x128xf32> -> vector<2x128xf32>
    %166 = arith.addf %160, %165 : vector<2x128xf32>
    %c4_156 = arith.constant 4 : index
    %c0_157 = arith.constant 0 : index
    %c384_158 = arith.constant 384 : index
    %167 = vector.load %arg1[%c4_156, %c0_157, %c384_158] : memref<12x2x768xbf16, #tpu.memory_space<vmem>>, vector<1x2x384xbf16>
    %168 = vector.shape_cast %167 : vector<1x2x384xbf16> to vector<2x384xbf16>
    %c4_159 = arith.constant 4 : index
    %c0_160 = arith.constant 0 : index
    %c0_161 = arith.constant 0 : index
    %169 = vector.load %arg2[%c4_159, %c0_160, %c0_161] : memref<5x384x128xbf16, #tpu.memory_space<vmem>>, vector<1x384x128xbf16>
    %170 = vector.shape_cast %169 : vector<1x384x128xbf16> to vector<384x128xbf16>
    %cst_162 = arith.constant dense<0.000000e+00> : vector<2x128xf32>
    %171 = tpu.matmul %168, %170, %cst_162 {dimension_numbers = #tpu.dot_dimension_numbers<[1], [0], [0], [1], [0, 0, 1, 1], [], []>} : vector<2x384xbf16>, vector<384x128xbf16>, vector<2x128xf32> -> vector<2x128xf32>
    %172 = arith.addf %166, %171 : vector<2x128xf32>
    %173 = vector.broadcast %0 : vector<1x128xf32> to vector<2x128xf32>
    %174 = arith.addf %172, %173 : vector<2x128xf32>
    %cst_163 = arith.constant 0.000000e+00 : f32
    %175 = vector.broadcast %cst_163 : f32 to vector<2x128xf32>
    %176 = arith.maximumf %174, %175 : vector<2x128xf32>
    %177 = arith.truncf %176 : vector<2x128xf32> to vector<2x128xbf16>
    %cst_164 = arith.constant dense<0.000000e+00> : vector<2x32xf32>
    %178 = tpu.matmul %177, %1, %cst_164 {dimension_numbers = #tpu.dot_dimension_numbers<[1], [0], [0], [1], [0, 0, 1, 1], [], []>} : vector<2x128xbf16>, vector<128x32xbf16>, vector<2x32xf32> -> vector<2x32xf32>
    %179 = vector.broadcast %2 : vector<1x32xf32> to vector<2x32xf32>
    %180 = arith.addf %178, %179 : vector<2x32xf32>
    %cst_165 = arith.constant 0.000000e+00 : f32
    %181 = vector.broadcast %cst_165 : f32 to vector<2x32xf32>
    %182 = arith.maximumf %180, %181 : vector<2x32xf32>
    %183 = arith.truncf %182 : vector<2x32xf32> to vector<2x32xbf16>
    %c3_166 = arith.constant 3 : index
    %c0_167 = arith.constant 0 : index
    %c0_168 = arith.constant 0 : index
    %184 = vector.load %arg6[%c3_166, %c0_167, %c0_168] : memref<16x32x256xbf16, #tpu.memory_space<vmem>>, vector<1x32x256xbf16>
    %185 = vector.shape_cast %184 : vector<1x32x256xbf16> to vector<32x256xbf16>
    %cst_169 = arith.constant dense<0.000000e+00> : vector<2x256xf32>
    %186 = tpu.matmul %183, %185, %cst_169 {dimension_numbers = #tpu.dot_dimension_numbers<[1], [0], [0], [1], [0, 0, 1, 1], [], []>} : vector<2x32xbf16>, vector<32x256xbf16>, vector<2x256xf32> -> vector<2x256xf32>
    %187 = arith.addf %141, %186 : vector<2x256xf32>
    %cst_170 = arith.constant 0.000000e+00 : f32
    %188 = vector.broadcast %cst_170 : f32 to vector<2x128xf32>
    %c2_171 = arith.constant 2 : index
    %c0_172 = arith.constant 0 : index
    %c0_173 = arith.constant 0 : index
    %189 = vector.load %arg1[%c2_171, %c0_172, %c0_173] : memref<12x2x768xbf16, #tpu.memory_space<vmem>>, vector<1x2x384xbf16>
    %190 = vector.shape_cast %189 : vector<1x2x384xbf16> to vector<2x384xbf16>
    %c0_174 = arith.constant 0 : index
    %c0_175 = arith.constant 0 : index
    %c0_176 = arith.constant 0 : index
    %191 = vector.load %arg2[%c0_174, %c0_175, %c0_176] : memref<5x384x128xbf16, #tpu.memory_space<vmem>>, vector<1x384x128xbf16>
    %192 = vector.shape_cast %191 : vector<1x384x128xbf16> to vector<384x128xbf16>
    %cst_177 = arith.constant dense<0.000000e+00> : vector<2x128xf32>
    %193 = tpu.matmul %190, %192, %cst_177 {dimension_numbers = #tpu.dot_dimension_numbers<[1], [0], [0], [1], [0, 0, 1, 1], [], []>} : vector<2x384xbf16>, vector<384x128xbf16>, vector<2x128xf32> -> vector<2x128xf32>
    %194 = arith.addf %188, %193 : vector<2x128xf32>
    %c3_178 = arith.constant 3 : index
    %c0_179 = arith.constant 0 : index
    %c0_180 = arith.constant 0 : index
    %195 = vector.load %arg1[%c3_178, %c0_179, %c0_180] : memref<12x2x768xbf16, #tpu.memory_space<vmem>>, vector<1x2x384xbf16>
    %196 = vector.shape_cast %195 : vector<1x2x384xbf16> to vector<2x384xbf16>
    %c1_181 = arith.constant 1 : index
    %c0_182 = arith.constant 0 : index
    %c0_183 = arith.constant 0 : index
    %197 = vector.load %arg2[%c1_181, %c0_182, %c0_183] : memref<5x384x128xbf16, #tpu.memory_space<vmem>>, vector<1x384x128xbf16>
    %198 = vector.shape_cast %197 : vector<1x384x128xbf16> to vector<384x128xbf16>
    %cst_184 = arith.constant dense<0.000000e+00> : vector<2x128xf32>
    %199 = tpu.matmul %196, %198, %cst_184 {dimension_numbers = #tpu.dot_dimension_numbers<[1], [0], [0], [1], [0, 0, 1, 1], [], []>} : vector<2x384xbf16>, vector<384x128xbf16>, vector<2x128xf32> -> vector<2x128xf32>
    %200 = arith.addf %194, %199 : vector<2x128xf32>
    %c4_185 = arith.constant 4 : index
    %c0_186 = arith.constant 0 : index
    %c0_187 = arith.constant 0 : index
    %201 = vector.load %arg1[%c4_185, %c0_186, %c0_187] : memref<12x2x768xbf16, #tpu.memory_space<vmem>>, vector<1x2x384xbf16>
    %202 = vector.shape_cast %201 : vector<1x2x384xbf16> to vector<2x384xbf16>
    %c2_188 = arith.constant 2 : index
    %c0_189 = arith.constant 0 : index
    %c0_190 = arith.constant 0 : index
    %203 = vector.load %arg2[%c2_188, %c0_189, %c0_190] : memref<5x384x128xbf16, #tpu.memory_space<vmem>>, vector<1x384x128xbf16>
    %204 = vector.shape_cast %203 : vector<1x384x128xbf16> to vector<384x128xbf16>
    %cst_191 = arith.constant dense<0.000000e+00> : vector<2x128xf32>
    %205 = tpu.matmul %202, %204, %cst_191 {dimension_numbers = #tpu.dot_dimension_numbers<[1], [0], [0], [1], [0, 0, 1, 1], [], []>} : vector<2x384xbf16>, vector<384x128xbf16>, vector<2x128xf32> -> vector<2x128xf32>
    %206 = arith.addf %200, %205 : vector<2x128xf32>
    %c5 = arith.constant 5 : index
    %c0_192 = arith.constant 0 : index
    %c0_193 = arith.constant 0 : index
    %207 = vector.load %arg1[%c5, %c0_192, %c0_193] : memref<12x2x768xbf16, #tpu.memory_space<vmem>>, vector<1x2x384xbf16>
    %208 = vector.shape_cast %207 : vector<1x2x384xbf16> to vector<2x384xbf16>
    %c3_194 = arith.constant 3 : index
    %c0_195 = arith.constant 0 : index
    %c0_196 = arith.constant 0 : index
    %209 = vector.load %arg2[%c3_194, %c0_195, %c0_196] : memref<5x384x128xbf16, #tpu.memory_space<vmem>>, vector<1x384x128xbf16>
    %210 = vector.shape_cast %209 : vector<1x384x128xbf16> to vector<384x128xbf16>
    %cst_197 = arith.constant dense<0.000000e+00> : vector<2x128xf32>
    %211 = tpu.matmul %208, %210, %cst_197 {dimension_numbers = #tpu.dot_dimension_numbers<[1], [0], [0], [1], [0, 0, 1, 1], [], []>} : vector<2x384xbf16>, vector<384x128xbf16>, vector<2x128xf32> -> vector<2x128xf32>
    %212 = arith.addf %206, %211 : vector<2x128xf32>
    %c6 = arith.constant 6 : index
    %c0_198 = arith.constant 0 : index
    %c0_199 = arith.constant 0 : index
    %213 = vector.load %arg1[%c6, %c0_198, %c0_199] : memref<12x2x768xbf16, #tpu.memory_space<vmem>>, vector<1x2x384xbf16>
    %214 = vector.shape_cast %213 : vector<1x2x384xbf16> to vector<2x384xbf16>
    %c4_200 = arith.constant 4 : index
    %c0_201 = arith.constant 0 : index
    %c0_202 = arith.constant 0 : index
    %215 = vector.load %arg2[%c4_200, %c0_201, %c0_202] : memref<5x384x128xbf16, #tpu.memory_space<vmem>>, vector<1x384x128xbf16>
    %216 = vector.shape_cast %215 : vector<1x384x128xbf16> to vector<384x128xbf16>
    %cst_203 = arith.constant dense<0.000000e+00> : vector<2x128xf32>
    %217 = tpu.matmul %214, %216, %cst_203 {dimension_numbers = #tpu.dot_dimension_numbers<[1], [0], [0], [1], [0, 0, 1, 1], [], []>} : vector<2x384xbf16>, vector<384x128xbf16>, vector<2x128xf32> -> vector<2x128xf32>
    %218 = arith.addf %212, %217 : vector<2x128xf32>
    %219 = vector.broadcast %0 : vector<1x128xf32> to vector<2x128xf32>
    %220 = arith.addf %218, %219 : vector<2x128xf32>
    %cst_204 = arith.constant 0.000000e+00 : f32
    %221 = vector.broadcast %cst_204 : f32 to vector<2x128xf32>
    %222 = arith.maximumf %220, %221 : vector<2x128xf32>
    %223 = arith.truncf %222 : vector<2x128xf32> to vector<2x128xbf16>
    %cst_205 = arith.constant dense<0.000000e+00> : vector<2x32xf32>
    %224 = tpu.matmul %223, %1, %cst_205 {dimension_numbers = #tpu.dot_dimension_numbers<[1], [0], [0], [1], [0, 0, 1, 1], [], []>} : vector<2x128xbf16>, vector<128x32xbf16>, vector<2x32xf32> -> vector<2x32xf32>
    %225 = vector.broadcast %2 : vector<1x32xf32> to vector<2x32xf32>
    %226 = arith.addf %224, %225 : vector<2x32xf32>
    %cst_206 = arith.constant 0.000000e+00 : f32
    %227 = vector.broadcast %cst_206 : f32 to vector<2x32xf32>
    %228 = arith.maximumf %226, %227 : vector<2x32xf32>
    %229 = arith.truncf %228 : vector<2x32xf32> to vector<2x32xbf16>
    %c4_207 = arith.constant 4 : index
    %c0_208 = arith.constant 0 : index
    %c0_209 = arith.constant 0 : index
    %230 = vector.load %arg6[%c4_207, %c0_208, %c0_209] : memref<16x32x256xbf16, #tpu.memory_space<vmem>>, vector<1x32x256xbf16>
    %231 = vector.shape_cast %230 : vector<1x32x256xbf16> to vector<32x256xbf16>
    %cst_210 = arith.constant dense<0.000000e+00> : vector<2x256xf32>
    %232 = tpu.matmul %229, %231, %cst_210 {dimension_numbers = #tpu.dot_dimension_numbers<[1], [0], [0], [1], [0, 0, 1, 1], [], []>} : vector<2x32xbf16>, vector<32x256xbf16>, vector<2x256xf32> -> vector<2x256xf32>
    %233 = arith.addf %187, %232 : vector<2x256xf32>
    %cst_211 = arith.constant 0.000000e+00 : f32
    %234 = vector.broadcast %cst_211 : f32 to vector<2x128xf32>
    %c2_212 = arith.constant 2 : index
    %c0_213 = arith.constant 0 : index
    %c128_214 = arith.constant 128 : index
    %235 = vector.load %arg1[%c2_212, %c0_213, %c128_214] : memref<12x2x768xbf16, #tpu.memory_space<vmem>>, vector<1x2x384xbf16>
    %236 = vector.shape_cast %235 : vector<1x2x384xbf16> to vector<2x384xbf16>
    %c0_215 = arith.constant 0 : index
    %c0_216 = arith.constant 0 : index
    %c0_217 = arith.constant 0 : index
    %237 = vector.load %arg2[%c0_215, %c0_216, %c0_217] : memref<5x384x128xbf16, #tpu.memory_space<vmem>>, vector<1x384x128xbf16>
    %238 = vector.shape_cast %237 : vector<1x384x128xbf16> to vector<384x128xbf16>
    %cst_218 = arith.constant dense<0.000000e+00> : vector<2x128xf32>
    %239 = tpu.matmul %236, %238, %cst_218 {dimension_numbers = #tpu.dot_dimension_numbers<[1], [0], [0], [1], [0, 0, 1, 1], [], []>} : vector<2x384xbf16>, vector<384x128xbf16>, vector<2x128xf32> -> vector<2x128xf32>
    %240 = arith.addf %234, %239 : vector<2x128xf32>
    %c3_219 = arith.constant 3 : index
    %c0_220 = arith.constant 0 : index
    %c128_221 = arith.constant 128 : index
    %241 = vector.load %arg1[%c3_219, %c0_220, %c128_221] : memref<12x2x768xbf16, #tpu.memory_space<vmem>>, vector<1x2x384xbf16>
    %242 = vector.shape_cast %241 : vector<1x2x384xbf16> to vector<2x384xbf16>
    %c1_222 = arith.constant 1 : index
    %c0_223 = arith.constant 0 : index
    %c0_224 = arith.constant 0 : index
    %243 = vector.load %arg2[%c1_222, %c0_223, %c0_224] : memref<5x384x128xbf16, #tpu.memory_space<vmem>>, vector<1x384x128xbf16>
    %244 = vector.shape_cast %243 : vector<1x384x128xbf16> to vector<384x128xbf16>
    %cst_225 = arith.constant dense<0.000000e+00> : vector<2x128xf32>
    %245 = tpu.matmul %242, %244, %cst_225 {dimension_numbers = #tpu.dot_dimension_numbers<[1], [0], [0], [1], [0, 0, 1, 1], [], []>} : vector<2x384xbf16>, vector<384x128xbf16>, vector<2x128xf32> -> vector<2x128xf32>
    %246 = arith.addf %240, %245 : vector<2x128xf32>
    %c4_226 = arith.constant 4 : index
    %c0_227 = arith.constant 0 : index
    %c128_228 = arith.constant 128 : index
    %247 = vector.load %arg1[%c4_226, %c0_227, %c128_228] : memref<12x2x768xbf16, #tpu.memory_space<vmem>>, vector<1x2x384xbf16>
    %248 = vector.shape_cast %247 : vector<1x2x384xbf16> to vector<2x384xbf16>
    %c2_229 = arith.constant 2 : index
    %c0_230 = arith.constant 0 : index
    %c0_231 = arith.constant 0 : index
    %249 = vector.load %arg2[%c2_229, %c0_230, %c0_231] : memref<5x384x128xbf16, #tpu.memory_space<vmem>>, vector<1x384x128xbf16>
    %250 = vector.shape_cast %249 : vector<1x384x128xbf16> to vector<384x128xbf16>
    %cst_232 = arith.constant dense<0.000000e+00> : vector<2x128xf32>
    %251 = tpu.matmul %248, %250, %cst_232 {dimension_numbers = #tpu.dot_dimension_numbers<[1], [0], [0], [1], [0, 0, 1, 1], [], []>} : vector<2x384xbf16>, vector<384x128xbf16>, vector<2x128xf32> -> vector<2x128xf32>
    %252 = arith.addf %246, %251 : vector<2x128xf32>
    %c5_233 = arith.constant 5 : index
    %c0_234 = arith.constant 0 : index
    %c128_235 = arith.constant 128 : index
    %253 = vector.load %arg1[%c5_233, %c0_234, %c128_235] : memref<12x2x768xbf16, #tpu.memory_space<vmem>>, vector<1x2x384xbf16>
    %254 = vector.shape_cast %253 : vector<1x2x384xbf16> to vector<2x384xbf16>
    %c3_236 = arith.constant 3 : index
    %c0_237 = arith.constant 0 : index
    %c0_238 = arith.constant 0 : index
    %255 = vector.load %arg2[%c3_236, %c0_237, %c0_238] : memref<5x384x128xbf16, #tpu.memory_space<vmem>>, vector<1x384x128xbf16>
    %256 = vector.shape_cast %255 : vector<1x384x128xbf16> to vector<384x128xbf16>
    %cst_239 = arith.constant dense<0.000000e+00> : vector<2x128xf32>
    %257 = tpu.matmul %254, %256, %cst_239 {dimension_numbers = #tpu.dot_dimension_numbers<[1], [0], [0], [1], [0, 0, 1, 1], [], []>} : vector<2x384xbf16>, vector<384x128xbf16>, vector<2x128xf32> -> vector<2x128xf32>
    %258 = arith.addf %252, %257 : vector<2x128xf32>
    %c6_240 = arith.constant 6 : index
    %c0_241 = arith.constant 0 : index
    %c128_242 = arith.constant 128 : index
    %259 = vector.load %arg1[%c6_240, %c0_241, %c128_242] : memref<12x2x768xbf16, #tpu.memory_space<vmem>>, vector<1x2x384xbf16>
    %260 = vector.shape_cast %259 : vector<1x2x384xbf16> to vector<2x384xbf16>
    %c4_243 = arith.constant 4 : index
    %c0_244 = arith.constant 0 : index
    %c0_245 = arith.constant 0 : index
    %261 = vector.load %arg2[%c4_243, %c0_244, %c0_245] : memref<5x384x128xbf16, #tpu.memory_space<vmem>>, vector<1x384x128xbf16>
    %262 = vector.shape_cast %261 : vector<1x384x128xbf16> to vector<384x128xbf16>
    %cst_246 = arith.constant dense<0.000000e+00> : vector<2x128xf32>
    %263 = tpu.matmul %260, %262, %cst_246 {dimension_numbers = #tpu.dot_dimension_numbers<[1], [0], [0], [1], [0, 0, 1, 1], [], []>} : vector<2x384xbf16>, vector<384x128xbf16>, vector<2x128xf32> -> vector<2x128xf32>
    %264 = arith.addf %258, %263 : vector<2x128xf32>
    %265 = vector.broadcast %0 : vector<1x128xf32> to vector<2x128xf32>
    %266 = arith.addf %264, %265 : vector<2x128xf32>
    %cst_247 = arith.constant 0.000000e+00 : f32
    %267 = vector.broadcast %cst_247 : f32 to vector<2x128xf32>
    %268 = arith.maximumf %266, %267 : vector<2x128xf32>
    %269 = arith.truncf %268 : vector<2x128xf32> to vector<2x128xbf16>
    %cst_248 = arith.constant dense<0.000000e+00> : vector<2x32xf32>
    %270 = tpu.matmul %269, %1, %cst_248 {dimension_numbers = #tpu.dot_dimension_numbers<[1], [0], [0], [1], [0, 0, 1, 1], [], []>} : vector<2x128xbf16>, vector<128x32xbf16>, vector<2x32xf32> -> vector<2x32xf32>
    %271 = vector.broadcast %2 : vector<1x32xf32> to vector<2x32xf32>
    %272 = arith.addf %270, %271 : vector<2x32xf32>
    %cst_249 = arith.constant 0.000000e+00 : f32
    %273 = vector.broadcast %cst_249 : f32 to vector<2x32xf32>
    %274 = arith.maximumf %272, %273 : vector<2x32xf32>
    %275 = arith.truncf %274 : vector<2x32xf32> to vector<2x32xbf16>
    %c5_250 = arith.constant 5 : index
    %c0_251 = arith.constant 0 : index
    %c0_252 = arith.constant 0 : index
    %276 = vector.load %arg6[%c5_250, %c0_251, %c0_252] : memref<16x32x256xbf16, #tpu.memory_space<vmem>>, vector<1x32x256xbf16>
    %277 = vector.shape_cast %276 : vector<1x32x256xbf16> to vector<32x256xbf16>
    %cst_253 = arith.constant dense<0.000000e+00> : vector<2x256xf32>
    %278 = tpu.matmul %275, %277, %cst_253 {dimension_numbers = #tpu.dot_dimension_numbers<[1], [0], [0], [1], [0, 0, 1, 1], [], []>} : vector<2x32xbf16>, vector<32x256xbf16>, vector<2x256xf32> -> vector<2x256xf32>
    %279 = arith.addf %233, %278 : vector<2x256xf32>
    %cst_254 = arith.constant 0.000000e+00 : f32
    %280 = vector.broadcast %cst_254 : f32 to vector<2x128xf32>
    %c2_255 = arith.constant 2 : index
    %c0_256 = arith.constant 0 : index
    %c256_257 = arith.constant 256 : index
    %281 = vector.load %arg1[%c2_255, %c0_256, %c256_257] : memref<12x2x768xbf16, #tpu.memory_space<vmem>>, vector<1x2x384xbf16>
    %282 = vector.shape_cast %281 : vector<1x2x384xbf16> to vector<2x384xbf16>
    %c0_258 = arith.constant 0 : index
    %c0_259 = arith.constant 0 : index
    %c0_260 = arith.constant 0 : index
    %283 = vector.load %arg2[%c0_258, %c0_259, %c0_260] : memref<5x384x128xbf16, #tpu.memory_space<vmem>>, vector<1x384x128xbf16>
    %284 = vector.shape_cast %283 : vector<1x384x128xbf16> to vector<384x128xbf16>
    %cst_261 = arith.constant dense<0.000000e+00> : vector<2x128xf32>
    %285 = tpu.matmul %282, %284, %cst_261 {dimension_numbers = #tpu.dot_dimension_numbers<[1], [0], [0], [1], [0, 0, 1, 1], [], []>} : vector<2x384xbf16>, vector<384x128xbf16>, vector<2x128xf32> -> vector<2x128xf32>
    %286 = arith.addf %280, %285 : vector<2x128xf32>
    %c3_262 = arith.constant 3 : index
    %c0_263 = arith.constant 0 : index
    %c256_264 = arith.constant 256 : index
    %287 = vector.load %arg1[%c3_262, %c0_263, %c256_264] : memref<12x2x768xbf16, #tpu.memory_space<vmem>>, vector<1x2x384xbf16>
    %288 = vector.shape_cast %287 : vector<1x2x384xbf16> to vector<2x384xbf16>
    %c1_265 = arith.constant 1 : index
    %c0_266 = arith.constant 0 : index
    %c0_267 = arith.constant 0 : index
    %289 = vector.load %arg2[%c1_265, %c0_266, %c0_267] : memref<5x384x128xbf16, #tpu.memory_space<vmem>>, vector<1x384x128xbf16>
    %290 = vector.shape_cast %289 : vector<1x384x128xbf16> to vector<384x128xbf16>
    %cst_268 = arith.constant dense<0.000000e+00> : vector<2x128xf32>
    %291 = tpu.matmul %288, %290, %cst_268 {dimension_numbers = #tpu.dot_dimension_numbers<[1], [0], [0], [1], [0, 0, 1, 1], [], []>} : vector<2x384xbf16>, vector<384x128xbf16>, vector<2x128xf32> -> vector<2x128xf32>
    %292 = arith.addf %286, %291 : vector<2x128xf32>
    %c4_269 = arith.constant 4 : index
    %c0_270 = arith.constant 0 : index
    %c256_271 = arith.constant 256 : index
    %293 = vector.load %arg1[%c4_269, %c0_270, %c256_271] : memref<12x2x768xbf16, #tpu.memory_space<vmem>>, vector<1x2x384xbf16>
    %294 = vector.shape_cast %293 : vector<1x2x384xbf16> to vector<2x384xbf16>
    %c2_272 = arith.constant 2 : index
    %c0_273 = arith.constant 0 : index
    %c0_274 = arith.constant 0 : index
    %295 = vector.load %arg2[%c2_272, %c0_273, %c0_274] : memref<5x384x128xbf16, #tpu.memory_space<vmem>>, vector<1x384x128xbf16>
    %296 = vector.shape_cast %295 : vector<1x384x128xbf16> to vector<384x128xbf16>
    %cst_275 = arith.constant dense<0.000000e+00> : vector<2x128xf32>
    %297 = tpu.matmul %294, %296, %cst_275 {dimension_numbers = #tpu.dot_dimension_numbers<[1], [0], [0], [1], [0, 0, 1, 1], [], []>} : vector<2x384xbf16>, vector<384x128xbf16>, vector<2x128xf32> -> vector<2x128xf32>
    %298 = arith.addf %292, %297 : vector<2x128xf32>
    %c5_276 = arith.constant 5 : index
    %c0_277 = arith.constant 0 : index
    %c256_278 = arith.constant 256 : index
    %299 = vector.load %arg1[%c5_276, %c0_277, %c256_278] : memref<12x2x768xbf16, #tpu.memory_space<vmem>>, vector<1x2x384xbf16>
    %300 = vector.shape_cast %299 : vector<1x2x384xbf16> to vector<2x384xbf16>
    %c3_279 = arith.constant 3 : index
    %c0_280 = arith.constant 0 : index
    %c0_281 = arith.constant 0 : index
    %301 = vector.load %arg2[%c3_279, %c0_280, %c0_281] : memref<5x384x128xbf16, #tpu.memory_space<vmem>>, vector<1x384x128xbf16>
    %302 = vector.shape_cast %301 : vector<1x384x128xbf16> to vector<384x128xbf16>
    %cst_282 = arith.constant dense<0.000000e+00> : vector<2x128xf32>
    %303 = tpu.matmul %300, %302, %cst_282 {dimension_numbers = #tpu.dot_dimension_numbers<[1], [0], [0], [1], [0, 0, 1, 1], [], []>} : vector<2x384xbf16>, vector<384x128xbf16>, vector<2x128xf32> -> vector<2x128xf32>
    %304 = arith.addf %298, %303 : vector<2x128xf32>
    %c6_283 = arith.constant 6 : index
    %c0_284 = arith.constant 0 : index
    %c256_285 = arith.constant 256 : index
    %305 = vector.load %arg1[%c6_283, %c0_284, %c256_285] : memref<12x2x768xbf16, #tpu.memory_space<vmem>>, vector<1x2x384xbf16>
    %306 = vector.shape_cast %305 : vector<1x2x384xbf16> to vector<2x384xbf16>
    %c4_286 = arith.constant 4 : index
    %c0_287 = arith.constant 0 : index
    %c0_288 = arith.constant 0 : index
    %307 = vector.load %arg2[%c4_286, %c0_287, %c0_288] : memref<5x384x128xbf16, #tpu.memory_space<vmem>>, vector<1x384x128xbf16>
    %308 = vector.shape_cast %307 : vector<1x384x128xbf16> to vector<384x128xbf16>
    %cst_289 = arith.constant dense<0.000000e+00> : vector<2x128xf32>
    %309 = tpu.matmul %306, %308, %cst_289 {dimension_numbers = #tpu.dot_dimension_numbers<[1], [0], [0], [1], [0, 0, 1, 1], [], []>} : vector<2x384xbf16>, vector<384x128xbf16>, vector<2x128xf32> -> vector<2x128xf32>
    %310 = arith.addf %304, %309 : vector<2x128xf32>
    %311 = vector.broadcast %0 : vector<1x128xf32> to vector<2x128xf32>
    %312 = arith.addf %310, %311 : vector<2x128xf32>
    %cst_290 = arith.constant 0.000000e+00 : f32
    %313 = vector.broadcast %cst_290 : f32 to vector<2x128xf32>
    %314 = arith.maximumf %312, %313 : vector<2x128xf32>
    %315 = arith.truncf %314 : vector<2x128xf32> to vector<2x128xbf16>
    %cst_291 = arith.constant dense<0.000000e+00> : vector<2x32xf32>
    %316 = tpu.matmul %315, %1, %cst_291 {dimension_numbers = #tpu.dot_dimension_numbers<[1], [0], [0], [1], [0, 0, 1, 1], [], []>} : vector<2x128xbf16>, vector<128x32xbf16>, vector<2x32xf32> -> vector<2x32xf32>
    %317 = vector.broadcast %2 : vector<1x32xf32> to vector<2x32xf32>
    %318 = arith.addf %316, %317 : vector<2x32xf32>
    %cst_292 = arith.constant 0.000000e+00 : f32
    %319 = vector.broadcast %cst_292 : f32 to vector<2x32xf32>
    %320 = arith.maximumf %318, %319 : vector<2x32xf32>
    %321 = arith.truncf %320 : vector<2x32xf32> to vector<2x32xbf16>
    %c6_293 = arith.constant 6 : index
    %c0_294 = arith.constant 0 : index
    %c0_295 = arith.constant 0 : index
    %322 = vector.load %arg6[%c6_293, %c0_294, %c0_295] : memref<16x32x256xbf16, #tpu.memory_space<vmem>>, vector<1x32x256xbf16>
    %323 = vector.shape_cast %322 : vector<1x32x256xbf16> to vector<32x256xbf16>
    %cst_296 = arith.constant dense<0.000000e+00> : vector<2x256xf32>
    %324 = tpu.matmul %321, %323, %cst_296 {dimension_numbers = #tpu.dot_dimension_numbers<[1], [0], [0], [1], [0, 0, 1, 1], [], []>} : vector<2x32xbf16>, vector<32x256xbf16>, vector<2x256xf32> -> vector<2x256xf32>
    %325 = arith.addf %279, %324 : vector<2x256xf32>
    %cst_297 = arith.constant 0.000000e+00 : f32
    %326 = vector.broadcast %cst_297 : f32 to vector<2x128xf32>
    %c2_298 = arith.constant 2 : index
    %c0_299 = arith.constant 0 : index
    %c384_300 = arith.constant 384 : index
    %327 = vector.load %arg1[%c2_298, %c0_299, %c384_300] : memref<12x2x768xbf16, #tpu.memory_space<vmem>>, vector<1x2x384xbf16>
    %328 = vector.shape_cast %327 : vector<1x2x384xbf16> to vector<2x384xbf16>
    %c0_301 = arith.constant 0 : index
    %c0_302 = arith.constant 0 : index
    %c0_303 = arith.constant 0 : index
    %329 = vector.load %arg2[%c0_301, %c0_302, %c0_303] : memref<5x384x128xbf16, #tpu.memory_space<vmem>>, vector<1x384x128xbf16>
    %330 = vector.shape_cast %329 : vector<1x384x128xbf16> to vector<384x128xbf16>
    %cst_304 = arith.constant dense<0.000000e+00> : vector<2x128xf32>
    %331 = tpu.matmul %328, %330, %cst_304 {dimension_numbers = #tpu.dot_dimension_numbers<[1], [0], [0], [1], [0, 0, 1, 1], [], []>} : vector<2x384xbf16>, vector<384x128xbf16>, vector<2x128xf32> -> vector<2x128xf32>
    %332 = arith.addf %326, %331 : vector<2x128xf32>
    %c3_305 = arith.constant 3 : index
    %c0_306 = arith.constant 0 : index
    %c384_307 = arith.constant 384 : index
    %333 = vector.load %arg1[%c3_305, %c0_306, %c384_307] : memref<12x2x768xbf16, #tpu.memory_space<vmem>>, vector<1x2x384xbf16>
    %334 = vector.shape_cast %333 : vector<1x2x384xbf16> to vector<2x384xbf16>
    %c1_308 = arith.constant 1 : index
    %c0_309 = arith.constant 0 : index
    %c0_310 = arith.constant 0 : index
    %335 = vector.load %arg2[%c1_308, %c0_309, %c0_310] : memref<5x384x128xbf16, #tpu.memory_space<vmem>>, vector<1x384x128xbf16>
    %336 = vector.shape_cast %335 : vector<1x384x128xbf16> to vector<384x128xbf16>
    %cst_311 = arith.constant dense<0.000000e+00> : vector<2x128xf32>
    %337 = tpu.matmul %334, %336, %cst_311 {dimension_numbers = #tpu.dot_dimension_numbers<[1], [0], [0], [1], [0, 0, 1, 1], [], []>} : vector<2x384xbf16>, vector<384x128xbf16>, vector<2x128xf32> -> vector<2x128xf32>
    %338 = arith.addf %332, %337 : vector<2x128xf32>
    %c4_312 = arith.constant 4 : index
    %c0_313 = arith.constant 0 : index
    %c384_314 = arith.constant 384 : index
    %339 = vector.load %arg1[%c4_312, %c0_313, %c384_314] : memref<12x2x768xbf16, #tpu.memory_space<vmem>>, vector<1x2x384xbf16>
    %340 = vector.shape_cast %339 : vector<1x2x384xbf16> to vector<2x384xbf16>
    %c2_315 = arith.constant 2 : index
    %c0_316 = arith.constant 0 : index
    %c0_317 = arith.constant 0 : index
    %341 = vector.load %arg2[%c2_315, %c0_316, %c0_317] : memref<5x384x128xbf16, #tpu.memory_space<vmem>>, vector<1x384x128xbf16>
    %342 = vector.shape_cast %341 : vector<1x384x128xbf16> to vector<384x128xbf16>
    %cst_318 = arith.constant dense<0.000000e+00> : vector<2x128xf32>
    %343 = tpu.matmul %340, %342, %cst_318 {dimension_numbers = #tpu.dot_dimension_numbers<[1], [0], [0], [1], [0, 0, 1, 1], [], []>} : vector<2x384xbf16>, vector<384x128xbf16>, vector<2x128xf32> -> vector<2x128xf32>
    %344 = arith.addf %338, %343 : vector<2x128xf32>
    %c5_319 = arith.constant 5 : index
    %c0_320 = arith.constant 0 : index
    %c384_321 = arith.constant 384 : index
    %345 = vector.load %arg1[%c5_319, %c0_320, %c384_321] : memref<12x2x768xbf16, #tpu.memory_space<vmem>>, vector<1x2x384xbf16>
    %346 = vector.shape_cast %345 : vector<1x2x384xbf16> to vector<2x384xbf16>
    %c3_322 = arith.constant 3 : index
    %c0_323 = arith.constant 0 : index
    %c0_324 = arith.constant 0 : index
    %347 = vector.load %arg2[%c3_322, %c0_323, %c0_324] : memref<5x384x128xbf16, #tpu.memory_space<vmem>>, vector<1x384x128xbf16>
    %348 = vector.shape_cast %347 : vector<1x384x128xbf16> to vector<384x128xbf16>
    %cst_325 = arith.constant dense<0.000000e+00> : vector<2x128xf32>
    %349 = tpu.matmul %346, %348, %cst_325 {dimension_numbers = #tpu.dot_dimension_numbers<[1], [0], [0], [1], [0, 0, 1, 1], [], []>} : vector<2x384xbf16>, vector<384x128xbf16>, vector<2x128xf32> -> vector<2x128xf32>
    %350 = arith.addf %344, %349 : vector<2x128xf32>
    %c6_326 = arith.constant 6 : index
    %c0_327 = arith.constant 0 : index
    %c384_328 = arith.constant 384 : index
    %351 = vector.load %arg1[%c6_326, %c0_327, %c384_328] : memref<12x2x768xbf16, #tpu.memory_space<vmem>>, vector<1x2x384xbf16>
    %352 = vector.shape_cast %351 : vector<1x2x384xbf16> to vector<2x384xbf16>
    %c4_329 = arith.constant 4 : index
    %c0_330 = arith.constant 0 : index
    %c0_331 = arith.constant 0 : index
    %353 = vector.load %arg2[%c4_329, %c0_330, %c0_331] : memref<5x384x128xbf16, #tpu.memory_space<vmem>>, vector<1x384x128xbf16>
    %354 = vector.shape_cast %353 : vector<1x384x128xbf16> to vector<384x128xbf16>
    %cst_332 = arith.constant dense<0.000000e+00> : vector<2x128xf32>
    %355 = tpu.matmul %352, %354, %cst_332 {dimension_numbers = #tpu.dot_dimension_numbers<[1], [0], [0], [1], [0, 0, 1, 1], [], []>} : vector<2x384xbf16>, vector<384x128xbf16>, vector<2x128xf32> -> vector<2x128xf32>
    %356 = arith.addf %350, %355 : vector<2x128xf32>
    %357 = vector.broadcast %0 : vector<1x128xf32> to vector<2x128xf32>
    %358 = arith.addf %356, %357 : vector<2x128xf32>
    %cst_333 = arith.constant 0.000000e+00 : f32
    %359 = vector.broadcast %cst_333 : f32 to vector<2x128xf32>
    %360 = arith.maximumf %358, %359 : vector<2x128xf32>
    %361 = arith.truncf %360 : vector<2x128xf32> to vector<2x128xbf16>
    %cst_334 = arith.constant dense<0.000000e+00> : vector<2x32xf32>
    %362 = tpu.matmul %361, %1, %cst_334 {dimension_numbers = #tpu.dot_dimension_numbers<[1], [0], [0], [1], [0, 0, 1, 1], [], []>} : vector<2x128xbf16>, vector<128x32xbf16>, vector<2x32xf32> -> vector<2x32xf32>
    %363 = vector.broadcast %2 : vector<1x32xf32> to vector<2x32xf32>
    %364 = arith.addf %362, %363 : vector<2x32xf32>
    %cst_335 = arith.constant 0.000000e+00 : f32
    %365 = vector.broadcast %cst_335 : f32 to vector<2x32xf32>
    %366 = arith.maximumf %364, %365 : vector<2x32xf32>
    %367 = arith.truncf %366 : vector<2x32xf32> to vector<2x32xbf16>
    %c7 = arith.constant 7 : index
    %c0_336 = arith.constant 0 : index
    %c0_337 = arith.constant 0 : index
    %368 = vector.load %arg6[%c7, %c0_336, %c0_337] : memref<16x32x256xbf16, #tpu.memory_space<vmem>>, vector<1x32x256xbf16>
    %369 = vector.shape_cast %368 : vector<1x32x256xbf16> to vector<32x256xbf16>
    %cst_338 = arith.constant dense<0.000000e+00> : vector<2x256xf32>
    %370 = tpu.matmul %367, %369, %cst_338 {dimension_numbers = #tpu.dot_dimension_numbers<[1], [0], [0], [1], [0, 0, 1, 1], [], []>} : vector<2x32xbf16>, vector<32x256xbf16>, vector<2x256xf32> -> vector<2x256xf32>
    %371 = arith.addf %325, %370 : vector<2x256xf32>
    %cst_339 = arith.constant 0.000000e+00 : f32
    %372 = vector.broadcast %cst_339 : f32 to vector<2x128xf32>
    %c4_340 = arith.constant 4 : index
    %c0_341 = arith.constant 0 : index
    %c0_342 = arith.constant 0 : index
    %373 = vector.load %arg1[%c4_340, %c0_341, %c0_342] : memref<12x2x768xbf16, #tpu.memory_space<vmem>>, vector<1x2x384xbf16>
    %374 = vector.shape_cast %373 : vector<1x2x384xbf16> to vector<2x384xbf16>
    %c0_343 = arith.constant 0 : index
    %c0_344 = arith.constant 0 : index
    %c0_345 = arith.constant 0 : index
    %375 = vector.load %arg2[%c0_343, %c0_344, %c0_345] : memref<5x384x128xbf16, #tpu.memory_space<vmem>>, vector<1x384x128xbf16>
    %376 = vector.shape_cast %375 : vector<1x384x128xbf16> to vector<384x128xbf16>
    %cst_346 = arith.constant dense<0.000000e+00> : vector<2x128xf32>
    %377 = tpu.matmul %374, %376, %cst_346 {dimension_numbers = #tpu.dot_dimension_numbers<[1], [0], [0], [1], [0, 0, 1, 1], [], []>} : vector<2x384xbf16>, vector<384x128xbf16>, vector<2x128xf32> -> vector<2x128xf32>
    %378 = arith.addf %372, %377 : vector<2x128xf32>
    %c5_347 = arith.constant 5 : index
    %c0_348 = arith.constant 0 : index
    %c0_349 = arith.constant 0 : index
    %379 = vector.load %arg1[%c5_347, %c0_348, %c0_349] : memref<12x2x768xbf16, #tpu.memory_space<vmem>>, vector<1x2x384xbf16>
    %380 = vector.shape_cast %379 : vector<1x2x384xbf16> to vector<2x384xbf16>
    %c1_350 = arith.constant 1 : index
    %c0_351 = arith.constant 0 : index
    %c0_352 = arith.constant 0 : index
    %381 = vector.load %arg2[%c1_350, %c0_351, %c0_352] : memref<5x384x128xbf16, #tpu.memory_space<vmem>>, vector<1x384x128xbf16>
    %382 = vector.shape_cast %381 : vector<1x384x128xbf16> to vector<384x128xbf16>
    %cst_353 = arith.constant dense<0.000000e+00> : vector<2x128xf32>
    %383 = tpu.matmul %380, %382, %cst_353 {dimension_numbers = #tpu.dot_dimension_numbers<[1], [0], [0], [1], [0, 0, 1, 1], [], []>} : vector<2x384xbf16>, vector<384x128xbf16>, vector<2x128xf32> -> vector<2x128xf32>
    %384 = arith.addf %378, %383 : vector<2x128xf32>
    %c6_354 = arith.constant 6 : index
    %c0_355 = arith.constant 0 : index
    %c0_356 = arith.constant 0 : index
    %385 = vector.load %arg1[%c6_354, %c0_355, %c0_356] : memref<12x2x768xbf16, #tpu.memory_space<vmem>>, vector<1x2x384xbf16>
    %386 = vector.shape_cast %385 : vector<1x2x384xbf16> to vector<2x384xbf16>
    %c2_357 = arith.constant 2 : index
    %c0_358 = arith.constant 0 : index
    %c0_359 = arith.constant 0 : index
    %387 = vector.load %arg2[%c2_357, %c0_358, %c0_359] : memref<5x384x128xbf16, #tpu.memory_space<vmem>>, vector<1x384x128xbf16>
    %388 = vector.shape_cast %387 : vector<1x384x128xbf16> to vector<384x128xbf16>
    %cst_360 = arith.constant dense<0.000000e+00> : vector<2x128xf32>
    %389 = tpu.matmul %386, %388, %cst_360 {dimension_numbers = #tpu.dot_dimension_numbers<[1], [0], [0], [1], [0, 0, 1, 1], [], []>} : vector<2x384xbf16>, vector<384x128xbf16>, vector<2x128xf32> -> vector<2x128xf32>
    %390 = arith.addf %384, %389 : vector<2x128xf32>
    %c7_361 = arith.constant 7 : index
    %c0_362 = arith.constant 0 : index
    %c0_363 = arith.constant 0 : index
    %391 = vector.load %arg1[%c7_361, %c0_362, %c0_363] : memref<12x2x768xbf16, #tpu.memory_space<vmem>>, vector<1x2x384xbf16>
    %392 = vector.shape_cast %391 : vector<1x2x384xbf16> to vector<2x384xbf16>
    %c3_364 = arith.constant 3 : index
    %c0_365 = arith.constant 0 : index
    %c0_366 = arith.constant 0 : index
    %393 = vector.load %arg2[%c3_364, %c0_365, %c0_366] : memref<5x384x128xbf16, #tpu.memory_space<vmem>>, vector<1x384x128xbf16>
    %394 = vector.shape_cast %393 : vector<1x384x128xbf16> to vector<384x128xbf16>
    %cst_367 = arith.constant dense<0.000000e+00> : vector<2x128xf32>
    %395 = tpu.matmul %392, %394, %cst_367 {dimension_numbers = #tpu.dot_dimension_numbers<[1], [0], [0], [1], [0, 0, 1, 1], [], []>} : vector<2x384xbf16>, vector<384x128xbf16>, vector<2x128xf32> -> vector<2x128xf32>
    %396 = arith.addf %390, %395 : vector<2x128xf32>
    %c8 = arith.constant 8 : index
    %c0_368 = arith.constant 0 : index
    %c0_369 = arith.constant 0 : index
    %397 = vector.load %arg1[%c8, %c0_368, %c0_369] : memref<12x2x768xbf16, #tpu.memory_space<vmem>>, vector<1x2x384xbf16>
    %398 = vector.shape_cast %397 : vector<1x2x384xbf16> to vector<2x384xbf16>
    %c4_370 = arith.constant 4 : index
    %c0_371 = arith.constant 0 : index
    %c0_372 = arith.constant 0 : index
    %399 = vector.load %arg2[%c4_370, %c0_371, %c0_372] : memref<5x384x128xbf16, #tpu.memory_space<vmem>>, vector<1x384x128xbf16>
    %400 = vector.shape_cast %399 : vector<1x384x128xbf16> to vector<384x128xbf16>
    %cst_373 = arith.constant dense<0.000000e+00> : vector<2x128xf32>
    %401 = tpu.matmul %398, %400, %cst_373 {dimension_numbers = #tpu.dot_dimension_numbers<[1], [0], [0], [1], [0, 0, 1, 1], [], []>} : vector<2x384xbf16>, vector<384x128xbf16>, vector<2x128xf32> -> vector<2x128xf32>
    %402 = arith.addf %396, %401 : vector<2x128xf32>
    %403 = vector.broadcast %0 : vector<1x128xf32> to vector<2x128xf32>
    %404 = arith.addf %402, %403 : vector<2x128xf32>
    %cst_374 = arith.constant 0.000000e+00 : f32
    %405 = vector.broadcast %cst_374 : f32 to vector<2x128xf32>
    %406 = arith.maximumf %404, %405 : vector<2x128xf32>
    %407 = arith.truncf %406 : vector<2x128xf32> to vector<2x128xbf16>
    %cst_375 = arith.constant dense<0.000000e+00> : vector<2x32xf32>
    %408 = tpu.matmul %407, %1, %cst_375 {dimension_numbers = #tpu.dot_dimension_numbers<[1], [0], [0], [1], [0, 0, 1, 1], [], []>} : vector<2x128xbf16>, vector<128x32xbf16>, vector<2x32xf32> -> vector<2x32xf32>
    %409 = vector.broadcast %2 : vector<1x32xf32> to vector<2x32xf32>
    %410 = arith.addf %408, %409 : vector<2x32xf32>
    %cst_376 = arith.constant 0.000000e+00 : f32
    %411 = vector.broadcast %cst_376 : f32 to vector<2x32xf32>
    %412 = arith.maximumf %410, %411 : vector<2x32xf32>
    %413 = arith.truncf %412 : vector<2x32xf32> to vector<2x32xbf16>
    %c8_377 = arith.constant 8 : index
    %c0_378 = arith.constant 0 : index
    %c0_379 = arith.constant 0 : index
    %414 = vector.load %arg6[%c8_377, %c0_378, %c0_379] : memref<16x32x256xbf16, #tpu.memory_space<vmem>>, vector<1x32x256xbf16>
    %415 = vector.shape_cast %414 : vector<1x32x256xbf16> to vector<32x256xbf16>
    %cst_380 = arith.constant dense<0.000000e+00> : vector<2x256xf32>
    %416 = tpu.matmul %413, %415, %cst_380 {dimension_numbers = #tpu.dot_dimension_numbers<[1], [0], [0], [1], [0, 0, 1, 1], [], []>} : vector<2x32xbf16>, vector<32x256xbf16>, vector<2x256xf32> -> vector<2x256xf32>
    %417 = arith.addf %371, %416 : vector<2x256xf32>
    %cst_381 = arith.constant 0.000000e+00 : f32
    %418 = vector.broadcast %cst_381 : f32 to vector<2x128xf32>
    %c4_382 = arith.constant 4 : index
    %c0_383 = arith.constant 0 : index
    %c128_384 = arith.constant 128 : index
    %419 = vector.load %arg1[%c4_382, %c0_383, %c128_384] : memref<12x2x768xbf16, #tpu.memory_space<vmem>>, vector<1x2x384xbf16>
    %420 = vector.shape_cast %419 : vector<1x2x384xbf16> to vector<2x384xbf16>
    %c0_385 = arith.constant 0 : index
    %c0_386 = arith.constant 0 : index
    %c0_387 = arith.constant 0 : index
    %421 = vector.load %arg2[%c0_385, %c0_386, %c0_387] : memref<5x384x128xbf16, #tpu.memory_space<vmem>>, vector<1x384x128xbf16>
    %422 = vector.shape_cast %421 : vector<1x384x128xbf16> to vector<384x128xbf16>
    %cst_388 = arith.constant dense<0.000000e+00> : vector<2x128xf32>
    %423 = tpu.matmul %420, %422, %cst_388 {dimension_numbers = #tpu.dot_dimension_numbers<[1], [0], [0], [1], [0, 0, 1, 1], [], []>} : vector<2x384xbf16>, vector<384x128xbf16>, vector<2x128xf32> -> vector<2x128xf32>
    %424 = arith.addf %418, %423 : vector<2x128xf32>
    %c5_389 = arith.constant 5 : index
    %c0_390 = arith.constant 0 : index
    %c128_391 = arith.constant 128 : index
    %425 = vector.load %arg1[%c5_389, %c0_390, %c128_391] : memref<12x2x768xbf16, #tpu.memory_space<vmem>>, vector<1x2x384xbf16>
    %426 = vector.shape_cast %425 : vector<1x2x384xbf16> to vector<2x384xbf16>
    %c1_392 = arith.constant 1 : index
    %c0_393 = arith.constant 0 : index
    %c0_394 = arith.constant 0 : index
    %427 = vector.load %arg2[%c1_392, %c0_393, %c0_394] : memref<5x384x128xbf16, #tpu.memory_space<vmem>>, vector<1x384x128xbf16>
    %428 = vector.shape_cast %427 : vector<1x384x128xbf16> to vector<384x128xbf16>
    %cst_395 = arith.constant dense<0.000000e+00> : vector<2x128xf32>
    %429 = tpu.matmul %426, %428, %cst_395 {dimension_numbers = #tpu.dot_dimension_numbers<[1], [0], [0], [1], [0, 0, 1, 1], [], []>} : vector<2x384xbf16>, vector<384x128xbf16>, vector<2x128xf32> -> vector<2x128xf32>
    %430 = arith.addf %424, %429 : vector<2x128xf32>
    %c6_396 = arith.constant 6 : index
    %c0_397 = arith.constant 0 : index
    %c128_398 = arith.constant 128 : index
    %431 = vector.load %arg1[%c6_396, %c0_397, %c128_398] : memref<12x2x768xbf16, #tpu.memory_space<vmem>>, vector<1x2x384xbf16>
    %432 = vector.shape_cast %431 : vector<1x2x384xbf16> to vector<2x384xbf16>
    %c2_399 = arith.constant 2 : index
    %c0_400 = arith.constant 0 : index
    %c0_401 = arith.constant 0 : index
    %433 = vector.load %arg2[%c2_399, %c0_400, %c0_401] : memref<5x384x128xbf16, #tpu.memory_space<vmem>>, vector<1x384x128xbf16>
    %434 = vector.shape_cast %433 : vector<1x384x128xbf16> to vector<384x128xbf16>
    %cst_402 = arith.constant dense<0.000000e+00> : vector<2x128xf32>
    %435 = tpu.matmul %432, %434, %cst_402 {dimension_numbers = #tpu.dot_dimension_numbers<[1], [0], [0], [1], [0, 0, 1, 1], [], []>} : vector<2x384xbf16>, vector<384x128xbf16>, vector<2x128xf32> -> vector<2x128xf32>
    %436 = arith.addf %430, %435 : vector<2x128xf32>
    %c7_403 = arith.constant 7 : index
    %c0_404 = arith.constant 0 : index
    %c128_405 = arith.constant 128 : index
    %437 = vector.load %arg1[%c7_403, %c0_404, %c128_405] : memref<12x2x768xbf16, #tpu.memory_space<vmem>>, vector<1x2x384xbf16>
    %438 = vector.shape_cast %437 : vector<1x2x384xbf16> to vector<2x384xbf16>
    %c3_406 = arith.constant 3 : index
    %c0_407 = arith.constant 0 : index
    %c0_408 = arith.constant 0 : index
    %439 = vector.load %arg2[%c3_406, %c0_407, %c0_408] : memref<5x384x128xbf16, #tpu.memory_space<vmem>>, vector<1x384x128xbf16>
    %440 = vector.shape_cast %439 : vector<1x384x128xbf16> to vector<384x128xbf16>
    %cst_409 = arith.constant dense<0.000000e+00> : vector<2x128xf32>
    %441 = tpu.matmul %438, %440, %cst_409 {dimension_numbers = #tpu.dot_dimension_numbers<[1], [0], [0], [1], [0, 0, 1, 1], [], []>} : vector<2x384xbf16>, vector<384x128xbf16>, vector<2x128xf32> -> vector<2x128xf32>
    %442 = arith.addf %436, %441 : vector<2x128xf32>
    %c8_410 = arith.constant 8 : index
    %c0_411 = arith.constant 0 : index
    %c128_412 = arith.constant 128 : index
    %443 = vector.load %arg1[%c8_410, %c0_411, %c128_412] : memref<12x2x768xbf16, #tpu.memory_space<vmem>>, vector<1x2x384xbf16>
    %444 = vector.shape_cast %443 : vector<1x2x384xbf16> to vector<2x384xbf16>
    %c4_413 = arith.constant 4 : index
    %c0_414 = arith.constant 0 : index
    %c0_415 = arith.constant 0 : index
    %445 = vector.load %arg2[%c4_413, %c0_414, %c0_415] : memref<5x384x128xbf16, #tpu.memory_space<vmem>>, vector<1x384x128xbf16>
    %446 = vector.shape_cast %445 : vector<1x384x128xbf16> to vector<384x128xbf16>
    %cst_416 = arith.constant dense<0.000000e+00> : vector<2x128xf32>
    %447 = tpu.matmul %444, %446, %cst_416 {dimension_numbers = #tpu.dot_dimension_numbers<[1], [0], [0], [1], [0, 0, 1, 1], [], []>} : vector<2x384xbf16>, vector<384x128xbf16>, vector<2x128xf32> -> vector<2x128xf32>
    %448 = arith.addf %442, %447 : vector<2x128xf32>
    %449 = vector.broadcast %0 : vector<1x128xf32> to vector<2x128xf32>
    %450 = arith.addf %448, %449 : vector<2x128xf32>
    %cst_417 = arith.constant 0.000000e+00 : f32
    %451 = vector.broadcast %cst_417 : f32 to vector<2x128xf32>
    %452 = arith.maximumf %450, %451 : vector<2x128xf32>
    %453 = arith.truncf %452 : vector<2x128xf32> to vector<2x128xbf16>
    %cst_418 = arith.constant dense<0.000000e+00> : vector<2x32xf32>
    %454 = tpu.matmul %453, %1, %cst_418 {dimension_numbers = #tpu.dot_dimension_numbers<[1], [0], [0], [1], [0, 0, 1, 1], [], []>} : vector<2x128xbf16>, vector<128x32xbf16>, vector<2x32xf32> -> vector<2x32xf32>
    %455 = vector.broadcast %2 : vector<1x32xf32> to vector<2x32xf32>
    %456 = arith.addf %454, %455 : vector<2x32xf32>
    %cst_419 = arith.constant 0.000000e+00 : f32
    %457 = vector.broadcast %cst_419 : f32 to vector<2x32xf32>
    %458 = arith.maximumf %456, %457 : vector<2x32xf32>
    %459 = arith.truncf %458 : vector<2x32xf32> to vector<2x32xbf16>
    %c9 = arith.constant 9 : index
    %c0_420 = arith.constant 0 : index
    %c0_421 = arith.constant 0 : index
    %460 = vector.load %arg6[%c9, %c0_420, %c0_421] : memref<16x32x256xbf16, #tpu.memory_space<vmem>>, vector<1x32x256xbf16>
    %461 = vector.shape_cast %460 : vector<1x32x256xbf16> to vector<32x256xbf16>
    %cst_422 = arith.constant dense<0.000000e+00> : vector<2x256xf32>
    %462 = tpu.matmul %459, %461, %cst_422 {dimension_numbers = #tpu.dot_dimension_numbers<[1], [0], [0], [1], [0, 0, 1, 1], [], []>} : vector<2x32xbf16>, vector<32x256xbf16>, vector<2x256xf32> -> vector<2x256xf32>
    %463 = arith.addf %417, %462 : vector<2x256xf32>
    %cst_423 = arith.constant 0.000000e+00 : f32
    %464 = vector.broadcast %cst_423 : f32 to vector<2x128xf32>
    %c4_424 = arith.constant 4 : index
    %c0_425 = arith.constant 0 : index
    %c256_426 = arith.constant 256 : index
    %465 = vector.load %arg1[%c4_424, %c0_425, %c256_426] : memref<12x2x768xbf16, #tpu.memory_space<vmem>>, vector<1x2x384xbf16>
    %466 = vector.shape_cast %465 : vector<1x2x384xbf16> to vector<2x384xbf16>
    %c0_427 = arith.constant 0 : index
    %c0_428 = arith.constant 0 : index
    %c0_429 = arith.constant 0 : index
    %467 = vector.load %arg2[%c0_427, %c0_428, %c0_429] : memref<5x384x128xbf16, #tpu.memory_space<vmem>>, vector<1x384x128xbf16>
    %468 = vector.shape_cast %467 : vector<1x384x128xbf16> to vector<384x128xbf16>
    %cst_430 = arith.constant dense<0.000000e+00> : vector<2x128xf32>
    %469 = tpu.matmul %466, %468, %cst_430 {dimension_numbers = #tpu.dot_dimension_numbers<[1], [0], [0], [1], [0, 0, 1, 1], [], []>} : vector<2x384xbf16>, vector<384x128xbf16>, vector<2x128xf32> -> vector<2x128xf32>
    %470 = arith.addf %464, %469 : vector<2x128xf32>
    %c5_431 = arith.constant 5 : index
    %c0_432 = arith.constant 0 : index
    %c256_433 = arith.constant 256 : index
    %471 = vector.load %arg1[%c5_431, %c0_432, %c256_433] : memref<12x2x768xbf16, #tpu.memory_space<vmem>>, vector<1x2x384xbf16>
    %472 = vector.shape_cast %471 : vector<1x2x384xbf16> to vector<2x384xbf16>
    %c1_434 = arith.constant 1 : index
    %c0_435 = arith.constant 0 : index
    %c0_436 = arith.constant 0 : index
    %473 = vector.load %arg2[%c1_434, %c0_435, %c0_436] : memref<5x384x128xbf16, #tpu.memory_space<vmem>>, vector<1x384x128xbf16>
    %474 = vector.shape_cast %473 : vector<1x384x128xbf16> to vector<384x128xbf16>
    %cst_437 = arith.constant dense<0.000000e+00> : vector<2x128xf32>
    %475 = tpu.matmul %472, %474, %cst_437 {dimension_numbers = #tpu.dot_dimension_numbers<[1], [0], [0], [1], [0, 0, 1, 1], [], []>} : vector<2x384xbf16>, vector<384x128xbf16>, vector<2x128xf32> -> vector<2x128xf32>
    %476 = arith.addf %470, %475 : vector<2x128xf32>
    %c6_438 = arith.constant 6 : index
    %c0_439 = arith.constant 0 : index
    %c256_440 = arith.constant 256 : index
    %477 = vector.load %arg1[%c6_438, %c0_439, %c256_440] : memref<12x2x768xbf16, #tpu.memory_space<vmem>>, vector<1x2x384xbf16>
    %478 = vector.shape_cast %477 : vector<1x2x384xbf16> to vector<2x384xbf16>
    %c2_441 = arith.constant 2 : index
    %c0_442 = arith.constant 0 : index
    %c0_443 = arith.constant 0 : index
    %479 = vector.load %arg2[%c2_441, %c0_442, %c0_443] : memref<5x384x128xbf16, #tpu.memory_space<vmem>>, vector<1x384x128xbf16>
    %480 = vector.shape_cast %479 : vector<1x384x128xbf16> to vector<384x128xbf16>
    %cst_444 = arith.constant dense<0.000000e+00> : vector<2x128xf32>
    %481 = tpu.matmul %478, %480, %cst_444 {dimension_numbers = #tpu.dot_dimension_numbers<[1], [0], [0], [1], [0, 0, 1, 1], [], []>} : vector<2x384xbf16>, vector<384x128xbf16>, vector<2x128xf32> -> vector<2x128xf32>
    %482 = arith.addf %476, %481 : vector<2x128xf32>
    %c7_445 = arith.constant 7 : index
    %c0_446 = arith.constant 0 : index
    %c256_447 = arith.constant 256 : index
    %483 = vector.load %arg1[%c7_445, %c0_446, %c256_447] : memref<12x2x768xbf16, #tpu.memory_space<vmem>>, vector<1x2x384xbf16>
    %484 = vector.shape_cast %483 : vector<1x2x384xbf16> to vector<2x384xbf16>
    %c3_448 = arith.constant 3 : index
    %c0_449 = arith.constant 0 : index
    %c0_450 = arith.constant 0 : index
    %485 = vector.load %arg2[%c3_448, %c0_449, %c0_450] : memref<5x384x128xbf16, #tpu.memory_space<vmem>>, vector<1x384x128xbf16>
    %486 = vector.shape_cast %485 : vector<1x384x128xbf16> to vector<384x128xbf16>
    %cst_451 = arith.constant dense<0.000000e+00> : vector<2x128xf32>
    %487 = tpu.matmul %484, %486, %cst_451 {dimension_numbers = #tpu.dot_dimension_numbers<[1], [0], [0], [1], [0, 0, 1, 1], [], []>} : vector<2x384xbf16>, vector<384x128xbf16>, vector<2x128xf32> -> vector<2x128xf32>
    %488 = arith.addf %482, %487 : vector<2x128xf32>
    %c8_452 = arith.constant 8 : index
    %c0_453 = arith.constant 0 : index
    %c256_454 = arith.constant 256 : index
    %489 = vector.load %arg1[%c8_452, %c0_453, %c256_454] : memref<12x2x768xbf16, #tpu.memory_space<vmem>>, vector<1x2x384xbf16>
    %490 = vector.shape_cast %489 : vector<1x2x384xbf16> to vector<2x384xbf16>
    %c4_455 = arith.constant 4 : index
    %c0_456 = arith.constant 0 : index
    %c0_457 = arith.constant 0 : index
    %491 = vector.load %arg2[%c4_455, %c0_456, %c0_457] : memref<5x384x128xbf16, #tpu.memory_space<vmem>>, vector<1x384x128xbf16>
    %492 = vector.shape_cast %491 : vector<1x384x128xbf16> to vector<384x128xbf16>
    %cst_458 = arith.constant dense<0.000000e+00> : vector<2x128xf32>
    %493 = tpu.matmul %490, %492, %cst_458 {dimension_numbers = #tpu.dot_dimension_numbers<[1], [0], [0], [1], [0, 0, 1, 1], [], []>} : vector<2x384xbf16>, vector<384x128xbf16>, vector<2x128xf32> -> vector<2x128xf32>
    %494 = arith.addf %488, %493 : vector<2x128xf32>
    %495 = vector.broadcast %0 : vector<1x128xf32> to vector<2x128xf32>
    %496 = arith.addf %494, %495 : vector<2x128xf32>
    %cst_459 = arith.constant 0.000000e+00 : f32
    %497 = vector.broadcast %cst_459 : f32 to vector<2x128xf32>
    %498 = arith.maximumf %496, %497 : vector<2x128xf32>
    %499 = arith.truncf %498 : vector<2x128xf32> to vector<2x128xbf16>
    %cst_460 = arith.constant dense<0.000000e+00> : vector<2x32xf32>
    %500 = tpu.matmul %499, %1, %cst_460 {dimension_numbers = #tpu.dot_dimension_numbers<[1], [0], [0], [1], [0, 0, 1, 1], [], []>} : vector<2x128xbf16>, vector<128x32xbf16>, vector<2x32xf32> -> vector<2x32xf32>
    %501 = vector.broadcast %2 : vector<1x32xf32> to vector<2x32xf32>
    %502 = arith.addf %500, %501 : vector<2x32xf32>
    %cst_461 = arith.constant 0.000000e+00 : f32
    %503 = vector.broadcast %cst_461 : f32 to vector<2x32xf32>
    %504 = arith.maximumf %502, %503 : vector<2x32xf32>
    %505 = arith.truncf %504 : vector<2x32xf32> to vector<2x32xbf16>
    %c10 = arith.constant 10 : index
    %c0_462 = arith.constant 0 : index
    %c0_463 = arith.constant 0 : index
    %506 = vector.load %arg6[%c10, %c0_462, %c0_463] : memref<16x32x256xbf16, #tpu.memory_space<vmem>>, vector<1x32x256xbf16>
    %507 = vector.shape_cast %506 : vector<1x32x256xbf16> to vector<32x256xbf16>
    %cst_464 = arith.constant dense<0.000000e+00> : vector<2x256xf32>
    %508 = tpu.matmul %505, %507, %cst_464 {dimension_numbers = #tpu.dot_dimension_numbers<[1], [0], [0], [1], [0, 0, 1, 1], [], []>} : vector<2x32xbf16>, vector<32x256xbf16>, vector<2x256xf32> -> vector<2x256xf32>
    %509 = arith.addf %463, %508 : vector<2x256xf32>
    %cst_465 = arith.constant 0.000000e+00 : f32
    %510 = vector.broadcast %cst_465 : f32 to vector<2x128xf32>
    %c4_466 = arith.constant 4 : index
    %c0_467 = arith.constant 0 : index
    %c384_468 = arith.constant 384 : index
    %511 = vector.load %arg1[%c4_466, %c0_467, %c384_468] : memref<12x2x768xbf16, #tpu.memory_space<vmem>>, vector<1x2x384xbf16>
    %512 = vector.shape_cast %511 : vector<1x2x384xbf16> to vector<2x384xbf16>
    %c0_469 = arith.constant 0 : index
    %c0_470 = arith.constant 0 : index
    %c0_471 = arith.constant 0 : index
    %513 = vector.load %arg2[%c0_469, %c0_470, %c0_471] : memref<5x384x128xbf16, #tpu.memory_space<vmem>>, vector<1x384x128xbf16>
    %514 = vector.shape_cast %513 : vector<1x384x128xbf16> to vector<384x128xbf16>
    %cst_472 = arith.constant dense<0.000000e+00> : vector<2x128xf32>
    %515 = tpu.matmul %512, %514, %cst_472 {dimension_numbers = #tpu.dot_dimension_numbers<[1], [0], [0], [1], [0, 0, 1, 1], [], []>} : vector<2x384xbf16>, vector<384x128xbf16>, vector<2x128xf32> -> vector<2x128xf32>
    %516 = arith.addf %510, %515 : vector<2x128xf32>
    %c5_473 = arith.constant 5 : index
    %c0_474 = arith.constant 0 : index
    %c384_475 = arith.constant 384 : index
    %517 = vector.load %arg1[%c5_473, %c0_474, %c384_475] : memref<12x2x768xbf16, #tpu.memory_space<vmem>>, vector<1x2x384xbf16>
    %518 = vector.shape_cast %517 : vector<1x2x384xbf16> to vector<2x384xbf16>
    %c1_476 = arith.constant 1 : index
    %c0_477 = arith.constant 0 : index
    %c0_478 = arith.constant 0 : index
    %519 = vector.load %arg2[%c1_476, %c0_477, %c0_478] : memref<5x384x128xbf16, #tpu.memory_space<vmem>>, vector<1x384x128xbf16>
    %520 = vector.shape_cast %519 : vector<1x384x128xbf16> to vector<384x128xbf16>
    %cst_479 = arith.constant dense<0.000000e+00> : vector<2x128xf32>
    %521 = tpu.matmul %518, %520, %cst_479 {dimension_numbers = #tpu.dot_dimension_numbers<[1], [0], [0], [1], [0, 0, 1, 1], [], []>} : vector<2x384xbf16>, vector<384x128xbf16>, vector<2x128xf32> -> vector<2x128xf32>
    %522 = arith.addf %516, %521 : vector<2x128xf32>
    %c6_480 = arith.constant 6 : index
    %c0_481 = arith.constant 0 : index
    %c384_482 = arith.constant 384 : index
    %523 = vector.load %arg1[%c6_480, %c0_481, %c384_482] : memref<12x2x768xbf16, #tpu.memory_space<vmem>>, vector<1x2x384xbf16>
    %524 = vector.shape_cast %523 : vector<1x2x384xbf16> to vector<2x384xbf16>
    %c2_483 = arith.constant 2 : index
    %c0_484 = arith.constant 0 : index
    %c0_485 = arith.constant 0 : index
    %525 = vector.load %arg2[%c2_483, %c0_484, %c0_485] : memref<5x384x128xbf16, #tpu.memory_space<vmem>>, vector<1x384x128xbf16>
    %526 = vector.shape_cast %525 : vector<1x384x128xbf16> to vector<384x128xbf16>
    %cst_486 = arith.constant dense<0.000000e+00> : vector<2x128xf32>
    %527 = tpu.matmul %524, %526, %cst_486 {dimension_numbers = #tpu.dot_dimension_numbers<[1], [0], [0], [1], [0, 0, 1, 1], [], []>} : vector<2x384xbf16>, vector<384x128xbf16>, vector<2x128xf32> -> vector<2x128xf32>
    %528 = arith.addf %522, %527 : vector<2x128xf32>
    %c7_487 = arith.constant 7 : index
    %c0_488 = arith.constant 0 : index
    %c384_489 = arith.constant 384 : index
    %529 = vector.load %arg1[%c7_487, %c0_488, %c384_489] : memref<12x2x768xbf16, #tpu.memory_space<vmem>>, vector<1x2x384xbf16>
    %530 = vector.shape_cast %529 : vector<1x2x384xbf16> to vector<2x384xbf16>
    %c3_490 = arith.constant 3 : index
    %c0_491 = arith.constant 0 : index
    %c0_492 = arith.constant 0 : index
    %531 = vector.load %arg2[%c3_490, %c0_491, %c0_492] : memref<5x384x128xbf16, #tpu.memory_space<vmem>>, vector<1x384x128xbf16>
    %532 = vector.shape_cast %531 : vector<1x384x128xbf16> to vector<384x128xbf16>
    %cst_493 = arith.constant dense<0.000000e+00> : vector<2x128xf32>
    %533 = tpu.matmul %530, %532, %cst_493 {dimension_numbers = #tpu.dot_dimension_numbers<[1], [0], [0], [1], [0, 0, 1, 1], [], []>} : vector<2x384xbf16>, vector<384x128xbf16>, vector<2x128xf32> -> vector<2x128xf32>
    %534 = arith.addf %528, %533 : vector<2x128xf32>
    %c8_494 = arith.constant 8 : index
    %c0_495 = arith.constant 0 : index
    %c384_496 = arith.constant 384 : index
    %535 = vector.load %arg1[%c8_494, %c0_495, %c384_496] : memref<12x2x768xbf16, #tpu.memory_space<vmem>>, vector<1x2x384xbf16>
    %536 = vector.shape_cast %535 : vector<1x2x384xbf16> to vector<2x384xbf16>
    %c4_497 = arith.constant 4 : index
    %c0_498 = arith.constant 0 : index
    %c0_499 = arith.constant 0 : index
    %537 = vector.load %arg2[%c4_497, %c0_498, %c0_499] : memref<5x384x128xbf16, #tpu.memory_space<vmem>>, vector<1x384x128xbf16>
    %538 = vector.shape_cast %537 : vector<1x384x128xbf16> to vector<384x128xbf16>
    %cst_500 = arith.constant dense<0.000000e+00> : vector<2x128xf32>
    %539 = tpu.matmul %536, %538, %cst_500 {dimension_numbers = #tpu.dot_dimension_numbers<[1], [0], [0], [1], [0, 0, 1, 1], [], []>} : vector<2x384xbf16>, vector<384x128xbf16>, vector<2x128xf32> -> vector<2x128xf32>
    %540 = arith.addf %534, %539 : vector<2x128xf32>
    %541 = vector.broadcast %0 : vector<1x128xf32> to vector<2x128xf32>
    %542 = arith.addf %540, %541 : vector<2x128xf32>
    %cst_501 = arith.constant 0.000000e+00 : f32
    %543 = vector.broadcast %cst_501 : f32 to vector<2x128xf32>
    %544 = arith.maximumf %542, %543 : vector<2x128xf32>
    %545 = arith.truncf %544 : vector<2x128xf32> to vector<2x128xbf16>
    %cst_502 = arith.constant dense<0.000000e+00> : vector<2x32xf32>
    %546 = tpu.matmul %545, %1, %cst_502 {dimension_numbers = #tpu.dot_dimension_numbers<[1], [0], [0], [1], [0, 0, 1, 1], [], []>} : vector<2x128xbf16>, vector<128x32xbf16>, vector<2x32xf32> -> vector<2x32xf32>
    %547 = vector.broadcast %2 : vector<1x32xf32> to vector<2x32xf32>
    %548 = arith.addf %546, %547 : vector<2x32xf32>
    %cst_503 = arith.constant 0.000000e+00 : f32
    %549 = vector.broadcast %cst_503 : f32 to vector<2x32xf32>
    %550 = arith.maximumf %548, %549 : vector<2x32xf32>
    %551 = arith.truncf %550 : vector<2x32xf32> to vector<2x32xbf16>
    %c11 = arith.constant 11 : index
    %c0_504 = arith.constant 0 : index
    %c0_505 = arith.constant 0 : index
    %552 = vector.load %arg6[%c11, %c0_504, %c0_505] : memref<16x32x256xbf16, #tpu.memory_space<vmem>>, vector<1x32x256xbf16>
    %553 = vector.shape_cast %552 : vector<1x32x256xbf16> to vector<32x256xbf16>
    %cst_506 = arith.constant dense<0.000000e+00> : vector<2x256xf32>
    %554 = tpu.matmul %551, %553, %cst_506 {dimension_numbers = #tpu.dot_dimension_numbers<[1], [0], [0], [1], [0, 0, 1, 1], [], []>} : vector<2x32xbf16>, vector<32x256xbf16>, vector<2x256xf32> -> vector<2x256xf32>
    %555 = arith.addf %509, %554 : vector<2x256xf32>
    %cst_507 = arith.constant 0.000000e+00 : f32
    %556 = vector.broadcast %cst_507 : f32 to vector<2x128xf32>
    %c6_508 = arith.constant 6 : index
    %c0_509 = arith.constant 0 : index
    %c0_510 = arith.constant 0 : index
    %557 = vector.load %arg1[%c6_508, %c0_509, %c0_510] : memref<12x2x768xbf16, #tpu.memory_space<vmem>>, vector<1x2x384xbf16>
    %558 = vector.shape_cast %557 : vector<1x2x384xbf16> to vector<2x384xbf16>
    %c0_511 = arith.constant 0 : index
    %c0_512 = arith.constant 0 : index
    %c0_513 = arith.constant 0 : index
    %559 = vector.load %arg2[%c0_511, %c0_512, %c0_513] : memref<5x384x128xbf16, #tpu.memory_space<vmem>>, vector<1x384x128xbf16>
    %560 = vector.shape_cast %559 : vector<1x384x128xbf16> to vector<384x128xbf16>
    %cst_514 = arith.constant dense<0.000000e+00> : vector<2x128xf32>
    %561 = tpu.matmul %558, %560, %cst_514 {dimension_numbers = #tpu.dot_dimension_numbers<[1], [0], [0], [1], [0, 0, 1, 1], [], []>} : vector<2x384xbf16>, vector<384x128xbf16>, vector<2x128xf32> -> vector<2x128xf32>
    %562 = arith.addf %556, %561 : vector<2x128xf32>
    %c7_515 = arith.constant 7 : index
    %c0_516 = arith.constant 0 : index
    %c0_517 = arith.constant 0 : index
    %563 = vector.load %arg1[%c7_515, %c0_516, %c0_517] : memref<12x2x768xbf16, #tpu.memory_space<vmem>>, vector<1x2x384xbf16>
    %564 = vector.shape_cast %563 : vector<1x2x384xbf16> to vector<2x384xbf16>
    %c1_518 = arith.constant 1 : index
    %c0_519 = arith.constant 0 : index
    %c0_520 = arith.constant 0 : index
    %565 = vector.load %arg2[%c1_518, %c0_519, %c0_520] : memref<5x384x128xbf16, #tpu.memory_space<vmem>>, vector<1x384x128xbf16>
    %566 = vector.shape_cast %565 : vector<1x384x128xbf16> to vector<384x128xbf16>
    %cst_521 = arith.constant dense<0.000000e+00> : vector<2x128xf32>
    %567 = tpu.matmul %564, %566, %cst_521 {dimension_numbers = #tpu.dot_dimension_numbers<[1], [0], [0], [1], [0, 0, 1, 1], [], []>} : vector<2x384xbf16>, vector<384x128xbf16>, vector<2x128xf32> -> vector<2x128xf32>
    %568 = arith.addf %562, %567 : vector<2x128xf32>
    %c8_522 = arith.constant 8 : index
    %c0_523 = arith.constant 0 : index
    %c0_524 = arith.constant 0 : index
    %569 = vector.load %arg1[%c8_522, %c0_523, %c0_524] : memref<12x2x768xbf16, #tpu.memory_space<vmem>>, vector<1x2x384xbf16>
    %570 = vector.shape_cast %569 : vector<1x2x384xbf16> to vector<2x384xbf16>
    %c2_525 = arith.constant 2 : index
    %c0_526 = arith.constant 0 : index
    %c0_527 = arith.constant 0 : index
    %571 = vector.load %arg2[%c2_525, %c0_526, %c0_527] : memref<5x384x128xbf16, #tpu.memory_space<vmem>>, vector<1x384x128xbf16>
    %572 = vector.shape_cast %571 : vector<1x384x128xbf16> to vector<384x128xbf16>
    %cst_528 = arith.constant dense<0.000000e+00> : vector<2x128xf32>
    %573 = tpu.matmul %570, %572, %cst_528 {dimension_numbers = #tpu.dot_dimension_numbers<[1], [0], [0], [1], [0, 0, 1, 1], [], []>} : vector<2x384xbf16>, vector<384x128xbf16>, vector<2x128xf32> -> vector<2x128xf32>
    %574 = arith.addf %568, %573 : vector<2x128xf32>
    %c9_529 = arith.constant 9 : index
    %c0_530 = arith.constant 0 : index
    %c0_531 = arith.constant 0 : index
    %575 = vector.load %arg1[%c9_529, %c0_530, %c0_531] : memref<12x2x768xbf16, #tpu.memory_space<vmem>>, vector<1x2x384xbf16>
    %576 = vector.shape_cast %575 : vector<1x2x384xbf16> to vector<2x384xbf16>
    %c3_532 = arith.constant 3 : index
    %c0_533 = arith.constant 0 : index
    %c0_534 = arith.constant 0 : index
    %577 = vector.load %arg2[%c3_532, %c0_533, %c0_534] : memref<5x384x128xbf16, #tpu.memory_space<vmem>>, vector<1x384x128xbf16>
    %578 = vector.shape_cast %577 : vector<1x384x128xbf16> to vector<384x128xbf16>
    %cst_535 = arith.constant dense<0.000000e+00> : vector<2x128xf32>
    %579 = tpu.matmul %576, %578, %cst_535 {dimension_numbers = #tpu.dot_dimension_numbers<[1], [0], [0], [1], [0, 0, 1, 1], [], []>} : vector<2x384xbf16>, vector<384x128xbf16>, vector<2x128xf32> -> vector<2x128xf32>
    %580 = arith.addf %574, %579 : vector<2x128xf32>
    %c10_536 = arith.constant 10 : index
    %c0_537 = arith.constant 0 : index
    %c0_538 = arith.constant 0 : index
    %581 = vector.load %arg1[%c10_536, %c0_537, %c0_538] : memref<12x2x768xbf16, #tpu.memory_space<vmem>>, vector<1x2x384xbf16>
    %582 = vector.shape_cast %581 : vector<1x2x384xbf16> to vector<2x384xbf16>
    %c4_539 = arith.constant 4 : index
    %c0_540 = arith.constant 0 : index
    %c0_541 = arith.constant 0 : index
    %583 = vector.load %arg2[%c4_539, %c0_540, %c0_541] : memref<5x384x128xbf16, #tpu.memory_space<vmem>>, vector<1x384x128xbf16>
    %584 = vector.shape_cast %583 : vector<1x384x128xbf16> to vector<384x128xbf16>
    %cst_542 = arith.constant dense<0.000000e+00> : vector<2x128xf32>
    %585 = tpu.matmul %582, %584, %cst_542 {dimension_numbers = #tpu.dot_dimension_numbers<[1], [0], [0], [1], [0, 0, 1, 1], [], []>} : vector<2x384xbf16>, vector<384x128xbf16>, vector<2x128xf32> -> vector<2x128xf32>
    %586 = arith.addf %580, %585 : vector<2x128xf32>
    %587 = vector.broadcast %0 : vector<1x128xf32> to vector<2x128xf32>
    %588 = arith.addf %586, %587 : vector<2x128xf32>
    %cst_543 = arith.constant 0.000000e+00 : f32
    %589 = vector.broadcast %cst_543 : f32 to vector<2x128xf32>
    %590 = arith.maximumf %588, %589 : vector<2x128xf32>
    %591 = arith.truncf %590 : vector<2x128xf32> to vector<2x128xbf16>
    %cst_544 = arith.constant dense<0.000000e+00> : vector<2x32xf32>
    %592 = tpu.matmul %591, %1, %cst_544 {dimension_numbers = #tpu.dot_dimension_numbers<[1], [0], [0], [1], [0, 0, 1, 1], [], []>} : vector<2x128xbf16>, vector<128x32xbf16>, vector<2x32xf32> -> vector<2x32xf32>
    %593 = vector.broadcast %2 : vector<1x32xf32> to vector<2x32xf32>
    %594 = arith.addf %592, %593 : vector<2x32xf32>
    %cst_545 = arith.constant 0.000000e+00 : f32
    %595 = vector.broadcast %cst_545 : f32 to vector<2x32xf32>
    %596 = arith.maximumf %594, %595 : vector<2x32xf32>
    %597 = arith.truncf %596 : vector<2x32xf32> to vector<2x32xbf16>
    %c12 = arith.constant 12 : index
    %c0_546 = arith.constant 0 : index
    %c0_547 = arith.constant 0 : index
    %598 = vector.load %arg6[%c12, %c0_546, %c0_547] : memref<16x32x256xbf16, #tpu.memory_space<vmem>>, vector<1x32x256xbf16>
    %599 = vector.shape_cast %598 : vector<1x32x256xbf16> to vector<32x256xbf16>
    %cst_548 = arith.constant dense<0.000000e+00> : vector<2x256xf32>
    %600 = tpu.matmul %597, %599, %cst_548 {dimension_numbers = #tpu.dot_dimension_numbers<[1], [0], [0], [1], [0, 0, 1, 1], [], []>} : vector<2x32xbf16>, vector<32x256xbf16>, vector<2x256xf32> -> vector<2x256xf32>
    %601 = arith.addf %555, %600 : vector<2x256xf32>
    %cst_549 = arith.constant 0.000000e+00 : f32
    %602 = vector.broadcast %cst_549 : f32 to vector<2x128xf32>
    %c6_550 = arith.constant 6 : index
    %c0_551 = arith.constant 0 : index
    %c128_552 = arith.constant 128 : index
    %603 = vector.load %arg1[%c6_550, %c0_551, %c128_552] : memref<12x2x768xbf16, #tpu.memory_space<vmem>>, vector<1x2x384xbf16>
    %604 = vector.shape_cast %603 : vector<1x2x384xbf16> to vector<2x384xbf16>
    %c0_553 = arith.constant 0 : index
    %c0_554 = arith.constant 0 : index
    %c0_555 = arith.constant 0 : index
    %605 = vector.load %arg2[%c0_553, %c0_554, %c0_555] : memref<5x384x128xbf16, #tpu.memory_space<vmem>>, vector<1x384x128xbf16>
    %606 = vector.shape_cast %605 : vector<1x384x128xbf16> to vector<384x128xbf16>
    %cst_556 = arith.constant dense<0.000000e+00> : vector<2x128xf32>
    %607 = tpu.matmul %604, %606, %cst_556 {dimension_numbers = #tpu.dot_dimension_numbers<[1], [0], [0], [1], [0, 0, 1, 1], [], []>} : vector<2x384xbf16>, vector<384x128xbf16>, vector<2x128xf32> -> vector<2x128xf32>
    %608 = arith.addf %602, %607 : vector<2x128xf32>
    %c7_557 = arith.constant 7 : index
    %c0_558 = arith.constant 0 : index
    %c128_559 = arith.constant 128 : index
    %609 = vector.load %arg1[%c7_557, %c0_558, %c128_559] : memref<12x2x768xbf16, #tpu.memory_space<vmem>>, vector<1x2x384xbf16>
    %610 = vector.shape_cast %609 : vector<1x2x384xbf16> to vector<2x384xbf16>
    %c1_560 = arith.constant 1 : index
    %c0_561 = arith.constant 0 : index
    %c0_562 = arith.constant 0 : index
    %611 = vector.load %arg2[%c1_560, %c0_561, %c0_562] : memref<5x384x128xbf16, #tpu.memory_space<vmem>>, vector<1x384x128xbf16>
    %612 = vector.shape_cast %611 : vector<1x384x128xbf16> to vector<384x128xbf16>
    %cst_563 = arith.constant dense<0.000000e+00> : vector<2x128xf32>
    %613 = tpu.matmul %610, %612, %cst_563 {dimension_numbers = #tpu.dot_dimension_numbers<[1], [0], [0], [1], [0, 0, 1, 1], [], []>} : vector<2x384xbf16>, vector<384x128xbf16>, vector<2x128xf32> -> vector<2x128xf32>
    %614 = arith.addf %608, %613 : vector<2x128xf32>
    %c8_564 = arith.constant 8 : index
    %c0_565 = arith.constant 0 : index
    %c128_566 = arith.constant 128 : index
    %615 = vector.load %arg1[%c8_564, %c0_565, %c128_566] : memref<12x2x768xbf16, #tpu.memory_space<vmem>>, vector<1x2x384xbf16>
    %616 = vector.shape_cast %615 : vector<1x2x384xbf16> to vector<2x384xbf16>
    %c2_567 = arith.constant 2 : index
    %c0_568 = arith.constant 0 : index
    %c0_569 = arith.constant 0 : index
    %617 = vector.load %arg2[%c2_567, %c0_568, %c0_569] : memref<5x384x128xbf16, #tpu.memory_space<vmem>>, vector<1x384x128xbf16>
    %618 = vector.shape_cast %617 : vector<1x384x128xbf16> to vector<384x128xbf16>
    %cst_570 = arith.constant dense<0.000000e+00> : vector<2x128xf32>
    %619 = tpu.matmul %616, %618, %cst_570 {dimension_numbers = #tpu.dot_dimension_numbers<[1], [0], [0], [1], [0, 0, 1, 1], [], []>} : vector<2x384xbf16>, vector<384x128xbf16>, vector<2x128xf32> -> vector<2x128xf32>
    %620 = arith.addf %614, %619 : vector<2x128xf32>
    %c9_571 = arith.constant 9 : index
    %c0_572 = arith.constant 0 : index
    %c128_573 = arith.constant 128 : index
    %621 = vector.load %arg1[%c9_571, %c0_572, %c128_573] : memref<12x2x768xbf16, #tpu.memory_space<vmem>>, vector<1x2x384xbf16>
    %622 = vector.shape_cast %621 : vector<1x2x384xbf16> to vector<2x384xbf16>
    %c3_574 = arith.constant 3 : index
    %c0_575 = arith.constant 0 : index
    %c0_576 = arith.constant 0 : index
    %623 = vector.load %arg2[%c3_574, %c0_575, %c0_576] : memref<5x384x128xbf16, #tpu.memory_space<vmem>>, vector<1x384x128xbf16>
    %624 = vector.shape_cast %623 : vector<1x384x128xbf16> to vector<384x128xbf16>
    %cst_577 = arith.constant dense<0.000000e+00> : vector<2x128xf32>
    %625 = tpu.matmul %622, %624, %cst_577 {dimension_numbers = #tpu.dot_dimension_numbers<[1], [0], [0], [1], [0, 0, 1, 1], [], []>} : vector<2x384xbf16>, vector<384x128xbf16>, vector<2x128xf32> -> vector<2x128xf32>
    %626 = arith.addf %620, %625 : vector<2x128xf32>
    %c10_578 = arith.constant 10 : index
    %c0_579 = arith.constant 0 : index
    %c128_580 = arith.constant 128 : index
    %627 = vector.load %arg1[%c10_578, %c0_579, %c128_580] : memref<12x2x768xbf16, #tpu.memory_space<vmem>>, vector<1x2x384xbf16>
    %628 = vector.shape_cast %627 : vector<1x2x384xbf16> to vector<2x384xbf16>
    %c4_581 = arith.constant 4 : index
    %c0_582 = arith.constant 0 : index
    %c0_583 = arith.constant 0 : index
    %629 = vector.load %arg2[%c4_581, %c0_582, %c0_583] : memref<5x384x128xbf16, #tpu.memory_space<vmem>>, vector<1x384x128xbf16>
    %630 = vector.shape_cast %629 : vector<1x384x128xbf16> to vector<384x128xbf16>
    %cst_584 = arith.constant dense<0.000000e+00> : vector<2x128xf32>
    %631 = tpu.matmul %628, %630, %cst_584 {dimension_numbers = #tpu.dot_dimension_numbers<[1], [0], [0], [1], [0, 0, 1, 1], [], []>} : vector<2x384xbf16>, vector<384x128xbf16>, vector<2x128xf32> -> vector<2x128xf32>
    %632 = arith.addf %626, %631 : vector<2x128xf32>
    %633 = vector.broadcast %0 : vector<1x128xf32> to vector<2x128xf32>
    %634 = arith.addf %632, %633 : vector<2x128xf32>
    %cst_585 = arith.constant 0.000000e+00 : f32
    %635 = vector.broadcast %cst_585 : f32 to vector<2x128xf32>
    %636 = arith.maximumf %634, %635 : vector<2x128xf32>
    %637 = arith.truncf %636 : vector<2x128xf32> to vector<2x128xbf16>
    %cst_586 = arith.constant dense<0.000000e+00> : vector<2x32xf32>
    %638 = tpu.matmul %637, %1, %cst_586 {dimension_numbers = #tpu.dot_dimension_numbers<[1], [0], [0], [1], [0, 0, 1, 1], [], []>} : vector<2x128xbf16>, vector<128x32xbf16>, vector<2x32xf32> -> vector<2x32xf32>
    %639 = vector.broadcast %2 : vector<1x32xf32> to vector<2x32xf32>
    %640 = arith.addf %638, %639 : vector<2x32xf32>
    %cst_587 = arith.constant 0.000000e+00 : f32
    %641 = vector.broadcast %cst_587 : f32 to vector<2x32xf32>
    %642 = arith.maximumf %640, %641 : vector<2x32xf32>
    %643 = arith.truncf %642 : vector<2x32xf32> to vector<2x32xbf16>
    %c13 = arith.constant 13 : index
    %c0_588 = arith.constant 0 : index
    %c0_589 = arith.constant 0 : index
    %644 = vector.load %arg6[%c13, %c0_588, %c0_589] : memref<16x32x256xbf16, #tpu.memory_space<vmem>>, vector<1x32x256xbf16>
    %645 = vector.shape_cast %644 : vector<1x32x256xbf16> to vector<32x256xbf16>
    %cst_590 = arith.constant dense<0.000000e+00> : vector<2x256xf32>
    %646 = tpu.matmul %643, %645, %cst_590 {dimension_numbers = #tpu.dot_dimension_numbers<[1], [0], [0], [1], [0, 0, 1, 1], [], []>} : vector<2x32xbf16>, vector<32x256xbf16>, vector<2x256xf32> -> vector<2x256xf32>
    %647 = arith.addf %601, %646 : vector<2x256xf32>
    %cst_591 = arith.constant 0.000000e+00 : f32
    %648 = vector.broadcast %cst_591 : f32 to vector<2x128xf32>
    %c6_592 = arith.constant 6 : index
    %c0_593 = arith.constant 0 : index
    %c256_594 = arith.constant 256 : index
    %649 = vector.load %arg1[%c6_592, %c0_593, %c256_594] : memref<12x2x768xbf16, #tpu.memory_space<vmem>>, vector<1x2x384xbf16>
    %650 = vector.shape_cast %649 : vector<1x2x384xbf16> to vector<2x384xbf16>
    %c0_595 = arith.constant 0 : index
    %c0_596 = arith.constant 0 : index
    %c0_597 = arith.constant 0 : index
    %651 = vector.load %arg2[%c0_595, %c0_596, %c0_597] : memref<5x384x128xbf16, #tpu.memory_space<vmem>>, vector<1x384x128xbf16>
    %652 = vector.shape_cast %651 : vector<1x384x128xbf16> to vector<384x128xbf16>
    %cst_598 = arith.constant dense<0.000000e+00> : vector<2x128xf32>
    %653 = tpu.matmul %650, %652, %cst_598 {dimension_numbers = #tpu.dot_dimension_numbers<[1], [0], [0], [1], [0, 0, 1, 1], [], []>} : vector<2x384xbf16>, vector<384x128xbf16>, vector<2x128xf32> -> vector<2x128xf32>
    %654 = arith.addf %648, %653 : vector<2x128xf32>
    %c7_599 = arith.constant 7 : index
    %c0_600 = arith.constant 0 : index
    %c256_601 = arith.constant 256 : index
    %655 = vector.load %arg1[%c7_599, %c0_600, %c256_601] : memref<12x2x768xbf16, #tpu.memory_space<vmem>>, vector<1x2x384xbf16>
    %656 = vector.shape_cast %655 : vector<1x2x384xbf16> to vector<2x384xbf16>
    %c1_602 = arith.constant 1 : index
    %c0_603 = arith.constant 0 : index
    %c0_604 = arith.constant 0 : index
    %657 = vector.load %arg2[%c1_602, %c0_603, %c0_604] : memref<5x384x128xbf16, #tpu.memory_space<vmem>>, vector<1x384x128xbf16>
    %658 = vector.shape_cast %657 : vector<1x384x128xbf16> to vector<384x128xbf16>
    %cst_605 = arith.constant dense<0.000000e+00> : vector<2x128xf32>
    %659 = tpu.matmul %656, %658, %cst_605 {dimension_numbers = #tpu.dot_dimension_numbers<[1], [0], [0], [1], [0, 0, 1, 1], [], []>} : vector<2x384xbf16>, vector<384x128xbf16>, vector<2x128xf32> -> vector<2x128xf32>
    %660 = arith.addf %654, %659 : vector<2x128xf32>
    %c8_606 = arith.constant 8 : index
    %c0_607 = arith.constant 0 : index
    %c256_608 = arith.constant 256 : index
    %661 = vector.load %arg1[%c8_606, %c0_607, %c256_608] : memref<12x2x768xbf16, #tpu.memory_space<vmem>>, vector<1x2x384xbf16>
    %662 = vector.shape_cast %661 : vector<1x2x384xbf16> to vector<2x384xbf16>
    %c2_609 = arith.constant 2 : index
    %c0_610 = arith.constant 0 : index
    %c0_611 = arith.constant 0 : index
    %663 = vector.load %arg2[%c2_609, %c0_610, %c0_611] : memref<5x384x128xbf16, #tpu.memory_space<vmem>>, vector<1x384x128xbf16>
    %664 = vector.shape_cast %663 : vector<1x384x128xbf16> to vector<384x128xbf16>
    %cst_612 = arith.constant dense<0.000000e+00> : vector<2x128xf32>
    %665 = tpu.matmul %662, %664, %cst_612 {dimension_numbers = #tpu.dot_dimension_numbers<[1], [0], [0], [1], [0, 0, 1, 1], [], []>} : vector<2x384xbf16>, vector<384x128xbf16>, vector<2x128xf32> -> vector<2x128xf32>
    %666 = arith.addf %660, %665 : vector<2x128xf32>
    %c9_613 = arith.constant 9 : index
    %c0_614 = arith.constant 0 : index
    %c256_615 = arith.constant 256 : index
    %667 = vector.load %arg1[%c9_613, %c0_614, %c256_615] : memref<12x2x768xbf16, #tpu.memory_space<vmem>>, vector<1x2x384xbf16>
    %668 = vector.shape_cast %667 : vector<1x2x384xbf16> to vector<2x384xbf16>
    %c3_616 = arith.constant 3 : index
    %c0_617 = arith.constant 0 : index
    %c0_618 = arith.constant 0 : index
    %669 = vector.load %arg2[%c3_616, %c0_617, %c0_618] : memref<5x384x128xbf16, #tpu.memory_space<vmem>>, vector<1x384x128xbf16>
    %670 = vector.shape_cast %669 : vector<1x384x128xbf16> to vector<384x128xbf16>
    %cst_619 = arith.constant dense<0.000000e+00> : vector<2x128xf32>
    %671 = tpu.matmul %668, %670, %cst_619 {dimension_numbers = #tpu.dot_dimension_numbers<[1], [0], [0], [1], [0, 0, 1, 1], [], []>} : vector<2x384xbf16>, vector<384x128xbf16>, vector<2x128xf32> -> vector<2x128xf32>
    %672 = arith.addf %666, %671 : vector<2x128xf32>
    %c10_620 = arith.constant 10 : index
    %c0_621 = arith.constant 0 : index
    %c256_622 = arith.constant 256 : index
    %673 = vector.load %arg1[%c10_620, %c0_621, %c256_622] : memref<12x2x768xbf16, #tpu.memory_space<vmem>>, vector<1x2x384xbf16>
    %674 = vector.shape_cast %673 : vector<1x2x384xbf16> to vector<2x384xbf16>
    %c4_623 = arith.constant 4 : index
    %c0_624 = arith.constant 0 : index
    %c0_625 = arith.constant 0 : index
    %675 = vector.load %arg2[%c4_623, %c0_624, %c0_625] : memref<5x384x128xbf16, #tpu.memory_space<vmem>>, vector<1x384x128xbf16>
    %676 = vector.shape_cast %675 : vector<1x384x128xbf16> to vector<384x128xbf16>
    %cst_626 = arith.constant dense<0.000000e+00> : vector<2x128xf32>
    %677 = tpu.matmul %674, %676, %cst_626 {dimension_numbers = #tpu.dot_dimension_numbers<[1], [0], [0], [1], [0, 0, 1, 1], [], []>} : vector<2x384xbf16>, vector<384x128xbf16>, vector<2x128xf32> -> vector<2x128xf32>
    %678 = arith.addf %672, %677 : vector<2x128xf32>
    %679 = vector.broadcast %0 : vector<1x128xf32> to vector<2x128xf32>
    %680 = arith.addf %678, %679 : vector<2x128xf32>
    %cst_627 = arith.constant 0.000000e+00 : f32
    %681 = vector.broadcast %cst_627 : f32 to vector<2x128xf32>
    %682 = arith.maximumf %680, %681 : vector<2x128xf32>
    %683 = arith.truncf %682 : vector<2x128xf32> to vector<2x128xbf16>
    %cst_628 = arith.constant dense<0.000000e+00> : vector<2x32xf32>
    %684 = tpu.matmul %683, %1, %cst_628 {dimension_numbers = #tpu.dot_dimension_numbers<[1], [0], [0], [1], [0, 0, 1, 1], [], []>} : vector<2x128xbf16>, vector<128x32xbf16>, vector<2x32xf32> -> vector<2x32xf32>
    %685 = vector.broadcast %2 : vector<1x32xf32> to vector<2x32xf32>
    %686 = arith.addf %684, %685 : vector<2x32xf32>
    %cst_629 = arith.constant 0.000000e+00 : f32
    %687 = vector.broadcast %cst_629 : f32 to vector<2x32xf32>
    %688 = arith.maximumf %686, %687 : vector<2x32xf32>
    %689 = arith.truncf %688 : vector<2x32xf32> to vector<2x32xbf16>
    %c14 = arith.constant 14 : index
    %c0_630 = arith.constant 0 : index
    %c0_631 = arith.constant 0 : index
    %690 = vector.load %arg6[%c14, %c0_630, %c0_631] : memref<16x32x256xbf16, #tpu.memory_space<vmem>>, vector<1x32x256xbf16>
    %691 = vector.shape_cast %690 : vector<1x32x256xbf16> to vector<32x256xbf16>
    %cst_632 = arith.constant dense<0.000000e+00> : vector<2x256xf32>
    %692 = tpu.matmul %689, %691, %cst_632 {dimension_numbers = #tpu.dot_dimension_numbers<[1], [0], [0], [1], [0, 0, 1, 1], [], []>} : vector<2x32xbf16>, vector<32x256xbf16>, vector<2x256xf32> -> vector<2x256xf32>
    %693 = arith.addf %647, %692 : vector<2x256xf32>
    %cst_633 = arith.constant 0.000000e+00 : f32
    %694 = vector.broadcast %cst_633 : f32 to vector<2x128xf32>
    %c6_634 = arith.constant 6 : index
    %c0_635 = arith.constant 0 : index
    %c384_636 = arith.constant 384 : index
    %695 = vector.load %arg1[%c6_634, %c0_635, %c384_636] : memref<12x2x768xbf16, #tpu.memory_space<vmem>>, vector<1x2x384xbf16>
    %696 = vector.shape_cast %695 : vector<1x2x384xbf16> to vector<2x384xbf16>
    %c0_637 = arith.constant 0 : index
    %c0_638 = arith.constant 0 : index
    %c0_639 = arith.constant 0 : index
    %697 = vector.load %arg2[%c0_637, %c0_638, %c0_639] : memref<5x384x128xbf16, #tpu.memory_space<vmem>>, vector<1x384x128xbf16>
    %698 = vector.shape_cast %697 : vector<1x384x128xbf16> to vector<384x128xbf16>
    %cst_640 = arith.constant dense<0.000000e+00> : vector<2x128xf32>
    %699 = tpu.matmul %696, %698, %cst_640 {dimension_numbers = #tpu.dot_dimension_numbers<[1], [0], [0], [1], [0, 0, 1, 1], [], []>} : vector<2x384xbf16>, vector<384x128xbf16>, vector<2x128xf32> -> vector<2x128xf32>
    %700 = arith.addf %694, %699 : vector<2x128xf32>
    %c7_641 = arith.constant 7 : index
    %c0_642 = arith.constant 0 : index
    %c384_643 = arith.constant 384 : index
    %701 = vector.load %arg1[%c7_641, %c0_642, %c384_643] : memref<12x2x768xbf16, #tpu.memory_space<vmem>>, vector<1x2x384xbf16>
    %702 = vector.shape_cast %701 : vector<1x2x384xbf16> to vector<2x384xbf16>
    %c1_644 = arith.constant 1 : index
    %c0_645 = arith.constant 0 : index
    %c0_646 = arith.constant 0 : index
    %703 = vector.load %arg2[%c1_644, %c0_645, %c0_646] : memref<5x384x128xbf16, #tpu.memory_space<vmem>>, vector<1x384x128xbf16>
    %704 = vector.shape_cast %703 : vector<1x384x128xbf16> to vector<384x128xbf16>
    %cst_647 = arith.constant dense<0.000000e+00> : vector<2x128xf32>
    %705 = tpu.matmul %702, %704, %cst_647 {dimension_numbers = #tpu.dot_dimension_numbers<[1], [0], [0], [1], [0, 0, 1, 1], [], []>} : vector<2x384xbf16>, vector<384x128xbf16>, vector<2x128xf32> -> vector<2x128xf32>
    %706 = arith.addf %700, %705 : vector<2x128xf32>
    %c8_648 = arith.constant 8 : index
    %c0_649 = arith.constant 0 : index
    %c384_650 = arith.constant 384 : index
    %707 = vector.load %arg1[%c8_648, %c0_649, %c384_650] : memref<12x2x768xbf16, #tpu.memory_space<vmem>>, vector<1x2x384xbf16>
    %708 = vector.shape_cast %707 : vector<1x2x384xbf16> to vector<2x384xbf16>
    %c2_651 = arith.constant 2 : index
    %c0_652 = arith.constant 0 : index
    %c0_653 = arith.constant 0 : index
    %709 = vector.load %arg2[%c2_651, %c0_652, %c0_653] : memref<5x384x128xbf16, #tpu.memory_space<vmem>>, vector<1x384x128xbf16>
    %710 = vector.shape_cast %709 : vector<1x384x128xbf16> to vector<384x128xbf16>
    %cst_654 = arith.constant dense<0.000000e+00> : vector<2x128xf32>
    %711 = tpu.matmul %708, %710, %cst_654 {dimension_numbers = #tpu.dot_dimension_numbers<[1], [0], [0], [1], [0, 0, 1, 1], [], []>} : vector<2x384xbf16>, vector<384x128xbf16>, vector<2x128xf32> -> vector<2x128xf32>
    %712 = arith.addf %706, %711 : vector<2x128xf32>
    %c9_655 = arith.constant 9 : index
    %c0_656 = arith.constant 0 : index
    %c384_657 = arith.constant 384 : index
    %713 = vector.load %arg1[%c9_655, %c0_656, %c384_657] : memref<12x2x768xbf16, #tpu.memory_space<vmem>>, vector<1x2x384xbf16>
    %714 = vector.shape_cast %713 : vector<1x2x384xbf16> to vector<2x384xbf16>
    %c3_658 = arith.constant 3 : index
    %c0_659 = arith.constant 0 : index
    %c0_660 = arith.constant 0 : index
    %715 = vector.load %arg2[%c3_658, %c0_659, %c0_660] : memref<5x384x128xbf16, #tpu.memory_space<vmem>>, vector<1x384x128xbf16>
    %716 = vector.shape_cast %715 : vector<1x384x128xbf16> to vector<384x128xbf16>
    %cst_661 = arith.constant dense<0.000000e+00> : vector<2x128xf32>
    %717 = tpu.matmul %714, %716, %cst_661 {dimension_numbers = #tpu.dot_dimension_numbers<[1], [0], [0], [1], [0, 0, 1, 1], [], []>} : vector<2x384xbf16>, vector<384x128xbf16>, vector<2x128xf32> -> vector<2x128xf32>
    %718 = arith.addf %712, %717 : vector<2x128xf32>
    %c10_662 = arith.constant 10 : index
    %c0_663 = arith.constant 0 : index
    %c384_664 = arith.constant 384 : index
    %719 = vector.load %arg1[%c10_662, %c0_663, %c384_664] : memref<12x2x768xbf16, #tpu.memory_space<vmem>>, vector<1x2x384xbf16>
    %720 = vector.shape_cast %719 : vector<1x2x384xbf16> to vector<2x384xbf16>
    %c4_665 = arith.constant 4 : index
    %c0_666 = arith.constant 0 : index
    %c0_667 = arith.constant 0 : index
    %721 = vector.load %arg2[%c4_665, %c0_666, %c0_667] : memref<5x384x128xbf16, #tpu.memory_space<vmem>>, vector<1x384x128xbf16>
    %722 = vector.shape_cast %721 : vector<1x384x128xbf16> to vector<384x128xbf16>
    %cst_668 = arith.constant dense<0.000000e+00> : vector<2x128xf32>
    %723 = tpu.matmul %720, %722, %cst_668 {dimension_numbers = #tpu.dot_dimension_numbers<[1], [0], [0], [1], [0, 0, 1, 1], [], []>} : vector<2x384xbf16>, vector<384x128xbf16>, vector<2x128xf32> -> vector<2x128xf32>
    %724 = arith.addf %718, %723 : vector<2x128xf32>
    %725 = vector.broadcast %0 : vector<1x128xf32> to vector<2x128xf32>
    %726 = arith.addf %724, %725 : vector<2x128xf32>
    %cst_669 = arith.constant 0.000000e+00 : f32
    %727 = vector.broadcast %cst_669 : f32 to vector<2x128xf32>
    %728 = arith.maximumf %726, %727 : vector<2x128xf32>
    %729 = arith.truncf %728 : vector<2x128xf32> to vector<2x128xbf16>
    %cst_670 = arith.constant dense<0.000000e+00> : vector<2x32xf32>
    %730 = tpu.matmul %729, %1, %cst_670 {dimension_numbers = #tpu.dot_dimension_numbers<[1], [0], [0], [1], [0, 0, 1, 1], [], []>} : vector<2x128xbf16>, vector<128x32xbf16>, vector<2x32xf32> -> vector<2x32xf32>
    %731 = vector.broadcast %2 : vector<1x32xf32> to vector<2x32xf32>
    %732 = arith.addf %730, %731 : vector<2x32xf32>
    %cst_671 = arith.constant 0.000000e+00 : f32
    %733 = vector.broadcast %cst_671 : f32 to vector<2x32xf32>
    %734 = arith.maximumf %732, %733 : vector<2x32xf32>
    %735 = arith.truncf %734 : vector<2x32xf32> to vector<2x32xbf16>
    %c15 = arith.constant 15 : index
    %c0_672 = arith.constant 0 : index
    %c0_673 = arith.constant 0 : index
    %736 = vector.load %arg6[%c15, %c0_672, %c0_673] : memref<16x32x256xbf16, #tpu.memory_space<vmem>>, vector<1x32x256xbf16>
    %737 = vector.shape_cast %736 : vector<1x32x256xbf16> to vector<32x256xbf16>
    %cst_674 = arith.constant dense<0.000000e+00> : vector<2x256xf32>
    %738 = tpu.matmul %735, %737, %cst_674 {dimension_numbers = #tpu.dot_dimension_numbers<[1], [0], [0], [1], [0, 0, 1, 1], [], []>} : vector<2x32xbf16>, vector<32x256xbf16>, vector<2x256xf32> -> vector<2x256xf32>
    %739 = arith.addf %693, %738 : vector<2x256xf32>
    %c0_675 = arith.constant 0 : index
    %c0_676 = arith.constant 0 : index
    %740 = vector.load %arg7[%c0_675, %c0_676] : memref<1x256xf32, #tpu.memory_space<vmem>>, vector<1x256xf32>
    %741 = vector.broadcast %740 : vector<1x256xf32> to vector<2x256xf32>
    %742 = arith.addf %739, %741 : vector<2x256xf32>
    %cst_677 = arith.constant 0.000000e+00 : f32
    %743 = vector.broadcast %cst_677 : f32 to vector<2x256xf32>
    %744 = arith.maximumf %742, %743 : vector<2x256xf32>
    %745 = arith.truncf %744 : vector<2x256xf32> to vector<2x256xbf16>
    %c0_678 = arith.constant 0 : index
    %c0_679 = arith.constant 0 : index
    %746 = vector.load %arg8[%c0_678, %c0_679] : memref<256x128xbf16, #tpu.memory_space<vmem>>, vector<256x128xbf16>
    %cst_680 = arith.constant dense<0.000000e+00> : vector<2x128xf32>
    %747 = tpu.matmul %745, %746, %cst_680 {dimension_numbers = #tpu.dot_dimension_numbers<[1], [0], [0], [1], [0, 0, 1, 1], [], []>} : vector<2x256xbf16>, vector<256x128xbf16>, vector<2x128xf32> -> vector<2x128xf32>
    %c0_681 = arith.constant 0 : index
    %c0_682 = arith.constant 0 : index
    %748 = vector.load %arg9[%c0_681, %c0_682] : memref<1x128xf32, #tpu.memory_space<vmem>>, vector<1x128xf32>
    %749 = vector.broadcast %748 : vector<1x128xf32> to vector<2x128xf32>
    %750 = arith.addf %747, %749 : vector<2x128xf32>
    %cst_683 = arith.constant 0.000000e+00 : f32
    %751 = vector.broadcast %cst_683 : f32 to vector<2x128xf32>
    %752 = arith.maximumf %750, %751 : vector<2x128xf32>
    %753 = arith.truncf %752 : vector<2x128xf32> to vector<2x128xbf16>
    %c0_684 = arith.constant 0 : index
    %c0_685 = arith.constant 0 : index
    %754 = vector.load %arg10[%c0_684, %c0_685] : memref<128x64xbf16, #tpu.memory_space<vmem>>, vector<128x64xbf16>
    %cst_686 = arith.constant dense<0.000000e+00> : vector<2x64xf32>
    %755 = tpu.matmul %753, %754, %cst_686 {dimension_numbers = #tpu.dot_dimension_numbers<[1], [0], [0], [1], [0, 0, 1, 1], [], []>} : vector<2x128xbf16>, vector<128x64xbf16>, vector<2x64xf32> -> vector<2x64xf32>
    %c0_687 = arith.constant 0 : index
    %c0_688 = arith.constant 0 : index
    %756 = vector.load %arg11[%c0_687, %c0_688] : memref<1x64xf32, #tpu.memory_space<vmem>>, vector<1x64xf32>
    %757 = vector.broadcast %756 : vector<1x64xf32> to vector<2x64xf32>
    %758 = arith.addf %755, %757 : vector<2x64xf32>
    %cst_689 = arith.constant 0.000000e+00 : f32
    %759 = vector.broadcast %cst_689 : f32 to vector<2x64xf32>
    %760 = arith.maximumf %758, %759 : vector<2x64xf32>
    %761 = arith.truncf %760 : vector<2x64xf32> to vector<2x64xbf16>
    %c0_690 = arith.constant 0 : index
    %c0_691 = arith.constant 0 : index
    %762 = vector.load %arg12[%c0_690, %c0_691] : memref<64x32xbf16, #tpu.memory_space<vmem>>, vector<64x32xbf16>
    %cst_692 = arith.constant dense<0.000000e+00> : vector<2x32xf32>
    %763 = tpu.matmul %761, %762, %cst_692 {dimension_numbers = #tpu.dot_dimension_numbers<[1], [0], [0], [1], [0, 0, 1, 1], [], []>} : vector<2x64xbf16>, vector<64x32xbf16>, vector<2x32xf32> -> vector<2x32xf32>
    %c0_693 = arith.constant 0 : index
    %c0_694 = arith.constant 0 : index
    %764 = vector.load %arg13[%c0_693, %c0_694] : memref<1x32xf32, #tpu.memory_space<vmem>>, vector<1x32xf32>
    %765 = vector.broadcast %764 : vector<1x32xf32> to vector<2x32xf32>
    %766 = arith.addf %763, %765 : vector<2x32xf32>
    %cst_695 = arith.constant 0.000000e+00 : f32
    %767 = vector.broadcast %cst_695 : f32 to vector<2x32xf32>
    %768 = arith.maximumf %766, %767 : vector<2x32xf32>
    %769 = arith.truncf %768 : vector<2x32xf32> to vector<2x32xbf16>
    %c0_696 = arith.constant 0 : index
    %c0_697 = arith.constant 0 : index
    %770 = vector.load %arg14[%c0_696, %c0_697] : memref<32x5xbf16, #tpu.memory_space<vmem>>, vector<32x5xbf16>
    %cst_698 = arith.constant dense<0.000000e+00> : vector<2x5xf32>
    %771 = tpu.matmul %769, %770, %cst_698 {dimension_numbers = #tpu.dot_dimension_numbers<[1], [0], [0], [1], [0, 0, 1, 1], [], []>} : vector<2x32xbf16>, vector<32x5xbf16>, vector<2x5xf32> -> vector<2x5xf32>
    %c0_699 = arith.constant 0 : index
    %c0_700 = arith.constant 0 : index
    %772 = vector.load %arg15[%c0_699, %c0_700] : memref<1x5xf32, #tpu.memory_space<vmem>>, vector<1x5xf32>
    %773 = vector.broadcast %772 : vector<1x5xf32> to vector<2x5xf32>
    %774 = arith.addf %771, %773 : vector<2x5xf32>
    %c0_701 = arith.constant 0 : index
    %c0_702 = arith.constant 0 : index
    %775 = vector.load %arg16[%c0_701, %c0_702] : memref<2x5xf32, #tpu.memory_space<vmem>>, vector<2x5xf32>
    tpu.vector_store %arg16[%c0_701, %c0_702], %774 {strides = array<i32>} : memref<2x5xf32, #tpu.memory_space<vmem>>, vector<2x5xf32>,
    return
  }
  func.func @transform_0(%arg0: i32) -> (i32, i32, i32) {
    %c0_i32 = arith.constant 0 : i32
    %c0_i32_0 = arith.constant 0 : i32
    %c0_i32_1 = arith.constant 0 : i32
    return %c0_i32, %arg0, %c0_i32_0 : i32, i32, i32
  }
  func.func @transform_1(%arg0: i32) -> (i32, i32, i32) {
    %c0_i32 = arith.constant 0 : i32
    %c0_i32_0 = arith.constant 0 : i32
    %c0_i32_1 = arith.constant 0 : i32
    %c0_i32_2 = arith.constant 0 : i32
    return %c0_i32, %c0_i32_0, %c0_i32_1 : i32, i32, i32
  }
  func.func @transform_2(%arg0: i32) -> (i32, i32) {
    %c0_i32 = arith.constant 0 : i32
    %c0_i32_0 = arith.constant 0 : i32
    %c0_i32_1 = arith.constant 0 : i32
    return %c0_i32, %c0_i32_0 : i32, i32
  }
  func.func @transform_3(%arg0: i32) -> (i32, i32) {
    %c0_i32 = arith.constant 0 : i32
    %c0_i32_0 = arith.constant 0 : i32
    %c0_i32_1 = arith.constant 0 : i32
    return %c0_i32, %c0_i32_0 : i32, i32
  }
  func.func @transform_4(%arg0: i32) -> (i32, i32) {
    %c0_i32 = arith.constant 0 : i32
    %c0_i32_0 = arith.constant 0 : i32
    %c0_i32_1 = arith.constant 0 : i32
    return %c0_i32, %c0_i32_0 : i32, i32
  }
  func.func @transform_5(%arg0: i32) -> (i32, i32, i32) {
    %c0_i32 = arith.constant 0 : i32
    %c0_i32_0 = arith.constant 0 : i32
    %c0_i32_1 = arith.constant 0 : i32
    %c0_i32_2 = arith.constant 0 : i32
    return %c0_i32, %c0_i32_0, %c0_i32_1 : i32, i32, i32
  }
  func.func @transform_6(%arg0: i32) -> (i32, i32) {
    %c0_i32 = arith.constant 0 : i32
    %c0_i32_0 = arith.constant 0 : i32
    %c0_i32_1 = arith.constant 0 : i32
    return %c0_i32, %c0_i32_0 : i32, i32
  }
  func.func @transform_7(%arg0: i32) -> (i32, i32) {
    %c0_i32 = arith.constant 0 : i32
    %c0_i32_0 = arith.constant 0 : i32
    %c0_i32_1 = arith.constant 0 : i32
    return %c0_i32, %c0_i32_0 : i32, i32
  }
  func.func @transform_8(%arg0: i32) -> (i32, i32) {
    %c0_i32 = arith.constant 0 : i32
    %c0_i32_0 = arith.constant 0 : i32
    %c0_i32_1 = arith.constant 0 : i32
    return %c0_i32, %c0_i32_0 : i32, i32
  }
  func.func @transform_9(%arg0: i32) -> (i32, i32) {
    %c0_i32 = arith.constant 0 : i32
    %c0_i32_0 = arith.constant 0 : i32
    %c0_i32_1 = arith.constant 0 : i32
    return %c0_i32, %c0_i32_0 : i32, i32
  }
  func.func @transform_10(%arg0: i32) -> (i32, i32) {
    %c0_i32 = arith.constant 0 : i32
    %c0_i32_0 = arith.constant 0 : i32
    %c0_i32_1 = arith.constant 0 : i32
    return %c0_i32, %c0_i32_0 : i32, i32
  }
  func.func @transform_11(%arg0: i32) -> (i32, i32) {
    %c0_i32 = arith.constant 0 : i32
    %c0_i32_0 = arith.constant 0 : i32
    %c0_i32_1 = arith.constant 0 : i32
    return %c0_i32, %c0_i32_0 : i32, i32
  }
  func.func @transform_12(%arg0: i32) -> (i32, i32) {
    %c0_i32 = arith.constant 0 : i32
    %c0_i32_0 = arith.constant 0 : i32
    %c0_i32_1 = arith.constant 0 : i32
    return %c0_i32, %c0_i32_0 : i32, i32
  }
  func.func @transform_13(%arg0: i32) -> (i32, i32) {
    %c0_i32 = arith.constant 0 : i32
    %c0_i32_0 = arith.constant 0 : i32
    %c0_i32_1 = arith.constant 0 : i32
    return %c0_i32, %c0_i32_0 : i32, i32
  }
  func.func @transform_14(%arg0: i32) -> (i32, i32) {
    %c0_i32 = arith.constant 0 : i32
    %c0_i32_0 = arith.constant 0 : i32
    %c0_i32_1 = arith.constant 0 : i32
    return %c0_i32, %c0_i32_0 : i32, i32
  }
  func.func @transform_15(%arg0: i32) -> (i32, i32) {
    %c0_i32 = arith.constant 0 : i32
    %c0_i32_0 = arith.constant 0 : i32
    return %arg0, %c0_i32 : i32, i32
  }
}

</mosaic_0001>

<llo_original>
// kernel: forward.3
$region0: #{forward.3}
  #allocation0 [shape = 'u32[]', space=smem, size = 0x4, offset = 0x4, fixed_abs, tag = 'smem constant byte address 0x4 - core index']
  #allocation1 [shape = 'u32[72,128]{1,0:T(1,128)}', space=vmem, size = 0x9000, scoped, tag = 'internal scratch']
  %s0 = inlined_call_operand.vmem [shape: bf16[512,75], index: 0, kind: input, shape index: {}]
  %s1 = inlined_call_operand.vmem [shape: bf16[75,16], index: 1, kind: input, shape index: {}]
  %s2 = inlined_call_operand.vmem [shape: f32[1,16], index: 2, kind: input, shape index: {}]
  %s3 = inlined_call_operand.vmem [shape: bf16[512,16], index: 3, kind: output, shape index: {}]
  %s4 = sld [smem:[#allocation0]]
  $region45: #{forward.3} parent=0
    _
  %s6 = ssub.s32 1, %s4
  %s7 = scalar_select 0, %s6, %s4
  loop: start=0, step=1, limit=4
  $region2: #{forward.3} parent=0 // loop_pre_header
    _
  $region3: #{forward.3} parent=0 // loop_header
    %s9 = sphi 0, %s13
    %p10 = scmp.ge.s32.totalorder %s9, 4
    %s19 = sphi 0, %s21
    %s22 = sphi 0, %s19
    %s23 = sphi 0, %s22
    %s39 = sphi 0, %s23
    %s43 = sphi 0, %s43
    %s45 = sphi 0, %s43
    %s46 = sphi 0, %s45
    %s60 = sphi 0, %s46
    %s64 = sphi 0, %s64
    %s66 = sphi 0, %s64
    %s67 = sphi 0, %s66
    %s81 = sphi 0, %s67
    %s87 = sphi 0, %s89
    %s90 = sphi 0, %s87
    %s91 = sphi 0, %s90
    %s107 = sphi 0, %s91
  $region4: #{forward.3} parent=0 // loop_header_branch
    %12 = sbr.rel (%p10) target = $region8
  $region5: #{forward.3} parent=0 // loop_body
    %s14 = ssub.s32 %s9, 1
    %s15 = ssub.s32 %s9, 2
    %s16 = sadd.s32 %s9, 1
    %s17 = ssub.s32 %s9, %s16
    %p18 = scmp.eq.s32.totalorder %s17, 0
    %s20 = sadd.s32 %s19, 1
    %s21 = scalar_select %p18, %s19, %s20
    %p24 = pneg %p18
    %p25 = scmp.eq.s32.totalorder %s9, 1
    %p26 = por %p24, %p25
    %p27 = scmp.ne.s32.totalorder %s19, %s22
    %p28 = scmp.eq.s32.totalorder %s9, 0
    %p29 = por %p27, %p28
    %p30 = scmp.ne.s32.totalorder %s19, %s22
    %p31 = scmp.eq.s32.totalorder %s14, 1
    %p32 = por %p30, %p31
    %p33 = scmp.ne.s32.totalorder %s22, %s23
    %p34 = scmp.eq.s32.totalorder %s14, 0
    %p35 = por %p33, %p34
    %p36 = scmp.ne.s32.totalorder %s22, %s23
    %p37 = scmp.eq.s32.totalorder %s15, 1
    %p38 = por %p36, %p37
    %p40 = scmp.ne.s32.totalorder %s23, %s39
    %p41 = scmp.eq.s32.totalorder %s15, 0
    %p42 = por %p40, %p41
    %s44 = sadd.s32 %s43, 1
    %p47 = scmp.eq.s32.totalorder %s9, 1
    %p48 = scmp.ne.s32.totalorder %s43, %s45
    %p49 = scmp.eq.s32.totalorder %s9, 0
    %p50 = por %p48, %p49
    %p51 = scmp.ne.s32.totalorder %s43, %s45
    %p52 = scmp.eq.s32.totalorder %s14, 1
    %p53 = por %p51, %p52
    %p54 = scmp.ne.s32.totalorder %s45, %s46
    %p55 = scmp.eq.s32.totalorder %s14, 0
    %p56 = por %p54, %p55
    %p57 = scmp.ne.s32.totalorder %s45, %s46
    %p58 = scmp.eq.s32.totalorder %s15, 1
    %p59 = por %p57, %p58
    %p61 = scmp.ne.s32.totalorder %s46, %s60
    %p62 = scmp.eq.s32.totalorder %s15, 0
    %p63 = por %p61, %p62
    %s65 = sadd.s32 %s64, 1
    %p68 = scmp.eq.s32.totalorder %s9, 1
    %p69 = scmp.ne.s32.totalorder %s64, %s66
    %p70 = scmp.eq.s32.totalorder %s9, 0
    %p71 = por %p69, %p70
    %p72 = scmp.ne.s32.totalorder %s64, %s66
    %p73 = scmp.eq.s32.totalorder %s14, 1
    %p74 = por %p72, %p73
    %p75 = scmp.ne.s32.totalorder %s66, %s67
    %p76 = scmp.eq.s32.totalorder %s14, 0
    %p77 = por %p75, %p76
    %p78 = scmp.ne.s32.totalorder %s66, %s67
    %p79 = scmp.eq.s32.totalorder %s15, 1
    %p80 = por %p78, %p79
    %p82 = scmp.ne.s32.totalorder %s67, %s81
    %p83 = scmp.eq.s32.totalorder %s15, 0
    %p84 = por %p82, %p83
    %s85 = ssub.s32 %s9, %s16
    %p86 = scmp.eq.s32.totalorder %s85, 0
    %s88 = sadd.s32 %s87, 1
    %s89 = scalar_select %p86, %s87, %s88
    %p92 = pneg %p86
    %p93 = scmp.eq.s32.totalorder %s9, 1
    %p94 = por %p92, %p93
    %p95 = scmp.ne.s32.totalorder %s87, %s90
    %p96 = scmp.eq.s32.totalorder %s9, 0
    %p97 = por %p95, %p96
    %p98 = scmp.ne.s32.totalorder %s87, %s90
    %p99 = scmp.eq.s32.totalorder %s14, 1
    %p100 = por %p98, %p99
    %p101 = scmp.ne.s32.totalorder %s90, %s91
    %p102 = scmp.eq.s32.totalorder %s14, 0
    %p103 = por %p101, %p102
    %p104 = scmp.ne.s32.totalorder %s90, %s91
    %p105 = scmp.eq.s32.totalorder %s15, 1
    %p106 = por %p104, %p105
    %p108 = scmp.ne.s32.totalorder %s91, %s107
    %p109 = scmp.eq.s32.totalorder %s15, 0
    %p110 = por %p108, %p109
    %p111 = scmp.le.s32.totalorder 1, %s9
    %p112 = scmp.lt.s32.totalorder %s9, 3
    %p113 = pnand %p111, %p112
    %p114 = pneg %p113
    // Predicated region
    $region9: #{forward.3} parent=5 // pred_check
      _
    $region10: #{forward.3} parent=5 // pred_check_branch
      %116 = sbr.rel (%p113) target = $region12
    $region11: #{forward.3} parent=5 // pred_region
      %s117 = ssub.s32 %s9, 1
      // Predicated region
      $region13: #{forward.3} parent=11 // pred_check
        %p118 = pneg %p56
      $region14: #{forward.3} parent=11 // pred_check_branch
        %120 = sbr.rel (%p118) target = $region16
      $region15: #{forward.3} parent=11 // pred_region
        _
      $region16: #{forward.3} parent=11 // pred_fallthru
        _
      // Predicated region
      $region17: #{forward.3} parent=11 // pred_check
        %p121 = pneg %p77
      $region18: #{forward.3} parent=11 // pred_check_branch
        %123 = sbr.rel (%p121) target = $region20
      $region19: #{forward.3} parent=11 // pred_region
        _
      $region20: #{forward.3} parent=11 // pred_fallthru
        _
    $region12: #{forward.3} parent=5 // pred_fallthru
      _
    %p124 = scmp.lt.s32.totalorder %s9, 2
    // Predicated region
    $region21: #{forward.3} parent=5 // pred_check
      %p125 = pneg %p124
    $region22: #{forward.3} parent=5 // pred_check_branch
      %127 = sbr.rel (%p125) target = $region24
    $region23: #{forward.3} parent=5 // pred_region
      // Predicated region
      $region25: #{forward.3} parent=23 // pred_check
        %p128 = pneg %p29
      $region26: #{forward.3} parent=23 // pred_check_branch
        %130 = sbr.rel (%p128) target = $region28
      $region27: #{forward.3} parent=23 // pred_region
        %s131 = smul.u32 32, %s9
        %p132 = scmp.lt.s32.totalorder %s131, 63
        %s133 = scalar_select %p132, %s131, 63
        %s134 = smul.addr %s133, 4
        %s135 = scalar_lea.vmem %s0, %s134
        %s136 = smul.u32 32, %s9
      $region28: #{forward.3} parent=23 // pred_fallthru
        _
    $region24: #{forward.3} parent=5 // pred_fallthru
      _
    %p137 = scmp.le.s32.totalorder 1, %s9
    %p138 = scmp.lt.s32.totalorder %s9, 3
    %p139 = pnand %p137, %p138
    %p140 = pneg %p139
    // Predicated region
    $region29: #{forward.3} parent=5 // pred_check
      _
    $region30: #{forward.3} parent=5 // pred_check_branch
      %142 = sbr.rel (%p139) target = $region32
    $region31: #{forward.3} parent=5 // pred_region
      %s143 = ssub.s32 %s9, 1
      %s144 = smul.u32 32, %s14
      %p145 = scmp.lt.s32.totalorder %s144, 63
      %s146 = scalar_select %p145, %s144, 63
      %s147 = smul.addr %s146, 4
      %s148 = scalar_lea.vmem %s0, %s147
      %p149 = pneg %p35
      %p150 = pneg %p32
      %p151 = pneg %p56
      %p152 = pneg %p53
      %p153 = pneg %p77
      %p154 = pneg %p74
      %p155 = pneg %p103
      %p156 = pneg %p100
      %s157 = smul.u32 32, %s14
      %p158 = scmp.lt.s32.totalorder %s157, 63
      %s159 = scalar_select %p158, %s157, 63
      %s160 = smul.addr %s159, 4
      %s161 = scalar_lea.vmem %s3, %s160
      %s162 = smul.u32 32, %s14
      %p163 = scmp.lt.s32.totalorder %s162, 63
      %s164 = scalar_select %p163, %s162, 63
      %s165 = smul.addr %s164, 4
      %s166 = scalar_lea.vmem %s0, %s165
      %s167 = smul.u32 32, %s14
      %s168 = smul.u32 32, %s14
      %p169 = scmp.lt.s32.totalorder %s168, 63
      %s170 = scalar_select %p169, %s168, 63
      %s171 = smul.addr %s170, 4
      %s172 = scalar_lea.vmem %s3, %s171
      %s173 = smul.u32 32, %s14
      %v175 = vld [vmem:[%s166] sm:$0xf]
      %v176 = vld [vmem:[%s166 + $0x4] sm:$0xf]
      %v177 = vld [vmem:[%s166 + $0x8] sm:$0xf]
      %v178 = vld [vmem:[%s166 + $0xc] sm:$0xf]
      %v179 = vld [vmem:[%s166 + $0x10] sm:$0xf]
      %v180 = vld [vmem:[%s166 + $0x14] sm:$0xf]
      %v181 = vld [vmem:[%s166 + $0x18] sm:$0xf]
      %v182 = vld [vmem:[%s166 + $0x1c] sm:$0xf]
      %v183 = vld [vmem:[%s166 + $0x20] sm:$0xf]
      %v184 = vld [vmem:[%s166 + $0x24] sm:$0xf]
      %v185 = vld [vmem:[%s166 + $0x28] sm:$0xf]
      %v186 = vld [vmem:[%s166 + $0x2c] sm:$0xf]
      %v187 = vld [vmem:[%s166 + $0x30] sm:$0xf]
      %v188 = vld [vmem:[%s166 + $0x34] sm:$0xf]
      %v189 = vld [vmem:[%s166 + $0x38] sm:$0xf]
      %v190 = vld [vmem:[%s166 + $0x3c] sm:$0xf]
      %v191 = vld [vmem:[%s166 + $0x40] sm:$0xf]
      %v192 = vld [vmem:[%s166 + $0x44] sm:$0xf]
      %v193 = vld [vmem:[%s166 + $0x48] sm:$0xf]
      %v194 = vld [vmem:[%s166 + $0x4c] sm:$0xf]
      %v195 = vld [vmem:[%s166 + $0x50] sm:$0xf]
      %v196 = vld [vmem:[%s166 + $0x54] sm:$0xf]
      %v197 = vld [vmem:[%s166 + $0x58] sm:$0xf]
      %v198 = vld [vmem:[%s166 + $0x5c] sm:$0xf]
      %v199 = vld [vmem:[%s166 + $0x60] sm:$0xf]
      %v200 = vld [vmem:[%s166 + $0x64] sm:$0xf]
      %v201 = vld [vmem:[%s166 + $0x68] sm:$0xf]
      %v202 = vld [vmem:[%s166 + $0x6c] sm:$0xf]
      %v203 = vld [vmem:[%s166 + $0x70] sm:$0xf]
      %v204 = vld [vmem:[%s166 + $0x74] sm:$0xf]
      %v205 = vld [vmem:[%s166 + $0x78] sm:$0xf]
      %v206 = vld [vmem:[%s166 + $0x7c] sm:$0xf]
      %v207 = vld [vmem:[%s1] sm:$0xf]
      %v208 = vld [vmem:[%s1 + $0x4] sm:$0xf]
      %v209 = vld [vmem:[%s1 + $0x8] sm:$0xf]
      %v210 = vld [vmem:[%s1 + $0xc] sm:$0xf]
      %v211 = vld [vmem:[%s1 + $0x10] sm:$0xf]
      %v212 = vld [vmem:[%s1 + $0x14] sm:$0xf]
      %v213 = vld [vmem:[%s1 + $0x18] sm:$0xf]
      %v214 = vld [vmem:[%s1 + $0x1c] sm:$0xf]
      %v215 = vld [vmem:[%s1 + $0x20] sm:$0xf]
      %v216 = vld [vmem:[%s1 + $0x24] sm:$0x3]
      %v217 = vld [vmem:[%s2] sm:$0x1]
      %v219 = vperm.slane %v217, 0
      %v253 = vunpack.c.l.b16 %v175
      %v254 = vunpack.c.l.b16 %v176
      %v255 = vunpack.c.l.b16 %v177
      %v256 = vunpack.c.l.b16 %v178
      %v257 = vunpack.c.l.b16 %v179
      %v258 = vunpack.c.l.b16 %v180
      %v259 = vunpack.c.l.b16 %v181
      %v260 = vunpack.c.l.b16 %v182
      %v261 = vunpack.c.l.b16 %v183
      %v262 = vunpack.c.l.b16 %v184
      %v263 = vunpack.c.l.b16 %v185
      %v264 = vunpack.c.l.b16 %v186
      %v265 = vunpack.c.l.b16 %v187
      %v266 = vunpack.c.l.b16 %v188
      %v267 = vunpack.c.l.b16 %v189
      %v268 = vunpack.c.l.b16 %v190
      %v269 = vunpack.c.l.b16 %v191
      %v270 = vunpack.c.l.b16 %v192
      %v271 = vunpack.c.l.b16 %v193
      %v272 = vunpack.c.l.b16 %v194
      %v273 = vunpack.c.l.b16 %v195
      %v274 = vunpack.c.l.b16 %v196
      %v275 = vunpack.c.l.b16 %v197
      %v276 = vunpack.c.l.b16 %v198
      %v277 = vunpack.c.l.b16 %v199
      %v278 = vunpack.c.l.b16 %v200
      %v279 = vunpack.c.l.b16 %v201
      %v280 = vunpack.c.l.b16 %v202
      %v281 = vunpack.c.l.b16 %v203
      %v282 = vunpack.c.l.b16 %v204
      %v283 = vunpack.c.l.b16 %v205
      %v284 = vunpack.c.l.b16 %v206
      %v285 = vpack.c.b16 %v254, %v253
      %v286 = vpack.c.b16 %v256, %v255
      %v287 = vpack.c.b16 %v258, %v257
      %v288 = vpack.c.b16 %v260, %v259
      %v289 = vpack.c.b16 %v262, %v261
      %v290 = vpack.c.b16 %v264, %v263
      %v291 = vpack.c.b16 %v266, %v265
      %v292 = vpack.c.b16 %v268, %v267
      %v293 = vpack.c.b16 %v270, %v269
      %v294 = vpack.c.b16 %v272, %v271
      %v295 = vpack.c.b16 %v274, %v273
      %v296 = vpack.c.b16 %v276, %v275
      %v297 = vpack.c.b16 %v278, %v277
      %v298 = vpack.c.b16 %v280, %v279
      %v299 = vpack.c.b16 %v282, %v281
      %v300 = vpack.c.b16 %v284, %v283
      %v311 = vunpack.c.l.b16 %v207
      %v312 = vunpack.c.l.b16 %v208
      %v313 = vunpack.c.l.b16 %v209
      %v314 = vunpack.c.l.b16 %v210
      %v315 = vunpack.c.l.b16 %v211
      %v316 = vunpack.c.l.b16 %v212
      %v317 = vunpack.c.l.b16 %v213
      %v318 = vunpack.c.l.b16 %v214
      %v319 = vunpack.c.l.b16 %v215
      %v320 = vunpack.c.l.b16 %v216
      %v321 = vpack.c.b16 %v312, %v311
      %v322 = vpack.c.b16 %v314, %v313
      %v323 = vpack.c.b16 %v316, %v315
      %v324 = vpack.c.b16 %v318, %v317
      %v325 = vpack.c.b16 %v320, %v319
      %vm330 = vcmask 613376
      %v332 = vsel %vm330, %v285, 0
      %v335 = vsel %vm330, %v286, 0
      %v338 = vsel %vm330, %v287, 0
      %v341 = vsel %vm330, %v288, 0
      %v344 = vsel %vm330, %v289, 0
      %v347 = vsel %vm330, %v290, 0
      %v350 = vsel %vm330, %v291, 0
      %v353 = vsel %vm330, %v292, 0
      %v356 = vsel %vm330, %v293, 0
      %v359 = vsel %vm330, %v294, 0
      %v362 = vsel %vm330, %v295, 0
      %v365 = vsel %vm330, %v296, 0
      %v368 = vsel %vm330, %v297, 0
      %v371 = vsel %vm330, %v298, 0
      %v374 = vsel %vm330, %v299, 0
      %v377 = vsel %vm330, %v300, 0
      %vm379 = vcmask 1044480
      %vm380 = vcmask 1045504
      %v381 = vsel %vm379, 4294967295, 65535
      %v382 = vsel %vm380, %v381, 0
      %v384 = vand.u32 %v325, %v382
      %386 = vmatpush.bf16.msra.mxu0 0
      %387 = vmatpush.bf16.msra.mxu0 0
      %388 = vmatpush.bf16.msra.mxu0 0
      %389 = vmatpush.bf16.msra.mxu0 %v384
      %390 = vmatpush.bf16.msra.mxu0 %v324
      %391 = vmatpush.bf16.msra.mxu0 %v323
      %392 = vmatpush.bf16.msra.mxu0 %v322
      %393 = vmatpush.bf16.msra.mxu0 %v321
      %394 = vmatmul.bf16.gmra.mxu0 %v332
      %v395 = vpop.f32.mrf.mxu0
      %v396 = vadd.f32 %v219, %v395
      %v397 = vpop.f32.mrf.mxu0
      %v398 = vadd.f32 %v219, %v397
      %399 = vmatmul.bf16.gmra.mxu0 %v335
      %v400 = vpop.f32.mrf.mxu0
      %v401 = vadd.f32 %v219, %v400
      %v402 = vpop.f32.mrf.mxu0
      %v403 = vadd.f32 %v219, %v402
      %404 = vmatmul.bf16.gmra.mxu0 %v338
      %v405 = vpop.f32.mrf.mxu0
      %v406 = vadd.f32 %v219, %v405
      %v407 = vpop.f32.mrf.mxu0
      %v408 = vadd.f32 %v219, %v407
      %409 = vmatmul.bf16.gmra.mxu0 %v341
      %v410 = vpop.f32.mrf.mxu0
      %v411 = vadd.f32 %v219, %v410
      %v412 = vpop.f32.mrf.mxu0
      %v413 = vadd.f32 %v219, %v412
      %414 = vmatmul.bf16.gmra.mxu0 %v344
      %v415 = vpop.f32.mrf.mxu0
      %v416 = vadd.f32 %v219, %v415
      %v417 = vpop.f32.mrf.mxu0
      %v418 = vadd.f32 %v219, %v417
      %419 = vmatmul.bf16.gmra.mxu0 %v347
      %v420 = vpop.f32.mrf.mxu0
      %v421 = vadd.f32 %v219, %v420
      %v422 = vpop.f32.mrf.mxu0
      %v423 = vadd.f32 %v219, %v422
      %424 = vmatmul.bf16.gmra.mxu0 %v350
      %v425 = vpop.f32.mrf.mxu0
      %v426 = vadd.f32 %v219, %v425
      %v427 = vpop.f32.mrf.mxu0
      %v428 = vadd.f32 %v219, %v427
      %429 = vmatmul.bf16.gmra.mxu0 %v353
      %v430 = vpop.f32.mrf.mxu0
      %v431 = vadd.f32 %v219, %v430
      %v432 = vpop.f32.mrf.mxu0
      %v433 = vadd.f32 %v219, %v432
      %434 = vmatmul.bf16.gmra.mxu0 %v356
      %v435 = vpop.f32.mrf.mxu0
      %v436 = vadd.f32 %v219, %v435
      %v437 = vpop.f32.mrf.mxu0
      %v438 = vadd.f32 %v219, %v437
      %439 = vmatmul.bf16.gmra.mxu0 %v359
      %v440 = vpop.f32.mrf.mxu0
      %v441 = vadd.f32 %v219, %v440
      %v442 = vpop.f32.mrf.mxu0
      %v443 = vadd.f32 %v219, %v442
      %444 = vmatmul.bf16.gmra.mxu0 %v362
      %v445 = vpop.f32.mrf.mxu0
      %v446 = vadd.f32 %v219, %v445
      %v447 = vpop.f32.mrf.mxu0
      %v448 = vadd.f32 %v219, %v447
      %449 = vmatmul.bf16.gmra.mxu0 %v365
      %v450 = vpop.f32.mrf.mxu0
      %v451 = vadd.f32 %v219, %v450
      %v452 = vpop.f32.mrf.mxu0
      %v453 = vadd.f32 %v219, %v452
      %454 = vmatmul.bf16.gmra.mxu0 %v368
      %v455 = vpop.f32.mrf.mxu0
      %v456 = vadd.f32 %v219, %v455
      %v457 = vpop.f32.mrf.mxu0
      %v458 = vadd.f32 %v219, %v457
      %459 = vmatmul.bf16.gmra.mxu0 %v371
      %v460 = vpop.f32.mrf.mxu0
      %v461 = vadd.f32 %v219, %v460
      %v462 = vpop.f32.mrf.mxu0
      %v463 = vadd.f32 %v219, %v462
      %464 = vmatmul.bf16.gmra.mxu0 %v374
      %v465 = vpop.f32.mrf.mxu0
      %v466 = vadd.f32 %v219, %v465
      %v467 = vpop.f32.mrf.mxu0
      %v468 = vadd.f32 %v219, %v467
      %469 = vmatmul.bf16.gmra.mxu0 %v377
      %v470 = vpop.f32.mrf.mxu0
      %v471 = vadd.f32 %v219, %v470
      %v472 = vpop.f32.mrf.mxu0
      %v473 = vadd.f32 %v219, %v472
      %474 = vdwg.mxu0
      %v475 = vmax.f32 %v396, 0.0
      %v476 = vmax.f32 %v398, 0.0
      %v477 = vmax.f32 %v401, 0.0
      %v478 = vmax.f32 %v403, 0.0
      %v479 = vmax.f32 %v406, 0.0
      %v480 = vmax.f32 %v408, 0.0
      %v481 = vmax.f32 %v411, 0.0
      %v482 = vmax.f32 %v413, 0.0
      %v483 = vmax.f32 %v416, 0.0
      %v484 = vmax.f32 %v418, 0.0
      %v485 = vmax.f32 %v421, 0.0
      %v486 = vmax.f32 %v423, 0.0
      %v487 = vmax.f32 %v426, 0.0
      %v488 = vmax.f32 %v428, 0.0
      %v489 = vmax.f32 %v431, 0.0
      %v490 = vmax.f32 %v433, 0.0
      %v491 = vmax.f32 %v436, 0.0
      %v492 = vmax.f32 %v438, 0.0
      %v493 = vmax.f32 %v441, 0.0
      %v494 = vmax.f32 %v443, 0.0
      %v495 = vmax.f32 %v446, 0.0
      %v496 = vmax.f32 %v448, 0.0
      %v497 = vmax.f32 %v451, 0.0
      %v498 = vmax.f32 %v453, 0.0
      %v499 = vmax.f32 %v456, 0.0
      %v500 = vmax.f32 %v458, 0.0
      %v501 = vmax.f32 %v461, 0.0
      %v502 = vmax.f32 %v463, 0.0
      %v503 = vmax.f32 %v466, 0.0
      %v504 = vmax.f32 %v468, 0.0
      %v505 = vmax.f32 %v471, 0.0
      %v506 = vmax.f32 %v473, 0.0
      %v507 = vpack.c.bf16 %v475, %v475
      %v508 = vpack.c.bf16 %v476, %v476
      %v509 = vpack.c.bf16 %v477, %v477
      %v510 = vpack.c.bf16 %v478, %v478
      %v511 = vpack.c.bf16 %v479, %v479
      %v512 = vpack.c.bf16 %v480, %v480
      %v513 = vpack.c.bf16 %v481, %v481
      %v514 = vpack.c.bf16 %v482, %v482
      %v515 = vpack.c.bf16 %v483, %v483
      %v516 = vpack.c.bf16 %v484, %v484
      %v517 = vpack.c.bf16 %v485, %v485
      %v518 = vpack.c.bf16 %v486, %v486
      %v519 = vpack.c.bf16 %v487, %v487
      %v520 = vpack.c.bf16 %v488, %v488
      %v521 = vpack.c.bf16 %v489, %v489
      %v522 = vpack.c.bf16 %v490, %v490
      %v523 = vpack.c.bf16 %v491, %v491
      %v524 = vpack.c.bf16 %v492, %v492
      %v525 = vpack.c.bf16 %v493, %v493
      %v526 = vpack.c.bf16 %v494, %v494
      %v527 = vpack.c.bf16 %v495, %v495
      %v528 = vpack.c.bf16 %v496, %v496
      %v529 = vpack.c.bf16 %v497, %v497
      %v530 = vpack.c.bf16 %v498, %v498
      %v531 = vpack.c.bf16 %v499, %v499
      %v532 = vpack.c.bf16 %v500, %v500
      %v533 = vpack.c.bf16 %v501, %v501
      %v534 = vpack.c.bf16 %v502, %v502
      %v535 = vpack.c.bf16 %v503, %v503
      %v536 = vpack.c.bf16 %v504, %v504
      %v537 = vpack.c.bf16 %v505, %v505
      %v538 = vpack.c.bf16 %v506, %v506
      %vm539 = vcmask 125952
      %540 = vst.msk [vmem:[%s172] sm:$0xf] %vm539, %v507
      %541 = vst.msk [vmem:[%s172 + $0x4] sm:$0xf] %vm539, %v508
      %542 = vst.msk [vmem:[%s172 + $0x8] sm:$0xf] %vm539, %v509
      %543 = vst.msk [vmem:[%s172 + $0xc] sm:$0xf] %vm539, %v510
      %544 = vst.msk [vmem:[%s172 + $0x10] sm:$0xf] %vm539, %v511
      %545 = vst.msk [vmem:[%s172 + $0x14] sm:$0xf] %vm539, %v512
      %546 = vst.msk [vmem:[%s172 + $0x18] sm:$0xf] %vm539, %v513
      %547 = vst.msk [vmem:[%s172 + $0x1c] sm:$0xf] %vm539, %v514
      %548 = vst.msk [vmem:[%s172 + $0x20] sm:$0xf] %vm539, %v515
      %549 = vst.msk [vmem:[%s172 + $0x24] sm:$0xf] %vm539, %v516
      %550 = vst.msk [vmem:[%s172 + $0x28] sm:$0xf] %vm539, %v517
      %551 = vst.msk [vmem:[%s172 + $0x2c] sm:$0xf] %vm539, %v518
      %552 = vst.msk [vmem:[%s172 + $0x30] sm:$0xf] %vm539, %v519
      %553 = vst.msk [vmem:[%s172 + $0x34] sm:$0xf] %vm539, %v520
      %554 = vst.msk [vmem:[%s172 + $0x38] sm:$0xf] %vm539, %v521
      %555 = vst.msk [vmem:[%s172 + $0x3c] sm:$0xf] %vm539, %v522
      %556 = vst.msk [vmem:[%s172 + $0x40] sm:$0xf] %vm539, %v523
      %557 = vst.msk [vmem:[%s172 + $0x44] sm:$0xf] %vm539, %v524
      %558 = vst.msk [vmem:[%s172 + $0x48] sm:$0xf] %vm539, %v525
      %559 = vst.msk [vmem:[%s172 + $0x4c] sm:$0xf] %vm539, %v526
      %560 = vst.msk [vmem:[%s172 + $0x50] sm:$0xf] %vm539, %v527
      %561 = vst.msk [vmem:[%s172 + $0x54] sm:$0xf] %vm539, %v528
      %562 = vst.msk [vmem:[%s172 + $0x58] sm:$0xf] %vm539, %v529
      %563 = vst.msk [vmem:[%s172 + $0x5c] sm:$0xf] %vm539, %v530
      %564 = vst.msk [vmem:[%s172 + $0x60] sm:$0xf] %vm539, %v531
      %565 = vst.msk [vmem:[%s172 + $0x64] sm:$0xf] %vm539, %v532
      %566 = vst.msk [vmem:[%s172 + $0x68] sm:$0xf] %vm539, %v533
      %567 = vst.msk [vmem:[%s172 + $0x6c] sm:$0xf] %vm539, %v534
      %568 = vst.msk [vmem:[%s172 + $0x70] sm:$0xf] %vm539, %v535
      %569 = vst.msk [vmem:[%s172 + $0x74] sm:$0xf] %vm539, %v536
      %570 = vst.msk [vmem:[%s172 + $0x78] sm:$0xf] %vm539, %v537
      %571 = vst.msk [vmem:[%s172 + $0x7c] sm:$0xf] %vm539, %v538
      %s572 = smul.u32 32, %s14
      %p573 = scmp.lt.s32.totalorder %s572, 63
      %s574 = scalar_select %p573, %s572, 63
      %s575 = smul.addr %s574, 4
      %s576 = scalar_lea.vmem %s3, %s575
      // Predicated region
      $region33: #{forward.3} parent=31 // pred_check
        %p577 = pneg %p100
      $region34: #{forward.3} parent=31 // pred_check_branch
        %579 = sbr.rel (%p577) target = $region36
      $region35: #{forward.3} parent=31 // pred_region
        %s580 = smul.u32 32, %s14
      $region36: #{forward.3} parent=31 // pred_fallthru
        _
    $region32: #{forward.3} parent=5 // pred_fallthru
      _
    %p581 = scmp.le.s32.totalorder 2, %s9
    // Predicated region
    $region37: #{forward.3} parent=5 // pred_check
      %p582 = pneg %p581
    $region38: #{forward.3} parent=5 // pred_check_branch
      %584 = sbr.rel (%p582) target = $region40
    $region39: #{forward.3} parent=5 // pred_region
      %s585 = ssub.s32 %s9, 2
      // Predicated region
      $region41: #{forward.3} parent=39 // pred_check
        %p586 = pneg %p106
      $region42: #{forward.3} parent=39 // pred_check_branch
        %588 = sbr.rel (%p586) target = $region44
      $region43: #{forward.3} parent=39 // pred_region
        %s589 = smul.u32 32, %s15
        %p590 = scmp.lt.s32.totalorder %s589, 63
        %s591 = scalar_select %p590, %s589, 63
        %s592 = smul.addr %s591, 4
        %s593 = scalar_lea.vmem %s3, %s592
      $region44: #{forward.3} parent=39 // pred_fallthru
        _
    $region40: #{forward.3} parent=5 // pred_fallthru
      _
  $region6: #{forward.3} parent=0 // loop_footer
    %s13 = sadd.s32 1, %s9
  $region7: #{forward.3} parent=0 // loop_footer_branch
    %8 = sbr.rel target = $region3
  $region8: #{forward.3} parent=0 // loop_exit
    _

// kernel: forward.4
$region0: #{forward.4}
  #allocation0 [shape = 'u32[]', space=smem, size = 0x4, offset = 0x4, fixed_abs, tag = 'smem constant byte address 0x4 - core index']
  #allocation1 [shape = 'u32[72,128]{1,0:T(1,128)}', space=vmem, size = 0x9000, scoped, tag = 'internal scratch']
  %s0 = inlined_call_operand.vmem [shape: bf16[128,400], index: 0, kind: input, shape index: {}]
  %s1 = inlined_call_operand.vmem [shape: bf16[400,64], index: 1, kind: input, shape index: {}]
  %s2 = inlined_call_operand.vmem [shape: f32[1,64], index: 2, kind: input, shape index: {}]
  %s3 = inlined_call_operand.vmem [shape: bf16[128,64], index: 3, kind: output, shape index: {}]
  %s4 = sld [smem:[#allocation0]]
  $region45: #{forward.4} parent=0
    _
  %s6 = ssub.s32 1, %s4
  %s7 = scalar_select 0, %s6, %s4
  loop: start=0, step=1, limit=4
  $region2: #{forward.4} parent=0 // loop_pre_header
    _
  $region3: #{forward.4} parent=0 // loop_header
    %s9 = sphi 0, %s13
    %p10 = scmp.ge.s32.totalorder %s9, 4
    %s19 = sphi 0, %s21
    %s22 = sphi 0, %s19
    %s23 = sphi 0, %s22
    %s39 = sphi 0, %s23
    %s43 = sphi 0, %s43
    %s45 = sphi 0, %s43
    %s46 = sphi 0, %s45
    %s60 = sphi 0, %s46
    %s64 = sphi 0, %s64
    %s66 = sphi 0, %s64
    %s67 = sphi 0, %s66
    %s81 = sphi 0, %s67
    %s87 = sphi 0, %s89
    %s90 = sphi 0, %s87
    %s91 = sphi 0, %s90
    %s107 = sphi 0, %s91
  $region4: #{forward.4} parent=0 // loop_header_branch
    %12 = sbr.rel (%p10) target = $region8
  $region5: #{forward.4} parent=0 // loop_body
    %s14 = ssub.s32 %s9, 1
    %s15 = ssub.s32 %s9, 2
    %s16 = sadd.s32 %s9, 1
    %s17 = ssub.s32 %s9, %s16
    %p18 = scmp.eq.s32.totalorder %s17, 0
    %s20 = sadd.s32 %s19, 1
    %s21 = scalar_select %p18, %s19, %s20
    %p24 = pneg %p18
    %p25 = scmp.eq.s32.totalorder %s9, 1
    %p26 = por %p24, %p25
    %p27 = scmp.ne.s32.totalorder %s19, %s22
    %p28 = scmp.eq.s32.totalorder %s9, 0
    %p29 = por %p27, %p28
    %p30 = scmp.ne.s32.totalorder %s19, %s22
    %p31 = scmp.eq.s32.totalorder %s14, 1
    %p32 = por %p30, %p31
    %p33 = scmp.ne.s32.totalorder %s22, %s23
    %p34 = scmp.eq.s32.totalorder %s14, 0
    %p35 = por %p33, %p34
    %p36 = scmp.ne.s32.totalorder %s22, %s23
    %p37 = scmp.eq.s32.totalorder %s15, 1
    %p38 = por %p36, %p37
    %p40 = scmp.ne.s32.totalorder %s23, %s39
    %p41 = scmp.eq.s32.totalorder %s15, 0
    %p42 = por %p40, %p41
    %s44 = sadd.s32 %s43, 1
    %p47 = scmp.eq.s32.totalorder %s9, 1
    %p48 = scmp.ne.s32.totalorder %s43, %s45
    %p49 = scmp.eq.s32.totalorder %s9, 0
    %p50 = por %p48, %p49
    %p51 = scmp.ne.s32.totalorder %s43, %s45
    %p52 = scmp.eq.s32.totalorder %s14, 1
    %p53 = por %p51, %p52
    %p54 = scmp.ne.s32.totalorder %s45, %s46
    %p55 = scmp.eq.s32.totalorder %s14, 0
    %p56 = por %p54, %p55
    %p57 = scmp.ne.s32.totalorder %s45, %s46
    %p58 = scmp.eq.s32.totalorder %s15, 1
    %p59 = por %p57, %p58
    %p61 = scmp.ne.s32.totalorder %s46, %s60
    %p62 = scmp.eq.s32.totalorder %s15, 0
    %p63 = por %p61, %p62
    %s65 = sadd.s32 %s64, 1
    %p68 = scmp.eq.s32.totalorder %s9, 1
    %p69 = scmp.ne.s32.totalorder %s64, %s66
    %p70 = scmp.eq.s32.totalorder %s9, 0
    %p71 = por %p69, %p70
    %p72 = scmp.ne.s32.totalorder %s64, %s66
    %p73 = scmp.eq.s32.totalorder %s14, 1
    %p74 = por %p72, %p73
    %p75 = scmp.ne.s32.totalorder %s66, %s67
    %p76 = scmp.eq.s32.totalorder %s14, 0
    %p77 = por %p75, %p76
    %p78 = scmp.ne.s32.totalorder %s66, %s67
    %p79 = scmp.eq.s32.totalorder %s15, 1
    %p80 = por %p78, %p79
    %p82 = scmp.ne.s32.totalorder %s67, %s81
    %p83 = scmp.eq.s32.totalorder %s15, 0
    %p84 = por %p82, %p83
    %s85 = ssub.s32 %s9, %s16
    %p86 = scmp.eq.s32.totalorder %s85, 0
    %s88 = sadd.s32 %s87, 1
    %s89 = scalar_select %p86, %s87, %s88
    %p92 = pneg %p86
    %p93 = scmp.eq.s32.totalorder %s9, 1
    %p94 = por %p92, %p93
    %p95 = scmp.ne.s32.totalorder %s87, %s90
    %p96 = scmp.eq.s32.totalorder %s9, 0
    %p97 = por %p95, %p96
    %p98 = scmp.ne.s32.totalorder %s87, %s90
    %p99 = scmp.eq.s32.totalorder %s14, 1
    %p100 = por %p98, %p99
    %p101 = scmp.ne.s32.totalorder %s90, %s91
    %p102 = scmp.eq.s32.totalorder %s14, 0
    %p103 = por %p101, %p102
    %p104 = scmp.ne.s32.totalorder %s90, %s91
    %p105 = scmp.eq.s32.totalorder %s15, 1
    %p106 = por %p104, %p105
    %p108 = scmp.ne.s32.totalorder %s91, %s107
    %p109 = scmp.eq.s32.totalorder %s15, 0
    %p110 = por %p108, %p109
    %p111 = scmp.le.s32.totalorder 1, %s9
    %p112 = scmp.lt.s32.totalorder %s9, 3
    %p113 = pnand %p111, %p112
    %p114 = pneg %p113
    // Predicated region
    $region9: #{forward.4} parent=5 // pred_check
      _
    $region10: #{forward.4} parent=5 // pred_check_branch
      %116 = sbr.rel (%p113) target = $region12
    $region11: #{forward.4} parent=5 // pred_region
      %s117 = ssub.s32 %s9, 1
      // Predicated region
      $region13: #{forward.4} parent=11 // pred_check
        %p118 = pneg %p56
      $region14: #{forward.4} parent=11 // pred_check_branch
        %120 = sbr.rel (%p118) target = $region16
      $region15: #{forward.4} parent=11 // pred_region
        _
      $region16: #{forward.4} parent=11 // pred_fallthru
        _
      // Predicated region
      $region17: #{forward.4} parent=11 // pred_check
        %p121 = pneg %p77
      $region18: #{forward.4} parent=11 // pred_check_branch
        %123 = sbr.rel (%p121) target = $region20
      $region19: #{forward.4} parent=11 // pred_region
        _
      $region20: #{forward.4} parent=11 // pred_fallthru
        _
    $region12: #{forward.4} parent=5 // pred_fallthru
      _
    %p124 = scmp.lt.s32.totalorder %s9, 2
    // Predicated region
    $region21: #{forward.4} parent=5 // pred_check
      %p125 = pneg %p124
    $region22: #{forward.4} parent=5 // pred_check_branch
      %127 = sbr.rel (%p125) target = $region24
    $region23: #{forward.4} parent=5 // pred_region
      // Predicated region
      $region25: #{forward.4} parent=23 // pred_check
        %p128 = pneg %p29
      $region26: #{forward.4} parent=23 // pred_check_branch
        %130 = sbr.rel (%p128) target = $region28
      $region27: #{forward.4} parent=23 // pred_region
        %s131 = smul.u32 8, %s9
        %p132 = scmp.lt.s32.totalorder %s131, 15
        %s133 = scalar_select %p132, %s131, 15
        %s134 = smul.addr %s133, 4
        %s135 = smul.addr %s134, 4
        %s136 = scalar_lea.vmem %s0, %s135
        %s137 = smul.u32 8, %s9
      $region28: #{forward.4} parent=23 // pred_fallthru
        _
    $region24: #{forward.4} parent=5 // pred_fallthru
      _
    %p138 = scmp.le.s32.totalorder 1, %s9
    %p139 = scmp.lt.s32.totalorder %s9, 3
    %p140 = pnand %p138, %p139
    %p141 = pneg %p140
    // Predicated region
    $region29: #{forward.4} parent=5 // pred_check
      _
    $region30: #{forward.4} parent=5 // pred_check_branch
      %143 = sbr.rel (%p140) target = $region32
    $region31: #{forward.4} parent=5 // pred_region
      %s144 = ssub.s32 %s9, 1
      %s145 = smul.u32 8, %s14
      %p146 = scmp.lt.s32.totalorder %s145, 15
      %s147 = scalar_select %p146, %s145, 15
      %s148 = smul.addr %s147, 4
      %s149 = smul.addr %s148, 4
      %s150 = scalar_lea.vmem %s0, %s149
      %p151 = pneg %p35
      %p152 = pneg %p32
      %p153 = pneg %p56
      %p154 = pneg %p53
      %p155 = pneg %p77
      %p156 = pneg %p74
      %p157 = pneg %p103
      %p158 = pneg %p100
      %s159 = smul.u32 8, %s14
      %p160 = scmp.lt.s32.totalorder %s159, 15
      %s161 = scalar_select %p160, %s159, 15
      %s162 = smul.addr %s161, 4
      %s163 = scalar_lea.vmem %s3, %s162
      %s164 = smul.u32 8, %s14
      %p165 = scmp.lt.s32.totalorder %s164, 15
      %s166 = scalar_select %p165, %s164, 15
      %s167 = smul.addr %s166, 4
      %s168 = smul.addr %s167, 4
      %s169 = scalar_lea.vmem %s0, %s168
      %s170 = smul.u32 8, %s14
      %s171 = smul.u32 8, %s14
      %p172 = scmp.lt.s32.totalorder %s171, 15
      %s173 = scalar_select %p172, %s171, 15
      %s174 = smul.addr %s173, 4
      %s175 = scalar_lea.vmem %s3, %s174
      %s176 = smul.u32 8, %s14
      %v178 = vld [vmem:[%s169] sm:$0xff]
      %v179 = vld [vmem:[%s169 + $0x8] sm:$0xff]
      %v180 = vld [vmem:[%s169 + $0x10] sm:$0xff]
      %v181 = vld [vmem:[%s169 + $0x18] sm:$0xff]
      %v182 = vld [vmem:[%s169 + $0x20] sm:$0xff]
      %v183 = vld [vmem:[%s169 + $0x28] sm:$0xff]
      %v184 = vld [vmem:[%s169 + $0x30] sm:$0xff]
      %v185 = vld [vmem:[%s169 + $0x38] sm:$0xff]
      %v186 = vld [vmem:[%s169 + $0x40] sm:$0xff]
      %v187 = vld [vmem:[%s169 + $0x48] sm:$0xff]
      %v188 = vld [vmem:[%s169 + $0x50] sm:$0xff]
      %v189 = vld [vmem:[%s169 + $0x58] sm:$0xff]
      %v190 = vld [vmem:[%s169 + $0x60] sm:$0xff]
      %v191 = vld [vmem:[%s169 + $0x68] sm:$0xff]
      %v192 = vld [vmem:[%s169 + $0x70] sm:$0xff]
      %v193 = vld [vmem:[%s169 + $0x78] sm:$0xff]
      %v194 = vld [vmem:[%s1] sm:$0xf]
      %v195 = vld [vmem:[%s1 + $0x4] sm:$0xf]
      %v196 = vld [vmem:[%s1 + $0x8] sm:$0xf]
      %v197 = vld [vmem:[%s1 + $0xc] sm:$0xf]
      %v198 = vld [vmem:[%s1 + $0x10] sm:$0xf]
      %v199 = vld [vmem:[%s1 + $0x14] sm:$0xf]
      %v200 = vld [vmem:[%s1 + $0x18] sm:$0xf]
      %v201 = vld [vmem:[%s1 + $0x1c] sm:$0xf]
      %v202 = vld [vmem:[%s1 + $0x20] sm:$0xf]
      %v203 = vld [vmem:[%s1 + $0x24] sm:$0xf]
      %v204 = vld [vmem:[%s1 + $0x28] sm:$0xf]
      %v205 = vld [vmem:[%s1 + $0x2c] sm:$0xf]
      %v206 = vld [vmem:[%s1 + $0x30] sm:$0xf]
      %v207 = vld [vmem:[%s1 + $0x34] sm:$0xf]
      %v208 = vld [vmem:[%s1 + $0x38] sm:$0xf]
      %v209 = vld [vmem:[%s1 + $0x3c] sm:$0xf]
      %v210 = vld [vmem:[%s1 + $0x40] sm:$0xf]
      %v211 = vld [vmem:[%s1 + $0x44] sm:$0xf]
      %v212 = vld [vmem:[%s1 + $0x48] sm:$0xf]
      %v213 = vld [vmem:[%s1 + $0x4c] sm:$0xf]
      %v214 = vld [vmem:[%s1 + $0x50] sm:$0xf]
      %v215 = vld [vmem:[%s1 + $0x54] sm:$0xf]
      %v216 = vld [vmem:[%s1 + $0x58] sm:$0xf]
      %v217 = vld [vmem:[%s1 + $0x5c] sm:$0xf]
      %v218 = vld [vmem:[%s1 + $0x60] sm:$0xf]
      %v219 = vld [vmem:[%s1 + $0x64] sm:$0xf]
      %v220 = vld [vmem:[%s1 + $0x68] sm:$0xf]
      %v221 = vld [vmem:[%s1 + $0x6c] sm:$0xf]
      %v222 = vld [vmem:[%s1 + $0x70] sm:$0xf]
      %v223 = vld [vmem:[%s1 + $0x74] sm:$0xf]
      %v224 = vld [vmem:[%s1 + $0x78] sm:$0xf]
      %v225 = vld [vmem:[%s1 + $0x7c] sm:$0xf]
      %v226 = vld [vmem:[%s1 + $0x80] sm:$0xf]
      %v227 = vld [vmem:[%s1 + $0x84] sm:$0xf]
      %v228 = vld [vmem:[%s1 + $0x88] sm:$0xf]
      %v229 = vld [vmem:[%s1 + $0x8c] sm:$0xf]
      %v230 = vld [vmem:[%s1 + $0x90] sm:$0xf]
      %v231 = vld [vmem:[%s1 + $0x94] sm:$0xf]
      %v232 = vld [vmem:[%s1 + $0x98] sm:$0xf]
      %v233 = vld [vmem:[%s1 + $0x9c] sm:$0xf]
      %v234 = vld [vmem:[%s1 + $0xa0] sm:$0xf]
      %v235 = vld [vmem:[%s1 + $0xa4] sm:$0xf]
      %v236 = vld [vmem:[%s1 + $0xa8] sm:$0xf]
      %v237 = vld [vmem:[%s1 + $0xac] sm:$0xf]
      %v238 = vld [vmem:[%s1 + $0xb0] sm:$0xf]
      %v239 = vld [vmem:[%s1 + $0xb4] sm:$0xf]
      %v240 = vld [vmem:[%s1 + $0xb8] sm:$0xf]
      %v241 = vld [vmem:[%s1 + $0xbc] sm:$0xf]
      %v242 = vld [vmem:[%s1 + $0xc0] sm:$0xf]
      %v243 = vld [vmem:[%s1 + $0xc4] sm:$0xf]
      %v244 = vld [vmem:[%s2] sm:$0x1]
      %v246 = vperm.slane %v244, 0
      %v264 = vunpack.c.l.b16 %v178
      %v265 = vunpack.c.h.b16 %v178
      %v266 = vunpack.c.l.b16 %v179
      %v267 = vunpack.c.h.b16 %v179
      %v268 = vunpack.c.l.b16 %v180
      %v269 = vunpack.c.h.b16 %v180
      %v270 = vunpack.c.l.b16 %v181
      %v271 = vunpack.c.h.b16 %v181
      %v272 = vunpack.c.l.b16 %v182
      %v273 = vunpack.c.h.b16 %v182
      %v274 = vunpack.c.l.b16 %v183
      %v275 = vunpack.c.h.b16 %v183
      %v276 = vunpack.c.l.b16 %v184
      %v277 = vunpack.c.h.b16 %v184
      %v278 = vunpack.c.l.b16 %v185
      %v279 = vunpack.c.h.b16 %v185
      %v280 = vunpack.c.l.b16 %v186
      %v281 = vunpack.c.h.b16 %v186
      %v282 = vunpack.c.l.b16 %v187
      %v283 = vunpack.c.h.b16 %v187
      %v284 = vunpack.c.l.b16 %v188
      %v285 = vunpack.c.h.b16 %v188
      %v286 = vunpack.c.l.b16 %v189
      %v287 = vunpack.c.h.b16 %v189
      %v288 = vunpack.c.l.b16 %v190
      %v289 = vunpack.c.h.b16 %v190
      %v290 = vunpack.c.l.b16 %v191
      %v291 = vunpack.c.h.b16 %v191
      %v292 = vunpack.c.l.b16 %v192
      %v293 = vunpack.c.h.b16 %v192
      %v294 = vunpack.c.l.b16 %v193
      %v295 = vunpack.c.h.b16 %v193
      %v296 = vpack.c.b16 %v268, %v264
      %v297 = vpack.c.b16 %v269, %v265
      %v298 = vpack.c.b16 %v270, %v266
      %v299 = vpack.c.b16 %v271, %v267
      %v300 = vpack.c.b16 %v276, %v272
      %v301 = vpack.c.b16 %v277, %v273
      %v302 = vpack.c.b16 %v278, %v274
      %v303 = vpack.c.b16 %v279, %v275
      %v304 = vpack.c.b16 %v284, %v280
      %v305 = vpack.c.b16 %v285, %v281
      %v306 = vpack.c.b16 %v286, %v282
      %v307 = vpack.c.b16 %v287, %v283
      %v308 = vpack.c.b16 %v292, %v288
      %v309 = vpack.c.b16 %v293, %v289
      %v310 = vpack.c.b16 %v294, %v290
      %v311 = vpack.c.b16 %v295, %v291
      %v374 = vunpack.c.l.b16 %v194
      %v375 = vunpack.c.l.b16 %v195
      %v376 = vunpack.c.l.b16 %v196
      %v377 = vunpack.c.l.b16 %v197
      %v378 = vunpack.c.l.b16 %v198
      %v379 = vunpack.c.l.b16 %v199
      %v380 = vunpack.c.l.b16 %v200
      %v381 = vunpack.c.l.b16 %v201
      %v382 = vunpack.c.l.b16 %v202
      %v383 = vunpack.c.l.b16 %v203
      %v384 = vunpack.c.l.b16 %v204
      %v385 = vunpack.c.l.b16 %v205
      %v386 = vunpack.c.l.b16 %v206
      %v387 = vunpack.c.l.b16 %v207
      %v388 = vunpack.c.l.b16 %v208
      %v389 = vunpack.c.l.b16 %v209
      %v390 = vunpack.c.l.b16 %v210
      %v391 = vunpack.c.l.b16 %v211
      %v392 = vunpack.c.l.b16 %v212
      %v393 = vunpack.c.l.b16 %v213
      %v394 = vunpack.c.l.b16 %v214
      %v395 = vunpack.c.l.b16 %v215
      %v396 = vunpack.c.l.b16 %v216
      %v397 = vunpack.c.l.b16 %v217
      %v398 = vunpack.c.l.b16 %v218
      %v399 = vunpack.c.l.b16 %v219
      %v400 = vunpack.c.l.b16 %v220
      %v401 = vunpack.c.l.b16 %v221
      %v402 = vunpack.c.l.b16 %v222
      %v403 = vunpack.c.l.b16 %v223
      %v404 = vunpack.c.l.b16 %v224
      %v405 = vunpack.c.l.b16 %v225
      %v406 = vunpack.c.l.b16 %v226
      %v407 = vunpack.c.l.b16 %v227
      %v408 = vunpack.c.l.b16 %v228
      %v409 = vunpack.c.l.b16 %v229
      %v410 = vunpack.c.l.b16 %v230
      %v411 = vunpack.c.l.b16 %v231
      %v412 = vunpack.c.l.b16 %v232
      %v413 = vunpack.c.l.b16 %v233
      %v414 = vunpack.c.l.b16 %v234
      %v415 = vunpack.c.l.b16 %v235
      %v416 = vunpack.c.l.b16 %v236
      %v417 = vunpack.c.l.b16 %v237
      %v418 = vunpack.c.l.b16 %v238
      %v419 = vunpack.c.l.b16 %v239
      %v420 = vunpack.c.l.b16 %v240
      %v421 = vunpack.c.l.b16 %v241
      %v422 = vunpack.c.l.b16 %v242
      %v423 = vunpack.c.l.b16 %v243
      %v424 = vpack.c.b16 %v375, %v374
      %v425 = vpack.c.b16 %v377, %v376
      %v426 = vpack.c.b16 %v379, %v378
      %v427 = vpack.c.b16 %v381, %v380
      %v428 = vpack.c.b16 %v383, %v382
      %v429 = vpack.c.b16 %v385, %v384
      %v430 = vpack.c.b16 %v387, %v386
      %v431 = vpack.c.b16 %v389, %v388
      %v432 = vpack.c.b16 %v391, %v390
      %v433 = vpack.c.b16 %v393, %v392
      %v434 = vpack.c.b16 %v395, %v394
      %v435 = vpack.c.b16 %v397, %v396
      %v436 = vpack.c.b16 %v399, %v398
      %v437 = vpack.c.b16 %v401, %v400
      %v438 = vpack.c.b16 %v403, %v402
      %v439 = vpack.c.b16 %v405, %v404
      %v440 = vpack.c.b16 %v407, %v406
      %v441 = vpack.c.b16 %v409, %v408
      %v442 = vpack.c.b16 %v411, %v410
      %v443 = vpack.c.b16 %v413, %v412
      %v444 = vpack.c.b16 %v415, %v414
      %v445 = vpack.c.b16 %v417, %v416
      %v446 = vpack.c.b16 %v419, %v418
      %v447 = vpack.c.b16 %v421, %v420
      %v448 = vpack.c.b16 %v423, %v422
      %vm474 = vcmask 130048
      %v476 = vsel %vm474, %v299, 0
      %v479 = vsel %vm474, %v303, 0
      %v482 = vsel %vm474, %v307, 0
      %v485 = vsel %vm474, %v311, 0
      %487 = vmatpush.bf16.msra.mxu0 %v431
      %488 = vmatpush.bf16.msra.mxu0 %v430
      %489 = vmatpush.bf16.msra.mxu0 %v429
      %490 = vmatpush.bf16.msra.mxu0 %v428
      %491 = vmatpush.bf16.msra.mxu0 %v427
      %492 = vmatpush.bf16.msra.mxu0 %v426
      %493 = vmatpush.bf16.msra.mxu0 %v425
      %494 = vmatpush.bf16.msra.mxu0 %v424
      %495 = vmatmul.bf16.gmra.mxu0 %v296
      %v496 = vpop.f32.mrf.mxu0
      %v497 = vadd.f32 %v246, %v496
      %v498 = vpop.f32.mrf.mxu0
      %v499 = vadd.f32 %v246, %v498
      %500 = vmatmul.bf16.gmra.mxu0 %v300
      %v501 = vpop.f32.mrf.mxu0
      %v502 = vadd.f32 %v246, %v501
      %v503 = vpop.f32.mrf.mxu0
      %v504 = vadd.f32 %v246, %v503
      %505 = vmatmul.bf16.gmra.mxu0 %v304
      %v506 = vpop.f32.mrf.mxu0
      %v507 = vadd.f32 %v246, %v506
      %v508 = vpop.f32.mrf.mxu0
      %v509 = vadd.f32 %v246, %v508
      %510 = vmatmul.bf16.gmra.mxu0 %v308
      %v511 = vpop.f32.mrf.mxu0
      %v512 = vadd.f32 %v246, %v511
      %v513 = vpop.f32.mrf.mxu0
      %v514 = vadd.f32 %v246, %v513
      %515 = vdwg.mxu0
      %516 = vmatpush.bf16.msra.mxu0 %v439
      %517 = vmatpush.bf16.msra.mxu0 %v438
      %518 = vmatpush.bf16.msra.mxu0 %v437
      %519 = vmatpush.bf16.msra.mxu0 %v436
      %520 = vmatpush.bf16.msra.mxu0 %v435
      %521 = vmatpush.bf16.msra.mxu0 %v434
      %522 = vmatpush.bf16.msra.mxu0 %v433
      %523 = vmatpush.bf16.msra.mxu0 %v432
      %524 = vmatmul.bf16.gmra.mxu0 %v297
      %v525 = vpop.f32.mrf.mxu0
      %v526 = vadd.f32 %v497, %v525
      %v527 = vpop.f32.mrf.mxu0
      %v528 = vadd.f32 %v499, %v527
      %529 = vmatmul.bf16.gmra.mxu0 %v301
      %v530 = vpop.f32.mrf.mxu0
      %v531 = vadd.f32 %v502, %v530
      %v532 = vpop.f32.mrf.mxu0
      %v533 = vadd.f32 %v504, %v532
      %534 = vmatmul.bf16.gmra.mxu0 %v305
      %v535 = vpop.f32.mrf.mxu0
      %v536 = vadd.f32 %v507, %v535
      %v537 = vpop.f32.mrf.mxu0
      %v538 = vadd.f32 %v509, %v537
      %539 = vmatmul.bf16.gmra.mxu0 %v309
      %v540 = vpop.f32.mrf.mxu0
      %v541 = vadd.f32 %v512, %v540
      %v542 = vpop.f32.mrf.mxu0
      %v543 = vadd.f32 %v514, %v542
      %544 = vdwg.mxu0
      %545 = vmatpush.bf16.msra.mxu0 %v447
      %546 = vmatpush.bf16.msra.mxu0 %v446
      %547 = vmatpush.bf16.msra.mxu0 %v445
      %548 = vmatpush.bf16.msra.mxu0 %v444
      %549 = vmatpush.bf16.msra.mxu0 %v443
      %550 = vmatpush.bf16.msra.mxu0 %v442
      %551 = vmatpush.bf16.msra.mxu0 %v441
      %552 = vmatpush.bf16.msra.mxu0 %v440
      %553 = vmatmul.bf16.gmra.mxu0 %v298
      %v554 = vpop.f32.mrf.mxu0
      %v555 = vadd.f32 %v526, %v554
      %v556 = vpop.f32.mrf.mxu0
      %v557 = vadd.f32 %v528, %v556
      %558 = vmatmul.bf16.gmra.mxu0 %v302
      %v559 = vpop.f32.mrf.mxu0
      %v560 = vadd.f32 %v531, %v559
      %v561 = vpop.f32.mrf.mxu0
      %v562 = vadd.f32 %v533, %v561
      %563 = vmatmul.bf16.gmra.mxu0 %v306
      %v564 = vpop.f32.mrf.mxu0
      %v565 = vadd.f32 %v536, %v564
      %v566 = vpop.f32.mrf.mxu0
      %v567 = vadd.f32 %v538, %v566
      %568 = vmatmul.bf16.gmra.mxu0 %v310
      %v569 = vpop.f32.mrf.mxu0
      %v570 = vadd.f32 %v541, %v569
      %v571 = vpop.f32.mrf.mxu0
      %v572 = vadd.f32 %v543, %v571
      %573 = vdwg.mxu0
      %574 = vmatpush.bf16.msra.mxu0 0
      %575 = vmatpush.bf16.msra.mxu0 0
      %576 = vmatpush.bf16.msra.mxu0 0
      %577 = vmatpush.bf16.msra.mxu0 0
      %578 = vmatpush.bf16.msra.mxu0 0
      %579 = vmatpush.bf16.msra.mxu0 0
      %580 = vmatpush.bf16.msra.mxu0 0
      %581 = vmatpush.bf16.msra.mxu0 %v448
      %582 = vmatmul.bf16.gmra.mxu0 %v476
      %v583 = vpop.f32.mrf.mxu0
      %v584 = vadd.f32 %v555, %v583
      %v585 = vpop.f32.mrf.mxu0
      %v586 = vadd.f32 %v557, %v585
      %587 = vmatmul.bf16.gmra.mxu0 %v479
      %v588 = vpop.f32.mrf.mxu0
      %v589 = vadd.f32 %v560, %v588
      %v590 = vpop.f32.mrf.mxu0
      %v591 = vadd.f32 %v562, %v590
      %592 = vmatmul.bf16.gmra.mxu0 %v482
      %v593 = vpop.f32.mrf.mxu0
      %v594 = vadd.f32 %v565, %v593
      %v595 = vpop.f32.mrf.mxu0
      %v596 = vadd.f32 %v567, %v595
      %597 = vmatmul.bf16.gmra.mxu0 %v485
      %v598 = vpop.f32.mrf.mxu0
      %v599 = vadd.f32 %v570, %v598
      %v600 = vpop.f32.mrf.mxu0
      %v601 = vadd.f32 %v572, %v600
      %602 = vdwg.mxu0
      %v603 = vmax.f32 %v584, 0.0
      %v604 = vmax.f32 %v586, 0.0
      %v605 = vmax.f32 %v589, 0.0
      %v606 = vmax.f32 %v591, 0.0
      %v607 = vmax.f32 %v594, 0.0
      %v608 = vmax.f32 %v596, 0.0
      %v609 = vmax.f32 %v599, 0.0
      %v610 = vmax.f32 %v601, 0.0
      %v611 = vpack.c.bf16 %v603, %v603
      %v612 = vpack.c.bf16 %v604, %v604
      %v613 = vpack.c.bf16 %v605, %v605
      %v614 = vpack.c.bf16 %v606, %v606
      %v615 = vpack.c.bf16 %v607, %v607
      %v616 = vpack.c.bf16 %v608, %v608
      %v617 = vpack.c.bf16 %v609, %v609
      %v618 = vpack.c.bf16 %v610, %v610
      %vm619 = vcmask 519168
      %620 = vst.msk [vmem:[%s175] sm:$0xf] %vm619, %v611
      %621 = vst.msk [vmem:[%s175 + $0x4] sm:$0xf] %vm619, %v612
      %622 = vst.msk [vmem:[%s175 + $0x8] sm:$0xf] %vm619, %v613
      %623 = vst.msk [vmem:[%s175 + $0xc] sm:$0xf] %vm619, %v614
      %624 = vst.msk [vmem:[%s175 + $0x10] sm:$0xf] %vm619, %v615
      %625 = vst.msk [vmem:[%s175 + $0x14] sm:$0xf] %vm619, %v616
      %626 = vst.msk [vmem:[%s175 + $0x18] sm:$0xf] %vm619, %v617
      %627 = vst.msk [vmem:[%s175 + $0x1c] sm:$0xf] %vm619, %v618
      %s628 = smul.u32 8, %s14
      %p629 = scmp.lt.s32.totalorder %s628, 15
      %s630 = scalar_select %p629, %s628, 15
      %s631 = smul.addr %s630, 4
      %s632 = scalar_lea.vmem %s3, %s631
      // Predicated region
      $region33: #{forward.4} parent=31 // pred_check
        %p633 = pneg %p100
      $region34: #{forward.4} parent=31 // pred_check_branch
        %635 = sbr.rel (%p633) target = $region36
      $region35: #{forward.4} parent=31 // pred_region
        %s636 = smul.u32 8, %s14
      $region36: #{forward.4} parent=31 // pred_fallthru
        _
    $region32: #{forward.4} parent=5 // pred_fallthru
      _
    %p637 = scmp.le.s32.totalorder 2, %s9
    // Predicated region
    $region37: #{forward.4} parent=5 // pred_check
      %p638 = pneg %p637
    $region38: #{forward.4} parent=5 // pred_check_branch
      %640 = sbr.rel (%p638) target = $region40
    $region39: #{forward.4} parent=5 // pred_region
      %s641 = ssub.s32 %s9, 2
      // Predicated region
      $region41: #{forward.4} parent=39 // pred_check
        %p642 = pneg %p106
      $region42: #{forward.4} parent=39 // pred_check_branch
        %644 = sbr.rel (%p642) target = $region44
      $region43: #{forward.4} parent=39 // pred_region
        %s645 = smul.u32 8, %s15
        %p646 = scmp.lt.s32.totalorder %s645, 15
        %s647 = scalar_select %p646, %s645, 15
        %s648 = smul.addr %s647, 4
        %s649 = scalar_lea.vmem %s3, %s648
      $region44: #{forward.4} parent=39 // pred_fallthru
        _
    $region40: #{forward.4} parent=5 // pred_fallthru
      _
  $region6: #{forward.4} parent=0 // loop_footer
    %s13 = sadd.s32 1, %s9
  $region7: #{forward.4} parent=0 // loop_footer_branch
    %8 = sbr.rel target = $region3
  $region8: #{forward.4} parent=0 // loop_exit
    _

// kernel: forward.5
$region0: #{forward.5}
  #allocation0 [shape = 'u32[]', space=smem, size = 0x4, offset = 0x4, fixed_abs, tag = 'smem constant byte address 0x4 - core index']
  #allocation1 [shape = 'u32[72,128]{1,0:T(1,128)}', space=vmem, size = 0x9000, scoped, tag = 'internal scratch']
  %s0 = inlined_call_operand.vmem [shape: bf16[12,2,768], index: 0, kind: input, shape index: {}]
  %s1 = inlined_call_operand.vmem [shape: bf16[5,384,128], index: 1, kind: input, shape index: {}]
  %s2 = inlined_call_operand.vmem [shape: f32[1,128], index: 2, kind: input, shape index: {}]
  %s3 = inlined_call_operand.vmem [shape: bf16[128,32], index: 3, kind: input, shape index: {}]
  %s4 = inlined_call_operand.vmem [shape: f32[1,32], index: 4, kind: input, shape index: {}]
  %s5 = inlined_call_operand.vmem [shape: bf16[16,32,256], index: 5, kind: input, shape index: {}]
  %s6 = inlined_call_operand.vmem [shape: f32[1,256], index: 6, kind: input, shape index: {}]
  %s7 = inlined_call_operand.vmem [shape: bf16[256,128], index: 7, kind: input, shape index: {}]
  %s8 = inlined_call_operand.vmem [shape: f32[1,128], index: 8, kind: input, shape index: {}]
  %s9 = inlined_call_operand.vmem [shape: bf16[128,64], index: 9, kind: input, shape index: {}]
  %s10 = inlined_call_operand.vmem [shape: f32[1,64], index: 10, kind: input, shape index: {}]
  %s11 = inlined_call_operand.vmem [shape: bf16[64,32], index: 11, kind: input, shape index: {}]
  %s12 = inlined_call_operand.vmem [shape: f32[1,32], index: 12, kind: input, shape index: {}]
  %s13 = inlined_call_operand.vmem [shape: bf16[32,5], index: 13, kind: input, shape index: {}]
  %s14 = inlined_call_operand.vmem [shape: f32[1,5], index: 14, kind: input, shape index: {}]
  %s15 = inlined_call_operand.hbm [shape: f32[2,5], index: 15, kind: output, shape index: {}]
  %s16 = sld [smem:[#allocation0]]
  $region70: #{forward.5} parent=0
    _
  %s18 = ssub.s32 1, %s16
  %s19 = scalar_select 0, %s18, %s16
  $region1: #{forward.5} parent=0
    #allocation2 [shape = 'u8[1024]{0}', space=vmem, size = 0x400, scoped, tag = 'output window, operand 0, single buffered']
    #allocation3 [shape = 's32[1]{0}', space=sflag, size = 0x4, scoped, tag = 'scoped memory for forward.5']
    %20 = vsyncpa [#allocation3], 0
    // Predicated region
    $region2: #{forward.5} parent=1 // pred_check
      _
    $region3: #{forward.5} parent=1 // pred_check_branch
      %22 = sbr.rel (0) target = $region5
    $region4: #{forward.5} parent=1 // pred_region
      _
    $region5: #{forward.5} parent=1 // pred_fallthru
      _
    // Predicated region
    $region6: #{forward.5} parent=1 // pred_check
      _
    $region7: #{forward.5} parent=1 // pred_check_branch
      %24 = sbr.rel (0) target = $region9
    $region8: #{forward.5} parent=1 // pred_region
      _
    $region9: #{forward.5} parent=1 // pred_fallthru
      _
    // Predicated region
    $region10: #{forward.5} parent=1 // pred_check
      _
    $region11: #{forward.5} parent=1 // pred_check_branch
      %26 = sbr.rel (0) target = $region13
    $region12: #{forward.5} parent=1 // pred_region
      _
    $region13: #{forward.5} parent=1 // pred_fallthru
      _
    // Predicated region
    $region14: #{forward.5} parent=1 // pred_check
      _
    $region15: #{forward.5} parent=1 // pred_check_branch
      %28 = sbr.rel (0) target = $region17
    $region16: #{forward.5} parent=1 // pred_region
      _
    $region17: #{forward.5} parent=1 // pred_fallthru
      _
    // Predicated region
    $region18: #{forward.5} parent=1 // pred_check
      _
    $region19: #{forward.5} parent=1 // pred_check_branch
      %30 = sbr.rel (0) target = $region21
    $region20: #{forward.5} parent=1 // pred_region
      _
    $region21: #{forward.5} parent=1 // pred_fallthru
      _
    // Predicated region
    $region22: #{forward.5} parent=1 // pred_check
      _
    $region23: #{forward.5} parent=1 // pred_check_branch
      %32 = sbr.rel (0) target = $region25
    $region24: #{forward.5} parent=1 // pred_region
      _
    $region25: #{forward.5} parent=1 // pred_fallthru
      _
    // Predicated region
    $region26: #{forward.5} parent=1 // pred_check
      _
    $region27: #{forward.5} parent=1 // pred_check_branch
      %34 = sbr.rel (0) target = $region29
    $region28: #{forward.5} parent=1 // pred_region
      _
    $region29: #{forward.5} parent=1 // pred_fallthru
      _
    // Predicated region
    $region30: #{forward.5} parent=1 // pred_check
      _
    $region31: #{forward.5} parent=1 // pred_check_branch
      %36 = sbr.rel (0) target = $region33
    $region32: #{forward.5} parent=1 // pred_region
      _
    $region33: #{forward.5} parent=1 // pred_fallthru
      _
    // Predicated region
    $region34: #{forward.5} parent=1 // pred_check
      _
    $region35: #{forward.5} parent=1 // pred_check_branch
      %38 = sbr.rel (0) target = $region37
    $region36: #{forward.5} parent=1 // pred_region
      _
    $region37: #{forward.5} parent=1 // pred_fallthru
      _
    // Predicated region
    $region38: #{forward.5} parent=1 // pred_check
      _
    $region39: #{forward.5} parent=1 // pred_check_branch
      %40 = sbr.rel (0) target = $region41
    $region40: #{forward.5} parent=1 // pred_region
      _
    $region41: #{forward.5} parent=1 // pred_fallthru
      _
    // Predicated region
    $region42: #{forward.5} parent=1 // pred_check
      _
    $region43: #{forward.5} parent=1 // pred_check_branch
      %42 = sbr.rel (0) target = $region45
    $region44: #{forward.5} parent=1 // pred_region
      _
    $region45: #{forward.5} parent=1 // pred_fallthru
      _
    // Predicated region
    $region46: #{forward.5} parent=1 // pred_check
      _
    $region47: #{forward.5} parent=1 // pred_check_branch
      %44 = sbr.rel (0) target = $region49
    $region48: #{forward.5} parent=1 // pred_region
      _
    $region49: #{forward.5} parent=1 // pred_fallthru
      _
    // Predicated region
    $region50: #{forward.5} parent=1 // pred_check
      _
    $region51: #{forward.5} parent=1 // pred_check_branch
      %46 = sbr.rel (0) target = $region53
    $region52: #{forward.5} parent=1 // pred_region
      _
    $region53: #{forward.5} parent=1 // pred_fallthru
      _
    // Predicated region
    $region54: #{forward.5} parent=1 // pred_check
      _
    $region55: #{forward.5} parent=1 // pred_check_branch
      %48 = sbr.rel (0) target = $region57
    $region56: #{forward.5} parent=1 // pred_region
      _
    $region57: #{forward.5} parent=1 // pred_fallthru
      _
    // Predicated region
    $region58: #{forward.5} parent=1 // pred_check
      _
    $region59: #{forward.5} parent=1 // pred_check_branch
      %50 = sbr.rel (0) target = $region61
    $region60: #{forward.5} parent=1 // pred_region
      _
    $region61: #{forward.5} parent=1 // pred_fallthru
      _
    %v52 = vld [vmem:[%s2] sm:$0x1]
    %v53 = vld [vmem:[%s3] sm:$0xf]
    %v54 = vld [vmem:[%s3 + $0x4] sm:$0xf]
    %v55 = vld [vmem:[%s3 + $0x8] sm:$0xf]
    %v56 = vld [vmem:[%s3 + $0xc] sm:$0xf]
    %v57 = vld [vmem:[%s3 + $0x10] sm:$0xf]
    %v58 = vld [vmem:[%s3 + $0x14] sm:$0xf]
    %v59 = vld [vmem:[%s3 + $0x18] sm:$0xf]
    %v60 = vld [vmem:[%s3 + $0x1c] sm:$0xf]
    %v61 = vld [vmem:[%s3 + $0x20] sm:$0xf]
    %v62 = vld [vmem:[%s3 + $0x24] sm:$0xf]
    %v63 = vld [vmem:[%s3 + $0x28] sm:$0xf]
    %v64 = vld [vmem:[%s3 + $0x2c] sm:$0xf]
    %v65 = vld [vmem:[%s3 + $0x30] sm:$0xf]
    %v66 = vld [vmem:[%s3 + $0x34] sm:$0xf]
    %v67 = vld [vmem:[%s3 + $0x38] sm:$0xf]
    %v68 = vld [vmem:[%s3 + $0x3c] sm:$0xf]
    %v69 = vld [vmem:[%s4] sm:$0x1]
    %v70 = vld [vmem:[%s0] sm:$0x7]
    %v71 = vld [vmem:[%s1] sm:$0xf]
    %v72 = vld [vmem:[%s1 + $0x4] sm:$0xf]
    %v73 = vld [vmem:[%s1 + $0x8] sm:$0xf]
    %v74 = vld [vmem:[%s1 + $0xc] sm:$0xf]
    %v75 = vld [vmem:[%s1 + $0x10] sm:$0xf]
    %v76 = vld [vmem:[%s1 + $0x14] sm:$0xf]
    %v77 = vld [vmem:[%s1 + $0x18] sm:$0xf]
    %v78 = vld [vmem:[%s1 + $0x1c] sm:$0xf]
    %v79 = vld [vmem:[%s1 + $0x20] sm:$0xf]
    %v80 = vld [vmem:[%s1 + $0x24] sm:$0xf]
    %v81 = vld [vmem:[%s1 + $0x28] sm:$0xf]
    %v82 = vld [vmem:[%s1 + $0x2c] sm:$0xf]
    %v83 = vld [vmem:[%s1 + $0x30] sm:$0xf]
    %v84 = vld [vmem:[%s1 + $0x34] sm:$0xf]
    %v85 = vld [vmem:[%s1 + $0x38] sm:$0xf]
    %v86 = vld [vmem:[%s1 + $0x3c] sm:$0xf]
    %v87 = vld [vmem:[%s1 + $0x40] sm:$0xf]
    %v88 = vld [vmem:[%s1 + $0x44] sm:$0xf]
    %v89 = vld [vmem:[%s1 + $0x48] sm:$0xf]
    %v90 = vld [vmem:[%s1 + $0x4c] sm:$0xf]
    %v91 = vld [vmem:[%s1 + $0x50] sm:$0xf]
    %v92 = vld [vmem:[%s1 + $0x54] sm:$0xf]
    %v93 = vld [vmem:[%s1 + $0x58] sm:$0xf]
    %v94 = vld [vmem:[%s1 + $0x5c] sm:$0xf]
    %v95 = vld [vmem:[%s1 + $0x60] sm:$0xf]
    %v96 = vld [vmem:[%s1 + $0x64] sm:$0xf]
    %v97 = vld [vmem:[%s1 + $0x68] sm:$0xf]
    %v98 = vld [vmem:[%s1 + $0x6c] sm:$0xf]
    %v99 = vld [vmem:[%s1 + $0x70] sm:$0xf]
    %v100 = vld [vmem:[%s1 + $0x74] sm:$0xf]
    %v101 = vld [vmem:[%s1 + $0x78] sm:$0xf]
    %v102 = vld [vmem:[%s1 + $0x7c] sm:$0xf]
    %v103 = vld [vmem:[%s1 + $0x80] sm:$0xf]
    %v104 = vld [vmem:[%s1 + $0x84] sm:$0xf]
    %v105 = vld [vmem:[%s1 + $0x88] sm:$0xf]
    %v106 = vld [vmem:[%s1 + $0x8c] sm:$0xf]
    %v107 = vld [vmem:[%s1 + $0x90] sm:$0xf]
    %v108 = vld [vmem:[%s1 + $0x94] sm:$0xf]
    %v109 = vld [vmem:[%s1 + $0x98] sm:$0xf]
    %v110 = vld [vmem:[%s1 + $0x9c] sm:$0xf]
    %v111 = vld [vmem:[%s1 + $0xa0] sm:$0xf]
    %v112 = vld [vmem:[%s1 + $0xa4] sm:$0xf]
    %v113 = vld [vmem:[%s1 + $0xa8] sm:$0xf]
    %v114 = vld [vmem:[%s1 + $0xac] sm:$0xf]
    %v115 = vld [vmem:[%s1 + $0xb0] sm:$0xf]
    %v116 = vld [vmem:[%s1 + $0xb4] sm:$0xf]
    %v117 = vld [vmem:[%s1 + $0xb8] sm:$0xf]
    %v118 = vld [vmem:[%s1 + $0xbc] sm:$0xf]
    %s119 = scalar_lea.vmem %s0, 6
    %v120 = vld [vmem:[%s119] sm:$0x7]
    %s121 = scalar_lea.vmem %s1, 192
    %v122 = vld [vmem:[%s121] sm:$0xf]
    %v123 = vld [vmem:[%s121 + $0x4] sm:$0xf]
    %v124 = vld [vmem:[%s121 + $0x8] sm:$0xf]
    %v125 = vld [vmem:[%s121 + $0xc] sm:$0xf]
    %v126 = vld [vmem:[%s121 + $0x10] sm:$0xf]
    %v127 = vld [vmem:[%s121 + $0x14] sm:$0xf]
    %v128 = vld [vmem:[%s121 + $0x18] sm:$0xf]
    %v129 = vld [vmem:[%s121 + $0x1c] sm:$0xf]
    %v130 = vld [vmem:[%s121 + $0x20] sm:$0xf]
    %v131 = vld [vmem:[%s121 + $0x24] sm:$0xf]
    %v132 = vld [vmem:[%s121 + $0x28] sm:$0xf]
    %v133 = vld [vmem:[%s121 + $0x2c] sm:$0xf]
    %v134 = vld [vmem:[%s121 + $0x30] sm:$0xf]
    %v135 = vld [vmem:[%s121 + $0x34] sm:$0xf]
    %v136 = vld [vmem:[%s121 + $0x38] sm:$0xf]
    %v137 = vld [vmem:[%s121 + $0x3c] sm:$0xf]
    %v138 = vld [vmem:[%s121 + $0x40] sm:$0xf]
    %v139 = vld [vmem:[%s121 + $0x44] sm:$0xf]
    %v140 = vld [vmem:[%s121 + $0x48] sm:$0xf]
    %v141 = vld [vmem:[%s121 + $0x4c] sm:$0xf]
    %v142 = vld [vmem:[%s121 + $0x50] sm:$0xf]
    %v143 = vld [vmem:[%s121 + $0x54] sm:$0xf]
    %v144 = vld [vmem:[%s121 + $0x58] sm:$0xf]
    %v145 = vld [vmem:[%s121 + $0x5c] sm:$0xf]
    %v146 = vld [vmem:[%s121 + $0x60] sm:$0xf]
    %v147 = vld [vmem:[%s121 + $0x64] sm:$0xf]
    %v148 = vld [vmem:[%s121 + $0x68] sm:$0xf]
    %v149 = vld [vmem:[%s121 + $0x6c] sm:$0xf]
    %v150 = vld [vmem:[%s121 + $0x70] sm:$0xf]
    %v151 = vld [vmem:[%s121 + $0x74] sm:$0xf]
    %v152 = vld [vmem:[%s121 + $0x78] sm:$0xf]
    %v153 = vld [vmem:[%s121 + $0x7c] sm:$0xf]
    %v154 = vld [vmem:[%s121 + $0x80] sm:$0xf]
    %v155 = vld [vmem:[%s121 + $0x84] sm:$0xf]
    %v156 = vld [vmem:[%s121 + $0x88] sm:$0xf]
    %v157 = vld [vmem:[%s121 + $0x8c] sm:$0xf]
    %v158 = vld [vmem:[%s121 + $0x90] sm:$0xf]
    %v159 = vld [vmem:[%s121 + $0x94] sm:$0xf]
    %v160 = vld [vmem:[%s121 + $0x98] sm:$0xf]
    %v161 = vld [vmem:[%s121 + $0x9c] sm:$0xf]
    %v162 = vld [vmem:[%s121 + $0xa0] sm:$0xf]
    %v163 = vld [vmem:[%s121 + $0xa4] sm:$0xf]
    %v164 = vld [vmem:[%s121 + $0xa8] sm:$0xf]
    %v165 = vld [vmem:[%s121 + $0xac] sm:$0xf]
    %v166 = vld [vmem:[%s121 + $0xb0] sm:$0xf]
    %v167 = vld [vmem:[%s121 + $0xb4] sm:$0xf]
    %v168 = vld [vmem:[%s121 + $0xb8] sm:$0xf]
    %v169 = vld [vmem:[%s121 + $0xbc] sm:$0xf]
    %171 = vst [vmem:[#allocation1] ss:$9 sm:$0xff] %v120
    %v172 = vld [vmem:[#allocation1] sm:$0xff]
    %v173 = vld [vmem:[#allocation1 + $0x9] sm:$0xff]
    %v174 = vld [vmem:[#allocation1 + $0x12] sm:$0xff]
    %v226 = vunpack.c.l.b16 %v122
    %v227 = vunpack.c.l.b16 %v123
    %v228 = vunpack.c.l.b16 %v124
    %v229 = vunpack.c.l.b16 %v125
    %v230 = vunpack.c.l.b16 %v126
    %v231 = vunpack.c.l.b16 %v127
    %v232 = vunpack.c.l.b16 %v128
    %v233 = vunpack.c.l.b16 %v129
    %v234 = vunpack.c.l.b16 %v130
    %v235 = vunpack.c.l.b16 %v131
    %v236 = vunpack.c.l.b16 %v132
    %v237 = vunpack.c.l.b16 %v133
    %v238 = vunpack.c.l.b16 %v134
    %v239 = vunpack.c.l.b16 %v135
    %v240 = vunpack.c.l.b16 %v136
    %v241 = vunpack.c.l.b16 %v137
    %v242 = vunpack.c.l.b16 %v138
    %v243 = vunpack.c.l.b16 %v139
    %v244 = vunpack.c.l.b16 %v140
    %v245 = vunpack.c.l.b16 %v141
    %v246 = vunpack.c.l.b16 %v142
    %v247 = vunpack.c.l.b16 %v143
    %v248 = vunpack.c.l.b16 %v144
    %v249 = vunpack.c.l.b16 %v145
    %v250 = vunpack.c.l.b16 %v146
    %v251 = vunpack.c.l.b16 %v147
    %v252 = vunpack.c.l.b16 %v148
    %v253 = vunpack.c.l.b16 %v149
    %v254 = vunpack.c.l.b16 %v150
    %v255 = vunpack.c.l.b16 %v151
    %v256 = vunpack.c.l.b16 %v152
    %v257 = vunpack.c.l.b16 %v153
    %v258 = vunpack.c.l.b16 %v154
    %v259 = vunpack.c.l.b16 %v155
    %v260 = vunpack.c.l.b16 %v156
    %v261 = vunpack.c.l.b16 %v157
    %v262 = vunpack.c.l.b16 %v158
    %v263 = vunpack.c.l.b16 %v159
    %v264 = vunpack.c.l.b16 %v160
    %v265 = vunpack.c.l.b16 %v161
    %v266 = vunpack.c.l.b16 %v162
    %v267 = vunpack.c.l.b16 %v163
    %v268 = vunpack.c.l.b16 %v164
    %v269 = vunpack.c.l.b16 %v165
    %v270 = vunpack.c.l.b16 %v166
    %v271 = vunpack.c.l.b16 %v167
    %v272 = vunpack.c.l.b16 %v168
    %v273 = vunpack.c.l.b16 %v169
    %v274 = vpack.c.b16 %v227, %v226
    %v275 = vpack.c.b16 %v229, %v228
    %v276 = vpack.c.b16 %v231, %v230
    %v277 = vpack.c.b16 %v233, %v232
    %v278 = vpack.c.b16 %v235, %v234
    %v279 = vpack.c.b16 %v237, %v236
    %v280 = vpack.c.b16 %v239, %v238
    %v281 = vpack.c.b16 %v241, %v240
    %v282 = vpack.c.b16 %v243, %v242
    %v283 = vpack.c.b16 %v245, %v244
    %v284 = vpack.c.b16 %v247, %v246
    %v285 = vpack.c.b16 %v249, %v248
    %v286 = vpack.c.b16 %v251, %v250
    %v287 = vpack.c.b16 %v253, %v252
    %v288 = vpack.c.b16 %v255, %v254
    %v289 = vpack.c.b16 %v257, %v256
    %v290 = vpack.c.b16 %v259, %v258
    %v291 = vpack.c.b16 %v261, %v260
    %v292 = vpack.c.b16 %v263, %v262
    %v293 = vpack.c.b16 %v265, %v264
    %v294 = vpack.c.b16 %v267, %v266
    %v295 = vpack.c.b16 %v269, %v268
    %v296 = vpack.c.b16 %v271, %v270
    %v297 = vpack.c.b16 %v273, %v272
    %322 = vmatpush.bf16.msra.mxu0 %v281
    %323 = vmatpush.bf16.msra.mxu0 %v280
    %324 = vmatpush.bf16.msra.mxu0 %v279
    %325 = vmatpush.bf16.msra.mxu0 %v278
    %326 = vmatpush.bf16.msra.mxu0 %v277
    %327 = vmatpush.bf16.msra.mxu0 %v276
    %328 = vmatpush.bf16.msra.mxu0 %v275
    %329 = vmatpush.bf16.msra.mxu0 %v274
    %330 = vmatmul.bf16.gmra.mxu0 %v172
    %v331 = vpop.f32.mrf.mxu0
    %v332 = vadd.f32 0.0, %v331
    %v333 = vpop.f32.mrf.mxu0
    %334 = vdwg.mxu0
    %335 = vmatpush.bf16.msra.mxu0 %v289
    %336 = vmatpush.bf16.msra.mxu0 %v288
    %337 = vmatpush.bf16.msra.mxu0 %v287
    %338 = vmatpush.bf16.msra.mxu0 %v286
    %339 = vmatpush.bf16.msra.mxu0 %v285
    %340 = vmatpush.bf16.msra.mxu0 %v284
    %341 = vmatpush.bf16.msra.mxu0 %v283
    %342 = vmatpush.bf16.msra.mxu0 %v282
    %343 = vmatmul.bf16.gmra.mxu0 %v173
    %v344 = vpop.f32.mrf.mxu0
    %v345 = vadd.f32 %v332, %v344
    %v346 = vpop.f32.mrf.mxu0
    %347 = vdwg.mxu0
    %348 = vmatpush.bf16.msra.mxu0 %v297
    %349 = vmatpush.bf16.msra.mxu0 %v296
    %350 = vmatpush.bf16.msra.mxu0 %v295
    %351 = vmatpush.bf16.msra.mxu0 %v294
    %352 = vmatpush.bf16.msra.mxu0 %v293
    %353 = vmatpush.bf16.msra.mxu0 %v292
    %354 = vmatpush.bf16.msra.mxu0 %v291
    %355 = vmatpush.bf16.msra.mxu0 %v290
    %356 = vmatmul.bf16.gmra.mxu0 %v174
    %v357 = vpop.f32.mrf.mxu0
    %v358 = vadd.f32 %v345, %v357
    %v359 = vpop.f32.mrf.mxu0
    %360 = vdwg.mxu0
    %362 = vst [vmem:[#allocation1] ss:$9 sm:$0xff] %v70
    %v363 = vld [vmem:[#allocation1] sm:$0xff]
    %v364 = vld [vmem:[#allocation1 + $0x9] sm:$0xff]
    %v365 = vld [vmem:[#allocation1 + $0x12] sm:$0xff]
    %v417 = vunpack.c.l.b16 %v71
    %v418 = vunpack.c.l.b16 %v72
    %v419 = vunpack.c.l.b16 %v73
    %v420 = vunpack.c.l.b16 %v74
    %v421 = vunpack.c.l.b16 %v75
    %v422 = vunpack.c.l.b16 %v76
    %v423 = vunpack.c.l.b16 %v77
    %v424 = vunpack.c.l.b16 %v78
    %v425 = vunpack.c.l.b16 %v79
    %v426 = vunpack.c.l.b16 %v80
    %v427 = vunpack.c.l.b16 %v81
    %v428 = vunpack.c.l.b16 %v82
    %v429 = vunpack.c.l.b16 %v83
    %v430 = vunpack.c.l.b16 %v84
    %v431 = vunpack.c.l.b16 %v85
    %v432 = vunpack.c.l.b16 %v86
    %v433 = vunpack.c.l.b16 %v87
    %v434 = vunpack.c.l.b16 %v88
    %v435 = vunpack.c.l.b16 %v89
    %v436 = vunpack.c.l.b16 %v90
    %v437 = vunpack.c.l.b16 %v91
    %v438 = vunpack.c.l.b16 %v92
    %v439 = vunpack.c.l.b16 %v93
    %v440 = vunpack.c.l.b16 %v94
    %v441 = vunpack.c.l.b16 %v95
    %v442 = vunpack.c.l.b16 %v96
    %v443 = vunpack.c.l.b16 %v97
    %v444 = vunpack.c.l.b16 %v98
    %v445 = vunpack.c.l.b16 %v99
    %v446 = vunpack.c.l.b16 %v100
    %v447 = vunpack.c.l.b16 %v101
    %v448 = vunpack.c.l.b16 %v102
    %v449 = vunpack.c.l.b16 %v103
    %v450 = vunpack.c.l.b16 %v104
    %v451 = vunpack.c.l.b16 %v105
    %v452 = vunpack.c.l.b16 %v106
    %v453 = vunpack.c.l.b16 %v107
    %v454 = vunpack.c.l.b16 %v108
    %v455 = vunpack.c.l.b16 %v109
    %v456 = vunpack.c.l.b16 %v110
    %v457 = vunpack.c.l.b16 %v111
    %v458 = vunpack.c.l.b16 %v112
    %v459 = vunpack.c.l.b16 %v113
    %v460 = vunpack.c.l.b16 %v114
    %v461 = vunpack.c.l.b16 %v115
    %v462 = vunpack.c.l.b16 %v116
    %v463 = vunpack.c.l.b16 %v117
    %v464 = vunpack.c.l.b16 %v118
    %v465 = vpack.c.b16 %v418, %v417
    %v466 = vpack.c.b16 %v420, %v419
    %v467 = vpack.c.b16 %v422, %v421
    %v468 = vpack.c.b16 %v424, %v423
    %v469 = vpack.c.b16 %v426, %v425
    %v470 = vpack.c.b16 %v428, %v427
    %v471 = vpack.c.b16 %v430, %v429
    %v472 = vpack.c.b16 %v432, %v431
    %v473 = vpack.c.b16 %v434, %v433
    %v474 = vpack.c.b16 %v436, %v435
    %v475 = vpack.c.b16 %v438, %v437
    %v476 = vpack.c.b16 %v440, %v439
    %v477 = vpack.c.b16 %v442, %v441
    %v478 = vpack.c.b16 %v444, %v443
    %v479 = vpack.c.b16 %v446, %v445
    %v480 = vpack.c.b16 %v448, %v447
    %v481 = vpack.c.b16 %v450, %v449
    %v482 = vpack.c.b16 %v452, %v451
    %v483 = vpack.c.b16 %v454, %v453
    %v484 = vpack.c.b16 %v456, %v455
    %v485 = vpack.c.b16 %v458, %v457
    %v486 = vpack.c.b16 %v460, %v459
    %v487 = vpack.c.b16 %v462, %v461
    %v488 = vpack.c.b16 %v464, %v463
    %513 = vmatpush.bf16.msra.mxu0 %v472
    %514 = vmatpush.bf16.msra.mxu0 %v471
    %515 = vmatpush.bf16.msra.mxu0 %v470
    %516 = vmatpush.bf16.msra.mxu0 %v469
    %517 = vmatpush.bf16.msra.mxu0 %v468
    %518 = vmatpush.bf16.msra.mxu0 %v467
    %519 = vmatpush.bf16.msra.mxu0 %v466
    %520 = vmatpush.bf16.msra.mxu0 %v465
    %521 = vmatmul.bf16.gmra.mxu0 %v363
    %v522 = vpop.f32.mrf.mxu0
    %v523 = vadd.f32 %v358, %v522
    %v524 = vpop.f32.mrf.mxu0
    %525 = vdwg.mxu0
    %526 = vmatpush.bf16.msra.mxu0 %v480
    %527 = vmatpush.bf16.msra.mxu0 %v479
    %528 = vmatpush.bf16.msra.mxu0 %v478
    %529 = vmatpush.bf16.msra.mxu0 %v477
    %530 = vmatpush.bf16.msra.mxu0 %v476
    %531 = vmatpush.bf16.msra.mxu0 %v475
    %532 = vmatpush.bf16.msra.mxu0 %v474
    %533 = vmatpush.bf16.msra.mxu0 %v473
    %534 = vmatmul.bf16.gmra.mxu0 %v364
    %v535 = vpop.f32.mrf.mxu0
    %v536 = vadd.f32 %v523, %v535
    %v537 = vpop.f32.mrf.mxu0
    %538 = vdwg.mxu0
    %539 = vmatpush.bf16.msra.mxu0 %v488
    %540 = vmatpush.bf16.msra.mxu0 %v487
    %541 = vmatpush.bf16.msra.mxu0 %v486
    %542 = vmatpush.bf16.msra.mxu0 %v485
    %543 = vmatpush.bf16.msra.mxu0 %v484
    %544 = vmatpush.bf16.msra.mxu0 %v483
    %545 = vmatpush.bf16.msra.mxu0 %v482
    %546 = vmatpush.bf16.msra.mxu0 %v481
    %547 = vmatmul.bf16.gmra.mxu0 %v365
    %v548 = vpop.f32.mrf.mxu0
    %v549 = vadd.f32 %v536, %v548
    %v550 = vpop.f32.mrf.mxu0
    %551 = vdwg.mxu0
    %s552 = scalar_lea.vmem %s0, 12
    %v553 = vld [vmem:[%s552] sm:$0x7]
    %s554 = scalar_lea.vmem %s1, 384
    %v555 = vld [vmem:[%s554] sm:$0xf]
    %v556 = vld [vmem:[%s554 + $0x4] sm:$0xf]
    %v557 = vld [vmem:[%s554 + $0x8] sm:$0xf]
    %v558 = vld [vmem:[%s554 + $0xc] sm:$0xf]
    %v559 = vld [vmem:[%s554 + $0x10] sm:$0xf]
    %v560 = vld [vmem:[%s554 + $0x14] sm:$0xf]
    %v561 = vld [vmem:[%s554 + $0x18] sm:$0xf]
    %v562 = vld [vmem:[%s554 + $0x1c] sm:$0xf]
    %v563 = vld [vmem:[%s554 + $0x20] sm:$0xf]
    %v564 = vld [vmem:[%s554 + $0x24] sm:$0xf]
    %v565 = vld [vmem:[%s554 + $0x28] sm:$0xf]
    %v566 = vld [vmem:[%s554 + $0x2c] sm:$0xf]
    %v567 = vld [vmem:[%s554 + $0x30] sm:$0xf]
    %v568 = vld [vmem:[%s554 + $0x34] sm:$0xf]
    %v569 = vld [vmem:[%s554 + $0x38] sm:$0xf]
    %v570 = vld [vmem:[%s554 + $0x3c] sm:$0xf]
    %v571 = vld [vmem:[%s554 + $0x40] sm:$0xf]
    %v572 = vld [vmem:[%s554 + $0x44] sm:$0xf]
    %v573 = vld [vmem:[%s554 + $0x48] sm:$0xf]
    %v574 = vld [vmem:[%s554 + $0x4c] sm:$0xf]
    %v575 = vld [vmem:[%s554 + $0x50] sm:$0xf]
    %v576 = vld [vmem:[%s554 + $0x54] sm:$0xf]
    %v577 = vld [vmem:[%s554 + $0x58] sm:$0xf]
    %v578 = vld [vmem:[%s554 + $0x5c] sm:$0xf]
    %v579 = vld [vmem:[%s554 + $0x60] sm:$0xf]
    %v580 = vld [vmem:[%s554 + $0x64] sm:$0xf]
    %v581 = vld [vmem:[%s554 + $0x68] sm:$0xf]
    %v582 = vld [vmem:[%s554 + $0x6c] sm:$0xf]
    %v583 = vld [vmem:[%s554 + $0x70] sm:$0xf]
    %v584 = vld [vmem:[%s554 + $0x74] sm:$0xf]
    %v585 = vld [vmem:[%s554 + $0x78] sm:$0xf]
    %v586 = vld [vmem:[%s554 + $0x7c] sm:$0xf]
    %v587 = vld [vmem:[%s554 + $0x80] sm:$0xf]
    %v588 = vld [vmem:[%s554 + $0x84] sm:$0xf]
    %v589 = vld [vmem:[%s554 + $0x88] sm:$0xf]
    %v590 = vld [vmem:[%s554 + $0x8c] sm:$0xf]
    %v591 = vld [vmem:[%s554 + $0x90] sm:$0xf]
    %v592 = vld [vmem:[%s554 + $0x94] sm:$0xf]
    %v593 = vld [vmem:[%s554 + $0x98] sm:$0xf]
    %v594 = vld [vmem:[%s554 + $0x9c] sm:$0xf]
    %v595 = vld [vmem:[%s554 + $0xa0] sm:$0xf]
    %v596 = vld [vmem:[%s554 + $0xa4] sm:$0xf]
    %v597 = vld [vmem:[%s554 + $0xa8] sm:$0xf]
    %v598 = vld [vmem:[%s554 + $0xac] sm:$0xf]
    %v599 = vld [vmem:[%s554 + $0xb0] sm:$0xf]
    %v600 = vld [vmem:[%s554 + $0xb4] sm:$0xf]
    %v601 = vld [vmem:[%s554 + $0xb8] sm:$0xf]
    %v602 = vld [vmem:[%s554 + $0xbc] sm:$0xf]
    %604 = vst [vmem:[#allocation1] ss:$9 sm:$0xff] %v553
    %v605 = vld [vmem:[#allocation1] sm:$0xff]
    %v606 = vld [vmem:[#allocation1 + $0x9] sm:$0xff]
    %v607 = vld [vmem:[#allocation1 + $0x12] sm:$0xff]
    %v659 = vunpack.c.l.b16 %v555
    %v660 = vunpack.c.l.b16 %v556
    %v661 = vunpack.c.l.b16 %v557
    %v662 = vunpack.c.l.b16 %v558
    %v663 = vunpack.c.l.b16 %v559
    %v664 = vunpack.c.l.b16 %v560
    %v665 = vunpack.c.l.b16 %v561
    %v666 = vunpack.c.l.b16 %v562
    %v667 = vunpack.c.l.b16 %v563
    %v668 = vunpack.c.l.b16 %v564
    %v669 = vunpack.c.l.b16 %v565
    %v670 = vunpack.c.l.b16 %v566
    %v671 = vunpack.c.l.b16 %v567
    %v672 = vunpack.c.l.b16 %v568
    %v673 = vunpack.c.l.b16 %v569
    %v674 = vunpack.c.l.b16 %v570
    %v675 = vunpack.c.l.b16 %v571
    %v676 = vunpack.c.l.b16 %v572
    %v677 = vunpack.c.l.b16 %v573
    %v678 = vunpack.c.l.b16 %v574
    %v679 = vunpack.c.l.b16 %v575
    %v680 = vunpack.c.l.b16 %v576
    %v681 = vunpack.c.l.b16 %v577
    %v682 = vunpack.c.l.b16 %v578
    %v683 = vunpack.c.l.b16 %v579
    %v684 = vunpack.c.l.b16 %v580
    %v685 = vunpack.c.l.b16 %v581
    %v686 = vunpack.c.l.b16 %v582
    %v687 = vunpack.c.l.b16 %v583
    %v688 = vunpack.c.l.b16 %v584
    %v689 = vunpack.c.l.b16 %v585
    %v690 = vunpack.c.l.b16 %v586
    %v691 = vunpack.c.l.b16 %v587
    %v692 = vunpack.c.l.b16 %v588
    %v693 = vunpack.c.l.b16 %v589
    %v694 = vunpack.c.l.b16 %v590
    %v695 = vunpack.c.l.b16 %v591
    %v696 = vunpack.c.l.b16 %v592
    %v697 = vunpack.c.l.b16 %v593
    %v698 = vunpack.c.l.b16 %v594
    %v699 = vunpack.c.l.b16 %v595
    %v700 = vunpack.c.l.b16 %v596
    %v701 = vunpack.c.l.b16 %v597
    %v702 = vunpack.c.l.b16 %v598
    %v703 = vunpack.c.l.b16 %v599
    %v704 = vunpack.c.l.b16 %v600
    %v705 = vunpack.c.l.b16 %v601
    %v706 = vunpack.c.l.b16 %v602
    %v707 = vpack.c.b16 %v660, %v659
    %v708 = vpack.c.b16 %v662, %v661
    %v709 = vpack.c.b16 %v664, %v663
    %v710 = vpack.c.b16 %v666, %v665
    %v711 = vpack.c.b16 %v668, %v667
    %v712 = vpack.c.b16 %v670, %v669
    %v713 = vpack.c.b16 %v672, %v671
    %v714 = vpack.c.b16 %v674, %v673
    %v715 = vpack.c.b16 %v676, %v675
    %v716 = vpack.c.b16 %v678, %v677
    %v717 = vpack.c.b16 %v680, %v679
    %v718 = vpack.c.b16 %v682, %v681
    %v719 = vpack.c.b16 %v684, %v683
    %v720 = vpack.c.b16 %v686, %v685
    %v721 = vpack.c.b16 %v688, %v687
    %v722 = vpack.c.b16 %v690, %v689
    %v723 = vpack.c.b16 %v692, %v691
    %v724 = vpack.c.b16 %v694, %v693
    %v725 = vpack.c.b16 %v696, %v695
    %v726 = vpack.c.b16 %v698, %v697
    %v727 = vpack.c.b16 %v700, %v699
    %v728 = vpack.c.b16 %v702, %v701
    %v729 = vpack.c.b16 %v704, %v703
    %v730 = vpack.c.b16 %v706, %v705
    %755 = vmatpush.bf16.msra.mxu0 %v714
    %756 = vmatpush.bf16.msra.mxu0 %v713
    %757 = vmatpush.bf16.msra.mxu0 %v712
    %758 = vmatpush.bf16.msra.mxu0 %v711
    %759 = vmatpush.bf16.msra.mxu0 %v710
    %760 = vmatpush.bf16.msra.mxu0 %v709
    %761 = vmatpush.bf16.msra.mxu0 %v708
    %762 = vmatpush.bf16.msra.mxu0 %v707
    %763 = vmatmul.bf16.gmra.mxu0 %v605
    %v764 = vpop.f32.mrf.mxu0
    %v765 = vadd.f32 0.0, %v764
    %v766 = vpop.f32.mrf.mxu0
    %767 = vdwg.mxu0
    %768 = vmatpush.bf16.msra.mxu0 %v722
    %769 = vmatpush.bf16.msra.mxu0 %v721
    %770 = vmatpush.bf16.msra.mxu0 %v720
    %771 = vmatpush.bf16.msra.mxu0 %v719
    %772 = vmatpush.bf16.msra.mxu0 %v718
    %773 = vmatpush.bf16.msra.mxu0 %v717
    %774 = vmatpush.bf16.msra.mxu0 %v716
    %775 = vmatpush.bf16.msra.mxu0 %v715
    %776 = vmatmul.bf16.gmra.mxu0 %v606
    %v777 = vpop.f32.mrf.mxu0
    %v778 = vadd.f32 %v765, %v777
    %v779 = vpop.f32.mrf.mxu0
    %780 = vdwg.mxu0
    %781 = vmatpush.bf16.msra.mxu0 %v730
    %782 = vmatpush.bf16.msra.mxu0 %v729
    %783 = vmatpush.bf16.msra.mxu0 %v728
    %784 = vmatpush.bf16.msra.mxu0 %v727
    %785 = vmatpush.bf16.msra.mxu0 %v726
    %786 = vmatpush.bf16.msra.mxu0 %v725
    %787 = vmatpush.bf16.msra.mxu0 %v724
    %788 = vmatpush.bf16.msra.mxu0 %v723
    %789 = vmatmul.bf16.gmra.mxu0 %v607
    %v790 = vpop.f32.mrf.mxu0
    %v791 = vadd.f32 %v778, %v790
    %v792 = vpop.f32.mrf.mxu0
    %793 = vdwg.mxu0
    %v794 = vadd.f32 %v549, %v791
    %s795 = scalar_lea.vmem %s0, 18
    %v796 = vld [vmem:[%s795] sm:$0x7]
    %s797 = scalar_lea.vmem %s1, 576
    %v798 = vld [vmem:[%s797] sm:$0xf]
    %v799 = vld [vmem:[%s797 + $0x4] sm:$0xf]
    %v800 = vld [vmem:[%s797 + $0x8] sm:$0xf]
    %v801 = vld [vmem:[%s797 + $0xc] sm:$0xf]
    %v802 = vld [vmem:[%s797 + $0x10] sm:$0xf]
    %v803 = vld [vmem:[%s797 + $0x14] sm:$0xf]
    %v804 = vld [vmem:[%s797 + $0x18] sm:$0xf]
    %v805 = vld [vmem:[%s797 + $0x1c] sm:$0xf]
    %v806 = vld [vmem:[%s797 + $0x20] sm:$0xf]
    %v807 = vld [vmem:[%s797 + $0x24] sm:$0xf]
    %v808 = vld [vmem:[%s797 + $0x28] sm:$0xf]
    %v809 = vld [vmem:[%s797 + $0x2c] sm:$0xf]
    %v810 = vld [vmem:[%s797 + $0x30] sm:$0xf]
    %v811 = vld [vmem:[%s797 + $0x34] sm:$0xf]
    %v812 = vld [vmem:[%s797 + $0x38] sm:$0xf]
    %v813 = vld [vmem:[%s797 + $0x3c] sm:$0xf]
    %v814 = vld [vmem:[%s797 + $0x40] sm:$0xf]
    %v815 = vld [vmem:[%s797 + $0x44] sm:$0xf]
    %v816 = vld [vmem:[%s797 + $0x48] sm:$0xf]
    %v817 = vld [vmem:[%s797 + $0x4c] sm:$0xf]
    %v818 = vld [vmem:[%s797 + $0x50] sm:$0xf]
    %v819 = vld [vmem:[%s797 + $0x54] sm:$0xf]
    %v820 = vld [vmem:[%s797 + $0x58] sm:$0xf]
    %v821 = vld [vmem:[%s797 + $0x5c] sm:$0xf]
    %v822 = vld [vmem:[%s797 + $0x60] sm:$0xf]
    %v823 = vld [vmem:[%s797 + $0x64] sm:$0xf]
    %v824 = vld [vmem:[%s797 + $0x68] sm:$0xf]
    %v825 = vld [vmem:[%s797 + $0x6c] sm:$0xf]
    %v826 = vld [vmem:[%s797 + $0x70] sm:$0xf]
    %v827 = vld [vmem:[%s797 + $0x74] sm:$0xf]
    %v828 = vld [vmem:[%s797 + $0x78] sm:$0xf]
    %v829 = vld [vmem:[%s797 + $0x7c] sm:$0xf]
    %v830 = vld [vmem:[%s797 + $0x80] sm:$0xf]
    %v831 = vld [vmem:[%s797 + $0x84] sm:$0xf]
    %v832 = vld [vmem:[%s797 + $0x88] sm:$0xf]
    %v833 = vld [vmem:[%s797 + $0x8c] sm:$0xf]
    %v834 = vld [vmem:[%s797 + $0x90] sm:$0xf]
    %v835 = vld [vmem:[%s797 + $0x94] sm:$0xf]
    %v836 = vld [vmem:[%s797 + $0x98] sm:$0xf]
    %v837 = vld [vmem:[%s797 + $0x9c] sm:$0xf]
    %v838 = vld [vmem:[%s797 + $0xa0] sm:$0xf]
    %v839 = vld [vmem:[%s797 + $0xa4] sm:$0xf]
    %v840 = vld [vmem:[%s797 + $0xa8] sm:$0xf]
    %v841 = vld [vmem:[%s797 + $0xac] sm:$0xf]
    %v842 = vld [vmem:[%s797 + $0xb0] sm:$0xf]
    %v843 = vld [vmem:[%s797 + $0xb4] sm:$0xf]
    %v844 = vld [vmem:[%s797 + $0xb8] sm:$0xf]
    %v845 = vld [vmem:[%s797 + $0xbc] sm:$0xf]
    %847 = vst [vmem:[#allocation1] ss:$9 sm:$0xff] %v796
    %v848 = vld [vmem:[#allocation1] sm:$0xff]
    %v849 = vld [vmem:[#allocation1 + $0x9] sm:$0xff]
    %v850 = vld [vmem:[#allocation1 + $0x12] sm:$0xff]
    %v902 = vunpack.c.l.b16 %v798
    %v903 = vunpack.c.l.b16 %v799
    %v904 = vunpack.c.l.b16 %v800
    %v905 = vunpack.c.l.b16 %v801
    %v906 = vunpack.c.l.b16 %v802
    %v907 = vunpack.c.l.b16 %v803
    %v908 = vunpack.c.l.b16 %v804
    %v909 = vunpack.c.l.b16 %v805
    %v910 = vunpack.c.l.b16 %v806
    %v911 = vunpack.c.l.b16 %v807
    %v912 = vunpack.c.l.b16 %v808
    %v913 = vunpack.c.l.b16 %v809
    %v914 = vunpack.c.l.b16 %v810
    %v915 = vunpack.c.l.b16 %v811
    %v916 = vunpack.c.l.b16 %v812
    %v917 = vunpack.c.l.b16 %v813
    %v918 = vunpack.c.l.b16 %v814
    %v919 = vunpack.c.l.b16 %v815
    %v920 = vunpack.c.l.b16 %v816
    %v921 = vunpack.c.l.b16 %v817
    %v922 = vunpack.c.l.b16 %v818
    %v923 = vunpack.c.l.b16 %v819
    %v924 = vunpack.c.l.b16 %v820
    %v925 = vunpack.c.l.b16 %v821
    %v926 = vunpack.c.l.b16 %v822
    %v927 = vunpack.c.l.b16 %v823
    %v928 = vunpack.c.l.b16 %v824
    %v929 = vunpack.c.l.b16 %v825
    %v930 = vunpack.c.l.b16 %v826
    %v931 = vunpack.c.l.b16 %v827
    %v932 = vunpack.c.l.b16 %v828
    %v933 = vunpack.c.l.b16 %v829
    %v934 = vunpack.c.l.b16 %v830
    %v935 = vunpack.c.l.b16 %v831
    %v936 = vunpack.c.l.b16 %v832
    %v937 = vunpack.c.l.b16 %v833
    %v938 = vunpack.c.l.b16 %v834
    %v939 = vunpack.c.l.b16 %v835
    %v940 = vunpack.c.l.b16 %v836
    %v941 = vunpack.c.l.b16 %v837
    %v942 = vunpack.c.l.b16 %v838
    %v943 = vunpack.c.l.b16 %v839
    %v944 = vunpack.c.l.b16 %v840
    %v945 = vunpack.c.l.b16 %v841
    %v946 = vunpack.c.l.b16 %v842
    %v947 = vunpack.c.l.b16 %v843
    %v948 = vunpack.c.l.b16 %v844
    %v949 = vunpack.c.l.b16 %v845
    %v950 = vpack.c.b16 %v903, %v902
    %v951 = vpack.c.b16 %v905, %v904
    %v952 = vpack.c.b16 %v907, %v906
    %v953 = vpack.c.b16 %v909, %v908
    %v954 = vpack.c.b16 %v911, %v910
    %v955 = vpack.c.b16 %v913, %v912
    %v956 = vpack.c.b16 %v915, %v914
    %v957 = vpack.c.b16 %v917, %v916
    %v958 = vpack.c.b16 %v919, %v918
    %v959 = vpack.c.b16 %v921, %v920
    %v960 = vpack.c.b16 %v923, %v922
    %v961 = vpack.c.b16 %v925, %v924
    %v962 = vpack.c.b16 %v927, %v926
    %v963 = vpack.c.b16 %v929, %v928
    %v964 = vpack.c.b16 %v931, %v930
    %v965 = vpack.c.b16 %v933, %v932
    %v966 = vpack.c.b16 %v935, %v934
    %v967 = vpack.c.b16 %v937, %v936
    %v968 = vpack.c.b16 %v939, %v938
    %v969 = vpack.c.b16 %v941, %v940
    %v970 = vpack.c.b16 %v943, %v942
    %v971 = vpack.c.b16 %v945, %v944
    %v972 = vpack.c.b16 %v947, %v946
    %v973 = vpack.c.b16 %v949, %v948
    %998 = vmatpush.bf16.msra.mxu0 %v957
    %999 = vmatpush.bf16.msra.mxu0 %v956
    %1000 = vmatpush.bf16.msra.mxu0 %v955
    %1001 = vmatpush.bf16.msra.mxu0 %v954
    %1002 = vmatpush.bf16.msra.mxu0 %v953
    %1003 = vmatpush.bf16.msra.mxu0 %v952
    %1004 = vmatpush.bf16.msra.mxu0 %v951
    %1005 = vmatpush.bf16.msra.mxu0 %v950
    %1006 = vmatmul.bf16.gmra.mxu0 %v848
    %v1007 = vpop.f32.mrf.mxu0
    %v1008 = vadd.f32 0.0, %v1007
    %v1009 = vpop.f32.mrf.mxu0
    %1010 = vdwg.mxu0
    %1011 = vmatpush.bf16.msra.mxu0 %v965
    %1012 = vmatpush.bf16.msra.mxu0 %v964
    %1013 = vmatpush.bf16.msra.mxu0 %v963
    %1014 = vmatpush.bf16.msra.mxu0 %v962
    %1015 = vmatpush.bf16.msra.mxu0 %v961
    %1016 = vmatpush.bf16.msra.mxu0 %v960
    %1017 = vmatpush.bf16.msra.mxu0 %v959
    %1018 = vmatpush.bf16.msra.mxu0 %v958
    %1019 = vmatmul.bf16.gmra.mxu0 %v849
    %v1020 = vpop.f32.mrf.mxu0
    %v1021 = vadd.f32 %v1008, %v1020
    %v1022 = vpop.f32.mrf.mxu0
    %1023 = vdwg.mxu0
    %1024 = vmatpush.bf16.msra.mxu0 %v973
    %1025 = vmatpush.bf16.msra.mxu0 %v972
    %1026 = vmatpush.bf16.msra.mxu0 %v971
    %1027 = vmatpush.bf16.msra.mxu0 %v970
    %1028 = vmatpush.bf16.msra.mxu0 %v969
    %1029 = vmatpush.bf16.msra.mxu0 %v968
    %1030 = vmatpush.bf16.msra.mxu0 %v967
    %1031 = vmatpush.bf16.msra.mxu0 %v966
    %1032 = vmatmul.bf16.gmra.mxu0 %v850
    %v1033 = vpop.f32.mrf.mxu0
    %v1034 = vadd.f32 %v1021, %v1033
    %v1035 = vpop.f32.mrf.mxu0
    %1036 = vdwg.mxu0
    %v1037 = vadd.f32 %v794, %v1034
    %s1038 = scalar_lea.vmem %s0, 24
    %v1039 = vld [vmem:[%s1038] sm:$0x7]
    %s1040 = scalar_lea.vmem %s1, 768
    %v1041 = vld [vmem:[%s1040] sm:$0xf]
    %v1042 = vld [vmem:[%s1040 + $0x4] sm:$0xf]
    %v1043 = vld [vmem:[%s1040 + $0x8] sm:$0xf]
    %v1044 = vld [vmem:[%s1040 + $0xc] sm:$0xf]
    %v1045 = vld [vmem:[%s1040 + $0x10] sm:$0xf]
    %v1046 = vld [vmem:[%s1040 + $0x14] sm:$0xf]
    %v1047 = vld [vmem:[%s1040 + $0x18] sm:$0xf]
    %v1048 = vld [vmem:[%s1040 + $0x1c] sm:$0xf]
    %v1049 = vld [vmem:[%s1040 + $0x20] sm:$0xf]
    %v1050 = vld [vmem:[%s1040 + $0x24] sm:$0xf]
    %v1051 = vld [vmem:[%s1040 + $0x28] sm:$0xf]
    %v1052 = vld [vmem:[%s1040 + $0x2c] sm:$0xf]
    %v1053 = vld [vmem:[%s1040 + $0x30] sm:$0xf]
    %v1054 = vld [vmem:[%s1040 + $0x34] sm:$0xf]
    %v1055 = vld [vmem:[%s1040 + $0x38] sm:$0xf]
    %v1056 = vld [vmem:[%s1040 + $0x3c] sm:$0xf]
    %v1057 = vld [vmem:[%s1040 + $0x40] sm:$0xf]
    %v1058 = vld [vmem:[%s1040 + $0x44] sm:$0xf]
    %v1059 = vld [vmem:[%s1040 + $0x48] sm:$0xf]
    %v1060 = vld [vmem:[%s1040 + $0x4c] sm:$0xf]
    %v1061 = vld [vmem:[%s1040 + $0x50] sm:$0xf]
    %v1062 = vld [vmem:[%s1040 + $0x54] sm:$0xf]
    %v1063 = vld [vmem:[%s1040 + $0x58] sm:$0xf]
    %v1064 = vld [vmem:[%s1040 + $0x5c] sm:$0xf]
    %v1065 = vld [vmem:[%s1040 + $0x60] sm:$0xf]
    %v1066 = vld [vmem:[%s1040 + $0x64] sm:$0xf]
    %v1067 = vld [vmem:[%s1040 + $0x68] sm:$0xf]
    %v1068 = vld [vmem:[%s1040 + $0x6c] sm:$0xf]
    %v1069 = vld [vmem:[%s1040 + $0x70] sm:$0xf]
    %v1070 = vld [vmem:[%s1040 + $0x74] sm:$0xf]
    %v1071 = vld [vmem:[%s1040 + $0x78] sm:$0xf]
    %v1072 = vld [vmem:[%s1040 + $0x7c] sm:$0xf]
    %v1073 = vld [vmem:[%s1040 + $0x80] sm:$0xf]
    %v1074 = vld [vmem:[%s1040 + $0x84] sm:$0xf]
    %v1075 = vld [vmem:[%s1040 + $0x88] sm:$0xf]
    %v1076 = vld [vmem:[%s1040 + $0x8c] sm:$0xf]
    %v1077 = vld [vmem:[%s1040 + $0x90] sm:$0xf]
    %v1078 = vld [vmem:[%s1040 + $0x94] sm:$0xf]
    %v1079 = vld [vmem:[%s1040 + $0x98] sm:$0xf]
    %v1080 = vld [vmem:[%s1040 + $0x9c] sm:$0xf]
    %v1081 = vld [vmem:[%s1040 + $0xa0] sm:$0xf]
    %v1082 = vld [vmem:[%s1040 + $0xa4] sm:$0xf]
    %v1083 = vld [vmem:[%s1040 + $0xa8] sm:$0xf]
    %v1084 = vld [vmem:[%s1040 + $0xac] sm:$0xf]
    %v1085 = vld [vmem:[%s1040 + $0xb0] sm:$0xf]
    %v1086 = vld [vmem:[%s1040 + $0xb4] sm:$0xf]
    %v1087 = vld [vmem:[%s1040 + $0xb8] sm:$0xf]
    %v1088 = vld [vmem:[%s1040 + $0xbc] sm:$0xf]
    %1090 = vst [vmem:[#allocation1] ss:$9 sm:$0xff] %v1039
    %v1091 = vld [vmem:[#allocation1] sm:$0xff]
    %v1092 = vld [vmem:[#allocation1 + $0x9] sm:$0xff]
    %v1093 = vld [vmem:[#allocation1 + $0x12] sm:$0xff]
    %v1145 = vunpack.c.l.b16 %v1041
    %v1146 = vunpack.c.l.b16 %v1042
    %v1147 = vunpack.c.l.b16 %v1043
    %v1148 = vunpack.c.l.b16 %v1044
    %v1149 = vunpack.c.l.b16 %v1045
    %v1150 = vunpack.c.l.b16 %v1046
    %v1151 = vunpack.c.l.b16 %v1047
    %v1152 = vunpack.c.l.b16 %v1048
    %v1153 = vunpack.c.l.b16 %v1049
    %v1154 = vunpack.c.l.b16 %v1050
    %v1155 = vunpack.c.l.b16 %v1051
    %v1156 = vunpack.c.l.b16 %v1052
    %v1157 = vunpack.c.l.b16 %v1053
    %v1158 = vunpack.c.l.b16 %v1054
    %v1159 = vunpack.c.l.b16 %v1055
    %v1160 = vunpack.c.l.b16 %v1056
    %v1161 = vunpack.c.l.b16 %v1057
    %v1162 = vunpack.c.l.b16 %v1058
    %v1163 = vunpack.c.l.b16 %v1059
    %v1164 = vunpack.c.l.b16 %v1060
    %v1165 = vunpack.c.l.b16 %v1061
    %v1166 = vunpack.c.l.b16 %v1062
    %v1167 = vunpack.c.l.b16 %v1063
    %v1168 = vunpack.c.l.b16 %v1064
    %v1169 = vunpack.c.l.b16 %v1065
    %v1170 = vunpack.c.l.b16 %v1066
    %v1171 = vunpack.c.l.b16 %v1067
    %v1172 = vunpack.c.l.b16 %v1068
    %v1173 = vunpack.c.l.b16 %v1069
    %v1174 = vunpack.c.l.b16 %v1070
    %v1175 = vunpack.c.l.b16 %v1071
    %v1176 = vunpack.c.l.b16 %v1072
    %v1177 = vunpack.c.l.b16 %v1073
    %v1178 = vunpack.c.l.b16 %v1074
    %v1179 = vunpack.c.l.b16 %v1075
    %v1180 = vunpack.c.l.b16 %v1076
    %v1181 = vunpack.c.l.b16 %v1077
    %v1182 = vunpack.c.l.b16 %v1078
    %v1183 = vunpack.c.l.b16 %v1079
    %v1184 = vunpack.c.l.b16 %v1080
    %v1185 = vunpack.c.l.b16 %v1081
    %v1186 = vunpack.c.l.b16 %v1082
    %v1187 = vunpack.c.l.b16 %v1083
    %v1188 = vunpack.c.l.b16 %v1084
    %v1189 = vunpack.c.l.b16 %v1085
    %v1190 = vunpack.c.l.b16 %v1086
    %v1191 = vunpack.c.l.b16 %v1087
    %v1192 = vunpack.c.l.b16 %v1088
    %v1193 = vpack.c.b16 %v1146, %v1145
    %v1194 = vpack.c.b16 %v1148, %v1147
    %v1195 = vpack.c.b16 %v1150, %v1149
    %v1196 = vpack.c.b16 %v1152, %v1151
    %v1197 = vpack.c.b16 %v1154, %v1153
    %v1198 = vpack.c.b16 %v1156, %v1155
    %v1199 = vpack.c.b16 %v1158, %v1157
    %v1200 = vpack.c.b16 %v1160, %v1159
    %v1201 = vpack.c.b16 %v1162, %v1161
    %v1202 = vpack.c.b16 %v1164, %v1163
    %v1203 = vpack.c.b16 %v1166, %v1165
    %v1204 = vpack.c.b16 %v1168, %v1167
    %v1205 = vpack.c.b16 %v1170, %v1169
    %v1206 = vpack.c.b16 %v1172, %v1171
    %v1207 = vpack.c.b16 %v1174, %v1173
    %v1208 = vpack.c.b16 %v1176, %v1175
    %v1209 = vpack.c.b16 %v1178, %v1177
    %v1210 = vpack.c.b16 %v1180, %v1179
    %v1211 = vpack.c.b16 %v1182, %v1181
    %v1212 = vpack.c.b16 %v1184, %v1183
    %v1213 = vpack.c.b16 %v1186, %v1185
    %v1214 = vpack.c.b16 %v1188, %v1187
    %v1215 = vpack.c.b16 %v1190, %v1189
    %v1216 = vpack.c.b16 %v1192, %v1191
    %1241 = vmatpush.bf16.msra.mxu0 %v1200
    %1242 = vmatpush.bf16.msra.mxu0 %v1199
    %1243 = vmatpush.bf16.msra.mxu0 %v1198
    %1244 = vmatpush.bf16.msra.mxu0 %v1197
    %1245 = vmatpush.bf16.msra.mxu0 %v1196
    %1246 = vmatpush.bf16.msra.mxu0 %v1195
    %1247 = vmatpush.bf16.msra.mxu0 %v1194
    %1248 = vmatpush.bf16.msra.mxu0 %v1193
    %1249 = vmatmul.bf16.gmra.mxu0 %v1091
    %v1250 = vpop.f32.mrf.mxu0
    %v1251 = vadd.f32 0.0, %v1250
    %v1252 = vpop.f32.mrf.mxu0
    %1253 = vdwg.mxu0
    %1254 = vmatpush.bf16.msra.mxu0 %v1208
    %1255 = vmatpush.bf16.msra.mxu0 %v1207
    %1256 = vmatpush.bf16.msra.mxu0 %v1206
    %1257 = vmatpush.bf16.msra.mxu0 %v1205
    %1258 = vmatpush.bf16.msra.mxu0 %v1204
    %1259 = vmatpush.bf16.msra.mxu0 %v1203
    %1260 = vmatpush.bf16.msra.mxu0 %v1202
    %1261 = vmatpush.bf16.msra.mxu0 %v1201
    %1262 = vmatmul.bf16.gmra.mxu0 %v1092
    %v1263 = vpop.f32.mrf.mxu0
    %v1264 = vadd.f32 %v1251, %v1263
    %v1265 = vpop.f32.mrf.mxu0
    %1266 = vdwg.mxu0
    %1267 = vmatpush.bf16.msra.mxu0 %v1216
    %1268 = vmatpush.bf16.msra.mxu0 %v1215
    %1269 = vmatpush.bf16.msra.mxu0 %v1214
    %1270 = vmatpush.bf16.msra.mxu0 %v1213
    %1271 = vmatpush.bf16.msra.mxu0 %v1212
    %1272 = vmatpush.bf16.msra.mxu0 %v1211
    %1273 = vmatpush.bf16.msra.mxu0 %v1210
    %1274 = vmatpush.bf16.msra.mxu0 %v1209
    %1275 = vmatmul.bf16.gmra.mxu0 %v1093
    %v1276 = vpop.f32.mrf.mxu0
    %v1277 = vadd.f32 %v1264, %v1276
    %v1278 = vpop.f32.mrf.mxu0
    %1279 = vdwg.mxu0
    %v1280 = vadd.f32 %v1037, %v1277
    %v1282 = vperm.slane %v52, 0
    %v1284 = vadd.f32 %v1280, %v1282
    %v1285 = vmax.f32 %v1284, 0.0
    %v1286 = vpack.c.bf16 %v1285, %v1285
    %v1288 = vperm.slane %v69, 0
    %v1306 = vunpack.c.l.b16 %v53
    %v1307 = vunpack.c.l.b16 %v54
    %v1308 = vunpack.c.l.b16 %v55
    %v1309 = vunpack.c.l.b16 %v56
    %v1310 = vunpack.c.l.b16 %v57
    %v1311 = vunpack.c.l.b16 %v58
    %v1312 = vunpack.c.l.b16 %v59
    %v1313 = vunpack.c.l.b16 %v60
    %v1314 = vunpack.c.l.b16 %v61
    %v1315 = vunpack.c.l.b16 %v62
    %v1316 = vunpack.c.l.b16 %v63
    %v1317 = vunpack.c.l.b16 %v64
    %v1318 = vunpack.c.l.b16 %v65
    %v1319 = vunpack.c.l.b16 %v66
    %v1320 = vunpack.c.l.b16 %v67
    %v1321 = vunpack.c.l.b16 %v68
    %v1322 = vpack.c.b16 %v1307, %v1306
    %v1323 = vpack.c.b16 %v1309, %v1308
    %v1324 = vpack.c.b16 %v1311, %v1310
    %v1325 = vpack.c.b16 %v1313, %v1312
    %v1326 = vpack.c.b16 %v1315, %v1314
    %v1327 = vpack.c.b16 %v1317, %v1316
    %v1328 = vpack.c.b16 %v1319, %v1318
    %v1329 = vpack.c.b16 %v1321, %v1320
    %1338 = vmatpush.bf16.msra.mxu0 %v1329
    %1339 = vmatpush.bf16.msra.mxu0 %v1328
    %1340 = vmatpush.bf16.msra.mxu0 %v1327
    %1341 = vmatpush.bf16.msra.mxu0 %v1326
    %1342 = vmatpush.bf16.msra.mxu0 %v1325
    %1343 = vmatpush.bf16.msra.mxu0 %v1324
    %1344 = vmatpush.bf16.msra.mxu0 %v1323
    %1345 = vmatpush.bf16.msra.mxu0 %v1322
    %1346 = vmatmul.bf16.gmra.mxu0 %v1286
    %v1347 = vpop.f32.mrf.mxu0
    %v1348 = vadd.f32 %v1288, %v1347
    %v1349 = vpop.f32.mrf.mxu0
    %1350 = vdwg.mxu0
    %v1351 = vmax.f32 %v1348, 0.0
    %v1352 = vpack.c.bf16 %v1351, %v1351
    %v1353 = vld [vmem:[%s5] sm:$0xff]
    %v1354 = vld [vmem:[%s5 + $0x8] sm:$0xff]
    %v1355 = vld [vmem:[%s5 + $0x10] sm:$0xff]
    %v1356 = vld [vmem:[%s5 + $0x18] sm:$0xff]
    %v1357 = vld [vmem:[%s0 + $0x1] sm:$0x7]
    %v1358 = vld [vmem:[%s119 + $0x1] sm:$0x7]
    %1360 = vst [vmem:[#allocation1] ss:$9 sm:$0xff] %v1358
    %v1361 = vld [vmem:[#allocation1] sm:$0xff]
    %v1362 = vld [vmem:[#allocation1 + $0x9] sm:$0xff]
    %v1363 = vld [vmem:[#allocation1 + $0x12] sm:$0xff]
    %1367 = vmatpush.bf16.msra.mxu0 %v281
    %1368 = vmatpush.bf16.msra.mxu0 %v280
    %1369 = vmatpush.bf16.msra.mxu0 %v279
    %1370 = vmatpush.bf16.msra.mxu0 %v278
    %1371 = vmatpush.bf16.msra.mxu0 %v277
    %1372 = vmatpush.bf16.msra.mxu0 %v276
    %1373 = vmatpush.bf16.msra.mxu0 %v275
    %1374 = vmatpush.bf16.msra.mxu0 %v274
    %1375 = vmatmul.bf16.gmra.mxu0 %v1361
    %v1376 = vpop.f32.mrf.mxu0
    %v1377 = vadd.f32 0.0, %v1376
    %v1378 = vpop.f32.mrf.mxu0
    %1379 = vdwg.mxu0
    %1380 = vmatpush.bf16.msra.mxu0 %v289
    %1381 = vmatpush.bf16.msra.mxu0 %v288
    %1382 = vmatpush.bf16.msra.mxu0 %v287
    %1383 = vmatpush.bf16.msra.mxu0 %v286
    %1384 = vmatpush.bf16.msra.mxu0 %v285
    %1385 = vmatpush.bf16.msra.mxu0 %v284
    %1386 = vmatpush.bf16.msra.mxu0 %v283
    %1387 = vmatpush.bf16.msra.mxu0 %v282
    %1388 = vmatmul.bf16.gmra.mxu0 %v1362
    %v1389 = vpop.f32.mrf.mxu0
    %v1390 = vadd.f32 %v1377, %v1389
    %v1391 = vpop.f32.mrf.mxu0
    %1392 = vdwg.mxu0
    %1393 = vmatpush.bf16.msra.mxu0 %v297
    %1394 = vmatpush.bf16.msra.mxu0 %v296
    %1395 = vmatpush.bf16.msra.mxu0 %v295
    %1396 = vmatpush.bf16.msra.mxu0 %v294
    %1397 = vmatpush.bf16.msra.mxu0 %v293
    %1398 = vmatpush.bf16.msra.mxu0 %v292
    %1399 = vmatpush.bf16.msra.mxu0 %v291
    %1400 = vmatpush.bf16.msra.mxu0 %v290
    %1401 = vmatmul.bf16.gmra.mxu0 %v1363
    %v1402 = vpop.f32.mrf.mxu0
    %v1403 = vadd.f32 %v1390, %v1402
    %v1404 = vpop.f32.mrf.mxu0
    %1405 = vdwg.mxu0
    %1407 = vst [vmem:[#allocation1] ss:$9 sm:$0xff] %v1357
    %v1408 = vld [vmem:[#allocation1] sm:$0xff]
    %v1409 = vld [vmem:[#allocation1 + $0x9] sm:$0xff]
    %v1410 = vld [vmem:[#allocation1 + $0x12] sm:$0xff]
    %1414 = vmatpush.bf16.msra.mxu0 %v472
    %1415 = vmatpush.bf16.msra.mxu0 %v471
    %1416 = vmatpush.bf16.msra.mxu0 %v470
    %1417 = vmatpush.bf16.msra.mxu0 %v469
    %1418 = vmatpush.bf16.msra.mxu0 %v468
    %1419 = vmatpush.bf16.msra.mxu0 %v467
    %1420 = vmatpush.bf16.msra.mxu0 %v466
    %1421 = vmatpush.bf16.msra.mxu0 %v465
    %1422 = vmatmul.bf16.gmra.mxu0 %v1408
    %v1423 = vpop.f32.mrf.mxu0
    %v1424 = vadd.f32 %v1403, %v1423
    %v1425 = vpop.f32.mrf.mxu0
    %1426 = vdwg.mxu0
    %1427 = vmatpush.bf16.msra.mxu0 %v480
    %1428 = vmatpush.bf16.msra.mxu0 %v479
    %1429 = vmatpush.bf16.msra.mxu0 %v478
    %1430 = vmatpush.bf16.msra.mxu0 %v477
    %1431 = vmatpush.bf16.msra.mxu0 %v476
    %1432 = vmatpush.bf16.msra.mxu0 %v475
    %1433 = vmatpush.bf16.msra.mxu0 %v474
    %1434 = vmatpush.bf16.msra.mxu0 %v473
    %1435 = vmatmul.bf16.gmra.mxu0 %v1409
    %v1436 = vpop.f32.mrf.mxu0
    %v1437 = vadd.f32 %v1424, %v1436
    %v1438 = vpop.f32.mrf.mxu0
    %1439 = vdwg.mxu0
    %1440 = vmatpush.bf16.msra.mxu0 %v488
    %1441 = vmatpush.bf16.msra.mxu0 %v487
    %1442 = vmatpush.bf16.msra.mxu0 %v486
    %1443 = vmatpush.bf16.msra.mxu0 %v485
    %1444 = vmatpush.bf16.msra.mxu0 %v484
    %1445 = vmatpush.bf16.msra.mxu0 %v483
    %1446 = vmatpush.bf16.msra.mxu0 %v482
    %1447 = vmatpush.bf16.msra.mxu0 %v481
    %1448 = vmatmul.bf16.gmra.mxu0 %v1410
    %v1449 = vpop.f32.mrf.mxu0
    %v1450 = vadd.f32 %v1437, %v1449
    %v1451 = vpop.f32.mrf.mxu0
    %1452 = vdwg.mxu0
    %v1453 = vld [vmem:[%s552 + $0x1] sm:$0x7]
    %1455 = vst [vmem:[#allocation1] ss:$9 sm:$0xff] %v1453
    %v1456 = vld [vmem:[#allocation1] sm:$0xff]
    %v1457 = vld [vmem:[#allocation1 + $0x9] sm:$0xff]
    %v1458 = vld [vmem:[#allocation1 + $0x12] sm:$0xff]
    %1462 = vmatpush.bf16.msra.mxu0 %v714
    %1463 = vmatpush.bf16.msra.mxu0 %v713
    %1464 = vmatpush.bf16.msra.mxu0 %v712
    %1465 = vmatpush.bf16.msra.mxu0 %v711
    %1466 = vmatpush.bf16.msra.mxu0 %v710
    %1467 = vmatpush.bf16.msra.mxu0 %v709
    %1468 = vmatpush.bf16.msra.mxu0 %v708
    %1469 = vmatpush.bf16.msra.mxu0 %v707
    %1470 = vmatmul.bf16.gmra.mxu0 %v1456
    %v1471 = vpop.f32.mrf.mxu0
    %v1472 = vadd.f32 0.0, %v1471
    %v1473 = vpop.f32.mrf.mxu0
    %1474 = vdwg.mxu0
    %1475 = vmatpush.bf16.msra.mxu0 %v722
    %1476 = vmatpush.bf16.msra.mxu0 %v721
    %1477 = vmatpush.bf16.msra.mxu0 %v720
    %1478 = vmatpush.bf16.msra.mxu0 %v719
    %1479 = vmatpush.bf16.msra.mxu0 %v718
    %1480 = vmatpush.bf16.msra.mxu0 %v717
    %1481 = vmatpush.bf16.msra.mxu0 %v716
    %1482 = vmatpush.bf16.msra.mxu0 %v715
    %1483 = vmatmul.bf16.gmra.mxu0 %v1457
    %v1484 = vpop.f32.mrf.mxu0
    %v1485 = vadd.f32 %v1472, %v1484
    %v1486 = vpop.f32.mrf.mxu0
    %1487 = vdwg.mxu0
    %1488 = vmatpush.bf16.msra.mxu0 %v730
    %1489 = vmatpush.bf16.msra.mxu0 %v729
    %1490 = vmatpush.bf16.msra.mxu0 %v728
    %1491 = vmatpush.bf16.msra.mxu0 %v727
    %1492 = vmatpush.bf16.msra.mxu0 %v726
    %1493 = vmatpush.bf16.msra.mxu0 %v725
    %1494 = vmatpush.bf16.msra.mxu0 %v724
    %1495 = vmatpush.bf16.msra.mxu0 %v723
    %1496 = vmatmul.bf16.gmra.mxu0 %v1458
    %v1497 = vpop.f32.mrf.mxu0
    %v1498 = vadd.f32 %v1485, %v1497
    %v1499 = vpop.f32.mrf.mxu0
    %1500 = vdwg.mxu0
    %v1501 = vadd.f32 %v1450, %v1498
    %v1502 = vld [vmem:[%s795 + $0x1] sm:$0x7]
    %1504 = vst [vmem:[#allocation1] ss:$9 sm:$0xff] %v1502
    %v1505 = vld [vmem:[#allocation1] sm:$0xff]
    %v1506 = vld [vmem:[#allocation1 + $0x9] sm:$0xff]
    %v1507 = vld [vmem:[#allocation1 + $0x12] sm:$0xff]
    %1511 = vmatpush.bf16.msra.mxu0 %v957
    %1512 = vmatpush.bf16.msra.mxu0 %v956
    %1513 = vmatpush.bf16.msra.mxu0 %v955
    %1514 = vmatpush.bf16.msra.mxu0 %v954
    %1515 = vmatpush.bf16.msra.mxu0 %v953
    %1516 = vmatpush.bf16.msra.mxu0 %v952
    %1517 = vmatpush.bf16.msra.mxu0 %v951
    %1518 = vmatpush.bf16.msra.mxu0 %v950
    %1519 = vmatmul.bf16.gmra.mxu0 %v1505
    %v1520 = vpop.f32.mrf.mxu0
    %v1521 = vadd.f32 0.0, %v1520
    %v1522 = vpop.f32.mrf.mxu0
    %1523 = vdwg.mxu0
    %1524 = vmatpush.bf16.msra.mxu0 %v965
    %1525 = vmatpush.bf16.msra.mxu0 %v964
    %1526 = vmatpush.bf16.msra.mxu0 %v963
    %1527 = vmatpush.bf16.msra.mxu0 %v962
    %1528 = vmatpush.bf16.msra.mxu0 %v961
    %1529 = vmatpush.bf16.msra.mxu0 %v960
    %1530 = vmatpush.bf16.msra.mxu0 %v959
    %1531 = vmatpush.bf16.msra.mxu0 %v958
    %1532 = vmatmul.bf16.gmra.mxu0 %v1506
    %v1533 = vpop.f32.mrf.mxu0
    %v1534 = vadd.f32 %v1521, %v1533
    %v1535 = vpop.f32.mrf.mxu0
    %1536 = vdwg.mxu0
    %1537 = vmatpush.bf16.msra.mxu0 %v973
    %1538 = vmatpush.bf16.msra.mxu0 %v972
    %1539 = vmatpush.bf16.msra.mxu0 %v971
    %1540 = vmatpush.bf16.msra.mxu0 %v970
    %1541 = vmatpush.bf16.msra.mxu0 %v969
    %1542 = vmatpush.bf16.msra.mxu0 %v968
    %1543 = vmatpush.bf16.msra.mxu0 %v967
    %1544 = vmatpush.bf16.msra.mxu0 %v966
    %1545 = vmatmul.bf16.gmra.mxu0 %v1507
    %v1546 = vpop.f32.mrf.mxu0
    %v1547 = vadd.f32 %v1534, %v1546
    %v1548 = vpop.f32.mrf.mxu0
    %1549 = vdwg.mxu0
    %v1550 = vadd.f32 %v1501, %v1547
    %v1551 = vld [vmem:[%s1038 + $0x1] sm:$0x7]
    %1553 = vst [vmem:[#allocation1] ss:$9 sm:$0xff] %v1551
    %v1554 = vld [vmem:[#allocation1] sm:$0xff]
    %v1555 = vld [vmem:[#allocation1 + $0x9] sm:$0xff]
    %v1556 = vld [vmem:[#allocation1 + $0x12] sm:$0xff]
    %1560 = vmatpush.bf16.msra.mxu0 %v1200
    %1561 = vmatpush.bf16.msra.mxu0 %v1199
    %1562 = vmatpush.bf16.msra.mxu0 %v1198
    %1563 = vmatpush.bf16.msra.mxu0 %v1197
    %1564 = vmatpush.bf16.msra.mxu0 %v1196
    %1565 = vmatpush.bf16.msra.mxu0 %v1195
    %1566 = vmatpush.bf16.msra.mxu0 %v1194
    %1567 = vmatpush.bf16.msra.mxu0 %v1193
    %1568 = vmatmul.bf16.gmra.mxu0 %v1554
    %v1569 = vpop.f32.mrf.mxu0
    %v1570 = vadd.f32 0.0, %v1569
    %v1571 = vpop.f32.mrf.mxu0
    %1572 = vdwg.mxu0
    %1573 = vmatpush.bf16.msra.mxu0 %v1208
    %1574 = vmatpush.bf16.msra.mxu0 %v1207
    %1575 = vmatpush.bf16.msra.mxu0 %v1206
    %1576 = vmatpush.bf16.msra.mxu0 %v1205
    %1577 = vmatpush.bf16.msra.mxu0 %v1204
    %1578 = vmatpush.bf16.msra.mxu0 %v1203
    %1579 = vmatpush.bf16.msra.mxu0 %v1202
    %1580 = vmatpush.bf16.msra.mxu0 %v1201
    %1581 = vmatmul.bf16.gmra.mxu0 %v1555
    %v1582 = vpop.f32.mrf.mxu0
    %v1583 = vadd.f32 %v1570, %v1582
    %v1584 = vpop.f32.mrf.mxu0
    %1585 = vdwg.mxu0
    %1586 = vmatpush.bf16.msra.mxu0 %v1216
    %1587 = vmatpush.bf16.msra.mxu0 %v1215
    %1588 = vmatpush.bf16.msra.mxu0 %v1214
    %1589 = vmatpush.bf16.msra.mxu0 %v1213
    %1590 = vmatpush.bf16.msra.mxu0 %v1212
    %1591 = vmatpush.bf16.msra.mxu0 %v1211
    %1592 = vmatpush.bf16.msra.mxu0 %v1210
    %1593 = vmatpush.bf16.msra.mxu0 %v1209
    %1594 = vmatmul.bf16.gmra.mxu0 %v1556
    %v1595 = vpop.f32.mrf.mxu0
    %v1596 = vadd.f32 %v1583, %v1595
    %v1597 = vpop.f32.mrf.mxu0
    %1598 = vdwg.mxu0
    %v1599 = vadd.f32 %v1550, %v1596
    %v1600 = vadd.f32 %v1599, %v1282
    %v1601 = vmax.f32 %v1600, 0.0
    %v1602 = vpack.c.bf16 %v1601, %v1601
    %1603 = vmatpush.bf16.msra.mxu0 %v1329
    %1604 = vmatpush.bf16.msra.mxu0 %v1328
    %1605 = vmatpush.bf16.msra.mxu0 %v1327
    %1606 = vmatpush.bf16.msra.mxu0 %v1326
    %1607 = vmatpush.bf16.msra.mxu0 %v1325
    %1608 = vmatpush.bf16.msra.mxu0 %v1324
    %1609 = vmatpush.bf16.msra.mxu0 %v1323
    %1610 = vmatpush.bf16.msra.mxu0 %v1322
    %1611 = vmatmul.bf16.gmra.mxu0 %v1602
    %v1612 = vpop.f32.mrf.mxu0
    %v1613 = vadd.f32 %v1288, %v1612
    %v1614 = vpop.f32.mrf.mxu0
    %1615 = vdwg.mxu0
    %v1616 = vmax.f32 %v1613, 0.0
    %v1617 = vpack.c.bf16 %v1616, %v1616
    %s1618 = scalar_lea.vmem %s5, 32
    %v1619 = vld [vmem:[%s1618] sm:$0xff]
    %v1620 = vld [vmem:[%s1618 + $0x8] sm:$0xff]
    %v1621 = vld [vmem:[%s1618 + $0x10] sm:$0xff]
    %v1622 = vld [vmem:[%s1618 + $0x18] sm:$0xff]
    %v1627 = vunpack.c.l.b16 %v1619
    %v1628 = vunpack.c.h.b16 %v1619
    %v1629 = vunpack.c.l.b16 %v1620
    %v1630 = vunpack.c.h.b16 %v1620
    %v1631 = vunpack.c.l.b16 %v1621
    %v1632 = vunpack.c.h.b16 %v1621
    %v1633 = vunpack.c.l.b16 %v1622
    %v1634 = vunpack.c.h.b16 %v1622
    %v1635 = vpack.c.b16 %v1629, %v1627
    %v1636 = vpack.c.b16 %v1630, %v1628
    %v1637 = vpack.c.b16 %v1633, %v1631
    %v1638 = vpack.c.b16 %v1634, %v1632
    %vm1643 = vcmask 261120
    %v1645 = vsel %vm1643, %v1617, 0
    %1647 = vmatpush.bf16.msra.mxu0 0
    %1648 = vmatpush.bf16.msra.mxu0 0
    %1649 = vmatpush.bf16.msra.mxu0 0
    %1650 = vmatpush.bf16.msra.mxu0 0
    %1651 = vmatpush.bf16.msra.mxu0 0
    %1652 = vmatpush.bf16.msra.mxu0 0
    %1653 = vmatpush.bf16.msra.mxu0 %v1637
    %1654 = vmatpush.bf16.msra.mxu0 %v1635
    %1655 = vmatmul.bf16.gmra.mxu0 %v1645
    %v1656 = vpop.f32.mrf.mxu0
    %v1657 = vadd.f32 0.0, %v1656
    %v1658 = vpop.f32.mrf.mxu0
    %1659 = vdwg.mxu0
    %1660 = vmatpush.bf16.msra.mxu0 0
    %1661 = vmatpush.bf16.msra.mxu0 0
    %1662 = vmatpush.bf16.msra.mxu0 0
    %1663 = vmatpush.bf16.msra.mxu0 0
    %1664 = vmatpush.bf16.msra.mxu0 0
    %1665 = vmatpush.bf16.msra.mxu0 0
    %1666 = vmatpush.bf16.msra.mxu0 %v1638
    %1667 = vmatpush.bf16.msra.mxu0 %v1636
    %1668 = vmatmul.bf16.gmra.mxu0 %v1645
    %v1669 = vpop.f32.mrf.mxu0
    %v1670 = vadd.f32 0.0, %v1669
    %v1671 = vpop.f32.mrf.mxu0
    %1672 = vdwg.mxu0
    %v1677 = vunpack.c.l.b16 %v1353
    %v1678 = vunpack.c.h.b16 %v1353
    %v1679 = vunpack.c.l.b16 %v1354
    %v1680 = vunpack.c.h.b16 %v1354
    %v1681 = vunpack.c.l.b16 %v1355
    %v1682 = vunpack.c.h.b16 %v1355
    %v1683 = vunpack.c.l.b16 %v1356
    %v1684 = vunpack.c.h.b16 %v1356
    %v1685 = vpack.c.b16 %v1679, %v1677
    %v1686 = vpack.c.b16 %v1680, %v1678
    %v1687 = vpack.c.b16 %v1683, %v1681
    %v1688 = vpack.c.b16 %v1684, %v1682
    %v1694 = vsel %vm1643, %v1352, 0
    %1696 = vmatpush.bf16.msra.mxu0 0
    %1697 = vmatpush.bf16.msra.mxu0 0
    %1698 = vmatpush.bf16.msra.mxu0 0
    %1699 = vmatpush.bf16.msra.mxu0 0
    %1700 = vmatpush.bf16.msra.mxu0 0
    %1701 = vmatpush.bf16.msra.mxu0 0
    %1702 = vmatpush.bf16.msra.mxu0 %v1687
    %1703 = vmatpush.bf16.msra.mxu0 %v1685
    %1704 = vmatmul.bf16.gmra.mxu0 %v1694
    %v1705 = vpop.f32.mrf.mxu0
    %v1706 = vadd.f32 %v1657, %v1705
    %v1707 = vpop.f32.mrf.mxu0
    %1708 = vdwg.mxu0
    %1709 = vmatpush.bf16.msra.mxu0 0
    %1710 = vmatpush.bf16.msra.mxu0 0
    %1711 = vmatpush.bf16.msra.mxu0 0
    %1712 = vmatpush.bf16.msra.mxu0 0
    %1713 = vmatpush.bf16.msra.mxu0 0
    %1714 = vmatpush.bf16.msra.mxu0 0
    %1715 = vmatpush.bf16.msra.mxu0 %v1688
    %1716 = vmatpush.bf16.msra.mxu0 %v1686
    %1717 = vmatmul.bf16.gmra.mxu0 %v1694
    %v1718 = vpop.f32.mrf.mxu0
    %v1719 = vadd.f32 %v1670, %v1718
    %v1720 = vpop.f32.mrf.mxu0
    %1721 = vdwg.mxu0
    %v1722 = vld [vmem:[%s0 + $0x2] sm:$0x7]
    %v1723 = vld [vmem:[%s119 + $0x2] sm:$0x7]
    %1725 = vst [vmem:[#allocation1] ss:$9 sm:$0xff] %v1723
    %v1726 = vld [vmem:[#allocation1] sm:$0xff]
    %v1727 = vld [vmem:[#allocation1 + $0x9] sm:$0xff]
    %v1728 = vld [vmem:[#allocation1 + $0x12] sm:$0xff]
    %1732 = vmatpush.bf16.msra.mxu0 %v281
    %1733 = vmatpush.bf16.msra.mxu0 %v280
    %1734 = vmatpush.bf16.msra.mxu0 %v279
    %1735 = vmatpush.bf16.msra.mxu0 %v278
    %1736 = vmatpush.bf16.msra.mxu0 %v277
    %1737 = vmatpush.bf16.msra.mxu0 %v276
    %1738 = vmatpush.bf16.msra.mxu0 %v275
    %1739 = vmatpush.bf16.msra.mxu0 %v274
    %1740 = vmatmul.bf16.gmra.mxu0 %v1726
    %v1741 = vpop.f32.mrf.mxu0
    %v1742 = vadd.f32 0.0, %v1741
    %v1743 = vpop.f32.mrf.mxu0
    %1744 = vdwg.mxu0
    %1745 = vmatpush.bf16.msra.mxu0 %v289
    %1746 = vmatpush.bf16.msra.mxu0 %v288
    %1747 = vmatpush.bf16.msra.mxu0 %v287
    %1748 = vmatpush.bf16.msra.mxu0 %v286
    %1749 = vmatpush.bf16.msra.mxu0 %v285
    %1750 = vmatpush.bf16.msra.mxu0 %v284
    %1751 = vmatpush.bf16.msra.mxu0 %v283
    %1752 = vmatpush.bf16.msra.mxu0 %v282
    %1753 = vmatmul.bf16.gmra.mxu0 %v1727
    %v1754 = vpop.f32.mrf.mxu0
    %v1755 = vadd.f32 %v1742, %v1754
    %v1756 = vpop.f32.mrf.mxu0
    %1757 = vdwg.mxu0
    %1758 = vmatpush.bf16.msra.mxu0 %v297
    %1759 = vmatpush.bf16.msra.mxu0 %v296
    %1760 = vmatpush.bf16.msra.mxu0 %v295
    %1761 = vmatpush.bf16.msra.mxu0 %v294
    %1762 = vmatpush.bf16.msra.mxu0 %v293
    %1763 = vmatpush.bf16.msra.mxu0 %v292
    %1764 = vmatpush.bf16.msra.mxu0 %v291
    %1765 = vmatpush.bf16.msra.mxu0 %v290
    %1766 = vmatmul.bf16.gmra.mxu0 %v1728
    %v1767 = vpop.f32.mrf.mxu0
    %v1768 = vadd.f32 %v1755, %v1767
    %v1769 = vpop.f32.mrf.mxu0
    %1770 = vdwg.mxu0
    %1772 = vst [vmem:[#allocation1] ss:$9 sm:$0xff] %v1722
    %v1773 = vld [vmem:[#allocation1] sm:$0xff]
    %v1774 = vld [vmem:[#allocation1 + $0x9] sm:$0xff]
    %v1775 = vld [vmem:[#allocation1 + $0x12] sm:$0xff]
    %1779 = vmatpush.bf16.msra.mxu0 %v472
    %1780 = vmatpush.bf16.msra.mxu0 %v471
    %1781 = vmatpush.bf16.msra.mxu0 %v470
    %1782 = vmatpush.bf16.msra.mxu0 %v469
    %1783 = vmatpush.bf16.msra.mxu0 %v468
    %1784 = vmatpush.bf16.msra.mxu0 %v467
    %1785 = vmatpush.bf16.msra.mxu0 %v466
    %1786 = vmatpush.bf16.msra.mxu0 %v465
    %1787 = vmatmul.bf16.gmra.mxu0 %v1773
    %v1788 = vpop.f32.mrf.mxu0
    %v1789 = vadd.f32 %v1768, %v1788
    %v1790 = vpop.f32.mrf.mxu0
    %1791 = vdwg.mxu0
    %1792 = vmatpush.bf16.msra.mxu0 %v480
    %1793 = vmatpush.bf16.msra.mxu0 %v479
    %1794 = vmatpush.bf16.msra.mxu0 %v478
    %1795 = vmatpush.bf16.msra.mxu0 %v477
    %1796 = vmatpush.bf16.msra.mxu0 %v476
    %1797 = vmatpush.bf16.msra.mxu0 %v475
    %1798 = vmatpush.bf16.msra.mxu0 %v474
    %1799 = vmatpush.bf16.msra.mxu0 %v473
    %1800 = vmatmul.bf16.gmra.mxu0 %v1774
    %v1801 = vpop.f32.mrf.mxu0
    %v1802 = vadd.f32 %v1789, %v1801
    %v1803 = vpop.f32.mrf.mxu0
    %1804 = vdwg.mxu0
    %1805 = vmatpush.bf16.msra.mxu0 %v488
    %1806 = vmatpush.bf16.msra.mxu0 %v487
    %1807 = vmatpush.bf16.msra.mxu0 %v486
    %1808 = vmatpush.bf16.msra.mxu0 %v485
    %1809 = vmatpush.bf16.msra.mxu0 %v484
    %1810 = vmatpush.bf16.msra.mxu0 %v483
    %1811 = vmatpush.bf16.msra.mxu0 %v482
    %1812 = vmatpush.bf16.msra.mxu0 %v481
    %1813 = vmatmul.bf16.gmra.mxu0 %v1775
    %v1814 = vpop.f32.mrf.mxu0
    %v1815 = vadd.f32 %v1802, %v1814
    %v1816 = vpop.f32.mrf.mxu0
    %1817 = vdwg.mxu0
    %v1818 = vld [vmem:[%s552 + $0x2] sm:$0x7]
    %1820 = vst [vmem:[#allocation1] ss:$9 sm:$0xff] %v1818
    %v1821 = vld [vmem:[#allocation1] sm:$0xff]
    %v1822 = vld [vmem:[#allocation1 + $0x9] sm:$0xff]
    %v1823 = vld [vmem:[#allocation1 + $0x12] sm:$0xff]
    %1827 = vmatpush.bf16.msra.mxu0 %v714
    %1828 = vmatpush.bf16.msra.mxu0 %v713
    %1829 = vmatpush.bf16.msra.mxu0 %v712
    %1830 = vmatpush.bf16.msra.mxu0 %v711
    %1831 = vmatpush.bf16.msra.mxu0 %v710
    %1832 = vmatpush.bf16.msra.mxu0 %v709
    %1833 = vmatpush.bf16.msra.mxu0 %v708
    %1834 = vmatpush.bf16.msra.mxu0 %v707
    %1835 = vmatmul.bf16.gmra.mxu0 %v1821
    %v1836 = vpop.f32.mrf.mxu0
    %v1837 = vadd.f32 0.0, %v1836
    %v1838 = vpop.f32.mrf.mxu0
    %1839 = vdwg.mxu0
    %1840 = vmatpush.bf16.msra.mxu0 %v722
    %1841 = vmatpush.bf16.msra.mxu0 %v721
    %1842 = vmatpush.bf16.msra.mxu0 %v720
    %1843 = vmatpush.bf16.msra.mxu0 %v719
    %1844 = vmatpush.bf16.msra.mxu0 %v718
    %1845 = vmatpush.bf16.msra.mxu0 %v717
    %1846 = vmatpush.bf16.msra.mxu0 %v716
    %1847 = vmatpush.bf16.msra.mxu0 %v715
    %1848 = vmatmul.bf16.gmra.mxu0 %v1822
    %v1849 = vpop.f32.mrf.mxu0
    %v1850 = vadd.f32 %v1837, %v1849
    %v1851 = vpop.f32.mrf.mxu0
    %1852 = vdwg.mxu0
    %1853 = vmatpush.bf16.msra.mxu0 %v730
    %1854 = vmatpush.bf16.msra.mxu0 %v729
    %1855 = vmatpush.bf16.msra.mxu0 %v728
    %1856 = vmatpush.bf16.msra.mxu0 %v727
    %1857 = vmatpush.bf16.msra.mxu0 %v726
    %1858 = vmatpush.bf16.msra.mxu0 %v725
    %1859 = vmatpush.bf16.msra.mxu0 %v724
    %1860 = vmatpush.bf16.msra.mxu0 %v723
    %1861 = vmatmul.bf16.gmra.mxu0 %v1823
    %v1862 = vpop.f32.mrf.mxu0
    %v1863 = vadd.f32 %v1850, %v1862
    %v1864 = vpop.f32.mrf.mxu0
    %1865 = vdwg.mxu0
    %v1866 = vadd.f32 %v1815, %v1863
    %v1867 = vld [vmem:[%s795 + $0x2] sm:$0x7]
    %1869 = vst [vmem:[#allocation1] ss:$9 sm:$0xff] %v1867
    %v1870 = vld [vmem:[#allocation1] sm:$0xff]
    %v1871 = vld [vmem:[#allocation1 + $0x9] sm:$0xff]
    %v1872 = vld [vmem:[#allocation1 + $0x12] sm:$0xff]
    %1876 = vmatpush.bf16.msra.mxu0 %v957
    %1877 = vmatpush.bf16.msra.mxu0 %v956
    %1878 = vmatpush.bf16.msra.mxu0 %v955
    %1879 = vmatpush.bf16.msra.mxu0 %v954
    %1880 = vmatpush.bf16.msra.mxu0 %v953
    %1881 = vmatpush.bf16.msra.mxu0 %v952
    %1882 = vmatpush.bf16.msra.mxu0 %v951
    %1883 = vmatpush.bf16.msra.mxu0 %v950
    %1884 = vmatmul.bf16.gmra.mxu0 %v1870
    %v1885 = vpop.f32.mrf.mxu0
    %v1886 = vadd.f32 0.0, %v1885
    %v1887 = vpop.f32.mrf.mxu0
    %1888 = vdwg.mxu0
    %1889 = vmatpush.bf16.msra.mxu0 %v965
    %1890 = vmatpush.bf16.msra.mxu0 %v964
    %1891 = vmatpush.bf16.msra.mxu0 %v963
    %1892 = vmatpush.bf16.msra.mxu0 %v962
    %1893 = vmatpush.bf16.msra.mxu0 %v961
    %1894 = vmatpush.bf16.msra.mxu0 %v960
    %1895 = vmatpush.bf16.msra.mxu0 %v959
    %1896 = vmatpush.bf16.msra.mxu0 %v958
    %1897 = vmatmul.bf16.gmra.mxu0 %v1871
    %v1898 = vpop.f32.mrf.mxu0
    %v1899 = vadd.f32 %v1886, %v1898
    %v1900 = vpop.f32.mrf.mxu0
    %1901 = vdwg.mxu0
    %1902 = vmatpush.bf16.msra.mxu0 %v973
    %1903 = vmatpush.bf16.msra.mxu0 %v972
    %1904 = vmatpush.bf16.msra.mxu0 %v971
    %1905 = vmatpush.bf16.msra.mxu0 %v970
    %1906 = vmatpush.bf16.msra.mxu0 %v969
    %1907 = vmatpush.bf16.msra.mxu0 %v968
    %1908 = vmatpush.bf16.msra.mxu0 %v967
    %1909 = vmatpush.bf16.msra.mxu0 %v966
    %1910 = vmatmul.bf16.gmra.mxu0 %v1872
    %v1911 = vpop.f32.mrf.mxu0
    %v1912 = vadd.f32 %v1899, %v1911
    %v1913 = vpop.f32.mrf.mxu0
    %1914 = vdwg.mxu0
    %v1915 = vadd.f32 %v1866, %v1912
    %v1916 = vld [vmem:[%s1038 + $0x2] sm:$0x7]
    %1918 = vst [vmem:[#allocation1] ss:$9 sm:$0xff] %v1916
    %v1919 = vld [vmem:[#allocation1] sm:$0xff]
    %v1920 = vld [vmem:[#allocation1 + $0x9] sm:$0xff]
    %v1921 = vld [vmem:[#allocation1 + $0x12] sm:$0xff]
    %1925 = vmatpush.bf16.msra.mxu0 %v1200
    %1926 = vmatpush.bf16.msra.mxu0 %v1199
    %1927 = vmatpush.bf16.msra.mxu0 %v1198
    %1928 = vmatpush.bf16.msra.mxu0 %v1197
    %1929 = vmatpush.bf16.msra.mxu0 %v1196
    %1930 = vmatpush.bf16.msra.mxu0 %v1195
    %1931 = vmatpush.bf16.msra.mxu0 %v1194
    %1932 = vmatpush.bf16.msra.mxu0 %v1193
    %1933 = vmatmul.bf16.gmra.mxu0 %v1919
    %v1934 = vpop.f32.mrf.mxu0
    %v1935 = vadd.f32 0.0, %v1934
    %v1936 = vpop.f32.mrf.mxu0
    %1937 = vdwg.mxu0
    %1938 = vmatpush.bf16.msra.mxu0 %v1208
    %1939 = vmatpush.bf16.msra.mxu0 %v1207
    %1940 = vmatpush.bf16.msra.mxu0 %v1206
    %1941 = vmatpush.bf16.msra.mxu0 %v1205
    %1942 = vmatpush.bf16.msra.mxu0 %v1204
    %1943 = vmatpush.bf16.msra.mxu0 %v1203
    %1944 = vmatpush.bf16.msra.mxu0 %v1202
    %1945 = vmatpush.bf16.msra.mxu0 %v1201
    %1946 = vmatmul.bf16.gmra.mxu0 %v1920
    %v1947 = vpop.f32.mrf.mxu0
    %v1948 = vadd.f32 %v1935, %v1947
    %v1949 = vpop.f32.mrf.mxu0
    %1950 = vdwg.mxu0
    %1951 = vmatpush.bf16.msra.mxu0 %v1216
    %1952 = vmatpush.bf16.msra.mxu0 %v1215
    %1953 = vmatpush.bf16.msra.mxu0 %v1214
    %1954 = vmatpush.bf16.msra.mxu0 %v1213
    %1955 = vmatpush.bf16.msra.mxu0 %v1212
    %1956 = vmatpush.bf16.msra.mxu0 %v1211
    %1957 = vmatpush.bf16.msra.mxu0 %v1210
    %1958 = vmatpush.bf16.msra.mxu0 %v1209
    %1959 = vmatmul.bf16.gmra.mxu0 %v1921
    %v1960 = vpop.f32.mrf.mxu0
    %v1961 = vadd.f32 %v1948, %v1960
    %v1962 = vpop.f32.mrf.mxu0
    %1963 = vdwg.mxu0
    %v1964 = vadd.f32 %v1915, %v1961
    %v1965 = vadd.f32 %v1964, %v1282
    %v1966 = vmax.f32 %v1965, 0.0
    %v1967 = vpack.c.bf16 %v1966, %v1966
    %1968 = vmatpush.bf16.msra.mxu0 %v1329
    %1969 = vmatpush.bf16.msra.mxu0 %v1328
    %1970 = vmatpush.bf16.msra.mxu0 %v1327
    %1971 = vmatpush.bf16.msra.mxu0 %v1326
    %1972 = vmatpush.bf16.msra.mxu0 %v1325
    %1973 = vmatpush.bf16.msra.mxu0 %v1324
    %1974 = vmatpush.bf16.msra.mxu0 %v1323
    %1975 = vmatpush.bf16.msra.mxu0 %v1322
    %1976 = vmatmul.bf16.gmra.mxu0 %v1967
    %v1977 = vpop.f32.mrf.mxu0
    %v1978 = vadd.f32 %v1288, %v1977
    %v1979 = vpop.f32.mrf.mxu0
    %1980 = vdwg.mxu0
    %v1981 = vmax.f32 %v1978, 0.0
    %v1982 = vpack.c.bf16 %v1981, %v1981
    %s1983 = scalar_lea.vmem %s5, 64
    %v1984 = vld [vmem:[%s1983] sm:$0xff]
    %v1985 = vld [vmem:[%s1983 + $0x8] sm:$0xff]
    %v1986 = vld [vmem:[%s1983 + $0x10] sm:$0xff]
    %v1987 = vld [vmem:[%s1983 + $0x18] sm:$0xff]
    %v1992 = vunpack.c.l.b16 %v1984
    %v1993 = vunpack.c.h.b16 %v1984
    %v1994 = vunpack.c.l.b16 %v1985
    %v1995 = vunpack.c.h.b16 %v1985
    %v1996 = vunpack.c.l.b16 %v1986
    %v1997 = vunpack.c.h.b16 %v1986
    %v1998 = vunpack.c.l.b16 %v1987
    %v1999 = vunpack.c.h.b16 %v1987
    %v2000 = vpack.c.b16 %v1994, %v1992
    %v2001 = vpack.c.b16 %v1995, %v1993
    %v2002 = vpack.c.b16 %v1998, %v1996
    %v2003 = vpack.c.b16 %v1999, %v1997
    %v2009 = vsel %vm1643, %v1982, 0
    %2011 = vmatpush.bf16.msra.mxu0 0
    %2012 = vmatpush.bf16.msra.mxu0 0
    %2013 = vmatpush.bf16.msra.mxu0 0
    %2014 = vmatpush.bf16.msra.mxu0 0
    %2015 = vmatpush.bf16.msra.mxu0 0
    %2016 = vmatpush.bf16.msra.mxu0 0
    %2017 = vmatpush.bf16.msra.mxu0 %v2002
    %2018 = vmatpush.bf16.msra.mxu0 %v2000
    %2019 = vmatmul.bf16.gmra.mxu0 %v2009
    %v2020 = vpop.f32.mrf.mxu0
    %v2021 = vadd.f32 0.0, %v2020
    %v2022 = vpop.f32.mrf.mxu0
    %2023 = vdwg.mxu0
    %2024 = vmatpush.bf16.msra.mxu0 0
    %2025 = vmatpush.bf16.msra.mxu0 0
    %2026 = vmatpush.bf16.msra.mxu0 0
    %2027 = vmatpush.bf16.msra.mxu0 0
    %2028 = vmatpush.bf16.msra.mxu0 0
    %2029 = vmatpush.bf16.msra.mxu0 0
    %2030 = vmatpush.bf16.msra.mxu0 %v2003
    %2031 = vmatpush.bf16.msra.mxu0 %v2001
    %2032 = vmatmul.bf16.gmra.mxu0 %v2009
    %v2033 = vpop.f32.mrf.mxu0
    %v2034 = vadd.f32 0.0, %v2033
    %v2035 = vpop.f32.mrf.mxu0
    %2036 = vdwg.mxu0
    %v2037 = vadd.f32 %v1706, %v2021
    %v2038 = vadd.f32 %v1719, %v2034
    %v2039 = vld [vmem:[%s0 + $0x3] sm:$0x7]
    %v2040 = vld [vmem:[%s119 + $0x3] sm:$0x7]
    %2042 = vst [vmem:[#allocation1] ss:$9 sm:$0xff] %v2040
    %v2043 = vld [vmem:[#allocation1] sm:$0xff]
    %v2044 = vld [vmem:[#allocation1 + $0x9] sm:$0xff]
    %v2045 = vld [vmem:[#allocation1 + $0x12] sm:$0xff]
    %2049 = vmatpush.bf16.msra.mxu0 %v281
    %2050 = vmatpush.bf16.msra.mxu0 %v280
    %2051 = vmatpush.bf16.msra.mxu0 %v279
    %2052 = vmatpush.bf16.msra.mxu0 %v278
    %2053 = vmatpush.bf16.msra.mxu0 %v277
    %2054 = vmatpush.bf16.msra.mxu0 %v276
    %2055 = vmatpush.bf16.msra.mxu0 %v275
    %2056 = vmatpush.bf16.msra.mxu0 %v274
    %2057 = vmatmul.bf16.gmra.mxu0 %v2043
    %v2058 = vpop.f32.mrf.mxu0
    %v2059 = vadd.f32 0.0, %v2058
    %v2060 = vpop.f32.mrf.mxu0
    %2061 = vdwg.mxu0
    %2062 = vmatpush.bf16.msra.mxu0 %v289
    %2063 = vmatpush.bf16.msra.mxu0 %v288
    %2064 = vmatpush.bf16.msra.mxu0 %v287
    %2065 = vmatpush.bf16.msra.mxu0 %v286
    %2066 = vmatpush.bf16.msra.mxu0 %v285
    %2067 = vmatpush.bf16.msra.mxu0 %v284
    %2068 = vmatpush.bf16.msra.mxu0 %v283
    %2069 = vmatpush.bf16.msra.mxu0 %v282
    %2070 = vmatmul.bf16.gmra.mxu0 %v2044
    %v2071 = vpop.f32.mrf.mxu0
    %v2072 = vadd.f32 %v2059, %v2071
    %v2073 = vpop.f32.mrf.mxu0
    %2074 = vdwg.mxu0
    %2075 = vmatpush.bf16.msra.mxu0 %v297
    %2076 = vmatpush.bf16.msra.mxu0 %v296
    %2077 = vmatpush.bf16.msra.mxu0 %v295
    %2078 = vmatpush.bf16.msra.mxu0 %v294
    %2079 = vmatpush.bf16.msra.mxu0 %v293
    %2080 = vmatpush.bf16.msra.mxu0 %v292
    %2081 = vmatpush.bf16.msra.mxu0 %v291
    %2082 = vmatpush.bf16.msra.mxu0 %v290
    %2083 = vmatmul.bf16.gmra.mxu0 %v2045
    %v2084 = vpop.f32.mrf.mxu0
    %v2085 = vadd.f32 %v2072, %v2084
    %v2086 = vpop.f32.mrf.mxu0
    %2087 = vdwg.mxu0
    %2089 = vst [vmem:[#allocation1] ss:$9 sm:$0xff] %v2039
    %v2090 = vld [vmem:[#allocation1] sm:$0xff]
    %v2091 = vld [vmem:[#allocation1 + $0x9] sm:$0xff]
    %v2092 = vld [vmem:[#allocation1 + $0x12] sm:$0xff]
    %2096 = vmatpush.bf16.msra.mxu0 %v472
    %2097 = vmatpush.bf16.msra.mxu0 %v471
    %2098 = vmatpush.bf16.msra.mxu0 %v470
    %2099 = vmatpush.bf16.msra.mxu0 %v469
    %2100 = vmatpush.bf16.msra.mxu0 %v468
    %2101 = vmatpush.bf16.msra.mxu0 %v467
    %2102 = vmatpush.bf16.msra.mxu0 %v466
    %2103 = vmatpush.bf16.msra.mxu0 %v465
    %2104 = vmatmul.bf16.gmra.mxu0 %v2090
    %v2105 = vpop.f32.mrf.mxu0
    %v2106 = vadd.f32 %v2085, %v2105
    %v2107 = vpop.f32.mrf.mxu0
    %2108 = vdwg.mxu0
    %2109 = vmatpush.bf16.msra.mxu0 %v480
    %2110 = vmatpush.bf16.msra.mxu0 %v479
    %2111 = vmatpush.bf16.msra.mxu0 %v478
    %2112 = vmatpush.bf16.msra.mxu0 %v477
    %2113 = vmatpush.bf16.msra.mxu0 %v476
    %2114 = vmatpush.bf16.msra.mxu0 %v475
    %2115 = vmatpush.bf16.msra.mxu0 %v474
    %2116 = vmatpush.bf16.msra.mxu0 %v473
    %2117 = vmatmul.bf16.gmra.mxu0 %v2091
    %v2118 = vpop.f32.mrf.mxu0
    %v2119 = vadd.f32 %v2106, %v2118
    %v2120 = vpop.f32.mrf.mxu0
    %2121 = vdwg.mxu0
    %2122 = vmatpush.bf16.msra.mxu0 %v488
    %2123 = vmatpush.bf16.msra.mxu0 %v487
    %2124 = vmatpush.bf16.msra.mxu0 %v486
    %2125 = vmatpush.bf16.msra.mxu0 %v485
    %2126 = vmatpush.bf16.msra.mxu0 %v484
    %2127 = vmatpush.bf16.msra.mxu0 %v483
    %2128 = vmatpush.bf16.msra.mxu0 %v482
    %2129 = vmatpush.bf16.msra.mxu0 %v481
    %2130 = vmatmul.bf16.gmra.mxu0 %v2092
    %v2131 = vpop.f32.mrf.mxu0
    %v2132 = vadd.f32 %v2119, %v2131
    %v2133 = vpop.f32.mrf.mxu0
    %2134 = vdwg.mxu0
    %v2135 = vld [vmem:[%s552 + $0x3] sm:$0x7]
    %2137 = vst [vmem:[#allocation1] ss:$9 sm:$0xff] %v2135
    %v2138 = vld [vmem:[#allocation1] sm:$0xff]
    %v2139 = vld [vmem:[#allocation1 + $0x9] sm:$0xff]
    %v2140 = vld [vmem:[#allocation1 + $0x12] sm:$0xff]
    %2144 = vmatpush.bf16.msra.mxu0 %v714
    %2145 = vmatpush.bf16.msra.mxu0 %v713
    %2146 = vmatpush.bf16.msra.mxu0 %v712
    %2147 = vmatpush.bf16.msra.mxu0 %v711
    %2148 = vmatpush.bf16.msra.mxu0 %v710
    %2149 = vmatpush.bf16.msra.mxu0 %v709
    %2150 = vmatpush.bf16.msra.mxu0 %v708
    %2151 = vmatpush.bf16.msra.mxu0 %v707
    %2152 = vmatmul.bf16.gmra.mxu0 %v2138
    %v2153 = vpop.f32.mrf.mxu0
    %v2154 = vadd.f32 0.0, %v2153
    %v2155 = vpop.f32.mrf.mxu0
    %2156 = vdwg.mxu0
    %2157 = vmatpush.bf16.msra.mxu0 %v722
    %2158 = vmatpush.bf16.msra.mxu0 %v721
    %2159 = vmatpush.bf16.msra.mxu0 %v720
    %2160 = vmatpush.bf16.msra.mxu0 %v719
    %2161 = vmatpush.bf16.msra.mxu0 %v718
    %2162 = vmatpush.bf16.msra.mxu0 %v717
    %2163 = vmatpush.bf16.msra.mxu0 %v716
    %2164 = vmatpush.bf16.msra.mxu0 %v715
    %2165 = vmatmul.bf16.gmra.mxu0 %v2139
    %v2166 = vpop.f32.mrf.mxu0
    %v2167 = vadd.f32 %v2154, %v2166
    %v2168 = vpop.f32.mrf.mxu0
    %2169 = vdwg.mxu0
    %2170 = vmatpush.bf16.msra.mxu0 %v730
    %2171 = vmatpush.bf16.msra.mxu0 %v729
    %2172 = vmatpush.bf16.msra.mxu0 %v728
    %2173 = vmatpush.bf16.msra.mxu0 %v727
    %2174 = vmatpush.bf16.msra.mxu0 %v726
    %2175 = vmatpush.bf16.msra.mxu0 %v725
    %2176 = vmatpush.bf16.msra.mxu0 %v724
    %2177 = vmatpush.bf16.msra.mxu0 %v723
    %2178 = vmatmul.bf16.gmra.mxu0 %v2140
    %v2179 = vpop.f32.mrf.mxu0
    %v2180 = vadd.f32 %v2167, %v2179
    %v2181 = vpop.f32.mrf.mxu0
    %2182 = vdwg.mxu0
    %v2183 = vadd.f32 %v2132, %v2180
    %v2184 = vld [vmem:[%s795 + $0x3] sm:$0x7]
    %2186 = vst [vmem:[#allocation1] ss:$9 sm:$0xff] %v2184
    %v2187 = vld [vmem:[#allocation1] sm:$0xff]
    %v2188 = vld [vmem:[#allocation1 + $0x9] sm:$0xff]
    %v2189 = vld [vmem:[#allocation1 + $0x12] sm:$0xff]
    %2193 = vmatpush.bf16.msra.mxu0 %v957
    %2194 = vmatpush.bf16.msra.mxu0 %v956
    %2195 = vmatpush.bf16.msra.mxu0 %v955
    %2196 = vmatpush.bf16.msra.mxu0 %v954
    %2197 = vmatpush.bf16.msra.mxu0 %v953
    %2198 = vmatpush.bf16.msra.mxu0 %v952
    %2199 = vmatpush.bf16.msra.mxu0 %v951
    %2200 = vmatpush.bf16.msra.mxu0 %v950
    %2201 = vmatmul.bf16.gmra.mxu0 %v2187
    %v2202 = vpop.f32.mrf.mxu0
    %v2203 = vadd.f32 0.0, %v2202
    %v2204 = vpop.f32.mrf.mxu0
    %2205 = vdwg.mxu0
    %2206 = vmatpush.bf16.msra.mxu0 %v965
    %2207 = vmatpush.bf16.msra.mxu0 %v964
    %2208 = vmatpush.bf16.msra.mxu0 %v963
    %2209 = vmatpush.bf16.msra.mxu0 %v962
    %2210 = vmatpush.bf16.msra.mxu0 %v961
    %2211 = vmatpush.bf16.msra.mxu0 %v960
    %2212 = vmatpush.bf16.msra.mxu0 %v959
    %2213 = vmatpush.bf16.msra.mxu0 %v958
    %2214 = vmatmul.bf16.gmra.mxu0 %v2188
    %v2215 = vpop.f32.mrf.mxu0
    %v2216 = vadd.f32 %v2203, %v2215
    %v2217 = vpop.f32.mrf.mxu0
    %2218 = vdwg.mxu0
    %2219 = vmatpush.bf16.msra.mxu0 %v973
    %2220 = vmatpush.bf16.msra.mxu0 %v972
    %2221 = vmatpush.bf16.msra.mxu0 %v971
    %2222 = vmatpush.bf16.msra.mxu0 %v970
    %2223 = vmatpush.bf16.msra.mxu0 %v969
    %2224 = vmatpush.bf16.msra.mxu0 %v968
    %2225 = vmatpush.bf16.msra.mxu0 %v967
    %2226 = vmatpush.bf16.msra.mxu0 %v966
    %2227 = vmatmul.bf16.gmra.mxu0 %v2189
    %v2228 = vpop.f32.mrf.mxu0
    %v2229 = vadd.f32 %v2216, %v2228
    %v2230 = vpop.f32.mrf.mxu0
    %2231 = vdwg.mxu0
    %v2232 = vadd.f32 %v2183, %v2229
    %v2233 = vld [vmem:[%s1038 + $0x3] sm:$0x7]
    %2235 = vst [vmem:[#allocation1] ss:$9 sm:$0xff] %v2233
    %v2236 = vld [vmem:[#allocation1] sm:$0xff]
    %v2237 = vld [vmem:[#allocation1 + $0x9] sm:$0xff]
    %v2238 = vld [vmem:[#allocation1 + $0x12] sm:$0xff]
    %2242 = vmatpush.bf16.msra.mxu0 %v1200
    %2243 = vmatpush.bf16.msra.mxu0 %v1199
    %2244 = vmatpush.bf16.msra.mxu0 %v1198
    %2245 = vmatpush.bf16.msra.mxu0 %v1197
    %2246 = vmatpush.bf16.msra.mxu0 %v1196
    %2247 = vmatpush.bf16.msra.mxu0 %v1195
    %2248 = vmatpush.bf16.msra.mxu0 %v1194
    %2249 = vmatpush.bf16.msra.mxu0 %v1193
    %2250 = vmatmul.bf16.gmra.mxu0 %v2236
    %v2251 = vpop.f32.mrf.mxu0
    %v2252 = vadd.f32 0.0, %v2251
    %v2253 = vpop.f32.mrf.mxu0
    %2254 = vdwg.mxu0
    %2255 = vmatpush.bf16.msra.mxu0 %v1208
    %2256 = vmatpush.bf16.msra.mxu0 %v1207
    %2257 = vmatpush.bf16.msra.mxu0 %v1206
    %2258 = vmatpush.bf16.msra.mxu0 %v1205
    %2259 = vmatpush.bf16.msra.mxu0 %v1204
    %2260 = vmatpush.bf16.msra.mxu0 %v1203
    %2261 = vmatpush.bf16.msra.mxu0 %v1202
    %2262 = vmatpush.bf16.msra.mxu0 %v1201
    %2263 = vmatmul.bf16.gmra.mxu0 %v2237
    %v2264 = vpop.f32.mrf.mxu0
    %v2265 = vadd.f32 %v2252, %v2264
    %v2266 = vpop.f32.mrf.mxu0
    %2267 = vdwg.mxu0
    %2268 = vmatpush.bf16.msra.mxu0 %v1216
    %2269 = vmatpush.bf16.msra.mxu0 %v1215
    %2270 = vmatpush.bf16.msra.mxu0 %v1214
    %2271 = vmatpush.bf16.msra.mxu0 %v1213
    %2272 = vmatpush.bf16.msra.mxu0 %v1212
    %2273 = vmatpush.bf16.msra.mxu0 %v1211
    %2274 = vmatpush.bf16.msra.mxu0 %v1210
    %2275 = vmatpush.bf16.msra.mxu0 %v1209
    %2276 = vmatmul.bf16.gmra.mxu0 %v2238
    %v2277 = vpop.f32.mrf.mxu0
    %v2278 = vadd.f32 %v2265, %v2277
    %v2279 = vpop.f32.mrf.mxu0
    %2280 = vdwg.mxu0
    %v2281 = vadd.f32 %v2232, %v2278
    %v2282 = vadd.f32 %v2281, %v1282
    %v2283 = vmax.f32 %v2282, 0.0
    %v2284 = vpack.c.bf16 %v2283, %v2283
    %2285 = vmatpush.bf16.msra.mxu0 %v1329
    %2286 = vmatpush.bf16.msra.mxu0 %v1328
    %2287 = vmatpush.bf16.msra.mxu0 %v1327
    %2288 = vmatpush.bf16.msra.mxu0 %v1326
    %2289 = vmatpush.bf16.msra.mxu0 %v1325
    %2290 = vmatpush.bf16.msra.mxu0 %v1324
    %2291 = vmatpush.bf16.msra.mxu0 %v1323
    %2292 = vmatpush.bf16.msra.mxu0 %v1322
    %2293 = vmatmul.bf16.gmra.mxu0 %v2284
    %v2294 = vpop.f32.mrf.mxu0
    %v2295 = vadd.f32 %v1288, %v2294
    %v2296 = vpop.f32.mrf.mxu0
    %2297 = vdwg.mxu0
    %v2298 = vmax.f32 %v2295, 0.0
    %v2299 = vpack.c.bf16 %v2298, %v2298
    %s2300 = scalar_lea.vmem %s5, 96
    %v2301 = vld [vmem:[%s2300] sm:$0xff]
    %v2302 = vld [vmem:[%s2300 + $0x8] sm:$0xff]
    %v2303 = vld [vmem:[%s2300 + $0x10] sm:$0xff]
    %v2304 = vld [vmem:[%s2300 + $0x18] sm:$0xff]
    %v2309 = vunpack.c.l.b16 %v2301
    %v2310 = vunpack.c.h.b16 %v2301
    %v2311 = vunpack.c.l.b16 %v2302
    %v2312 = vunpack.c.h.b16 %v2302
    %v2313 = vunpack.c.l.b16 %v2303
    %v2314 = vunpack.c.h.b16 %v2303
    %v2315 = vunpack.c.l.b16 %v2304
    %v2316 = vunpack.c.h.b16 %v2304
    %v2317 = vpack.c.b16 %v2311, %v2309
    %v2318 = vpack.c.b16 %v2312, %v2310
    %v2319 = vpack.c.b16 %v2315, %v2313
    %v2320 = vpack.c.b16 %v2316, %v2314
    %v2326 = vsel %vm1643, %v2299, 0
    %2328 = vmatpush.bf16.msra.mxu0 0
    %2329 = vmatpush.bf16.msra.mxu0 0
    %2330 = vmatpush.bf16.msra.mxu0 0
    %2331 = vmatpush.bf16.msra.mxu0 0
    %2332 = vmatpush.bf16.msra.mxu0 0
    %2333 = vmatpush.bf16.msra.mxu0 0
    %2334 = vmatpush.bf16.msra.mxu0 %v2319
    %2335 = vmatpush.bf16.msra.mxu0 %v2317
    %2336 = vmatmul.bf16.gmra.mxu0 %v2326
    %v2337 = vpop.f32.mrf.mxu0
    %v2338 = vadd.f32 0.0, %v2337
    %v2339 = vpop.f32.mrf.mxu0
    %2340 = vdwg.mxu0
    %2341 = vmatpush.bf16.msra.mxu0 0
    %2342 = vmatpush.bf16.msra.mxu0 0
    %2343 = vmatpush.bf16.msra.mxu0 0
    %2344 = vmatpush.bf16.msra.mxu0 0
    %2345 = vmatpush.bf16.msra.mxu0 0
    %2346 = vmatpush.bf16.msra.mxu0 0
    %2347 = vmatpush.bf16.msra.mxu0 %v2320
    %2348 = vmatpush.bf16.msra.mxu0 %v2318
    %2349 = vmatmul.bf16.gmra.mxu0 %v2326
    %v2350 = vpop.f32.mrf.mxu0
    %v2351 = vadd.f32 0.0, %v2350
    %v2352 = vpop.f32.mrf.mxu0
    %2353 = vdwg.mxu0
    %v2354 = vadd.f32 %v2037, %v2338
    %v2355 = vadd.f32 %v2038, %v2351
    %2356 = vst [vmem:[#allocation1] ss:$9 sm:$0xff] %v796
    %v2357 = vld [vmem:[#allocation1] sm:$0xff]
    %v2358 = vld [vmem:[#allocation1 + $0x9] sm:$0xff]
    %v2359 = vld [vmem:[#allocation1 + $0x12] sm:$0xff]
    %2363 = vmatpush.bf16.msra.mxu0 %v281
    %2364 = vmatpush.bf16.msra.mxu0 %v280
    %2365 = vmatpush.bf16.msra.mxu0 %v279
    %2366 = vmatpush.bf16.msra.mxu0 %v278
    %2367 = vmatpush.bf16.msra.mxu0 %v277
    %2368 = vmatpush.bf16.msra.mxu0 %v276
    %2369 = vmatpush.bf16.msra.mxu0 %v275
    %2370 = vmatpush.bf16.msra.mxu0 %v274
    %2371 = vmatmul.bf16.gmra.mxu0 %v2357
    %v2372 = vpop.f32.mrf.mxu0
    %v2373 = vadd.f32 0.0, %v2372
    %v2374 = vpop.f32.mrf.mxu0
    %2375 = vdwg.mxu0
    %2376 = vmatpush.bf16.msra.mxu0 %v289
    %2377 = vmatpush.bf16.msra.mxu0 %v288
    %2378 = vmatpush.bf16.msra.mxu0 %v287
    %2379 = vmatpush.bf16.msra.mxu0 %v286
    %2380 = vmatpush.bf16.msra.mxu0 %v285
    %2381 = vmatpush.bf16.msra.mxu0 %v284
    %2382 = vmatpush.bf16.msra.mxu0 %v283
    %2383 = vmatpush.bf16.msra.mxu0 %v282
    %2384 = vmatmul.bf16.gmra.mxu0 %v2358
    %v2385 = vpop.f32.mrf.mxu0
    %v2386 = vadd.f32 %v2373, %v2385
    %v2387 = vpop.f32.mrf.mxu0
    %2388 = vdwg.mxu0
    %2389 = vmatpush.bf16.msra.mxu0 %v297
    %2390 = vmatpush.bf16.msra.mxu0 %v296
    %2391 = vmatpush.bf16.msra.mxu0 %v295
    %2392 = vmatpush.bf16.msra.mxu0 %v294
    %2393 = vmatpush.bf16.msra.mxu0 %v293
    %2394 = vmatpush.bf16.msra.mxu0 %v292
    %2395 = vmatpush.bf16.msra.mxu0 %v291
    %2396 = vmatpush.bf16.msra.mxu0 %v290
    %2397 = vmatmul.bf16.gmra.mxu0 %v2359
    %v2398 = vpop.f32.mrf.mxu0
    %v2399 = vadd.f32 %v2386, %v2398
    %v2400 = vpop.f32.mrf.mxu0
    %2401 = vdwg.mxu0
    %2402 = vst [vmem:[#allocation1] ss:$9 sm:$0xff] %v553
    %v2403 = vld [vmem:[#allocation1] sm:$0xff]
    %v2404 = vld [vmem:[#allocation1 + $0x9] sm:$0xff]
    %v2405 = vld [vmem:[#allocation1 + $0x12] sm:$0xff]
    %2409 = vmatpush.bf16.msra.mxu0 %v472
    %2410 = vmatpush.bf16.msra.mxu0 %v471
    %2411 = vmatpush.bf16.msra.mxu0 %v470
    %2412 = vmatpush.bf16.msra.mxu0 %v469
    %2413 = vmatpush.bf16.msra.mxu0 %v468
    %2414 = vmatpush.bf16.msra.mxu0 %v467
    %2415 = vmatpush.bf16.msra.mxu0 %v466
    %2416 = vmatpush.bf16.msra.mxu0 %v465
    %2417 = vmatmul.bf16.gmra.mxu0 %v2403
    %v2418 = vpop.f32.mrf.mxu0
    %v2419 = vadd.f32 %v2399, %v2418
    %v2420 = vpop.f32.mrf.mxu0
    %2421 = vdwg.mxu0
    %2422 = vmatpush.bf16.msra.mxu0 %v480
    %2423 = vmatpush.bf16.msra.mxu0 %v479
    %2424 = vmatpush.bf16.msra.mxu0 %v478
    %2425 = vmatpush.bf16.msra.mxu0 %v477
    %2426 = vmatpush.bf16.msra.mxu0 %v476
    %2427 = vmatpush.bf16.msra.mxu0 %v475
    %2428 = vmatpush.bf16.msra.mxu0 %v474
    %2429 = vmatpush.bf16.msra.mxu0 %v473
    %2430 = vmatmul.bf16.gmra.mxu0 %v2404
    %v2431 = vpop.f32.mrf.mxu0
    %v2432 = vadd.f32 %v2419, %v2431
    %v2433 = vpop.f32.mrf.mxu0
    %2434 = vdwg.mxu0
    %2435 = vmatpush.bf16.msra.mxu0 %v488
    %2436 = vmatpush.bf16.msra.mxu0 %v487
    %2437 = vmatpush.bf16.msra.mxu0 %v486
    %2438 = vmatpush.bf16.msra.mxu0 %v485
    %2439 = vmatpush.bf16.msra.mxu0 %v484
    %2440 = vmatpush.bf16.msra.mxu0 %v483
    %2441 = vmatpush.bf16.msra.mxu0 %v482
    %2442 = vmatpush.bf16.msra.mxu0 %v481
    %2443 = vmatmul.bf16.gmra.mxu0 %v2405
    %v2444 = vpop.f32.mrf.mxu0
    %v2445 = vadd.f32 %v2432, %v2444
    %v2446 = vpop.f32.mrf.mxu0
    %2447 = vdwg.mxu0
    %2448 = vst [vmem:[#allocation1] ss:$9 sm:$0xff] %v1039
    %v2449 = vld [vmem:[#allocation1] sm:$0xff]
    %v2450 = vld [vmem:[#allocation1 + $0x9] sm:$0xff]
    %v2451 = vld [vmem:[#allocation1 + $0x12] sm:$0xff]
    %2455 = vmatpush.bf16.msra.mxu0 %v714
    %2456 = vmatpush.bf16.msra.mxu0 %v713
    %2457 = vmatpush.bf16.msra.mxu0 %v712
    %2458 = vmatpush.bf16.msra.mxu0 %v711
    %2459 = vmatpush.bf16.msra.mxu0 %v710
    %2460 = vmatpush.bf16.msra.mxu0 %v709
    %2461 = vmatpush.bf16.msra.mxu0 %v708
    %2462 = vmatpush.bf16.msra.mxu0 %v707
    %2463 = vmatmul.bf16.gmra.mxu0 %v2449
    %v2464 = vpop.f32.mrf.mxu0
    %v2465 = vadd.f32 0.0, %v2464
    %v2466 = vpop.f32.mrf.mxu0
    %2467 = vdwg.mxu0
    %2468 = vmatpush.bf16.msra.mxu0 %v722
    %2469 = vmatpush.bf16.msra.mxu0 %v721
    %2470 = vmatpush.bf16.msra.mxu0 %v720
    %2471 = vmatpush.bf16.msra.mxu0 %v719
    %2472 = vmatpush.bf16.msra.mxu0 %v718
    %2473 = vmatpush.bf16.msra.mxu0 %v717
    %2474 = vmatpush.bf16.msra.mxu0 %v716
    %2475 = vmatpush.bf16.msra.mxu0 %v715
    %2476 = vmatmul.bf16.gmra.mxu0 %v2450
    %v2477 = vpop.f32.mrf.mxu0
    %v2478 = vadd.f32 %v2465, %v2477
    %v2479 = vpop.f32.mrf.mxu0
    %2480 = vdwg.mxu0
    %2481 = vmatpush.bf16.msra.mxu0 %v730
    %2482 = vmatpush.bf16.msra.mxu0 %v729
    %2483 = vmatpush.bf16.msra.mxu0 %v728
    %2484 = vmatpush.bf16.msra.mxu0 %v727
    %2485 = vmatpush.bf16.msra.mxu0 %v726
    %2486 = vmatpush.bf16.msra.mxu0 %v725
    %2487 = vmatpush.bf16.msra.mxu0 %v724
    %2488 = vmatpush.bf16.msra.mxu0 %v723
    %2489 = vmatmul.bf16.gmra.mxu0 %v2451
    %v2490 = vpop.f32.mrf.mxu0
    %v2491 = vadd.f32 %v2478, %v2490
    %v2492 = vpop.f32.mrf.mxu0
    %2493 = vdwg.mxu0
    %v2494 = vadd.f32 %v2445, %v2491
    %s2495 = scalar_lea.vmem %s0, 30
    %v2496 = vld [vmem:[%s2495] sm:$0x7]
    %2498 = vst [vmem:[#allocation1] ss:$9 sm:$0xff] %v2496
    %v2499 = vld [vmem:[#allocation1] sm:$0xff]
    %v2500 = vld [vmem:[#allocation1 + $0x9] sm:$0xff]
    %v2501 = vld [vmem:[#allocation1 + $0x12] sm:$0xff]
    %2505 = vmatpush.bf16.msra.mxu0 %v957
    %2506 = vmatpush.bf16.msra.mxu0 %v956
    %2507 = vmatpush.bf16.msra.mxu0 %v955
    %2508 = vmatpush.bf16.msra.mxu0 %v954
    %2509 = vmatpush.bf16.msra.mxu0 %v953
    %2510 = vmatpush.bf16.msra.mxu0 %v952
    %2511 = vmatpush.bf16.msra.mxu0 %v951
    %2512 = vmatpush.bf16.msra.mxu0 %v950
    %2513 = vmatmul.bf16.gmra.mxu0 %v2499
    %v2514 = vpop.f32.mrf.mxu0
    %v2515 = vadd.f32 0.0, %v2514
    %v2516 = vpop.f32.mrf.mxu0
    %2517 = vdwg.mxu0
    %2518 = vmatpush.bf16.msra.mxu0 %v965
    %2519 = vmatpush.bf16.msra.mxu0 %v964
    %2520 = vmatpush.bf16.msra.mxu0 %v963
    %2521 = vmatpush.bf16.msra.mxu0 %v962
    %2522 = vmatpush.bf16.msra.mxu0 %v961
    %2523 = vmatpush.bf16.msra.mxu0 %v960
    %2524 = vmatpush.bf16.msra.mxu0 %v959
    %2525 = vmatpush.bf16.msra.mxu0 %v958
    %2526 = vmatmul.bf16.gmra.mxu0 %v2500
    %v2527 = vpop.f32.mrf.mxu0
    %v2528 = vadd.f32 %v2515, %v2527
    %v2529 = vpop.f32.mrf.mxu0
    %2530 = vdwg.mxu0
    %2531 = vmatpush.bf16.msra.mxu0 %v973
    %2532 = vmatpush.bf16.msra.mxu0 %v972
    %2533 = vmatpush.bf16.msra.mxu0 %v971
    %2534 = vmatpush.bf16.msra.mxu0 %v970
    %2535 = vmatpush.bf16.msra.mxu0 %v969
    %2536 = vmatpush.bf16.msra.mxu0 %v968
    %2537 = vmatpush.bf16.msra.mxu0 %v967
    %2538 = vmatpush.bf16.msra.mxu0 %v966
    %2539 = vmatmul.bf16.gmra.mxu0 %v2501
    %v2540 = vpop.f32.mrf.mxu0
    %v2541 = vadd.f32 %v2528, %v2540
    %v2542 = vpop.f32.mrf.mxu0
    %2543 = vdwg.mxu0
    %v2544 = vadd.f32 %v2494, %v2541
    %s2545 = scalar_lea.vmem %s0, 36
    %v2546 = vld [vmem:[%s2545] sm:$0x7]
    %2548 = vst [vmem:[#allocation1] ss:$9 sm:$0xff] %v2546
    %v2549 = vld [vmem:[#allocation1] sm:$0xff]
    %v2550 = vld [vmem:[#allocation1 + $0x9] sm:$0xff]
    %v2551 = vld [vmem:[#allocation1 + $0x12] sm:$0xff]
    %2555 = vmatpush.bf16.msra.mxu0 %v1200
    %2556 = vmatpush.bf16.msra.mxu0 %v1199
    %2557 = vmatpush.bf16.msra.mxu0 %v1198
    %2558 = vmatpush.bf16.msra.mxu0 %v1197
    %2559 = vmatpush.bf16.msra.mxu0 %v1196
    %2560 = vmatpush.bf16.msra.mxu0 %v1195
    %2561 = vmatpush.bf16.msra.mxu0 %v1194
    %2562 = vmatpush.bf16.msra.mxu0 %v1193
    %2563 = vmatmul.bf16.gmra.mxu0 %v2549
    %v2564 = vpop.f32.mrf.mxu0
    %v2565 = vadd.f32 0.0, %v2564
    %v2566 = vpop.f32.mrf.mxu0
    %2567 = vdwg.mxu0
    %2568 = vmatpush.bf16.msra.mxu0 %v1208
    %2569 = vmatpush.bf16.msra.mxu0 %v1207
    %2570 = vmatpush.bf16.msra.mxu0 %v1206
    %2571 = vmatpush.bf16.msra.mxu0 %v1205
    %2572 = vmatpush.bf16.msra.mxu0 %v1204
    %2573 = vmatpush.bf16.msra.mxu0 %v1203
    %2574 = vmatpush.bf16.msra.mxu0 %v1202
    %2575 = vmatpush.bf16.msra.mxu0 %v1201
    %2576 = vmatmul.bf16.gmra.mxu0 %v2550
    %v2577 = vpop.f32.mrf.mxu0
    %v2578 = vadd.f32 %v2565, %v2577
    %v2579 = vpop.f32.mrf.mxu0
    %2580 = vdwg.mxu0
    %2581 = vmatpush.bf16.msra.mxu0 %v1216
    %2582 = vmatpush.bf16.msra.mxu0 %v1215
    %2583 = vmatpush.bf16.msra.mxu0 %v1214
    %2584 = vmatpush.bf16.msra.mxu0 %v1213
    %2585 = vmatpush.bf16.msra.mxu0 %v1212
    %2586 = vmatpush.bf16.msra.mxu0 %v1211
    %2587 = vmatpush.bf16.msra.mxu0 %v1210
    %2588 = vmatpush.bf16.msra.mxu0 %v1209
    %2589 = vmatmul.bf16.gmra.mxu0 %v2551
    %v2590 = vpop.f32.mrf.mxu0
    %v2591 = vadd.f32 %v2578, %v2590
    %v2592 = vpop.f32.mrf.mxu0
    %2593 = vdwg.mxu0
    %v2594 = vadd.f32 %v2544, %v2591
    %v2595 = vadd.f32 %v2594, %v1282
    %v2596 = vmax.f32 %v2595, 0.0
    %v2597 = vpack.c.bf16 %v2596, %v2596
    %2598 = vmatpush.bf16.msra.mxu0 %v1329
    %2599 = vmatpush.bf16.msra.mxu0 %v1328
    %2600 = vmatpush.bf16.msra.mxu0 %v1327
    %2601 = vmatpush.bf16.msra.mxu0 %v1326
    %2602 = vmatpush.bf16.msra.mxu0 %v1325
    %2603 = vmatpush.bf16.msra.mxu0 %v1324
    %2604 = vmatpush.bf16.msra.mxu0 %v1323
    %2605 = vmatpush.bf16.msra.mxu0 %v1322
    %2606 = vmatmul.bf16.gmra.mxu0 %v2597
    %v2607 = vpop.f32.mrf.mxu0
    %v2608 = vadd.f32 %v1288, %v2607
    %v2609 = vpop.f32.mrf.mxu0
    %2610 = vdwg.mxu0
    %v2611 = vmax.f32 %v2608, 0.0
    %v2612 = vpack.c.bf16 %v2611, %v2611
    %s2613 = scalar_lea.vmem %s5, 128
    %v2614 = vld [vmem:[%s2613] sm:$0xff]
    %v2615 = vld [vmem:[%s2613 + $0x8] sm:$0xff]
    %v2616 = vld [vmem:[%s2613 + $0x10] sm:$0xff]
    %v2617 = vld [vmem:[%s2613 + $0x18] sm:$0xff]
    %v2622 = vunpack.c.l.b16 %v2614
    %v2623 = vunpack.c.h.b16 %v2614
    %v2624 = vunpack.c.l.b16 %v2615
    %v2625 = vunpack.c.h.b16 %v2615
    %v2626 = vunpack.c.l.b16 %v2616
    %v2627 = vunpack.c.h.b16 %v2616
    %v2628 = vunpack.c.l.b16 %v2617
    %v2629 = vunpack.c.h.b16 %v2617
    %v2630 = vpack.c.b16 %v2624, %v2622
    %v2631 = vpack.c.b16 %v2625, %v2623
    %v2632 = vpack.c.b16 %v2628, %v2626
    %v2633 = vpack.c.b16 %v2629, %v2627
    %v2639 = vsel %vm1643, %v2612, 0
    %2641 = vmatpush.bf16.msra.mxu0 0
    %2642 = vmatpush.bf16.msra.mxu0 0
    %2643 = vmatpush.bf16.msra.mxu0 0
    %2644 = vmatpush.bf16.msra.mxu0 0
    %2645 = vmatpush.bf16.msra.mxu0 0
    %2646 = vmatpush.bf16.msra.mxu0 0
    %2647 = vmatpush.bf16.msra.mxu0 %v2632
    %2648 = vmatpush.bf16.msra.mxu0 %v2630
    %2649 = vmatmul.bf16.gmra.mxu0 %v2639
    %v2650 = vpop.f32.mrf.mxu0
    %v2651 = vadd.f32 0.0, %v2650
    %v2652 = vpop.f32.mrf.mxu0
    %2653 = vdwg.mxu0
    %2654 = vmatpush.bf16.msra.mxu0 0
    %2655 = vmatpush.bf16.msra.mxu0 0
    %2656 = vmatpush.bf16.msra.mxu0 0
    %2657 = vmatpush.bf16.msra.mxu0 0
    %2658 = vmatpush.bf16.msra.mxu0 0
    %2659 = vmatpush.bf16.msra.mxu0 0
    %2660 = vmatpush.bf16.msra.mxu0 %v2633
    %2661 = vmatpush.bf16.msra.mxu0 %v2631
    %2662 = vmatmul.bf16.gmra.mxu0 %v2639
    %v2663 = vpop.f32.mrf.mxu0
    %v2664 = vadd.f32 0.0, %v2663
    %v2665 = vpop.f32.mrf.mxu0
    %2666 = vdwg.mxu0
    %v2667 = vadd.f32 %v2354, %v2651
    %v2668 = vadd.f32 %v2355, %v2664
    %2669 = vst [vmem:[#allocation1] ss:$9 sm:$0xff] %v1502
    %v2670 = vld [vmem:[#allocation1] sm:$0xff]
    %v2671 = vld [vmem:[#allocation1 + $0x9] sm:$0xff]
    %v2672 = vld [vmem:[#allocation1 + $0x12] sm:$0xff]
    %2676 = vmatpush.bf16.msra.mxu0 %v281
    %2677 = vmatpush.bf16.msra.mxu0 %v280
    %2678 = vmatpush.bf16.msra.mxu0 %v279
    %2679 = vmatpush.bf16.msra.mxu0 %v278
    %2680 = vmatpush.bf16.msra.mxu0 %v277
    %2681 = vmatpush.bf16.msra.mxu0 %v276
    %2682 = vmatpush.bf16.msra.mxu0 %v275
    %2683 = vmatpush.bf16.msra.mxu0 %v274
    %2684 = vmatmul.bf16.gmra.mxu0 %v2670
    %v2685 = vpop.f32.mrf.mxu0
    %v2686 = vadd.f32 0.0, %v2685
    %v2687 = vpop.f32.mrf.mxu0
    %2688 = vdwg.mxu0
    %2689 = vmatpush.bf16.msra.mxu0 %v289
    %2690 = vmatpush.bf16.msra.mxu0 %v288
    %2691 = vmatpush.bf16.msra.mxu0 %v287
    %2692 = vmatpush.bf16.msra.mxu0 %v286
    %2693 = vmatpush.bf16.msra.mxu0 %v285
    %2694 = vmatpush.bf16.msra.mxu0 %v284
    %2695 = vmatpush.bf16.msra.mxu0 %v283
    %2696 = vmatpush.bf16.msra.mxu0 %v282
    %2697 = vmatmul.bf16.gmra.mxu0 %v2671
    %v2698 = vpop.f32.mrf.mxu0
    %v2699 = vadd.f32 %v2686, %v2698
    %v2700 = vpop.f32.mrf.mxu0
    %2701 = vdwg.mxu0
    %2702 = vmatpush.bf16.msra.mxu0 %v297
    %2703 = vmatpush.bf16.msra.mxu0 %v296
    %2704 = vmatpush.bf16.msra.mxu0 %v295
    %2705 = vmatpush.bf16.msra.mxu0 %v294
    %2706 = vmatpush.bf16.msra.mxu0 %v293
    %2707 = vmatpush.bf16.msra.mxu0 %v292
    %2708 = vmatpush.bf16.msra.mxu0 %v291
    %2709 = vmatpush.bf16.msra.mxu0 %v290
    %2710 = vmatmul.bf16.gmra.mxu0 %v2672
    %v2711 = vpop.f32.mrf.mxu0
    %v2712 = vadd.f32 %v2699, %v2711
    %v2713 = vpop.f32.mrf.mxu0
    %2714 = vdwg.mxu0
    %2715 = vst [vmem:[#allocation1] ss:$9 sm:$0xff] %v1453
    %v2716 = vld [vmem:[#allocation1] sm:$0xff]
    %v2717 = vld [vmem:[#allocation1 + $0x9] sm:$0xff]
    %v2718 = vld [vmem:[#allocation1 + $0x12] sm:$0xff]
    %2722 = vmatpush.bf16.msra.mxu0 %v472
    %2723 = vmatpush.bf16.msra.mxu0 %v471
    %2724 = vmatpush.bf16.msra.mxu0 %v470
    %2725 = vmatpush.bf16.msra.mxu0 %v469
    %2726 = vmatpush.bf16.msra.mxu0 %v468
    %2727 = vmatpush.bf16.msra.mxu0 %v467
    %2728 = vmatpush.bf16.msra.mxu0 %v466
    %2729 = vmatpush.bf16.msra.mxu0 %v465
    %2730 = vmatmul.bf16.gmra.mxu0 %v2716
    %v2731 = vpop.f32.mrf.mxu0
    %v2732 = vadd.f32 %v2712, %v2731
    %v2733 = vpop.f32.mrf.mxu0
    %2734 = vdwg.mxu0
    %2735 = vmatpush.bf16.msra.mxu0 %v480
    %2736 = vmatpush.bf16.msra.mxu0 %v479
    %2737 = vmatpush.bf16.msra.mxu0 %v478
    %2738 = vmatpush.bf16.msra.mxu0 %v477
    %2739 = vmatpush.bf16.msra.mxu0 %v476
    %2740 = vmatpush.bf16.msra.mxu0 %v475
    %2741 = vmatpush.bf16.msra.mxu0 %v474
    %2742 = vmatpush.bf16.msra.mxu0 %v473
    %2743 = vmatmul.bf16.gmra.mxu0 %v2717
    %v2744 = vpop.f32.mrf.mxu0
    %v2745 = vadd.f32 %v2732, %v2744
    %v2746 = vpop.f32.mrf.mxu0
    %2747 = vdwg.mxu0
    %2748 = vmatpush.bf16.msra.mxu0 %v488
    %2749 = vmatpush.bf16.msra.mxu0 %v487
    %2750 = vmatpush.bf16.msra.mxu0 %v486
    %2751 = vmatpush.bf16.msra.mxu0 %v485
    %2752 = vmatpush.bf16.msra.mxu0 %v484
    %2753 = vmatpush.bf16.msra.mxu0 %v483
    %2754 = vmatpush.bf16.msra.mxu0 %v482
    %2755 = vmatpush.bf16.msra.mxu0 %v481
    %2756 = vmatmul.bf16.gmra.mxu0 %v2718
    %v2757 = vpop.f32.mrf.mxu0
    %v2758 = vadd.f32 %v2745, %v2757
    %v2759 = vpop.f32.mrf.mxu0
    %2760 = vdwg.mxu0
    %2761 = vst [vmem:[#allocation1] ss:$9 sm:$0xff] %v1551
    %v2762 = vld [vmem:[#allocation1] sm:$0xff]
    %v2763 = vld [vmem:[#allocation1 + $0x9] sm:$0xff]
    %v2764 = vld [vmem:[#allocation1 + $0x12] sm:$0xff]
    %2768 = vmatpush.bf16.msra.mxu0 %v714
    %2769 = vmatpush.bf16.msra.mxu0 %v713
    %2770 = vmatpush.bf16.msra.mxu0 %v712
    %2771 = vmatpush.bf16.msra.mxu0 %v711
    %2772 = vmatpush.bf16.msra.mxu0 %v710
    %2773 = vmatpush.bf16.msra.mxu0 %v709
    %2774 = vmatpush.bf16.msra.mxu0 %v708
    %2775 = vmatpush.bf16.msra.mxu0 %v707
    %2776 = vmatmul.bf16.gmra.mxu0 %v2762
    %v2777 = vpop.f32.mrf.mxu0
    %v2778 = vadd.f32 0.0, %v2777
    %v2779 = vpop.f32.mrf.mxu0
    %2780 = vdwg.mxu0
    %2781 = vmatpush.bf16.msra.mxu0 %v722
    %2782 = vmatpush.bf16.msra.mxu0 %v721
    %2783 = vmatpush.bf16.msra.mxu0 %v720
    %2784 = vmatpush.bf16.msra.mxu0 %v719
    %2785 = vmatpush.bf16.msra.mxu0 %v718
    %2786 = vmatpush.bf16.msra.mxu0 %v717
    %2787 = vmatpush.bf16.msra.mxu0 %v716
    %2788 = vmatpush.bf16.msra.mxu0 %v715
    %2789 = vmatmul.bf16.gmra.mxu0 %v2763
    %v2790 = vpop.f32.mrf.mxu0
    %v2791 = vadd.f32 %v2778, %v2790
    %v2792 = vpop.f32.mrf.mxu0
    %2793 = vdwg.mxu0
    %2794 = vmatpush.bf16.msra.mxu0 %v730
    %2795 = vmatpush.bf16.msra.mxu0 %v729
    %2796 = vmatpush.bf16.msra.mxu0 %v728
    %2797 = vmatpush.bf16.msra.mxu0 %v727
    %2798 = vmatpush.bf16.msra.mxu0 %v726
    %2799 = vmatpush.bf16.msra.mxu0 %v725
    %2800 = vmatpush.bf16.msra.mxu0 %v724
    %2801 = vmatpush.bf16.msra.mxu0 %v723
    %2802 = vmatmul.bf16.gmra.mxu0 %v2764
    %v2803 = vpop.f32.mrf.mxu0
    %v2804 = vadd.f32 %v2791, %v2803
    %v2805 = vpop.f32.mrf.mxu0
    %2806 = vdwg.mxu0
    %v2807 = vadd.f32 %v2758, %v2804
    %v2808 = vld [vmem:[%s2495 + $0x1] sm:$0x7]
    %2810 = vst [vmem:[#allocation1] ss:$9 sm:$0xff] %v2808
    %v2811 = vld [vmem:[#allocation1] sm:$0xff]
    %v2812 = vld [vmem:[#allocation1 + $0x9] sm:$0xff]
    %v2813 = vld [vmem:[#allocation1 + $0x12] sm:$0xff]
    %2817 = vmatpush.bf16.msra.mxu0 %v957
    %2818 = vmatpush.bf16.msra.mxu0 %v956
    %2819 = vmatpush.bf16.msra.mxu0 %v955
    %2820 = vmatpush.bf16.msra.mxu0 %v954
    %2821 = vmatpush.bf16.msra.mxu0 %v953
    %2822 = vmatpush.bf16.msra.mxu0 %v952
    %2823 = vmatpush.bf16.msra.mxu0 %v951
    %2824 = vmatpush.bf16.msra.mxu0 %v950
    %2825 = vmatmul.bf16.gmra.mxu0 %v2811
    %v2826 = vpop.f32.mrf.mxu0
    %v2827 = vadd.f32 0.0, %v2826
    %v2828 = vpop.f32.mrf.mxu0
    %2829 = vdwg.mxu0
    %2830 = vmatpush.bf16.msra.mxu0 %v965
    %2831 = vmatpush.bf16.msra.mxu0 %v964
    %2832 = vmatpush.bf16.msra.mxu0 %v963
    %2833 = vmatpush.bf16.msra.mxu0 %v962
    %2834 = vmatpush.bf16.msra.mxu0 %v961
    %2835 = vmatpush.bf16.msra.mxu0 %v960
    %2836 = vmatpush.bf16.msra.mxu0 %v959
    %2837 = vmatpush.bf16.msra.mxu0 %v958
    %2838 = vmatmul.bf16.gmra.mxu0 %v2812
    %v2839 = vpop.f32.mrf.mxu0
    %v2840 = vadd.f32 %v2827, %v2839
    %v2841 = vpop.f32.mrf.mxu0
    %2842 = vdwg.mxu0
    %2843 = vmatpush.bf16.msra.mxu0 %v973
    %2844 = vmatpush.bf16.msra.mxu0 %v972
    %2845 = vmatpush.bf16.msra.mxu0 %v971
    %2846 = vmatpush.bf16.msra.mxu0 %v970
    %2847 = vmatpush.bf16.msra.mxu0 %v969
    %2848 = vmatpush.bf16.msra.mxu0 %v968
    %2849 = vmatpush.bf16.msra.mxu0 %v967
    %2850 = vmatpush.bf16.msra.mxu0 %v966
    %2851 = vmatmul.bf16.gmra.mxu0 %v2813
    %v2852 = vpop.f32.mrf.mxu0
    %v2853 = vadd.f32 %v2840, %v2852
    %v2854 = vpop.f32.mrf.mxu0
    %2855 = vdwg.mxu0
    %v2856 = vadd.f32 %v2807, %v2853
    %v2857 = vld [vmem:[%s2545 + $0x1] sm:$0x7]
    %2859 = vst [vmem:[#allocation1] ss:$9 sm:$0xff] %v2857
    %v2860 = vld [vmem:[#allocation1] sm:$0xff]
    %v2861 = vld [vmem:[#allocation1 + $0x9] sm:$0xff]
    %v2862 = vld [vmem:[#allocation1 + $0x12] sm:$0xff]
    %2866 = vmatpush.bf16.msra.mxu0 %v1200
    %2867 = vmatpush.bf16.msra.mxu0 %v1199
    %2868 = vmatpush.bf16.msra.mxu0 %v1198
    %2869 = vmatpush.bf16.msra.mxu0 %v1197
    %2870 = vmatpush.bf16.msra.mxu0 %v1196
    %2871 = vmatpush.bf16.msra.mxu0 %v1195
    %2872 = vmatpush.bf16.msra.mxu0 %v1194
    %2873 = vmatpush.bf16.msra.mxu0 %v1193
    %2874 = vmatmul.bf16.gmra.mxu0 %v2860
    %v2875 = vpop.f32.mrf.mxu0
    %v2876 = vadd.f32 0.0, %v2875
    %v2877 = vpop.f32.mrf.mxu0
    %2878 = vdwg.mxu0
    %2879 = vmatpush.bf16.msra.mxu0 %v1208
    %2880 = vmatpush.bf16.msra.mxu0 %v1207
    %2881 = vmatpush.bf16.msra.mxu0 %v1206
    %2882 = vmatpush.bf16.msra.mxu0 %v1205
    %2883 = vmatpush.bf16.msra.mxu0 %v1204
    %2884 = vmatpush.bf16.msra.mxu0 %v1203
    %2885 = vmatpush.bf16.msra.mxu0 %v1202
    %2886 = vmatpush.bf16.msra.mxu0 %v1201
    %2887 = vmatmul.bf16.gmra.mxu0 %v2861
    %v2888 = vpop.f32.mrf.mxu0
    %v2889 = vadd.f32 %v2876, %v2888
    %v2890 = vpop.f32.mrf.mxu0
    %2891 = vdwg.mxu0
    %2892 = vmatpush.bf16.msra.mxu0 %v1216
    %2893 = vmatpush.bf16.msra.mxu0 %v1215
    %2894 = vmatpush.bf16.msra.mxu0 %v1214
    %2895 = vmatpush.bf16.msra.mxu0 %v1213
    %2896 = vmatpush.bf16.msra.mxu0 %v1212
    %2897 = vmatpush.bf16.msra.mxu0 %v1211
    %2898 = vmatpush.bf16.msra.mxu0 %v1210
    %2899 = vmatpush.bf16.msra.mxu0 %v1209
    %2900 = vmatmul.bf16.gmra.mxu0 %v2862
    %v2901 = vpop.f32.mrf.mxu0
    %v2902 = vadd.f32 %v2889, %v2901
    %v2903 = vpop.f32.mrf.mxu0
    %2904 = vdwg.mxu0
    %v2905 = vadd.f32 %v2856, %v2902
    %v2906 = vadd.f32 %v2905, %v1282
    %v2907 = vmax.f32 %v2906, 0.0
    %v2908 = vpack.c.bf16 %v2907, %v2907
    %2909 = vmatpush.bf16.msra.mxu0 %v1329
    %2910 = vmatpush.bf16.msra.mxu0 %v1328
    %2911 = vmatpush.bf16.msra.mxu0 %v1327
    %2912 = vmatpush.bf16.msra.mxu0 %v1326
    %2913 = vmatpush.bf16.msra.mxu0 %v1325
    %2914 = vmatpush.bf16.msra.mxu0 %v1324
    %2915 = vmatpush.bf16.msra.mxu0 %v1323
    %2916 = vmatpush.bf16.msra.mxu0 %v1322
    %2917 = vmatmul.bf16.gmra.mxu0 %v2908
    %v2918 = vpop.f32.mrf.mxu0
    %v2919 = vadd.f32 %v1288, %v2918
    %v2920 = vpop.f32.mrf.mxu0
    %2921 = vdwg.mxu0
    %v2922 = vmax.f32 %v2919, 0.0
    %v2923 = vpack.c.bf16 %v2922, %v2922
    %s2924 = scalar_lea.vmem %s5, 160
    %v2925 = vld [vmem:[%s2924] sm:$0xff]
    %v2926 = vld [vmem:[%s2924 + $0x8] sm:$0xff]
    %v2927 = vld [vmem:[%s2924 + $0x10] sm:$0xff]
    %v2928 = vld [vmem:[%s2924 + $0x18] sm:$0xff]
    %v2933 = vunpack.c.l.b16 %v2925
    %v2934 = vunpack.c.h.b16 %v2925
    %v2935 = vunpack.c.l.b16 %v2926
    %v2936 = vunpack.c.h.b16 %v2926
    %v2937 = vunpack.c.l.b16 %v2927
    %v2938 = vunpack.c.h.b16 %v2927
    %v2939 = vunpack.c.l.b16 %v2928
    %v2940 = vunpack.c.h.b16 %v2928
    %v2941 = vpack.c.b16 %v2935, %v2933
    %v2942 = vpack.c.b16 %v2936, %v2934
    %v2943 = vpack.c.b16 %v2939, %v2937
    %v2944 = vpack.c.b16 %v2940, %v2938
    %v2950 = vsel %vm1643, %v2923, 0
    %2952 = vmatpush.bf16.msra.mxu0 0
    %2953 = vmatpush.bf16.msra.mxu0 0
    %2954 = vmatpush.bf16.msra.mxu0 0
    %2955 = vmatpush.bf16.msra.mxu0 0
    %2956 = vmatpush.bf16.msra.mxu0 0
    %2957 = vmatpush.bf16.msra.mxu0 0
    %2958 = vmatpush.bf16.msra.mxu0 %v2943
    %2959 = vmatpush.bf16.msra.mxu0 %v2941
    %2960 = vmatmul.bf16.gmra.mxu0 %v2950
    %v2961 = vpop.f32.mrf.mxu0
    %v2962 = vadd.f32 0.0, %v2961
    %v2963 = vpop.f32.mrf.mxu0
    %2964 = vdwg.mxu0
    %2965 = vmatpush.bf16.msra.mxu0 0
    %2966 = vmatpush.bf16.msra.mxu0 0
    %2967 = vmatpush.bf16.msra.mxu0 0
    %2968 = vmatpush.bf16.msra.mxu0 0
    %2969 = vmatpush.bf16.msra.mxu0 0
    %2970 = vmatpush.bf16.msra.mxu0 0
    %2971 = vmatpush.bf16.msra.mxu0 %v2944
    %2972 = vmatpush.bf16.msra.mxu0 %v2942
    %2973 = vmatmul.bf16.gmra.mxu0 %v2950
    %v2974 = vpop.f32.mrf.mxu0
    %v2975 = vadd.f32 0.0, %v2974
    %v2976 = vpop.f32.mrf.mxu0
    %2977 = vdwg.mxu0
    %v2978 = vadd.f32 %v2667, %v2962
    %v2979 = vadd.f32 %v2668, %v2975
    %2980 = vst [vmem:[#allocation1] ss:$9 sm:$0xff] %v1867
    %v2981 = vld [vmem:[#allocation1] sm:$0xff]
    %v2982 = vld [vmem:[#allocation1 + $0x9] sm:$0xff]
    %v2983 = vld [vmem:[#allocation1 + $0x12] sm:$0xff]
    %2987 = vmatpush.bf16.msra.mxu0 %v281
    %2988 = vmatpush.bf16.msra.mxu0 %v280
    %2989 = vmatpush.bf16.msra.mxu0 %v279
    %2990 = vmatpush.bf16.msra.mxu0 %v278
    %2991 = vmatpush.bf16.msra.mxu0 %v277
    %2992 = vmatpush.bf16.msra.mxu0 %v276
    %2993 = vmatpush.bf16.msra.mxu0 %v275
    %2994 = vmatpush.bf16.msra.mxu0 %v274
    %2995 = vmatmul.bf16.gmra.mxu0 %v2981
    %v2996 = vpop.f32.mrf.mxu0
    %v2997 = vadd.f32 0.0, %v2996
    %v2998 = vpop.f32.mrf.mxu0
    %2999 = vdwg.mxu0
    %3000 = vmatpush.bf16.msra.mxu0 %v289
    %3001 = vmatpush.bf16.msra.mxu0 %v288
    %3002 = vmatpush.bf16.msra.mxu0 %v287
    %3003 = vmatpush.bf16.msra.mxu0 %v286
    %3004 = vmatpush.bf16.msra.mxu0 %v285
    %3005 = vmatpush.bf16.msra.mxu0 %v284
    %3006 = vmatpush.bf16.msra.mxu0 %v283
    %3007 = vmatpush.bf16.msra.mxu0 %v282
    %3008 = vmatmul.bf16.gmra.mxu0 %v2982
    %v3009 = vpop.f32.mrf.mxu0
    %v3010 = vadd.f32 %v2997, %v3009
    %v3011 = vpop.f32.mrf.mxu0
    %3012 = vdwg.mxu0
    %3013 = vmatpush.bf16.msra.mxu0 %v297
    %3014 = vmatpush.bf16.msra.mxu0 %v296
    %3015 = vmatpush.bf16.msra.mxu0 %v295
    %3016 = vmatpush.bf16.msra.mxu0 %v294
    %3017 = vmatpush.bf16.msra.mxu0 %v293
    %3018 = vmatpush.bf16.msra.mxu0 %v292
    %3019 = vmatpush.bf16.msra.mxu0 %v291
    %3020 = vmatpush.bf16.msra.mxu0 %v290
    %3021 = vmatmul.bf16.gmra.mxu0 %v2983
    %v3022 = vpop.f32.mrf.mxu0
    %v3023 = vadd.f32 %v3010, %v3022
    %v3024 = vpop.f32.mrf.mxu0
    %3025 = vdwg.mxu0
    %3026 = vst [vmem:[#allocation1] ss:$9 sm:$0xff] %v1818
    %v3027 = vld [vmem:[#allocation1] sm:$0xff]
    %v3028 = vld [vmem:[#allocation1 + $0x9] sm:$0xff]
    %v3029 = vld [vmem:[#allocation1 + $0x12] sm:$0xff]
    %3033 = vmatpush.bf16.msra.mxu0 %v472
    %3034 = vmatpush.bf16.msra.mxu0 %v471
    %3035 = vmatpush.bf16.msra.mxu0 %v470
    %3036 = vmatpush.bf16.msra.mxu0 %v469
    %3037 = vmatpush.bf16.msra.mxu0 %v468
    %3038 = vmatpush.bf16.msra.mxu0 %v467
    %3039 = vmatpush.bf16.msra.mxu0 %v466
    %3040 = vmatpush.bf16.msra.mxu0 %v465
    %3041 = vmatmul.bf16.gmra.mxu0 %v3027
    %v3042 = vpop.f32.mrf.mxu0
    %v3043 = vadd.f32 %v3023, %v3042
    %v3044 = vpop.f32.mrf.mxu0
    %3045 = vdwg.mxu0
    %3046 = vmatpush.bf16.msra.mxu0 %v480
    %3047 = vmatpush.bf16.msra.mxu0 %v479
    %3048 = vmatpush.bf16.msra.mxu0 %v478
    %3049 = vmatpush.bf16.msra.mxu0 %v477
    %3050 = vmatpush.bf16.msra.mxu0 %v476
    %3051 = vmatpush.bf16.msra.mxu0 %v475
    %3052 = vmatpush.bf16.msra.mxu0 %v474
    %3053 = vmatpush.bf16.msra.mxu0 %v473
    %3054 = vmatmul.bf16.gmra.mxu0 %v3028
    %v3055 = vpop.f32.mrf.mxu0
    %v3056 = vadd.f32 %v3043, %v3055
    %v3057 = vpop.f32.mrf.mxu0
    %3058 = vdwg.mxu0
    %3059 = vmatpush.bf16.msra.mxu0 %v488
    %3060 = vmatpush.bf16.msra.mxu0 %v487
    %3061 = vmatpush.bf16.msra.mxu0 %v486
    %3062 = vmatpush.bf16.msra.mxu0 %v485
    %3063 = vmatpush.bf16.msra.mxu0 %v484
    %3064 = vmatpush.bf16.msra.mxu0 %v483
    %3065 = vmatpush.bf16.msra.mxu0 %v482
    %3066 = vmatpush.bf16.msra.mxu0 %v481
    %3067 = vmatmul.bf16.gmra.mxu0 %v3029
    %v3068 = vpop.f32.mrf.mxu0
    %v3069 = vadd.f32 %v3056, %v3068
    %v3070 = vpop.f32.mrf.mxu0
    %3071 = vdwg.mxu0
    %3072 = vst [vmem:[#allocation1] ss:$9 sm:$0xff] %v1916
    %v3073 = vld [vmem:[#allocation1] sm:$0xff]
    %v3074 = vld [vmem:[#allocation1 + $0x9] sm:$0xff]
    %v3075 = vld [vmem:[#allocation1 + $0x12] sm:$0xff]
    %3079 = vmatpush.bf16.msra.mxu0 %v714
    %3080 = vmatpush.bf16.msra.mxu0 %v713
    %3081 = vmatpush.bf16.msra.mxu0 %v712
    %3082 = vmatpush.bf16.msra.mxu0 %v711
    %3083 = vmatpush.bf16.msra.mxu0 %v710
    %3084 = vmatpush.bf16.msra.mxu0 %v709
    %3085 = vmatpush.bf16.msra.mxu0 %v708
    %3086 = vmatpush.bf16.msra.mxu0 %v707
    %3087 = vmatmul.bf16.gmra.mxu0 %v3073
    %v3088 = vpop.f32.mrf.mxu0
    %v3089 = vadd.f32 0.0, %v3088
    %v3090 = vpop.f32.mrf.mxu0
    %3091 = vdwg.mxu0
    %3092 = vmatpush.bf16.msra.mxu0 %v722
    %3093 = vmatpush.bf16.msra.mxu0 %v721
    %3094 = vmatpush.bf16.msra.mxu0 %v720
    %3095 = vmatpush.bf16.msra.mxu0 %v719
    %3096 = vmatpush.bf16.msra.mxu0 %v718
    %3097 = vmatpush.bf16.msra.mxu0 %v717
    %3098 = vmatpush.bf16.msra.mxu0 %v716
    %3099 = vmatpush.bf16.msra.mxu0 %v715
    %3100 = vmatmul.bf16.gmra.mxu0 %v3074
    %v3101 = vpop.f32.mrf.mxu0
    %v3102 = vadd.f32 %v3089, %v3101
    %v3103 = vpop.f32.mrf.mxu0
    %3104 = vdwg.mxu0
    %3105 = vmatpush.bf16.msra.mxu0 %v730
    %3106 = vmatpush.bf16.msra.mxu0 %v729
    %3107 = vmatpush.bf16.msra.mxu0 %v728
    %3108 = vmatpush.bf16.msra.mxu0 %v727
    %3109 = vmatpush.bf16.msra.mxu0 %v726
    %3110 = vmatpush.bf16.msra.mxu0 %v725
    %3111 = vmatpush.bf16.msra.mxu0 %v724
    %3112 = vmatpush.bf16.msra.mxu0 %v723
    %3113 = vmatmul.bf16.gmra.mxu0 %v3075
    %v3114 = vpop.f32.mrf.mxu0
    %v3115 = vadd.f32 %v3102, %v3114
    %v3116 = vpop.f32.mrf.mxu0
    %3117 = vdwg.mxu0
    %v3118 = vadd.f32 %v3069, %v3115
    %v3119 = vld [vmem:[%s2495 + $0x2] sm:$0x7]
    %3121 = vst [vmem:[#allocation1] ss:$9 sm:$0xff] %v3119
    %v3122 = vld [vmem:[#allocation1] sm:$0xff]
    %v3123 = vld [vmem:[#allocation1 + $0x9] sm:$0xff]
    %v3124 = vld [vmem:[#allocation1 + $0x12] sm:$0xff]
    %3128 = vmatpush.bf16.msra.mxu0 %v957
    %3129 = vmatpush.bf16.msra.mxu0 %v956
    %3130 = vmatpush.bf16.msra.mxu0 %v955
    %3131 = vmatpush.bf16.msra.mxu0 %v954
    %3132 = vmatpush.bf16.msra.mxu0 %v953
    %3133 = vmatpush.bf16.msra.mxu0 %v952
    %3134 = vmatpush.bf16.msra.mxu0 %v951
    %3135 = vmatpush.bf16.msra.mxu0 %v950
    %3136 = vmatmul.bf16.gmra.mxu0 %v3122
    %v3137 = vpop.f32.mrf.mxu0
    %v3138 = vadd.f32 0.0, %v3137
    %v3139 = vpop.f32.mrf.mxu0
    %3140 = vdwg.mxu0
    %3141 = vmatpush.bf16.msra.mxu0 %v965
    %3142 = vmatpush.bf16.msra.mxu0 %v964
    %3143 = vmatpush.bf16.msra.mxu0 %v963
    %3144 = vmatpush.bf16.msra.mxu0 %v962
    %3145 = vmatpush.bf16.msra.mxu0 %v961
    %3146 = vmatpush.bf16.msra.mxu0 %v960
    %3147 = vmatpush.bf16.msra.mxu0 %v959
    %3148 = vmatpush.bf16.msra.mxu0 %v958
    %3149 = vmatmul.bf16.gmra.mxu0 %v3123
    %v3150 = vpop.f32.mrf.mxu0
    %v3151 = vadd.f32 %v3138, %v3150
    %v3152 = vpop.f32.mrf.mxu0
    %3153 = vdwg.mxu0
    %3154 = vmatpush.bf16.msra.mxu0 %v973
    %3155 = vmatpush.bf16.msra.mxu0 %v972
    %3156 = vmatpush.bf16.msra.mxu0 %v971
    %3157 = vmatpush.bf16.msra.mxu0 %v970
    %3158 = vmatpush.bf16.msra.mxu0 %v969
    %3159 = vmatpush.bf16.msra.mxu0 %v968
    %3160 = vmatpush.bf16.msra.mxu0 %v967
    %3161 = vmatpush.bf16.msra.mxu0 %v966
    %3162 = vmatmul.bf16.gmra.mxu0 %v3124
    %v3163 = vpop.f32.mrf.mxu0
    %v3164 = vadd.f32 %v3151, %v3163
    %v3165 = vpop.f32.mrf.mxu0
    %3166 = vdwg.mxu0
    %v3167 = vadd.f32 %v3118, %v3164
    %v3168 = vld [vmem:[%s2545 + $0x2] sm:$0x7]
    %3170 = vst [vmem:[#allocation1] ss:$9 sm:$0xff] %v3168
    %v3171 = vld [vmem:[#allocation1] sm:$0xff]
    %v3172 = vld [vmem:[#allocation1 + $0x9] sm:$0xff]
    %v3173 = vld [vmem:[#allocation1 + $0x12] sm:$0xff]
    %3177 = vmatpush.bf16.msra.mxu0 %v1200
    %3178 = vmatpush.bf16.msra.mxu0 %v1199
    %3179 = vmatpush.bf16.msra.mxu0 %v1198
    %3180 = vmatpush.bf16.msra.mxu0 %v1197
    %3181 = vmatpush.bf16.msra.mxu0 %v1196
    %3182 = vmatpush.bf16.msra.mxu0 %v1195
    %3183 = vmatpush.bf16.msra.mxu0 %v1194
    %3184 = vmatpush.bf16.msra.mxu0 %v1193
    %3185 = vmatmul.bf16.gmra.mxu0 %v3171
    %v3186 = vpop.f32.mrf.mxu0
    %v3187 = vadd.f32 0.0, %v3186
    %v3188 = vpop.f32.mrf.mxu0
    %3189 = vdwg.mxu0
    %3190 = vmatpush.bf16.msra.mxu0 %v1208
    %3191 = vmatpush.bf16.msra.mxu0 %v1207
    %3192 = vmatpush.bf16.msra.mxu0 %v1206
    %3193 = vmatpush.bf16.msra.mxu0 %v1205
    %3194 = vmatpush.bf16.msra.mxu0 %v1204
    %3195 = vmatpush.bf16.msra.mxu0 %v1203
    %3196 = vmatpush.bf16.msra.mxu0 %v1202
    %3197 = vmatpush.bf16.msra.mxu0 %v1201
    %3198 = vmatmul.bf16.gmra.mxu0 %v3172
    %v3199 = vpop.f32.mrf.mxu0
    %v3200 = vadd.f32 %v3187, %v3199
    %v3201 = vpop.f32.mrf.mxu0
    %3202 = vdwg.mxu0
    %3203 = vmatpush.bf16.msra.mxu0 %v1216
    %3204 = vmatpush.bf16.msra.mxu0 %v1215
    %3205 = vmatpush.bf16.msra.mxu0 %v1214
    %3206 = vmatpush.bf16.msra.mxu0 %v1213
    %3207 = vmatpush.bf16.msra.mxu0 %v1212
    %3208 = vmatpush.bf16.msra.mxu0 %v1211
    %3209 = vmatpush.bf16.msra.mxu0 %v1210
    %3210 = vmatpush.bf16.msra.mxu0 %v1209
    %3211 = vmatmul.bf16.gmra.mxu0 %v3173
    %v3212 = vpop.f32.mrf.mxu0
    %v3213 = vadd.f32 %v3200, %v3212
    %v3214 = vpop.f32.mrf.mxu0
    %3215 = vdwg.mxu0
    %v3216 = vadd.f32 %v3167, %v3213
    %v3217 = vadd.f32 %v3216, %v1282
    %v3218 = vmax.f32 %v3217, 0.0
    %v3219 = vpack.c.bf16 %v3218, %v3218
    %3220 = vmatpush.bf16.msra.mxu0 %v1329
    %3221 = vmatpush.bf16.msra.mxu0 %v1328
    %3222 = vmatpush.bf16.msra.mxu0 %v1327
    %3223 = vmatpush.bf16.msra.mxu0 %v1326
    %3224 = vmatpush.bf16.msra.mxu0 %v1325
    %3225 = vmatpush.bf16.msra.mxu0 %v1324
    %3226 = vmatpush.bf16.msra.mxu0 %v1323
    %3227 = vmatpush.bf16.msra.mxu0 %v1322
    %3228 = vmatmul.bf16.gmra.mxu0 %v3219
    %v3229 = vpop.f32.mrf.mxu0
    %v3230 = vadd.f32 %v1288, %v3229
    %v3231 = vpop.f32.mrf.mxu0
    %3232 = vdwg.mxu0
    %v3233 = vmax.f32 %v3230, 0.0
    %v3234 = vpack.c.bf16 %v3233, %v3233
    %s3235 = scalar_lea.vmem %s5, 192
    %v3236 = vld [vmem:[%s3235] sm:$0xff]
    %v3237 = vld [vmem:[%s3235 + $0x8] sm:$0xff]
    %v3238 = vld [vmem:[%s3235 + $0x10] sm:$0xff]
    %v3239 = vld [vmem:[%s3235 + $0x18] sm:$0xff]
    %v3244 = vunpack.c.l.b16 %v3236
    %v3245 = vunpack.c.h.b16 %v3236
    %v3246 = vunpack.c.l.b16 %v3237
    %v3247 = vunpack.c.h.b16 %v3237
    %v3248 = vunpack.c.l.b16 %v3238
    %v3249 = vunpack.c.h.b16 %v3238
    %v3250 = vunpack.c.l.b16 %v3239
    %v3251 = vunpack.c.h.b16 %v3239
    %v3252 = vpack.c.b16 %v3246, %v3244
    %v3253 = vpack.c.b16 %v3247, %v3245
    %v3254 = vpack.c.b16 %v3250, %v3248
    %v3255 = vpack.c.b16 %v3251, %v3249
    %v3261 = vsel %vm1643, %v3234, 0
    %3263 = vmatpush.bf16.msra.mxu0 0
    %3264 = vmatpush.bf16.msra.mxu0 0
    %3265 = vmatpush.bf16.msra.mxu0 0
    %3266 = vmatpush.bf16.msra.mxu0 0
    %3267 = vmatpush.bf16.msra.mxu0 0
    %3268 = vmatpush.bf16.msra.mxu0 0
    %3269 = vmatpush.bf16.msra.mxu0 %v3254
    %3270 = vmatpush.bf16.msra.mxu0 %v3252
    %3271 = vmatmul.bf16.gmra.mxu0 %v3261
    %v3272 = vpop.f32.mrf.mxu0
    %v3273 = vadd.f32 0.0, %v3272
    %v3274 = vpop.f32.mrf.mxu0
    %3275 = vdwg.mxu0
    %3276 = vmatpush.bf16.msra.mxu0 0
    %3277 = vmatpush.bf16.msra.mxu0 0
    %3278 = vmatpush.bf16.msra.mxu0 0
    %3279 = vmatpush.bf16.msra.mxu0 0
    %3280 = vmatpush.bf16.msra.mxu0 0
    %3281 = vmatpush.bf16.msra.mxu0 0
    %3282 = vmatpush.bf16.msra.mxu0 %v3255
    %3283 = vmatpush.bf16.msra.mxu0 %v3253
    %3284 = vmatmul.bf16.gmra.mxu0 %v3261
    %v3285 = vpop.f32.mrf.mxu0
    %v3286 = vadd.f32 0.0, %v3285
    %v3287 = vpop.f32.mrf.mxu0
    %3288 = vdwg.mxu0
    %v3289 = vadd.f32 %v2978, %v3273
    %v3290 = vadd.f32 %v2979, %v3286
    %3291 = vst [vmem:[#allocation1] ss:$9 sm:$0xff] %v2184
    %v3292 = vld [vmem:[#allocation1] sm:$0xff]
    %v3293 = vld [vmem:[#allocation1 + $0x9] sm:$0xff]
    %v3294 = vld [vmem:[#allocation1 + $0x12] sm:$0xff]
    %3298 = vmatpush.bf16.msra.mxu0 %v281
    %3299 = vmatpush.bf16.msra.mxu0 %v280
    %3300 = vmatpush.bf16.msra.mxu0 %v279
    %3301 = vmatpush.bf16.msra.mxu0 %v278
    %3302 = vmatpush.bf16.msra.mxu0 %v277
    %3303 = vmatpush.bf16.msra.mxu0 %v276
    %3304 = vmatpush.bf16.msra.mxu0 %v275
    %3305 = vmatpush.bf16.msra.mxu0 %v274
    %3306 = vmatmul.bf16.gmra.mxu0 %v3292
    %v3307 = vpop.f32.mrf.mxu0
    %v3308 = vadd.f32 0.0, %v3307
    %v3309 = vpop.f32.mrf.mxu0
    %3310 = vdwg.mxu0
    %3311 = vmatpush.bf16.msra.mxu0 %v289
    %3312 = vmatpush.bf16.msra.mxu0 %v288
    %3313 = vmatpush.bf16.msra.mxu0 %v287
    %3314 = vmatpush.bf16.msra.mxu0 %v286
    %3315 = vmatpush.bf16.msra.mxu0 %v285
    %3316 = vmatpush.bf16.msra.mxu0 %v284
    %3317 = vmatpush.bf16.msra.mxu0 %v283
    %3318 = vmatpush.bf16.msra.mxu0 %v282
    %3319 = vmatmul.bf16.gmra.mxu0 %v3293
    %v3320 = vpop.f32.mrf.mxu0
    %v3321 = vadd.f32 %v3308, %v3320
    %v3322 = vpop.f32.mrf.mxu0
    %3323 = vdwg.mxu0
    %3324 = vmatpush.bf16.msra.mxu0 %v297
    %3325 = vmatpush.bf16.msra.mxu0 %v296
    %3326 = vmatpush.bf16.msra.mxu0 %v295
    %3327 = vmatpush.bf16.msra.mxu0 %v294
    %3328 = vmatpush.bf16.msra.mxu0 %v293
    %3329 = vmatpush.bf16.msra.mxu0 %v292
    %3330 = vmatpush.bf16.msra.mxu0 %v291
    %3331 = vmatpush.bf16.msra.mxu0 %v290
    %3332 = vmatmul.bf16.gmra.mxu0 %v3294
    %v3333 = vpop.f32.mrf.mxu0
    %v3334 = vadd.f32 %v3321, %v3333
    %v3335 = vpop.f32.mrf.mxu0
    %3336 = vdwg.mxu0
    %3337 = vst [vmem:[#allocation1] ss:$9 sm:$0xff] %v2135
    %v3338 = vld [vmem:[#allocation1] sm:$0xff]
    %v3339 = vld [vmem:[#allocation1 + $0x9] sm:$0xff]
    %v3340 = vld [vmem:[#allocation1 + $0x12] sm:$0xff]
    %3344 = vmatpush.bf16.msra.mxu0 %v472
    %3345 = vmatpush.bf16.msra.mxu0 %v471
    %3346 = vmatpush.bf16.msra.mxu0 %v470
    %3347 = vmatpush.bf16.msra.mxu0 %v469
    %3348 = vmatpush.bf16.msra.mxu0 %v468
    %3349 = vmatpush.bf16.msra.mxu0 %v467
    %3350 = vmatpush.bf16.msra.mxu0 %v466
    %3351 = vmatpush.bf16.msra.mxu0 %v465
    %3352 = vmatmul.bf16.gmra.mxu0 %v3338
    %v3353 = vpop.f32.mrf.mxu0
    %v3354 = vadd.f32 %v3334, %v3353
    %v3355 = vpop.f32.mrf.mxu0
    %3356 = vdwg.mxu0
    %3357 = vmatpush.bf16.msra.mxu0 %v480
    %3358 = vmatpush.bf16.msra.mxu0 %v479
    %3359 = vmatpush.bf16.msra.mxu0 %v478
    %3360 = vmatpush.bf16.msra.mxu0 %v477
    %3361 = vmatpush.bf16.msra.mxu0 %v476
    %3362 = vmatpush.bf16.msra.mxu0 %v475
    %3363 = vmatpush.bf16.msra.mxu0 %v474
    %3364 = vmatpush.bf16.msra.mxu0 %v473
    %3365 = vmatmul.bf16.gmra.mxu0 %v3339
    %v3366 = vpop.f32.mrf.mxu0
    %v3367 = vadd.f32 %v3354, %v3366
    %v3368 = vpop.f32.mrf.mxu0
    %3369 = vdwg.mxu0
    %3370 = vmatpush.bf16.msra.mxu0 %v488
    %3371 = vmatpush.bf16.msra.mxu0 %v487
    %3372 = vmatpush.bf16.msra.mxu0 %v486
    %3373 = vmatpush.bf16.msra.mxu0 %v485
    %3374 = vmatpush.bf16.msra.mxu0 %v484
    %3375 = vmatpush.bf16.msra.mxu0 %v483
    %3376 = vmatpush.bf16.msra.mxu0 %v482
    %3377 = vmatpush.bf16.msra.mxu0 %v481
    %3378 = vmatmul.bf16.gmra.mxu0 %v3340
    %v3379 = vpop.f32.mrf.mxu0
    %v3380 = vadd.f32 %v3367, %v3379
    %v3381 = vpop.f32.mrf.mxu0
    %3382 = vdwg.mxu0
    %3383 = vst [vmem:[#allocation1] ss:$9 sm:$0xff] %v2233
    %v3384 = vld [vmem:[#allocation1] sm:$0xff]
    %v3385 = vld [vmem:[#allocation1 + $0x9] sm:$0xff]
    %v3386 = vld [vmem:[#allocation1 + $0x12] sm:$0xff]
    %3390 = vmatpush.bf16.msra.mxu0 %v714
    %3391 = vmatpush.bf16.msra.mxu0 %v713
    %3392 = vmatpush.bf16.msra.mxu0 %v712
    %3393 = vmatpush.bf16.msra.mxu0 %v711
    %3394 = vmatpush.bf16.msra.mxu0 %v710
    %3395 = vmatpush.bf16.msra.mxu0 %v709
    %3396 = vmatpush.bf16.msra.mxu0 %v708
    %3397 = vmatpush.bf16.msra.mxu0 %v707
    %3398 = vmatmul.bf16.gmra.mxu0 %v3384
    %v3399 = vpop.f32.mrf.mxu0
    %v3400 = vadd.f32 0.0, %v3399
    %v3401 = vpop.f32.mrf.mxu0
    %3402 = vdwg.mxu0
    %3403 = vmatpush.bf16.msra.mxu0 %v722
    %3404 = vmatpush.bf16.msra.mxu0 %v721
    %3405 = vmatpush.bf16.msra.mxu0 %v720
    %3406 = vmatpush.bf16.msra.mxu0 %v719
    %3407 = vmatpush.bf16.msra.mxu0 %v718
    %3408 = vmatpush.bf16.msra.mxu0 %v717
    %3409 = vmatpush.bf16.msra.mxu0 %v716
    %3410 = vmatpush.bf16.msra.mxu0 %v715
    %3411 = vmatmul.bf16.gmra.mxu0 %v3385
    %v3412 = vpop.f32.mrf.mxu0
    %v3413 = vadd.f32 %v3400, %v3412
    %v3414 = vpop.f32.mrf.mxu0
    %3415 = vdwg.mxu0
    %3416 = vmatpush.bf16.msra.mxu0 %v730
    %3417 = vmatpush.bf16.msra.mxu0 %v729
    %3418 = vmatpush.bf16.msra.mxu0 %v728
    %3419 = vmatpush.bf16.msra.mxu0 %v727
    %3420 = vmatpush.bf16.msra.mxu0 %v726
    %3421 = vmatpush.bf16.msra.mxu0 %v725
    %3422 = vmatpush.bf16.msra.mxu0 %v724
    %3423 = vmatpush.bf16.msra.mxu0 %v723
    %3424 = vmatmul.bf16.gmra.mxu0 %v3386
    %v3425 = vpop.f32.mrf.mxu0
    %v3426 = vadd.f32 %v3413, %v3425
    %v3427 = vpop.f32.mrf.mxu0
    %3428 = vdwg.mxu0
    %v3429 = vadd.f32 %v3380, %v3426
    %v3430 = vld [vmem:[%s2495 + $0x3] sm:$0x7]
    %3432 = vst [vmem:[#allocation1] ss:$9 sm:$0xff] %v3430
    %v3433 = vld [vmem:[#allocation1] sm:$0xff]
    %v3434 = vld [vmem:[#allocation1 + $0x9] sm:$0xff]
    %v3435 = vld [vmem:[#allocation1 + $0x12] sm:$0xff]
    %3439 = vmatpush.bf16.msra.mxu0 %v957
    %3440 = vmatpush.bf16.msra.mxu0 %v956
    %3441 = vmatpush.bf16.msra.mxu0 %v955
    %3442 = vmatpush.bf16.msra.mxu0 %v954
    %3443 = vmatpush.bf16.msra.mxu0 %v953
    %3444 = vmatpush.bf16.msra.mxu0 %v952
    %3445 = vmatpush.bf16.msra.mxu0 %v951
    %3446 = vmatpush.bf16.msra.mxu0 %v950
    %3447 = vmatmul.bf16.gmra.mxu0 %v3433
    %v3448 = vpop.f32.mrf.mxu0
    %v3449 = vadd.f32 0.0, %v3448
    %v3450 = vpop.f32.mrf.mxu0
    %3451 = vdwg.mxu0
    %3452 = vmatpush.bf16.msra.mxu0 %v965
    %3453 = vmatpush.bf16.msra.mxu0 %v964
    %3454 = vmatpush.bf16.msra.mxu0 %v963
    %3455 = vmatpush.bf16.msra.mxu0 %v962
    %3456 = vmatpush.bf16.msra.mxu0 %v961
    %3457 = vmatpush.bf16.msra.mxu0 %v960
    %3458 = vmatpush.bf16.msra.mxu0 %v959
    %3459 = vmatpush.bf16.msra.mxu0 %v958
    %3460 = vmatmul.bf16.gmra.mxu0 %v3434
    %v3461 = vpop.f32.mrf.mxu0
    %v3462 = vadd.f32 %v3449, %v3461
    %v3463 = vpop.f32.mrf.mxu0
    %3464 = vdwg.mxu0
    %3465 = vmatpush.bf16.msra.mxu0 %v973
    %3466 = vmatpush.bf16.msra.mxu0 %v972
    %3467 = vmatpush.bf16.msra.mxu0 %v971
    %3468 = vmatpush.bf16.msra.mxu0 %v970
    %3469 = vmatpush.bf16.msra.mxu0 %v969
    %3470 = vmatpush.bf16.msra.mxu0 %v968
    %3471 = vmatpush.bf16.msra.mxu0 %v967
    %3472 = vmatpush.bf16.msra.mxu0 %v966
    %3473 = vmatmul.bf16.gmra.mxu0 %v3435
    %v3474 = vpop.f32.mrf.mxu0
    %v3475 = vadd.f32 %v3462, %v3474
    %v3476 = vpop.f32.mrf.mxu0
    %3477 = vdwg.mxu0
    %v3478 = vadd.f32 %v3429, %v3475
    %v3479 = vld [vmem:[%s2545 + $0x3] sm:$0x7]
    %3481 = vst [vmem:[#allocation1] ss:$9 sm:$0xff] %v3479
    %v3482 = vld [vmem:[#allocation1] sm:$0xff]
    %v3483 = vld [vmem:[#allocation1 + $0x9] sm:$0xff]
    %v3484 = vld [vmem:[#allocation1 + $0x12] sm:$0xff]
    %3488 = vmatpush.bf16.msra.mxu0 %v1200
    %3489 = vmatpush.bf16.msra.mxu0 %v1199
    %3490 = vmatpush.bf16.msra.mxu0 %v1198
    %3491 = vmatpush.bf16.msra.mxu0 %v1197
    %3492 = vmatpush.bf16.msra.mxu0 %v1196
    %3493 = vmatpush.bf16.msra.mxu0 %v1195
    %3494 = vmatpush.bf16.msra.mxu0 %v1194
    %3495 = vmatpush.bf16.msra.mxu0 %v1193
    %3496 = vmatmul.bf16.gmra.mxu0 %v3482
    %v3497 = vpop.f32.mrf.mxu0
    %v3498 = vadd.f32 0.0, %v3497
    %v3499 = vpop.f32.mrf.mxu0
    %3500 = vdwg.mxu0
    %3501 = vmatpush.bf16.msra.mxu0 %v1208
    %3502 = vmatpush.bf16.msra.mxu0 %v1207
    %3503 = vmatpush.bf16.msra.mxu0 %v1206
    %3504 = vmatpush.bf16.msra.mxu0 %v1205
    %3505 = vmatpush.bf16.msra.mxu0 %v1204
    %3506 = vmatpush.bf16.msra.mxu0 %v1203
    %3507 = vmatpush.bf16.msra.mxu0 %v1202
    %3508 = vmatpush.bf16.msra.mxu0 %v1201
    %3509 = vmatmul.bf16.gmra.mxu0 %v3483
    %v3510 = vpop.f32.mrf.mxu0
    %v3511 = vadd.f32 %v3498, %v3510
    %v3512 = vpop.f32.mrf.mxu0
    %3513 = vdwg.mxu0
    %3514 = vmatpush.bf16.msra.mxu0 %v1216
    %3515 = vmatpush.bf16.msra.mxu0 %v1215
    %3516 = vmatpush.bf16.msra.mxu0 %v1214
    %3517 = vmatpush.bf16.msra.mxu0 %v1213
    %3518 = vmatpush.bf16.msra.mxu0 %v1212
    %3519 = vmatpush.bf16.msra.mxu0 %v1211
    %3520 = vmatpush.bf16.msra.mxu0 %v1210
    %3521 = vmatpush.bf16.msra.mxu0 %v1209
    %3522 = vmatmul.bf16.gmra.mxu0 %v3484
    %v3523 = vpop.f32.mrf.mxu0
    %v3524 = vadd.f32 %v3511, %v3523
    %v3525 = vpop.f32.mrf.mxu0
    %3526 = vdwg.mxu0
    %v3527 = vadd.f32 %v3478, %v3524
    %v3528 = vadd.f32 %v3527, %v1282
    %v3529 = vmax.f32 %v3528, 0.0
    %v3530 = vpack.c.bf16 %v3529, %v3529
    %3531 = vmatpush.bf16.msra.mxu0 %v1329
    %3532 = vmatpush.bf16.msra.mxu0 %v1328
    %3533 = vmatpush.bf16.msra.mxu0 %v1327
    %3534 = vmatpush.bf16.msra.mxu0 %v1326
    %3535 = vmatpush.bf16.msra.mxu0 %v1325
    %3536 = vmatpush.bf16.msra.mxu0 %v1324
    %3537 = vmatpush.bf16.msra.mxu0 %v1323
    %3538 = vmatpush.bf16.msra.mxu0 %v1322
    %3539 = vmatmul.bf16.gmra.mxu0 %v3530
    %v3540 = vpop.f32.mrf.mxu0
    %v3541 = vadd.f32 %v1288, %v3540
    %v3542 = vpop.f32.mrf.mxu0
    %3543 = vdwg.mxu0
    %v3544 = vmax.f32 %v3541, 0.0
    %v3545 = vpack.c.bf16 %v3544, %v3544
    %s3546 = scalar_lea.vmem %s5, 224
    %v3547 = vld [vmem:[%s3546] sm:$0xff]
    %v3548 = vld [vmem:[%s3546 + $0x8] sm:$0xff]
    %v3549 = vld [vmem:[%s3546 + $0x10] sm:$0xff]
    %v3550 = vld [vmem:[%s3546 + $0x18] sm:$0xff]
    %v3555 = vunpack.c.l.b16 %v3547
    %v3556 = vunpack.c.h.b16 %v3547
    %v3557 = vunpack.c.l.b16 %v3548
    %v3558 = vunpack.c.h.b16 %v3548
    %v3559 = vunpack.c.l.b16 %v3549
    %v3560 = vunpack.c.h.b16 %v3549
    %v3561 = vunpack.c.l.b16 %v3550
    %v3562 = vunpack.c.h.b16 %v3550
    %v3563 = vpack.c.b16 %v3557, %v3555
    %v3564 = vpack.c.b16 %v3558, %v3556
    %v3565 = vpack.c.b16 %v3561, %v3559
    %v3566 = vpack.c.b16 %v3562, %v3560
    %v3572 = vsel %vm1643, %v3545, 0
    %3574 = vmatpush.bf16.msra.mxu0 0
    %3575 = vmatpush.bf16.msra.mxu0 0
    %3576 = vmatpush.bf16.msra.mxu0 0
    %3577 = vmatpush.bf16.msra.mxu0 0
    %3578 = vmatpush.bf16.msra.mxu0 0
    %3579 = vmatpush.bf16.msra.mxu0 0
    %3580 = vmatpush.bf16.msra.mxu0 %v3565
    %3581 = vmatpush.bf16.msra.mxu0 %v3563
    %3582 = vmatmul.bf16.gmra.mxu0 %v3572
    %v3583 = vpop.f32.mrf.mxu0
    %v3584 = vadd.f32 0.0, %v3583
    %v3585 = vpop.f32.mrf.mxu0
    %3586 = vdwg.mxu0
    %3587 = vmatpush.bf16.msra.mxu0 0
    %3588 = vmatpush.bf16.msra.mxu0 0
    %3589 = vmatpush.bf16.msra.mxu0 0
    %3590 = vmatpush.bf16.msra.mxu0 0
    %3591 = vmatpush.bf16.msra.mxu0 0
    %3592 = vmatpush.bf16.msra.mxu0 0
    %3593 = vmatpush.bf16.msra.mxu0 %v3566
    %3594 = vmatpush.bf16.msra.mxu0 %v3564
    %3595 = vmatmul.bf16.gmra.mxu0 %v3572
    %v3596 = vpop.f32.mrf.mxu0
    %v3597 = vadd.f32 0.0, %v3596
    %v3598 = vpop.f32.mrf.mxu0
    %3599 = vdwg.mxu0
    %v3600 = vadd.f32 %v3289, %v3584
    %v3601 = vadd.f32 %v3290, %v3597
    %3602 = vst [vmem:[#allocation1] ss:$9 sm:$0xff] %v2496
    %v3603 = vld [vmem:[#allocation1] sm:$0xff]
    %v3604 = vld [vmem:[#allocation1 + $0x9] sm:$0xff]
    %v3605 = vld [vmem:[#allocation1 + $0x12] sm:$0xff]
    %3609 = vmatpush.bf16.msra.mxu0 %v281
    %3610 = vmatpush.bf16.msra.mxu0 %v280
    %3611 = vmatpush.bf16.msra.mxu0 %v279
    %3612 = vmatpush.bf16.msra.mxu0 %v278
    %3613 = vmatpush.bf16.msra.mxu0 %v277
    %3614 = vmatpush.bf16.msra.mxu0 %v276
    %3615 = vmatpush.bf16.msra.mxu0 %v275
    %3616 = vmatpush.bf16.msra.mxu0 %v274
    %3617 = vmatmul.bf16.gmra.mxu0 %v3603
    %v3618 = vpop.f32.mrf.mxu0
    %v3619 = vadd.f32 0.0, %v3618
    %v3620 = vpop.f32.mrf.mxu0
    %3621 = vdwg.mxu0
    %3622 = vmatpush.bf16.msra.mxu0 %v289
    %3623 = vmatpush.bf16.msra.mxu0 %v288
    %3624 = vmatpush.bf16.msra.mxu0 %v287
    %3625 = vmatpush.bf16.msra.mxu0 %v286
    %3626 = vmatpush.bf16.msra.mxu0 %v285
    %3627 = vmatpush.bf16.msra.mxu0 %v284
    %3628 = vmatpush.bf16.msra.mxu0 %v283
    %3629 = vmatpush.bf16.msra.mxu0 %v282
    %3630 = vmatmul.bf16.gmra.mxu0 %v3604
    %v3631 = vpop.f32.mrf.mxu0
    %v3632 = vadd.f32 %v3619, %v3631
    %v3633 = vpop.f32.mrf.mxu0
    %3634 = vdwg.mxu0
    %3635 = vmatpush.bf16.msra.mxu0 %v297
    %3636 = vmatpush.bf16.msra.mxu0 %v296
    %3637 = vmatpush.bf16.msra.mxu0 %v295
    %3638 = vmatpush.bf16.msra.mxu0 %v294
    %3639 = vmatpush.bf16.msra.mxu0 %v293
    %3640 = vmatpush.bf16.msra.mxu0 %v292
    %3641 = vmatpush.bf16.msra.mxu0 %v291
    %3642 = vmatpush.bf16.msra.mxu0 %v290
    %3643 = vmatmul.bf16.gmra.mxu0 %v3605
    %v3644 = vpop.f32.mrf.mxu0
    %v3645 = vadd.f32 %v3632, %v3644
    %v3646 = vpop.f32.mrf.mxu0
    %3647 = vdwg.mxu0
    %3648 = vst [vmem:[#allocation1] ss:$9 sm:$0xff] %v1039
    %v3649 = vld [vmem:[#allocation1] sm:$0xff]
    %v3650 = vld [vmem:[#allocation1 + $0x9] sm:$0xff]
    %v3651 = vld [vmem:[#allocation1 + $0x12] sm:$0xff]
    %3655 = vmatpush.bf16.msra.mxu0 %v472
    %3656 = vmatpush.bf16.msra.mxu0 %v471
    %3657 = vmatpush.bf16.msra.mxu0 %v470
    %3658 = vmatpush.bf16.msra.mxu0 %v469
    %3659 = vmatpush.bf16.msra.mxu0 %v468
    %3660 = vmatpush.bf16.msra.mxu0 %v467
    %3661 = vmatpush.bf16.msra.mxu0 %v466
    %3662 = vmatpush.bf16.msra.mxu0 %v465
    %3663 = vmatmul.bf16.gmra.mxu0 %v3649
    %v3664 = vpop.f32.mrf.mxu0
    %v3665 = vadd.f32 %v3645, %v3664
    %v3666 = vpop.f32.mrf.mxu0
    %3667 = vdwg.mxu0
    %3668 = vmatpush.bf16.msra.mxu0 %v480
    %3669 = vmatpush.bf16.msra.mxu0 %v479
    %3670 = vmatpush.bf16.msra.mxu0 %v478
    %3671 = vmatpush.bf16.msra.mxu0 %v477
    %3672 = vmatpush.bf16.msra.mxu0 %v476
    %3673 = vmatpush.bf16.msra.mxu0 %v475
    %3674 = vmatpush.bf16.msra.mxu0 %v474
    %3675 = vmatpush.bf16.msra.mxu0 %v473
    %3676 = vmatmul.bf16.gmra.mxu0 %v3650
    %v3677 = vpop.f32.mrf.mxu0
    %v3678 = vadd.f32 %v3665, %v3677
    %v3679 = vpop.f32.mrf.mxu0
    %3680 = vdwg.mxu0
    %3681 = vmatpush.bf16.msra.mxu0 %v488
    %3682 = vmatpush.bf16.msra.mxu0 %v487
    %3683 = vmatpush.bf16.msra.mxu0 %v486
    %3684 = vmatpush.bf16.msra.mxu0 %v485
    %3685 = vmatpush.bf16.msra.mxu0 %v484
    %3686 = vmatpush.bf16.msra.mxu0 %v483
    %3687 = vmatpush.bf16.msra.mxu0 %v482
    %3688 = vmatpush.bf16.msra.mxu0 %v481
    %3689 = vmatmul.bf16.gmra.mxu0 %v3651
    %v3690 = vpop.f32.mrf.mxu0
    %v3691 = vadd.f32 %v3678, %v3690
    %v3692 = vpop.f32.mrf.mxu0
    %3693 = vdwg.mxu0
    %3694 = vst [vmem:[#allocation1] ss:$9 sm:$0xff] %v2546
    %v3695 = vld [vmem:[#allocation1] sm:$0xff]
    %v3696 = vld [vmem:[#allocation1 + $0x9] sm:$0xff]
    %v3697 = vld [vmem:[#allocation1 + $0x12] sm:$0xff]
    %3701 = vmatpush.bf16.msra.mxu0 %v714
    %3702 = vmatpush.bf16.msra.mxu0 %v713
    %3703 = vmatpush.bf16.msra.mxu0 %v712
    %3704 = vmatpush.bf16.msra.mxu0 %v711
    %3705 = vmatpush.bf16.msra.mxu0 %v710
    %3706 = vmatpush.bf16.msra.mxu0 %v709
    %3707 = vmatpush.bf16.msra.mxu0 %v708
    %3708 = vmatpush.bf16.msra.mxu0 %v707
    %3709 = vmatmul.bf16.gmra.mxu0 %v3695
    %v3710 = vpop.f32.mrf.mxu0
    %v3711 = vadd.f32 0.0, %v3710
    %v3712 = vpop.f32.mrf.mxu0
    %3713 = vdwg.mxu0
    %3714 = vmatpush.bf16.msra.mxu0 %v722
    %3715 = vmatpush.bf16.msra.mxu0 %v721
    %3716 = vmatpush.bf16.msra.mxu0 %v720
    %3717 = vmatpush.bf16.msra.mxu0 %v719
    %3718 = vmatpush.bf16.msra.mxu0 %v718
    %3719 = vmatpush.bf16.msra.mxu0 %v717
    %3720 = vmatpush.bf16.msra.mxu0 %v716
    %3721 = vmatpush.bf16.msra.mxu0 %v715
    %3722 = vmatmul.bf16.gmra.mxu0 %v3696
    %v3723 = vpop.f32.mrf.mxu0
    %v3724 = vadd.f32 %v3711, %v3723
    %v3725 = vpop.f32.mrf.mxu0
    %3726 = vdwg.mxu0
    %3727 = vmatpush.bf16.msra.mxu0 %v730
    %3728 = vmatpush.bf16.msra.mxu0 %v729
    %3729 = vmatpush.bf16.msra.mxu0 %v728
    %3730 = vmatpush.bf16.msra.mxu0 %v727
    %3731 = vmatpush.bf16.msra.mxu0 %v726
    %3732 = vmatpush.bf16.msra.mxu0 %v725
    %3733 = vmatpush.bf16.msra.mxu0 %v724
    %3734 = vmatpush.bf16.msra.mxu0 %v723
    %3735 = vmatmul.bf16.gmra.mxu0 %v3697
    %v3736 = vpop.f32.mrf.mxu0
    %v3737 = vadd.f32 %v3724, %v3736
    %v3738 = vpop.f32.mrf.mxu0
    %3739 = vdwg.mxu0
    %v3740 = vadd.f32 %v3691, %v3737
    %s3741 = scalar_lea.vmem %s0, 42
    %v3742 = vld [vmem:[%s3741] sm:$0x7]
    %3744 = vst [vmem:[#allocation1] ss:$9 sm:$0xff] %v3742
    %v3745 = vld [vmem:[#allocation1] sm:$0xff]
    %v3746 = vld [vmem:[#allocation1 + $0x9] sm:$0xff]
    %v3747 = vld [vmem:[#allocation1 + $0x12] sm:$0xff]
    %3751 = vmatpush.bf16.msra.mxu0 %v957
    %3752 = vmatpush.bf16.msra.mxu0 %v956
    %3753 = vmatpush.bf16.msra.mxu0 %v955
    %3754 = vmatpush.bf16.msra.mxu0 %v954
    %3755 = vmatpush.bf16.msra.mxu0 %v953
    %3756 = vmatpush.bf16.msra.mxu0 %v952
    %3757 = vmatpush.bf16.msra.mxu0 %v951
    %3758 = vmatpush.bf16.msra.mxu0 %v950
    %3759 = vmatmul.bf16.gmra.mxu0 %v3745
    %v3760 = vpop.f32.mrf.mxu0
    %v3761 = vadd.f32 0.0, %v3760
    %v3762 = vpop.f32.mrf.mxu0
    %3763 = vdwg.mxu0
    %3764 = vmatpush.bf16.msra.mxu0 %v965
    %3765 = vmatpush.bf16.msra.mxu0 %v964
    %3766 = vmatpush.bf16.msra.mxu0 %v963
    %3767 = vmatpush.bf16.msra.mxu0 %v962
    %3768 = vmatpush.bf16.msra.mxu0 %v961
    %3769 = vmatpush.bf16.msra.mxu0 %v960
    %3770 = vmatpush.bf16.msra.mxu0 %v959
    %3771 = vmatpush.bf16.msra.mxu0 %v958
    %3772 = vmatmul.bf16.gmra.mxu0 %v3746
    %v3773 = vpop.f32.mrf.mxu0
    %v3774 = vadd.f32 %v3761, %v3773
    %v3775 = vpop.f32.mrf.mxu0
    %3776 = vdwg.mxu0
    %3777 = vmatpush.bf16.msra.mxu0 %v973
    %3778 = vmatpush.bf16.msra.mxu0 %v972
    %3779 = vmatpush.bf16.msra.mxu0 %v971
    %3780 = vmatpush.bf16.msra.mxu0 %v970
    %3781 = vmatpush.bf16.msra.mxu0 %v969
    %3782 = vmatpush.bf16.msra.mxu0 %v968
    %3783 = vmatpush.bf16.msra.mxu0 %v967
    %3784 = vmatpush.bf16.msra.mxu0 %v966
    %3785 = vmatmul.bf16.gmra.mxu0 %v3747
    %v3786 = vpop.f32.mrf.mxu0
    %v3787 = vadd.f32 %v3774, %v3786
    %v3788 = vpop.f32.mrf.mxu0
    %3789 = vdwg.mxu0
    %v3790 = vadd.f32 %v3740, %v3787
    %s3791 = scalar_lea.vmem %s0, 48
    %v3792 = vld [vmem:[%s3791] sm:$0x7]
    %3794 = vst [vmem:[#allocation1] ss:$9 sm:$0xff] %v3792
    %v3795 = vld [vmem:[#allocation1] sm:$0xff]
    %v3796 = vld [vmem:[#allocation1 + $0x9] sm:$0xff]
    %v3797 = vld [vmem:[#allocation1 + $0x12] sm:$0xff]
    %3801 = vmatpush.bf16.msra.mxu0 %v1200
    %3802 = vmatpush.bf16.msra.mxu0 %v1199
    %3803 = vmatpush.bf16.msra.mxu0 %v1198
    %3804 = vmatpush.bf16.msra.mxu0 %v1197
    %3805 = vmatpush.bf16.msra.mxu0 %v1196
    %3806 = vmatpush.bf16.msra.mxu0 %v1195
    %3807 = vmatpush.bf16.msra.mxu0 %v1194
    %3808 = vmatpush.bf16.msra.mxu0 %v1193
    %3809 = vmatmul.bf16.gmra.mxu0 %v3795
    %v3810 = vpop.f32.mrf.mxu0
    %v3811 = vadd.f32 0.0, %v3810
    %v3812 = vpop.f32.mrf.mxu0
    %3813 = vdwg.mxu0
    %3814 = vmatpush.bf16.msra.mxu0 %v1208
    %3815 = vmatpush.bf16.msra.mxu0 %v1207
    %3816 = vmatpush.bf16.msra.mxu0 %v1206
    %3817 = vmatpush.bf16.msra.mxu0 %v1205
    %3818 = vmatpush.bf16.msra.mxu0 %v1204
    %3819 = vmatpush.bf16.msra.mxu0 %v1203
    %3820 = vmatpush.bf16.msra.mxu0 %v1202
    %3821 = vmatpush.bf16.msra.mxu0 %v1201
    %3822 = vmatmul.bf16.gmra.mxu0 %v3796
    %v3823 = vpop.f32.mrf.mxu0
    %v3824 = vadd.f32 %v3811, %v3823
    %v3825 = vpop.f32.mrf.mxu0
    %3826 = vdwg.mxu0
    %3827 = vmatpush.bf16.msra.mxu0 %v1216
    %3828 = vmatpush.bf16.msra.mxu0 %v1215
    %3829 = vmatpush.bf16.msra.mxu0 %v1214
    %3830 = vmatpush.bf16.msra.mxu0 %v1213
    %3831 = vmatpush.bf16.msra.mxu0 %v1212
    %3832 = vmatpush.bf16.msra.mxu0 %v1211
    %3833 = vmatpush.bf16.msra.mxu0 %v1210
    %3834 = vmatpush.bf16.msra.mxu0 %v1209
    %3835 = vmatmul.bf16.gmra.mxu0 %v3797
    %v3836 = vpop.f32.mrf.mxu0
    %v3837 = vadd.f32 %v3824, %v3836
    %v3838 = vpop.f32.mrf.mxu0
    %3839 = vdwg.mxu0
    %v3840 = vadd.f32 %v3790, %v3837
    %v3841 = vadd.f32 %v3840, %v1282
    %v3842 = vmax.f32 %v3841, 0.0
    %v3843 = vpack.c.bf16 %v3842, %v3842
    %3844 = vmatpush.bf16.msra.mxu0 %v1329
    %3845 = vmatpush.bf16.msra.mxu0 %v1328
    %3846 = vmatpush.bf16.msra.mxu0 %v1327
    %3847 = vmatpush.bf16.msra.mxu0 %v1326
    %3848 = vmatpush.bf16.msra.mxu0 %v1325
    %3849 = vmatpush.bf16.msra.mxu0 %v1324
    %3850 = vmatpush.bf16.msra.mxu0 %v1323
    %3851 = vmatpush.bf16.msra.mxu0 %v1322
    %3852 = vmatmul.bf16.gmra.mxu0 %v3843
    %v3853 = vpop.f32.mrf.mxu0
    %v3854 = vadd.f32 %v1288, %v3853
    %v3855 = vpop.f32.mrf.mxu0
    %3856 = vdwg.mxu0
    %v3857 = vmax.f32 %v3854, 0.0
    %v3858 = vpack.c.bf16 %v3857, %v3857
    %s3859 = scalar_lea.vmem %s5, 256
    %v3860 = vld [vmem:[%s3859] sm:$0xff]
    %v3861 = vld [vmem:[%s3859 + $0x8] sm:$0xff]
    %v3862 = vld [vmem:[%s3859 + $0x10] sm:$0xff]
    %v3863 = vld [vmem:[%s3859 + $0x18] sm:$0xff]
    %v3868 = vunpack.c.l.b16 %v3860
    %v3869 = vunpack.c.h.b16 %v3860
    %v3870 = vunpack.c.l.b16 %v3861
    %v3871 = vunpack.c.h.b16 %v3861
    %v3872 = vunpack.c.l.b16 %v3862
    %v3873 = vunpack.c.h.b16 %v3862
    %v3874 = vunpack.c.l.b16 %v3863
    %v3875 = vunpack.c.h.b16 %v3863
    %v3876 = vpack.c.b16 %v3870, %v3868
    %v3877 = vpack.c.b16 %v3871, %v3869
    %v3878 = vpack.c.b16 %v3874, %v3872
    %v3879 = vpack.c.b16 %v3875, %v3873
    %v3885 = vsel %vm1643, %v3858, 0
    %3887 = vmatpush.bf16.msra.mxu0 0
    %3888 = vmatpush.bf16.msra.mxu0 0
    %3889 = vmatpush.bf16.msra.mxu0 0
    %3890 = vmatpush.bf16.msra.mxu0 0
    %3891 = vmatpush.bf16.msra.mxu0 0
    %3892 = vmatpush.bf16.msra.mxu0 0
    %3893 = vmatpush.bf16.msra.mxu0 %v3878
    %3894 = vmatpush.bf16.msra.mxu0 %v3876
    %3895 = vmatmul.bf16.gmra.mxu0 %v3885
    %v3896 = vpop.f32.mrf.mxu0
    %v3897 = vadd.f32 0.0, %v3896
    %v3898 = vpop.f32.mrf.mxu0
    %3899 = vdwg.mxu0
    %3900 = vmatpush.bf16.msra.mxu0 0
    %3901 = vmatpush.bf16.msra.mxu0 0
    %3902 = vmatpush.bf16.msra.mxu0 0
    %3903 = vmatpush.bf16.msra.mxu0 0
    %3904 = vmatpush.bf16.msra.mxu0 0
    %3905 = vmatpush.bf16.msra.mxu0 0
    %3906 = vmatpush.bf16.msra.mxu0 %v3879
    %3907 = vmatpush.bf16.msra.mxu0 %v3877
    %3908 = vmatmul.bf16.gmra.mxu0 %v3885
    %v3909 = vpop.f32.mrf.mxu0
    %v3910 = vadd.f32 0.0, %v3909
    %v3911 = vpop.f32.mrf.mxu0
    %3912 = vdwg.mxu0
    %v3913 = vadd.f32 %v3600, %v3897
    %v3914 = vadd.f32 %v3601, %v3910
    %3915 = vst [vmem:[#allocation1] ss:$9 sm:$0xff] %v2808
    %v3916 = vld [vmem:[#allocation1] sm:$0xff]
    %v3917 = vld [vmem:[#allocation1 + $0x9] sm:$0xff]
    %v3918 = vld [vmem:[#allocation1 + $0x12] sm:$0xff]
    %3922 = vmatpush.bf16.msra.mxu0 %v281
    %3923 = vmatpush.bf16.msra.mxu0 %v280
    %3924 = vmatpush.bf16.msra.mxu0 %v279
    %3925 = vmatpush.bf16.msra.mxu0 %v278
    %3926 = vmatpush.bf16.msra.mxu0 %v277
    %3927 = vmatpush.bf16.msra.mxu0 %v276
    %3928 = vmatpush.bf16.msra.mxu0 %v275
    %3929 = vmatpush.bf16.msra.mxu0 %v274
    %3930 = vmatmul.bf16.gmra.mxu0 %v3916
    %v3931 = vpop.f32.mrf.mxu0
    %v3932 = vadd.f32 0.0, %v3931
    %v3933 = vpop.f32.mrf.mxu0
    %3934 = vdwg.mxu0
    %3935 = vmatpush.bf16.msra.mxu0 %v289
    %3936 = vmatpush.bf16.msra.mxu0 %v288
    %3937 = vmatpush.bf16.msra.mxu0 %v287
    %3938 = vmatpush.bf16.msra.mxu0 %v286
    %3939 = vmatpush.bf16.msra.mxu0 %v285
    %3940 = vmatpush.bf16.msra.mxu0 %v284
    %3941 = vmatpush.bf16.msra.mxu0 %v283
    %3942 = vmatpush.bf16.msra.mxu0 %v282
    %3943 = vmatmul.bf16.gmra.mxu0 %v3917
    %v3944 = vpop.f32.mrf.mxu0
    %v3945 = vadd.f32 %v3932, %v3944
    %v3946 = vpop.f32.mrf.mxu0
    %3947 = vdwg.mxu0
    %3948 = vmatpush.bf16.msra.mxu0 %v297
    %3949 = vmatpush.bf16.msra.mxu0 %v296
    %3950 = vmatpush.bf16.msra.mxu0 %v295
    %3951 = vmatpush.bf16.msra.mxu0 %v294
    %3952 = vmatpush.bf16.msra.mxu0 %v293
    %3953 = vmatpush.bf16.msra.mxu0 %v292
    %3954 = vmatpush.bf16.msra.mxu0 %v291
    %3955 = vmatpush.bf16.msra.mxu0 %v290
    %3956 = vmatmul.bf16.gmra.mxu0 %v3918
    %v3957 = vpop.f32.mrf.mxu0
    %v3958 = vadd.f32 %v3945, %v3957
    %v3959 = vpop.f32.mrf.mxu0
    %3960 = vdwg.mxu0
    %3961 = vst [vmem:[#allocation1] ss:$9 sm:$0xff] %v1551
    %v3962 = vld [vmem:[#allocation1] sm:$0xff]
    %v3963 = vld [vmem:[#allocation1 + $0x9] sm:$0xff]
    %v3964 = vld [vmem:[#allocation1 + $0x12] sm:$0xff]
    %3968 = vmatpush.bf16.msra.mxu0 %v472
    %3969 = vmatpush.bf16.msra.mxu0 %v471
    %3970 = vmatpush.bf16.msra.mxu0 %v470
    %3971 = vmatpush.bf16.msra.mxu0 %v469
    %3972 = vmatpush.bf16.msra.mxu0 %v468
    %3973 = vmatpush.bf16.msra.mxu0 %v467
    %3974 = vmatpush.bf16.msra.mxu0 %v466
    %3975 = vmatpush.bf16.msra.mxu0 %v465
    %3976 = vmatmul.bf16.gmra.mxu0 %v3962
    %v3977 = vpop.f32.mrf.mxu0
    %v3978 = vadd.f32 %v3958, %v3977
    %v3979 = vpop.f32.mrf.mxu0
    %3980 = vdwg.mxu0
    %3981 = vmatpush.bf16.msra.mxu0 %v480
    %3982 = vmatpush.bf16.msra.mxu0 %v479
    %3983 = vmatpush.bf16.msra.mxu0 %v478
    %3984 = vmatpush.bf16.msra.mxu0 %v477
    %3985 = vmatpush.bf16.msra.mxu0 %v476
    %3986 = vmatpush.bf16.msra.mxu0 %v475
    %3987 = vmatpush.bf16.msra.mxu0 %v474
    %3988 = vmatpush.bf16.msra.mxu0 %v473
    %3989 = vmatmul.bf16.gmra.mxu0 %v3963
    %v3990 = vpop.f32.mrf.mxu0
    %v3991 = vadd.f32 %v3978, %v3990
    %v3992 = vpop.f32.mrf.mxu0
    %3993 = vdwg.mxu0
    %3994 = vmatpush.bf16.msra.mxu0 %v488
    %3995 = vmatpush.bf16.msra.mxu0 %v487
    %3996 = vmatpush.bf16.msra.mxu0 %v486
    %3997 = vmatpush.bf16.msra.mxu0 %v485
    %3998 = vmatpush.bf16.msra.mxu0 %v484
    %3999 = vmatpush.bf16.msra.mxu0 %v483
    %4000 = vmatpush.bf16.msra.mxu0 %v482
    %4001 = vmatpush.bf16.msra.mxu0 %v481
    %4002 = vmatmul.bf16.gmra.mxu0 %v3964
    %v4003 = vpop.f32.mrf.mxu0
    %v4004 = vadd.f32 %v3991, %v4003
    %v4005 = vpop.f32.mrf.mxu0
    %4006 = vdwg.mxu0
    %4007 = vst [vmem:[#allocation1] ss:$9 sm:$0xff] %v2857
    %v4008 = vld [vmem:[#allocation1] sm:$0xff]
    %v4009 = vld [vmem:[#allocation1 + $0x9] sm:$0xff]
    %v4010 = vld [vmem:[#allocation1 + $0x12] sm:$0xff]
    %4014 = vmatpush.bf16.msra.mxu0 %v714
    %4015 = vmatpush.bf16.msra.mxu0 %v713
    %4016 = vmatpush.bf16.msra.mxu0 %v712
    %4017 = vmatpush.bf16.msra.mxu0 %v711
    %4018 = vmatpush.bf16.msra.mxu0 %v710
    %4019 = vmatpush.bf16.msra.mxu0 %v709
    %4020 = vmatpush.bf16.msra.mxu0 %v708
    %4021 = vmatpush.bf16.msra.mxu0 %v707
    %4022 = vmatmul.bf16.gmra.mxu0 %v4008
    %v4023 = vpop.f32.mrf.mxu0
    %v4024 = vadd.f32 0.0, %v4023
    %v4025 = vpop.f32.mrf.mxu0
    %4026 = vdwg.mxu0
    %4027 = vmatpush.bf16.msra.mxu0 %v722
    %4028 = vmatpush.bf16.msra.mxu0 %v721
    %4029 = vmatpush.bf16.msra.mxu0 %v720
    %4030 = vmatpush.bf16.msra.mxu0 %v719
    %4031 = vmatpush.bf16.msra.mxu0 %v718
    %4032 = vmatpush.bf16.msra.mxu0 %v717
    %4033 = vmatpush.bf16.msra.mxu0 %v716
    %4034 = vmatpush.bf16.msra.mxu0 %v715
    %4035 = vmatmul.bf16.gmra.mxu0 %v4009
    %v4036 = vpop.f32.mrf.mxu0
    %v4037 = vadd.f32 %v4024, %v4036
    %v4038 = vpop.f32.mrf.mxu0
    %4039 = vdwg.mxu0
    %4040 = vmatpush.bf16.msra.mxu0 %v730
    %4041 = vmatpush.bf16.msra.mxu0 %v729
    %4042 = vmatpush.bf16.msra.mxu0 %v728
    %4043 = vmatpush.bf16.msra.mxu0 %v727
    %4044 = vmatpush.bf16.msra.mxu0 %v726
    %4045 = vmatpush.bf16.msra.mxu0 %v725
    %4046 = vmatpush.bf16.msra.mxu0 %v724
    %4047 = vmatpush.bf16.msra.mxu0 %v723
    %4048 = vmatmul.bf16.gmra.mxu0 %v4010
    %v4049 = vpop.f32.mrf.mxu0
    %v4050 = vadd.f32 %v4037, %v4049
    %v4051 = vpop.f32.mrf.mxu0
    %4052 = vdwg.mxu0
    %v4053 = vadd.f32 %v4004, %v4050
    %v4054 = vld [vmem:[%s3741 + $0x1] sm:$0x7]
    %4056 = vst [vmem:[#allocation1] ss:$9 sm:$0xff] %v4054
    %v4057 = vld [vmem:[#allocation1] sm:$0xff]
    %v4058 = vld [vmem:[#allocation1 + $0x9] sm:$0xff]
    %v4059 = vld [vmem:[#allocation1 + $0x12] sm:$0xff]
    %4063 = vmatpush.bf16.msra.mxu0 %v957
    %4064 = vmatpush.bf16.msra.mxu0 %v956
    %4065 = vmatpush.bf16.msra.mxu0 %v955
    %4066 = vmatpush.bf16.msra.mxu0 %v954
    %4067 = vmatpush.bf16.msra.mxu0 %v953
    %4068 = vmatpush.bf16.msra.mxu0 %v952
    %4069 = vmatpush.bf16.msra.mxu0 %v951
    %4070 = vmatpush.bf16.msra.mxu0 %v950
    %4071 = vmatmul.bf16.gmra.mxu0 %v4057
    %v4072 = vpop.f32.mrf.mxu0
    %v4073 = vadd.f32 0.0, %v4072
    %v4074 = vpop.f32.mrf.mxu0
    %4075 = vdwg.mxu0
    %4076 = vmatpush.bf16.msra.mxu0 %v965
    %4077 = vmatpush.bf16.msra.mxu0 %v964
    %4078 = vmatpush.bf16.msra.mxu0 %v963
    %4079 = vmatpush.bf16.msra.mxu0 %v962
    %4080 = vmatpush.bf16.msra.mxu0 %v961
    %4081 = vmatpush.bf16.msra.mxu0 %v960
    %4082 = vmatpush.bf16.msra.mxu0 %v959
    %4083 = vmatpush.bf16.msra.mxu0 %v958
    %4084 = vmatmul.bf16.gmra.mxu0 %v4058
    %v4085 = vpop.f32.mrf.mxu0
    %v4086 = vadd.f32 %v4073, %v4085
    %v4087 = vpop.f32.mrf.mxu0
    %4088 = vdwg.mxu0
    %4089 = vmatpush.bf16.msra.mxu0 %v973
    %4090 = vmatpush.bf16.msra.mxu0 %v972
    %4091 = vmatpush.bf16.msra.mxu0 %v971
    %4092 = vmatpush.bf16.msra.mxu0 %v970
    %4093 = vmatpush.bf16.msra.mxu0 %v969
    %4094 = vmatpush.bf16.msra.mxu0 %v968
    %4095 = vmatpush.bf16.msra.mxu0 %v967
    %4096 = vmatpush.bf16.msra.mxu0 %v966
    %4097 = vmatmul.bf16.gmra.mxu0 %v4059
    %v4098 = vpop.f32.mrf.mxu0
    %v4099 = vadd.f32 %v4086, %v4098
    %v4100 = vpop.f32.mrf.mxu0
    %4101 = vdwg.mxu0
    %v4102 = vadd.f32 %v4053, %v4099
    %v4103 = vld [vmem:[%s3791 + $0x1] sm:$0x7]
    %4105 = vst [vmem:[#allocation1] ss:$9 sm:$0xff] %v4103
    %v4106 = vld [vmem:[#allocation1] sm:$0xff]
    %v4107 = vld [vmem:[#allocation1 + $0x9] sm:$0xff]
    %v4108 = vld [vmem:[#allocation1 + $0x12] sm:$0xff]
    %4112 = vmatpush.bf16.msra.mxu0 %v1200
    %4113 = vmatpush.bf16.msra.mxu0 %v1199
    %4114 = vmatpush.bf16.msra.mxu0 %v1198
    %4115 = vmatpush.bf16.msra.mxu0 %v1197
    %4116 = vmatpush.bf16.msra.mxu0 %v1196
    %4117 = vmatpush.bf16.msra.mxu0 %v1195
    %4118 = vmatpush.bf16.msra.mxu0 %v1194
    %4119 = vmatpush.bf16.msra.mxu0 %v1193
    %4120 = vmatmul.bf16.gmra.mxu0 %v4106
    %v4121 = vpop.f32.mrf.mxu0
    %v4122 = vadd.f32 0.0, %v4121
    %v4123 = vpop.f32.mrf.mxu0
    %4124 = vdwg.mxu0
    %4125 = vmatpush.bf16.msra.mxu0 %v1208
    %4126 = vmatpush.bf16.msra.mxu0 %v1207
    %4127 = vmatpush.bf16.msra.mxu0 %v1206
    %4128 = vmatpush.bf16.msra.mxu0 %v1205
    %4129 = vmatpush.bf16.msra.mxu0 %v1204
    %4130 = vmatpush.bf16.msra.mxu0 %v1203
    %4131 = vmatpush.bf16.msra.mxu0 %v1202
    %4132 = vmatpush.bf16.msra.mxu0 %v1201
    %4133 = vmatmul.bf16.gmra.mxu0 %v4107
    %v4134 = vpop.f32.mrf.mxu0
    %v4135 = vadd.f32 %v4122, %v4134
    %v4136 = vpop.f32.mrf.mxu0
    %4137 = vdwg.mxu0
    %4138 = vmatpush.bf16.msra.mxu0 %v1216
    %4139 = vmatpush.bf16.msra.mxu0 %v1215
    %4140 = vmatpush.bf16.msra.mxu0 %v1214
    %4141 = vmatpush.bf16.msra.mxu0 %v1213
    %4142 = vmatpush.bf16.msra.mxu0 %v1212
    %4143 = vmatpush.bf16.msra.mxu0 %v1211
    %4144 = vmatpush.bf16.msra.mxu0 %v1210
    %4145 = vmatpush.bf16.msra.mxu0 %v1209
    %4146 = vmatmul.bf16.gmra.mxu0 %v4108
    %v4147 = vpop.f32.mrf.mxu0
    %v4148 = vadd.f32 %v4135, %v4147
    %v4149 = vpop.f32.mrf.mxu0
    %4150 = vdwg.mxu0
    %v4151 = vadd.f32 %v4102, %v4148
    %v4152 = vadd.f32 %v4151, %v1282
    %v4153 = vmax.f32 %v4152, 0.0
    %v4154 = vpack.c.bf16 %v4153, %v4153
    %4155 = vmatpush.bf16.msra.mxu0 %v1329
    %4156 = vmatpush.bf16.msra.mxu0 %v1328
    %4157 = vmatpush.bf16.msra.mxu0 %v1327
    %4158 = vmatpush.bf16.msra.mxu0 %v1326
    %4159 = vmatpush.bf16.msra.mxu0 %v1325
    %4160 = vmatpush.bf16.msra.mxu0 %v1324
    %4161 = vmatpush.bf16.msra.mxu0 %v1323
    %4162 = vmatpush.bf16.msra.mxu0 %v1322
    %4163 = vmatmul.bf16.gmra.mxu0 %v4154
    %v4164 = vpop.f32.mrf.mxu0
    %v4165 = vadd.f32 %v1288, %v4164
    %v4166 = vpop.f32.mrf.mxu0
    %4167 = vdwg.mxu0
    %v4168 = vmax.f32 %v4165, 0.0
    %v4169 = vpack.c.bf16 %v4168, %v4168
    %s4170 = scalar_lea.vmem %s5, 288
    %v4171 = vld [vmem:[%s4170] sm:$0xff]
    %v4172 = vld [vmem:[%s4170 + $0x8] sm:$0xff]
    %v4173 = vld [vmem:[%s4170 + $0x10] sm:$0xff]
    %v4174 = vld [vmem:[%s4170 + $0x18] sm:$0xff]
    %v4179 = vunpack.c.l.b16 %v4171
    %v4180 = vunpack.c.h.b16 %v4171
    %v4181 = vunpack.c.l.b16 %v4172
    %v4182 = vunpack.c.h.b16 %v4172
    %v4183 = vunpack.c.l.b16 %v4173
    %v4184 = vunpack.c.h.b16 %v4173
    %v4185 = vunpack.c.l.b16 %v4174
    %v4186 = vunpack.c.h.b16 %v4174
    %v4187 = vpack.c.b16 %v4181, %v4179
    %v4188 = vpack.c.b16 %v4182, %v4180
    %v4189 = vpack.c.b16 %v4185, %v4183
    %v4190 = vpack.c.b16 %v4186, %v4184
    %v4196 = vsel %vm1643, %v4169, 0
    %4198 = vmatpush.bf16.msra.mxu0 0
    %4199 = vmatpush.bf16.msra.mxu0 0
    %4200 = vmatpush.bf16.msra.mxu0 0
    %4201 = vmatpush.bf16.msra.mxu0 0
    %4202 = vmatpush.bf16.msra.mxu0 0
    %4203 = vmatpush.bf16.msra.mxu0 0
    %4204 = vmatpush.bf16.msra.mxu0 %v4189
    %4205 = vmatpush.bf16.msra.mxu0 %v4187
    %4206 = vmatmul.bf16.gmra.mxu0 %v4196
    %v4207 = vpop.f32.mrf.mxu0
    %v4208 = vadd.f32 0.0, %v4207
    %v4209 = vpop.f32.mrf.mxu0
    %4210 = vdwg.mxu0
    %4211 = vmatpush.bf16.msra.mxu0 0
    %4212 = vmatpush.bf16.msra.mxu0 0
    %4213 = vmatpush.bf16.msra.mxu0 0
    %4214 = vmatpush.bf16.msra.mxu0 0
    %4215 = vmatpush.bf16.msra.mxu0 0
    %4216 = vmatpush.bf16.msra.mxu0 0
    %4217 = vmatpush.bf16.msra.mxu0 %v4190
    %4218 = vmatpush.bf16.msra.mxu0 %v4188
    %4219 = vmatmul.bf16.gmra.mxu0 %v4196
    %v4220 = vpop.f32.mrf.mxu0
    %v4221 = vadd.f32 0.0, %v4220
    %v4222 = vpop.f32.mrf.mxu0
    %4223 = vdwg.mxu0
    %v4224 = vadd.f32 %v3913, %v4208
    %v4225 = vadd.f32 %v3914, %v4221
    %4226 = vst [vmem:[#allocation1] ss:$9 sm:$0xff] %v3119
    %v4227 = vld [vmem:[#allocation1] sm:$0xff]
    %v4228 = vld [vmem:[#allocation1 + $0x9] sm:$0xff]
    %v4229 = vld [vmem:[#allocation1 + $0x12] sm:$0xff]
    %4233 = vmatpush.bf16.msra.mxu0 %v281
    %4234 = vmatpush.bf16.msra.mxu0 %v280
    %4235 = vmatpush.bf16.msra.mxu0 %v279
    %4236 = vmatpush.bf16.msra.mxu0 %v278
    %4237 = vmatpush.bf16.msra.mxu0 %v277
    %4238 = vmatpush.bf16.msra.mxu0 %v276
    %4239 = vmatpush.bf16.msra.mxu0 %v275
    %4240 = vmatpush.bf16.msra.mxu0 %v274
    %4241 = vmatmul.bf16.gmra.mxu0 %v4227
    %v4242 = vpop.f32.mrf.mxu0
    %v4243 = vadd.f32 0.0, %v4242
    %v4244 = vpop.f32.mrf.mxu0
    %4245 = vdwg.mxu0
    %4246 = vmatpush.bf16.msra.mxu0 %v289
    %4247 = vmatpush.bf16.msra.mxu0 %v288
    %4248 = vmatpush.bf16.msra.mxu0 %v287
    %4249 = vmatpush.bf16.msra.mxu0 %v286
    %4250 = vmatpush.bf16.msra.mxu0 %v285
    %4251 = vmatpush.bf16.msra.mxu0 %v284
    %4252 = vmatpush.bf16.msra.mxu0 %v283
    %4253 = vmatpush.bf16.msra.mxu0 %v282
    %4254 = vmatmul.bf16.gmra.mxu0 %v4228
    %v4255 = vpop.f32.mrf.mxu0
    %v4256 = vadd.f32 %v4243, %v4255
    %v4257 = vpop.f32.mrf.mxu0
    %4258 = vdwg.mxu0
    %4259 = vmatpush.bf16.msra.mxu0 %v297
    %4260 = vmatpush.bf16.msra.mxu0 %v296
    %4261 = vmatpush.bf16.msra.mxu0 %v295
    %4262 = vmatpush.bf16.msra.mxu0 %v294
    %4263 = vmatpush.bf16.msra.mxu0 %v293
    %4264 = vmatpush.bf16.msra.mxu0 %v292
    %4265 = vmatpush.bf16.msra.mxu0 %v291
    %4266 = vmatpush.bf16.msra.mxu0 %v290
    %4267 = vmatmul.bf16.gmra.mxu0 %v4229
    %v4268 = vpop.f32.mrf.mxu0
    %v4269 = vadd.f32 %v4256, %v4268
    %v4270 = vpop.f32.mrf.mxu0
    %4271 = vdwg.mxu0
    %4272 = vst [vmem:[#allocation1] ss:$9 sm:$0xff] %v1916
    %v4273 = vld [vmem:[#allocation1] sm:$0xff]
    %v4274 = vld [vmem:[#allocation1 + $0x9] sm:$0xff]
    %v4275 = vld [vmem:[#allocation1 + $0x12] sm:$0xff]
    %4279 = vmatpush.bf16.msra.mxu0 %v472
    %4280 = vmatpush.bf16.msra.mxu0 %v471
    %4281 = vmatpush.bf16.msra.mxu0 %v470
    %4282 = vmatpush.bf16.msra.mxu0 %v469
    %4283 = vmatpush.bf16.msra.mxu0 %v468
    %4284 = vmatpush.bf16.msra.mxu0 %v467
    %4285 = vmatpush.bf16.msra.mxu0 %v466
    %4286 = vmatpush.bf16.msra.mxu0 %v465
    %4287 = vmatmul.bf16.gmra.mxu0 %v4273
    %v4288 = vpop.f32.mrf.mxu0
    %v4289 = vadd.f32 %v4269, %v4288
    %v4290 = vpop.f32.mrf.mxu0
    %4291 = vdwg.mxu0
    %4292 = vmatpush.bf16.msra.mxu0 %v480
    %4293 = vmatpush.bf16.msra.mxu0 %v479
    %4294 = vmatpush.bf16.msra.mxu0 %v478
    %4295 = vmatpush.bf16.msra.mxu0 %v477
    %4296 = vmatpush.bf16.msra.mxu0 %v476
    %4297 = vmatpush.bf16.msra.mxu0 %v475
    %4298 = vmatpush.bf16.msra.mxu0 %v474
    %4299 = vmatpush.bf16.msra.mxu0 %v473
    %4300 = vmatmul.bf16.gmra.mxu0 %v4274
    %v4301 = vpop.f32.mrf.mxu0
    %v4302 = vadd.f32 %v4289, %v4301
    %v4303 = vpop.f32.mrf.mxu0
    %4304 = vdwg.mxu0
    %4305 = vmatpush.bf16.msra.mxu0 %v488
    %4306 = vmatpush.bf16.msra.mxu0 %v487
    %4307 = vmatpush.bf16.msra.mxu0 %v486
    %4308 = vmatpush.bf16.msra.mxu0 %v485
    %4309 = vmatpush.bf16.msra.mxu0 %v484
    %4310 = vmatpush.bf16.msra.mxu0 %v483
    %4311 = vmatpush.bf16.msra.mxu0 %v482
    %4312 = vmatpush.bf16.msra.mxu0 %v481
    %4313 = vmatmul.bf16.gmra.mxu0 %v4275
    %v4314 = vpop.f32.mrf.mxu0
    %v4315 = vadd.f32 %v4302, %v4314
    %v4316 = vpop.f32.mrf.mxu0
    %4317 = vdwg.mxu0
    %4318 = vst [vmem:[#allocation1] ss:$9 sm:$0xff] %v3168
    %v4319 = vld [vmem:[#allocation1] sm:$0xff]
    %v4320 = vld [vmem:[#allocation1 + $0x9] sm:$0xff]
    %v4321 = vld [vmem:[#allocation1 + $0x12] sm:$0xff]
    %4325 = vmatpush.bf16.msra.mxu0 %v714
    %4326 = vmatpush.bf16.msra.mxu0 %v713
    %4327 = vmatpush.bf16.msra.mxu0 %v712
    %4328 = vmatpush.bf16.msra.mxu0 %v711
    %4329 = vmatpush.bf16.msra.mxu0 %v710
    %4330 = vmatpush.bf16.msra.mxu0 %v709
    %4331 = vmatpush.bf16.msra.mxu0 %v708
    %4332 = vmatpush.bf16.msra.mxu0 %v707
    %4333 = vmatmul.bf16.gmra.mxu0 %v4319
    %v4334 = vpop.f32.mrf.mxu0
    %v4335 = vadd.f32 0.0, %v4334
    %v4336 = vpop.f32.mrf.mxu0
    %4337 = vdwg.mxu0
    %4338 = vmatpush.bf16.msra.mxu0 %v722
    %4339 = vmatpush.bf16.msra.mxu0 %v721
    %4340 = vmatpush.bf16.msra.mxu0 %v720
    %4341 = vmatpush.bf16.msra.mxu0 %v719
    %4342 = vmatpush.bf16.msra.mxu0 %v718
    %4343 = vmatpush.bf16.msra.mxu0 %v717
    %4344 = vmatpush.bf16.msra.mxu0 %v716
    %4345 = vmatpush.bf16.msra.mxu0 %v715
    %4346 = vmatmul.bf16.gmra.mxu0 %v4320
    %v4347 = vpop.f32.mrf.mxu0
    %v4348 = vadd.f32 %v4335, %v4347
    %v4349 = vpop.f32.mrf.mxu0
    %4350 = vdwg.mxu0
    %4351 = vmatpush.bf16.msra.mxu0 %v730
    %4352 = vmatpush.bf16.msra.mxu0 %v729
    %4353 = vmatpush.bf16.msra.mxu0 %v728
    %4354 = vmatpush.bf16.msra.mxu0 %v727
    %4355 = vmatpush.bf16.msra.mxu0 %v726
    %4356 = vmatpush.bf16.msra.mxu0 %v725
    %4357 = vmatpush.bf16.msra.mxu0 %v724
    %4358 = vmatpush.bf16.msra.mxu0 %v723
    %4359 = vmatmul.bf16.gmra.mxu0 %v4321
    %v4360 = vpop.f32.mrf.mxu0
    %v4361 = vadd.f32 %v4348, %v4360
    %v4362 = vpop.f32.mrf.mxu0
    %4363 = vdwg.mxu0
    %v4364 = vadd.f32 %v4315, %v4361
    %v4365 = vld [vmem:[%s3741 + $0x2] sm:$0x7]
    %4367 = vst [vmem:[#allocation1] ss:$9 sm:$0xff] %v4365
    %v4368 = vld [vmem:[#allocation1] sm:$0xff]
    %v4369 = vld [vmem:[#allocation1 + $0x9] sm:$0xff]
    %v4370 = vld [vmem:[#allocation1 + $0x12] sm:$0xff]
    %4374 = vmatpush.bf16.msra.mxu0 %v957
    %4375 = vmatpush.bf16.msra.mxu0 %v956
    %4376 = vmatpush.bf16.msra.mxu0 %v955
    %4377 = vmatpush.bf16.msra.mxu0 %v954
    %4378 = vmatpush.bf16.msra.mxu0 %v953
    %4379 = vmatpush.bf16.msra.mxu0 %v952
    %4380 = vmatpush.bf16.msra.mxu0 %v951
    %4381 = vmatpush.bf16.msra.mxu0 %v950
    %4382 = vmatmul.bf16.gmra.mxu0 %v4368
    %v4383 = vpop.f32.mrf.mxu0
    %v4384 = vadd.f32 0.0, %v4383
    %v4385 = vpop.f32.mrf.mxu0
    %4386 = vdwg.mxu0
    %4387 = vmatpush.bf16.msra.mxu0 %v965
    %4388 = vmatpush.bf16.msra.mxu0 %v964
    %4389 = vmatpush.bf16.msra.mxu0 %v963
    %4390 = vmatpush.bf16.msra.mxu0 %v962
    %4391 = vmatpush.bf16.msra.mxu0 %v961
    %4392 = vmatpush.bf16.msra.mxu0 %v960
    %4393 = vmatpush.bf16.msra.mxu0 %v959
    %4394 = vmatpush.bf16.msra.mxu0 %v958
    %4395 = vmatmul.bf16.gmra.mxu0 %v4369
    %v4396 = vpop.f32.mrf.mxu0
    %v4397 = vadd.f32 %v4384, %v4396
    %v4398 = vpop.f32.mrf.mxu0
    %4399 = vdwg.mxu0
    %4400 = vmatpush.bf16.msra.mxu0 %v973
    %4401 = vmatpush.bf16.msra.mxu0 %v972
    %4402 = vmatpush.bf16.msra.mxu0 %v971
    %4403 = vmatpush.bf16.msra.mxu0 %v970
    %4404 = vmatpush.bf16.msra.mxu0 %v969
    %4405 = vmatpush.bf16.msra.mxu0 %v968
    %4406 = vmatpush.bf16.msra.mxu0 %v967
    %4407 = vmatpush.bf16.msra.mxu0 %v966
    %4408 = vmatmul.bf16.gmra.mxu0 %v4370
    %v4409 = vpop.f32.mrf.mxu0
    %v4410 = vadd.f32 %v4397, %v4409
    %v4411 = vpop.f32.mrf.mxu0
    %4412 = vdwg.mxu0
    %v4413 = vadd.f32 %v4364, %v4410
    %v4414 = vld [vmem:[%s3791 + $0x2] sm:$0x7]
    %4416 = vst [vmem:[#allocation1] ss:$9 sm:$0xff] %v4414
    %v4417 = vld [vmem:[#allocation1] sm:$0xff]
    %v4418 = vld [vmem:[#allocation1 + $0x9] sm:$0xff]
    %v4419 = vld [vmem:[#allocation1 + $0x12] sm:$0xff]
    %4423 = vmatpush.bf16.msra.mxu0 %v1200
    %4424 = vmatpush.bf16.msra.mxu0 %v1199
    %4425 = vmatpush.bf16.msra.mxu0 %v1198
    %4426 = vmatpush.bf16.msra.mxu0 %v1197
    %4427 = vmatpush.bf16.msra.mxu0 %v1196
    %4428 = vmatpush.bf16.msra.mxu0 %v1195
    %4429 = vmatpush.bf16.msra.mxu0 %v1194
    %4430 = vmatpush.bf16.msra.mxu0 %v1193
    %4431 = vmatmul.bf16.gmra.mxu0 %v4417
    %v4432 = vpop.f32.mrf.mxu0
    %v4433 = vadd.f32 0.0, %v4432
    %v4434 = vpop.f32.mrf.mxu0
    %4435 = vdwg.mxu0
    %4436 = vmatpush.bf16.msra.mxu0 %v1208
    %4437 = vmatpush.bf16.msra.mxu0 %v1207
    %4438 = vmatpush.bf16.msra.mxu0 %v1206
    %4439 = vmatpush.bf16.msra.mxu0 %v1205
    %4440 = vmatpush.bf16.msra.mxu0 %v1204
    %4441 = vmatpush.bf16.msra.mxu0 %v1203
    %4442 = vmatpush.bf16.msra.mxu0 %v1202
    %4443 = vmatpush.bf16.msra.mxu0 %v1201
    %4444 = vmatmul.bf16.gmra.mxu0 %v4418
    %v4445 = vpop.f32.mrf.mxu0
    %v4446 = vadd.f32 %v4433, %v4445
    %v4447 = vpop.f32.mrf.mxu0
    %4448 = vdwg.mxu0
    %4449 = vmatpush.bf16.msra.mxu0 %v1216
    %4450 = vmatpush.bf16.msra.mxu0 %v1215
    %4451 = vmatpush.bf16.msra.mxu0 %v1214
    %4452 = vmatpush.bf16.msra.mxu0 %v1213
    %4453 = vmatpush.bf16.msra.mxu0 %v1212
    %4454 = vmatpush.bf16.msra.mxu0 %v1211
    %4455 = vmatpush.bf16.msra.mxu0 %v1210
    %4456 = vmatpush.bf16.msra.mxu0 %v1209
    %4457 = vmatmul.bf16.gmra.mxu0 %v4419
    %v4458 = vpop.f32.mrf.mxu0
    %v4459 = vadd.f32 %v4446, %v4458
    %v4460 = vpop.f32.mrf.mxu0
    %4461 = vdwg.mxu0
    %v4462 = vadd.f32 %v4413, %v4459
    %v4463 = vadd.f32 %v4462, %v1282
    %v4464 = vmax.f32 %v4463, 0.0
    %v4465 = vpack.c.bf16 %v4464, %v4464
    %4466 = vmatpush.bf16.msra.mxu0 %v1329
    %4467 = vmatpush.bf16.msra.mxu0 %v1328
    %4468 = vmatpush.bf16.msra.mxu0 %v1327
    %4469 = vmatpush.bf16.msra.mxu0 %v1326
    %4470 = vmatpush.bf16.msra.mxu0 %v1325
    %4471 = vmatpush.bf16.msra.mxu0 %v1324
    %4472 = vmatpush.bf16.msra.mxu0 %v1323
    %4473 = vmatpush.bf16.msra.mxu0 %v1322
    %4474 = vmatmul.bf16.gmra.mxu0 %v4465
    %v4475 = vpop.f32.mrf.mxu0
    %v4476 = vadd.f32 %v1288, %v4475
    %v4477 = vpop.f32.mrf.mxu0
    %4478 = vdwg.mxu0
    %v4479 = vmax.f32 %v4476, 0.0
    %v4480 = vpack.c.bf16 %v4479, %v4479
    %s4481 = scalar_lea.vmem %s5, 320
    %v4482 = vld [vmem:[%s4481] sm:$0xff]
    %v4483 = vld [vmem:[%s4481 + $0x8] sm:$0xff]
    %v4484 = vld [vmem:[%s4481 + $0x10] sm:$0xff]
    %v4485 = vld [vmem:[%s4481 + $0x18] sm:$0xff]
    %v4490 = vunpack.c.l.b16 %v4482
    %v4491 = vunpack.c.h.b16 %v4482
    %v4492 = vunpack.c.l.b16 %v4483
    %v4493 = vunpack.c.h.b16 %v4483
    %v4494 = vunpack.c.l.b16 %v4484
    %v4495 = vunpack.c.h.b16 %v4484
    %v4496 = vunpack.c.l.b16 %v4485
    %v4497 = vunpack.c.h.b16 %v4485
    %v4498 = vpack.c.b16 %v4492, %v4490
    %v4499 = vpack.c.b16 %v4493, %v4491
    %v4500 = vpack.c.b16 %v4496, %v4494
    %v4501 = vpack.c.b16 %v4497, %v4495
    %v4507 = vsel %vm1643, %v4480, 0
    %4509 = vmatpush.bf16.msra.mxu0 0
    %4510 = vmatpush.bf16.msra.mxu0 0
    %4511 = vmatpush.bf16.msra.mxu0 0
    %4512 = vmatpush.bf16.msra.mxu0 0
    %4513 = vmatpush.bf16.msra.mxu0 0
    %4514 = vmatpush.bf16.msra.mxu0 0
    %4515 = vmatpush.bf16.msra.mxu0 %v4500
    %4516 = vmatpush.bf16.msra.mxu0 %v4498
    %4517 = vmatmul.bf16.gmra.mxu0 %v4507
    %v4518 = vpop.f32.mrf.mxu0
    %v4519 = vadd.f32 0.0, %v4518
    %v4520 = vpop.f32.mrf.mxu0
    %4521 = vdwg.mxu0
    %4522 = vmatpush.bf16.msra.mxu0 0
    %4523 = vmatpush.bf16.msra.mxu0 0
    %4524 = vmatpush.bf16.msra.mxu0 0
    %4525 = vmatpush.bf16.msra.mxu0 0
    %4526 = vmatpush.bf16.msra.mxu0 0
    %4527 = vmatpush.bf16.msra.mxu0 0
    %4528 = vmatpush.bf16.msra.mxu0 %v4501
    %4529 = vmatpush.bf16.msra.mxu0 %v4499
    %4530 = vmatmul.bf16.gmra.mxu0 %v4507
    %v4531 = vpop.f32.mrf.mxu0
    %v4532 = vadd.f32 0.0, %v4531
    %v4533 = vpop.f32.mrf.mxu0
    %4534 = vdwg.mxu0
    %v4535 = vadd.f32 %v4224, %v4519
    %v4536 = vadd.f32 %v4225, %v4532
    %4537 = vst [vmem:[#allocation1] ss:$9 sm:$0xff] %v3430
    %v4538 = vld [vmem:[#allocation1] sm:$0xff]
    %v4539 = vld [vmem:[#allocation1 + $0x9] sm:$0xff]
    %v4540 = vld [vmem:[#allocation1 + $0x12] sm:$0xff]
    %4544 = vmatpush.bf16.msra.mxu0 %v281
    %4545 = vmatpush.bf16.msra.mxu0 %v280
    %4546 = vmatpush.bf16.msra.mxu0 %v279
    %4547 = vmatpush.bf16.msra.mxu0 %v278
    %4548 = vmatpush.bf16.msra.mxu0 %v277
    %4549 = vmatpush.bf16.msra.mxu0 %v276
    %4550 = vmatpush.bf16.msra.mxu0 %v275
    %4551 = vmatpush.bf16.msra.mxu0 %v274
    %4552 = vmatmul.bf16.gmra.mxu0 %v4538
    %v4553 = vpop.f32.mrf.mxu0
    %v4554 = vadd.f32 0.0, %v4553
    %v4555 = vpop.f32.mrf.mxu0
    %4556 = vdwg.mxu0
    %4557 = vmatpush.bf16.msra.mxu0 %v289
    %4558 = vmatpush.bf16.msra.mxu0 %v288
    %4559 = vmatpush.bf16.msra.mxu0 %v287
    %4560 = vmatpush.bf16.msra.mxu0 %v286
    %4561 = vmatpush.bf16.msra.mxu0 %v285
    %4562 = vmatpush.bf16.msra.mxu0 %v284
    %4563 = vmatpush.bf16.msra.mxu0 %v283
    %4564 = vmatpush.bf16.msra.mxu0 %v282
    %4565 = vmatmul.bf16.gmra.mxu0 %v4539
    %v4566 = vpop.f32.mrf.mxu0
    %v4567 = vadd.f32 %v4554, %v4566
    %v4568 = vpop.f32.mrf.mxu0
    %4569 = vdwg.mxu0
    %4570 = vmatpush.bf16.msra.mxu0 %v297
    %4571 = vmatpush.bf16.msra.mxu0 %v296
    %4572 = vmatpush.bf16.msra.mxu0 %v295
    %4573 = vmatpush.bf16.msra.mxu0 %v294
    %4574 = vmatpush.bf16.msra.mxu0 %v293
    %4575 = vmatpush.bf16.msra.mxu0 %v292
    %4576 = vmatpush.bf16.msra.mxu0 %v291
    %4577 = vmatpush.bf16.msra.mxu0 %v290
    %4578 = vmatmul.bf16.gmra.mxu0 %v4540
    %v4579 = vpop.f32.mrf.mxu0
    %v4580 = vadd.f32 %v4567, %v4579
    %v4581 = vpop.f32.mrf.mxu0
    %4582 = vdwg.mxu0
    %4583 = vst [vmem:[#allocation1] ss:$9 sm:$0xff] %v2233
    %v4584 = vld [vmem:[#allocation1] sm:$0xff]
    %v4585 = vld [vmem:[#allocation1 + $0x9] sm:$0xff]
    %v4586 = vld [vmem:[#allocation1 + $0x12] sm:$0xff]
    %4590 = vmatpush.bf16.msra.mxu0 %v472
    %4591 = vmatpush.bf16.msra.mxu0 %v471
    %4592 = vmatpush.bf16.msra.mxu0 %v470
    %4593 = vmatpush.bf16.msra.mxu0 %v469
    %4594 = vmatpush.bf16.msra.mxu0 %v468
    %4595 = vmatpush.bf16.msra.mxu0 %v467
    %4596 = vmatpush.bf16.msra.mxu0 %v466
    %4597 = vmatpush.bf16.msra.mxu0 %v465
    %4598 = vmatmul.bf16.gmra.mxu0 %v4584
    %v4599 = vpop.f32.mrf.mxu0
    %v4600 = vadd.f32 %v4580, %v4599
    %v4601 = vpop.f32.mrf.mxu0
    %4602 = vdwg.mxu0
    %4603 = vmatpush.bf16.msra.mxu0 %v480
    %4604 = vmatpush.bf16.msra.mxu0 %v479
    %4605 = vmatpush.bf16.msra.mxu0 %v478
    %4606 = vmatpush.bf16.msra.mxu0 %v477
    %4607 = vmatpush.bf16.msra.mxu0 %v476
    %4608 = vmatpush.bf16.msra.mxu0 %v475
    %4609 = vmatpush.bf16.msra.mxu0 %v474
    %4610 = vmatpush.bf16.msra.mxu0 %v473
    %4611 = vmatmul.bf16.gmra.mxu0 %v4585
    %v4612 = vpop.f32.mrf.mxu0
    %v4613 = vadd.f32 %v4600, %v4612
    %v4614 = vpop.f32.mrf.mxu0
    %4615 = vdwg.mxu0
    %4616 = vmatpush.bf16.msra.mxu0 %v488
    %4617 = vmatpush.bf16.msra.mxu0 %v487
    %4618 = vmatpush.bf16.msra.mxu0 %v486
    %4619 = vmatpush.bf16.msra.mxu0 %v485
    %4620 = vmatpush.bf16.msra.mxu0 %v484
    %4621 = vmatpush.bf16.msra.mxu0 %v483
    %4622 = vmatpush.bf16.msra.mxu0 %v482
    %4623 = vmatpush.bf16.msra.mxu0 %v481
    %4624 = vmatmul.bf16.gmra.mxu0 %v4586
    %v4625 = vpop.f32.mrf.mxu0
    %v4626 = vadd.f32 %v4613, %v4625
    %v4627 = vpop.f32.mrf.mxu0
    %4628 = vdwg.mxu0
    %4629 = vst [vmem:[#allocation1] ss:$9 sm:$0xff] %v3479
    %v4630 = vld [vmem:[#allocation1] sm:$0xff]
    %v4631 = vld [vmem:[#allocation1 + $0x9] sm:$0xff]
    %v4632 = vld [vmem:[#allocation1 + $0x12] sm:$0xff]
    %4636 = vmatpush.bf16.msra.mxu0 %v714
    %4637 = vmatpush.bf16.msra.mxu0 %v713
    %4638 = vmatpush.bf16.msra.mxu0 %v712
    %4639 = vmatpush.bf16.msra.mxu0 %v711
    %4640 = vmatpush.bf16.msra.mxu0 %v710
    %4641 = vmatpush.bf16.msra.mxu0 %v709
    %4642 = vmatpush.bf16.msra.mxu0 %v708
    %4643 = vmatpush.bf16.msra.mxu0 %v707
    %4644 = vmatmul.bf16.gmra.mxu0 %v4630
    %v4645 = vpop.f32.mrf.mxu0
    %v4646 = vadd.f32 0.0, %v4645
    %v4647 = vpop.f32.mrf.mxu0
    %4648 = vdwg.mxu0
    %4649 = vmatpush.bf16.msra.mxu0 %v722
    %4650 = vmatpush.bf16.msra.mxu0 %v721
    %4651 = vmatpush.bf16.msra.mxu0 %v720
    %4652 = vmatpush.bf16.msra.mxu0 %v719
    %4653 = vmatpush.bf16.msra.mxu0 %v718
    %4654 = vmatpush.bf16.msra.mxu0 %v717
    %4655 = vmatpush.bf16.msra.mxu0 %v716
    %4656 = vmatpush.bf16.msra.mxu0 %v715
    %4657 = vmatmul.bf16.gmra.mxu0 %v4631
    %v4658 = vpop.f32.mrf.mxu0
    %v4659 = vadd.f32 %v4646, %v4658
    %v4660 = vpop.f32.mrf.mxu0
    %4661 = vdwg.mxu0
    %4662 = vmatpush.bf16.msra.mxu0 %v730
    %4663 = vmatpush.bf16.msra.mxu0 %v729
    %4664 = vmatpush.bf16.msra.mxu0 %v728
    %4665 = vmatpush.bf16.msra.mxu0 %v727
    %4666 = vmatpush.bf16.msra.mxu0 %v726
    %4667 = vmatpush.bf16.msra.mxu0 %v725
    %4668 = vmatpush.bf16.msra.mxu0 %v724
    %4669 = vmatpush.bf16.msra.mxu0 %v723
    %4670 = vmatmul.bf16.gmra.mxu0 %v4632
    %v4671 = vpop.f32.mrf.mxu0
    %v4672 = vadd.f32 %v4659, %v4671
    %v4673 = vpop.f32.mrf.mxu0
    %4674 = vdwg.mxu0
    %v4675 = vadd.f32 %v4626, %v4672
    %v4676 = vld [vmem:[%s3741 + $0x3] sm:$0x7]
    %4678 = vst [vmem:[#allocation1] ss:$9 sm:$0xff] %v4676
    %v4679 = vld [vmem:[#allocation1] sm:$0xff]
    %v4680 = vld [vmem:[#allocation1 + $0x9] sm:$0xff]
    %v4681 = vld [vmem:[#allocation1 + $0x12] sm:$0xff]
    %4685 = vmatpush.bf16.msra.mxu0 %v957
    %4686 = vmatpush.bf16.msra.mxu0 %v956
    %4687 = vmatpush.bf16.msra.mxu0 %v955
    %4688 = vmatpush.bf16.msra.mxu0 %v954
    %4689 = vmatpush.bf16.msra.mxu0 %v953
    %4690 = vmatpush.bf16.msra.mxu0 %v952
    %4691 = vmatpush.bf16.msra.mxu0 %v951
    %4692 = vmatpush.bf16.msra.mxu0 %v950
    %4693 = vmatmul.bf16.gmra.mxu0 %v4679
    %v4694 = vpop.f32.mrf.mxu0
    %v4695 = vadd.f32 0.0, %v4694
    %v4696 = vpop.f32.mrf.mxu0
    %4697 = vdwg.mxu0
    %4698 = vmatpush.bf16.msra.mxu0 %v965
    %4699 = vmatpush.bf16.msra.mxu0 %v964
    %4700 = vmatpush.bf16.msra.mxu0 %v963
    %4701 = vmatpush.bf16.msra.mxu0 %v962
    %4702 = vmatpush.bf16.msra.mxu0 %v961
    %4703 = vmatpush.bf16.msra.mxu0 %v960
    %4704 = vmatpush.bf16.msra.mxu0 %v959
    %4705 = vmatpush.bf16.msra.mxu0 %v958
    %4706 = vmatmul.bf16.gmra.mxu0 %v4680
    %v4707 = vpop.f32.mrf.mxu0
    %v4708 = vadd.f32 %v4695, %v4707
    %v4709 = vpop.f32.mrf.mxu0
    %4710 = vdwg.mxu0
    %4711 = vmatpush.bf16.msra.mxu0 %v973
    %4712 = vmatpush.bf16.msra.mxu0 %v972
    %4713 = vmatpush.bf16.msra.mxu0 %v971
    %4714 = vmatpush.bf16.msra.mxu0 %v970
    %4715 = vmatpush.bf16.msra.mxu0 %v969
    %4716 = vmatpush.bf16.msra.mxu0 %v968
    %4717 = vmatpush.bf16.msra.mxu0 %v967
    %4718 = vmatpush.bf16.msra.mxu0 %v966
    %4719 = vmatmul.bf16.gmra.mxu0 %v4681
    %v4720 = vpop.f32.mrf.mxu0
    %v4721 = vadd.f32 %v4708, %v4720
    %v4722 = vpop.f32.mrf.mxu0
    %4723 = vdwg.mxu0
    %v4724 = vadd.f32 %v4675, %v4721
    %v4725 = vld [vmem:[%s3791 + $0x3] sm:$0x7]
    %4727 = vst [vmem:[#allocation1] ss:$9 sm:$0xff] %v4725
    %v4728 = vld [vmem:[#allocation1] sm:$0xff]
    %v4729 = vld [vmem:[#allocation1 + $0x9] sm:$0xff]
    %v4730 = vld [vmem:[#allocation1 + $0x12] sm:$0xff]
    %4734 = vmatpush.bf16.msra.mxu0 %v1200
    %4735 = vmatpush.bf16.msra.mxu0 %v1199
    %4736 = vmatpush.bf16.msra.mxu0 %v1198
    %4737 = vmatpush.bf16.msra.mxu0 %v1197
    %4738 = vmatpush.bf16.msra.mxu0 %v1196
    %4739 = vmatpush.bf16.msra.mxu0 %v1195
    %4740 = vmatpush.bf16.msra.mxu0 %v1194
    %4741 = vmatpush.bf16.msra.mxu0 %v1193
    %4742 = vmatmul.bf16.gmra.mxu0 %v4728
    %v4743 = vpop.f32.mrf.mxu0
    %v4744 = vadd.f32 0.0, %v4743
    %v4745 = vpop.f32.mrf.mxu0
    %4746 = vdwg.mxu0
    %4747 = vmatpush.bf16.msra.mxu0 %v1208
    %4748 = vmatpush.bf16.msra.mxu0 %v1207
    %4749 = vmatpush.bf16.msra.mxu0 %v1206
    %4750 = vmatpush.bf16.msra.mxu0 %v1205
    %4751 = vmatpush.bf16.msra.mxu0 %v1204
    %4752 = vmatpush.bf16.msra.mxu0 %v1203
    %4753 = vmatpush.bf16.msra.mxu0 %v1202
    %4754 = vmatpush.bf16.msra.mxu0 %v1201
    %4755 = vmatmul.bf16.gmra.mxu0 %v4729
    %v4756 = vpop.f32.mrf.mxu0
    %v4757 = vadd.f32 %v4744, %v4756
    %v4758 = vpop.f32.mrf.mxu0
    %4759 = vdwg.mxu0
    %4760 = vmatpush.bf16.msra.mxu0 %v1216
    %4761 = vmatpush.bf16.msra.mxu0 %v1215
    %4762 = vmatpush.bf16.msra.mxu0 %v1214
    %4763 = vmatpush.bf16.msra.mxu0 %v1213
    %4764 = vmatpush.bf16.msra.mxu0 %v1212
    %4765 = vmatpush.bf16.msra.mxu0 %v1211
    %4766 = vmatpush.bf16.msra.mxu0 %v1210
    %4767 = vmatpush.bf16.msra.mxu0 %v1209
    %4768 = vmatmul.bf16.gmra.mxu0 %v4730
    %v4769 = vpop.f32.mrf.mxu0
    %v4770 = vadd.f32 %v4757, %v4769
    %v4771 = vpop.f32.mrf.mxu0
    %4772 = vdwg.mxu0
    %v4773 = vadd.f32 %v4724, %v4770
    %v4774 = vadd.f32 %v4773, %v1282
    %v4775 = vmax.f32 %v4774, 0.0
    %v4776 = vpack.c.bf16 %v4775, %v4775
    %4777 = vmatpush.bf16.msra.mxu0 %v1329
    %4778 = vmatpush.bf16.msra.mxu0 %v1328
    %4779 = vmatpush.bf16.msra.mxu0 %v1327
    %4780 = vmatpush.bf16.msra.mxu0 %v1326
    %4781 = vmatpush.bf16.msra.mxu0 %v1325
    %4782 = vmatpush.bf16.msra.mxu0 %v1324
    %4783 = vmatpush.bf16.msra.mxu0 %v1323
    %4784 = vmatpush.bf16.msra.mxu0 %v1322
    %4785 = vmatmul.bf16.gmra.mxu0 %v4776
    %v4786 = vpop.f32.mrf.mxu0
    %v4787 = vadd.f32 %v1288, %v4786
    %v4788 = vpop.f32.mrf.mxu0
    %4789 = vdwg.mxu0
    %v4790 = vmax.f32 %v4787, 0.0
    %v4791 = vpack.c.bf16 %v4790, %v4790
    %s4792 = scalar_lea.vmem %s5, 352
    %v4793 = vld [vmem:[%s4792] sm:$0xff]
    %v4794 = vld [vmem:[%s4792 + $0x8] sm:$0xff]
    %v4795 = vld [vmem:[%s4792 + $0x10] sm:$0xff]
    %v4796 = vld [vmem:[%s4792 + $0x18] sm:$0xff]
    %v4801 = vunpack.c.l.b16 %v4793
    %v4802 = vunpack.c.h.b16 %v4793
    %v4803 = vunpack.c.l.b16 %v4794
    %v4804 = vunpack.c.h.b16 %v4794
    %v4805 = vunpack.c.l.b16 %v4795
    %v4806 = vunpack.c.h.b16 %v4795
    %v4807 = vunpack.c.l.b16 %v4796
    %v4808 = vunpack.c.h.b16 %v4796
    %v4809 = vpack.c.b16 %v4803, %v4801
    %v4810 = vpack.c.b16 %v4804, %v4802
    %v4811 = vpack.c.b16 %v4807, %v4805
    %v4812 = vpack.c.b16 %v4808, %v4806
    %v4818 = vsel %vm1643, %v4791, 0
    %4820 = vmatpush.bf16.msra.mxu0 0
    %4821 = vmatpush.bf16.msra.mxu0 0
    %4822 = vmatpush.bf16.msra.mxu0 0
    %4823 = vmatpush.bf16.msra.mxu0 0
    %4824 = vmatpush.bf16.msra.mxu0 0
    %4825 = vmatpush.bf16.msra.mxu0 0
    %4826 = vmatpush.bf16.msra.mxu0 %v4811
    %4827 = vmatpush.bf16.msra.mxu0 %v4809
    %4828 = vmatmul.bf16.gmra.mxu0 %v4818
    %v4829 = vpop.f32.mrf.mxu0
    %v4830 = vadd.f32 0.0, %v4829
    %v4831 = vpop.f32.mrf.mxu0
    %4832 = vdwg.mxu0
    %4833 = vmatpush.bf16.msra.mxu0 0
    %4834 = vmatpush.bf16.msra.mxu0 0
    %4835 = vmatpush.bf16.msra.mxu0 0
    %4836 = vmatpush.bf16.msra.mxu0 0
    %4837 = vmatpush.bf16.msra.mxu0 0
    %4838 = vmatpush.bf16.msra.mxu0 0
    %4839 = vmatpush.bf16.msra.mxu0 %v4812
    %4840 = vmatpush.bf16.msra.mxu0 %v4810
    %4841 = vmatmul.bf16.gmra.mxu0 %v4818
    %v4842 = vpop.f32.mrf.mxu0
    %v4843 = vadd.f32 0.0, %v4842
    %v4844 = vpop.f32.mrf.mxu0
    %4845 = vdwg.mxu0
    %v4846 = vadd.f32 %v4535, %v4830
    %v4847 = vadd.f32 %v4536, %v4843
    %4848 = vst [vmem:[#allocation1] ss:$9 sm:$0xff] %v3742
    %v4849 = vld [vmem:[#allocation1] sm:$0xff]
    %v4850 = vld [vmem:[#allocation1 + $0x9] sm:$0xff]
    %v4851 = vld [vmem:[#allocation1 + $0x12] sm:$0xff]
    %4855 = vmatpush.bf16.msra.mxu0 %v281
    %4856 = vmatpush.bf16.msra.mxu0 %v280
    %4857 = vmatpush.bf16.msra.mxu0 %v279
    %4858 = vmatpush.bf16.msra.mxu0 %v278
    %4859 = vmatpush.bf16.msra.mxu0 %v277
    %4860 = vmatpush.bf16.msra.mxu0 %v276
    %4861 = vmatpush.bf16.msra.mxu0 %v275
    %4862 = vmatpush.bf16.msra.mxu0 %v274
    %4863 = vmatmul.bf16.gmra.mxu0 %v4849
    %v4864 = vpop.f32.mrf.mxu0
    %v4865 = vadd.f32 0.0, %v4864
    %v4866 = vpop.f32.mrf.mxu0
    %4867 = vdwg.mxu0
    %4868 = vmatpush.bf16.msra.mxu0 %v289
    %4869 = vmatpush.bf16.msra.mxu0 %v288
    %4870 = vmatpush.bf16.msra.mxu0 %v287
    %4871 = vmatpush.bf16.msra.mxu0 %v286
    %4872 = vmatpush.bf16.msra.mxu0 %v285
    %4873 = vmatpush.bf16.msra.mxu0 %v284
    %4874 = vmatpush.bf16.msra.mxu0 %v283
    %4875 = vmatpush.bf16.msra.mxu0 %v282
    %4876 = vmatmul.bf16.gmra.mxu0 %v4850
    %v4877 = vpop.f32.mrf.mxu0
    %v4878 = vadd.f32 %v4865, %v4877
    %v4879 = vpop.f32.mrf.mxu0
    %4880 = vdwg.mxu0
    %4881 = vmatpush.bf16.msra.mxu0 %v297
    %4882 = vmatpush.bf16.msra.mxu0 %v296
    %4883 = vmatpush.bf16.msra.mxu0 %v295
    %4884 = vmatpush.bf16.msra.mxu0 %v294
    %4885 = vmatpush.bf16.msra.mxu0 %v293
    %4886 = vmatpush.bf16.msra.mxu0 %v292
    %4887 = vmatpush.bf16.msra.mxu0 %v291
    %4888 = vmatpush.bf16.msra.mxu0 %v290
    %4889 = vmatmul.bf16.gmra.mxu0 %v4851
    %v4890 = vpop.f32.mrf.mxu0
    %v4891 = vadd.f32 %v4878, %v4890
    %v4892 = vpop.f32.mrf.mxu0
    %4893 = vdwg.mxu0
    %4894 = vst [vmem:[#allocation1] ss:$9 sm:$0xff] %v2546
    %v4895 = vld [vmem:[#allocation1] sm:$0xff]
    %v4896 = vld [vmem:[#allocation1 + $0x9] sm:$0xff]
    %v4897 = vld [vmem:[#allocation1 + $0x12] sm:$0xff]
    %4901 = vmatpush.bf16.msra.mxu0 %v472
    %4902 = vmatpush.bf16.msra.mxu0 %v471
    %4903 = vmatpush.bf16.msra.mxu0 %v470
    %4904 = vmatpush.bf16.msra.mxu0 %v469
    %4905 = vmatpush.bf16.msra.mxu0 %v468
    %4906 = vmatpush.bf16.msra.mxu0 %v467
    %4907 = vmatpush.bf16.msra.mxu0 %v466
    %4908 = vmatpush.bf16.msra.mxu0 %v465
    %4909 = vmatmul.bf16.gmra.mxu0 %v4895
    %v4910 = vpop.f32.mrf.mxu0
    %v4911 = vadd.f32 %v4891, %v4910
    %v4912 = vpop.f32.mrf.mxu0
    %4913 = vdwg.mxu0
    %4914 = vmatpush.bf16.msra.mxu0 %v480
    %4915 = vmatpush.bf16.msra.mxu0 %v479
    %4916 = vmatpush.bf16.msra.mxu0 %v478
    %4917 = vmatpush.bf16.msra.mxu0 %v477
    %4918 = vmatpush.bf16.msra.mxu0 %v476
    %4919 = vmatpush.bf16.msra.mxu0 %v475
    %4920 = vmatpush.bf16.msra.mxu0 %v474
    %4921 = vmatpush.bf16.msra.mxu0 %v473
    %4922 = vmatmul.bf16.gmra.mxu0 %v4896
    %v4923 = vpop.f32.mrf.mxu0
    %v4924 = vadd.f32 %v4911, %v4923
    %v4925 = vpop.f32.mrf.mxu0
    %4926 = vdwg.mxu0
    %4927 = vmatpush.bf16.msra.mxu0 %v488
    %4928 = vmatpush.bf16.msra.mxu0 %v487
    %4929 = vmatpush.bf16.msra.mxu0 %v486
    %4930 = vmatpush.bf16.msra.mxu0 %v485
    %4931 = vmatpush.bf16.msra.mxu0 %v484
    %4932 = vmatpush.bf16.msra.mxu0 %v483
    %4933 = vmatpush.bf16.msra.mxu0 %v482
    %4934 = vmatpush.bf16.msra.mxu0 %v481
    %4935 = vmatmul.bf16.gmra.mxu0 %v4897
    %v4936 = vpop.f32.mrf.mxu0
    %v4937 = vadd.f32 %v4924, %v4936
    %v4938 = vpop.f32.mrf.mxu0
    %4939 = vdwg.mxu0
    %4940 = vst [vmem:[#allocation1] ss:$9 sm:$0xff] %v3792
    %v4941 = vld [vmem:[#allocation1] sm:$0xff]
    %v4942 = vld [vmem:[#allocation1 + $0x9] sm:$0xff]
    %v4943 = vld [vmem:[#allocation1 + $0x12] sm:$0xff]
    %4947 = vmatpush.bf16.msra.mxu0 %v714
    %4948 = vmatpush.bf16.msra.mxu0 %v713
    %4949 = vmatpush.bf16.msra.mxu0 %v712
    %4950 = vmatpush.bf16.msra.mxu0 %v711
    %4951 = vmatpush.bf16.msra.mxu0 %v710
    %4952 = vmatpush.bf16.msra.mxu0 %v709
    %4953 = vmatpush.bf16.msra.mxu0 %v708
    %4954 = vmatpush.bf16.msra.mxu0 %v707
    %4955 = vmatmul.bf16.gmra.mxu0 %v4941
    %v4956 = vpop.f32.mrf.mxu0
    %v4957 = vadd.f32 0.0, %v4956
    %v4958 = vpop.f32.mrf.mxu0
    %4959 = vdwg.mxu0
    %4960 = vmatpush.bf16.msra.mxu0 %v722
    %4961 = vmatpush.bf16.msra.mxu0 %v721
    %4962 = vmatpush.bf16.msra.mxu0 %v720
    %4963 = vmatpush.bf16.msra.mxu0 %v719
    %4964 = vmatpush.bf16.msra.mxu0 %v718
    %4965 = vmatpush.bf16.msra.mxu0 %v717
    %4966 = vmatpush.bf16.msra.mxu0 %v716
    %4967 = vmatpush.bf16.msra.mxu0 %v715
    %4968 = vmatmul.bf16.gmra.mxu0 %v4942
    %v4969 = vpop.f32.mrf.mxu0
    %v4970 = vadd.f32 %v4957, %v4969
    %v4971 = vpop.f32.mrf.mxu0
    %4972 = vdwg.mxu0
    %4973 = vmatpush.bf16.msra.mxu0 %v730
    %4974 = vmatpush.bf16.msra.mxu0 %v729
    %4975 = vmatpush.bf16.msra.mxu0 %v728
    %4976 = vmatpush.bf16.msra.mxu0 %v727
    %4977 = vmatpush.bf16.msra.mxu0 %v726
    %4978 = vmatpush.bf16.msra.mxu0 %v725
    %4979 = vmatpush.bf16.msra.mxu0 %v724
    %4980 = vmatpush.bf16.msra.mxu0 %v723
    %4981 = vmatmul.bf16.gmra.mxu0 %v4943
    %v4982 = vpop.f32.mrf.mxu0
    %v4983 = vadd.f32 %v4970, %v4982
    %v4984 = vpop.f32.mrf.mxu0
    %4985 = vdwg.mxu0
    %v4986 = vadd.f32 %v4937, %v4983
    %s4987 = scalar_lea.vmem %s0, 54
    %v4988 = vld [vmem:[%s4987] sm:$0x7]
    %4990 = vst [vmem:[#allocation1] ss:$9 sm:$0xff] %v4988
    %v4991 = vld [vmem:[#allocation1] sm:$0xff]
    %v4992 = vld [vmem:[#allocation1 + $0x9] sm:$0xff]
    %v4993 = vld [vmem:[#allocation1 + $0x12] sm:$0xff]
    %4997 = vmatpush.bf16.msra.mxu0 %v957
    %4998 = vmatpush.bf16.msra.mxu0 %v956
    %4999 = vmatpush.bf16.msra.mxu0 %v955
    %5000 = vmatpush.bf16.msra.mxu0 %v954
    %5001 = vmatpush.bf16.msra.mxu0 %v953
    %5002 = vmatpush.bf16.msra.mxu0 %v952
    %5003 = vmatpush.bf16.msra.mxu0 %v951
    %5004 = vmatpush.bf16.msra.mxu0 %v950
    %5005 = vmatmul.bf16.gmra.mxu0 %v4991
    %v5006 = vpop.f32.mrf.mxu0
    %v5007 = vadd.f32 0.0, %v5006
    %v5008 = vpop.f32.mrf.mxu0
    %5009 = vdwg.mxu0
    %5010 = vmatpush.bf16.msra.mxu0 %v965
    %5011 = vmatpush.bf16.msra.mxu0 %v964
    %5012 = vmatpush.bf16.msra.mxu0 %v963
    %5013 = vmatpush.bf16.msra.mxu0 %v962
    %5014 = vmatpush.bf16.msra.mxu0 %v961
    %5015 = vmatpush.bf16.msra.mxu0 %v960
    %5016 = vmatpush.bf16.msra.mxu0 %v959
    %5017 = vmatpush.bf16.msra.mxu0 %v958
    %5018 = vmatmul.bf16.gmra.mxu0 %v4992
    %v5019 = vpop.f32.mrf.mxu0
    %v5020 = vadd.f32 %v5007, %v5019
    %v5021 = vpop.f32.mrf.mxu0
    %5022 = vdwg.mxu0
    %5023 = vmatpush.bf16.msra.mxu0 %v973
    %5024 = vmatpush.bf16.msra.mxu0 %v972
    %5025 = vmatpush.bf16.msra.mxu0 %v971
    %5026 = vmatpush.bf16.msra.mxu0 %v970
    %5027 = vmatpush.bf16.msra.mxu0 %v969
    %5028 = vmatpush.bf16.msra.mxu0 %v968
    %5029 = vmatpush.bf16.msra.mxu0 %v967
    %5030 = vmatpush.bf16.msra.mxu0 %v966
    %5031 = vmatmul.bf16.gmra.mxu0 %v4993
    %v5032 = vpop.f32.mrf.mxu0
    %v5033 = vadd.f32 %v5020, %v5032
    %v5034 = vpop.f32.mrf.mxu0
    %5035 = vdwg.mxu0
    %v5036 = vadd.f32 %v4986, %v5033
    %s5037 = scalar_lea.vmem %s0, 60
    %v5038 = vld [vmem:[%s5037] sm:$0x7]
    %5040 = vst [vmem:[#allocation1] ss:$9 sm:$0xff] %v5038
    %v5041 = vld [vmem:[#allocation1] sm:$0xff]
    %v5042 = vld [vmem:[#allocation1 + $0x9] sm:$0xff]
    %v5043 = vld [vmem:[#allocation1 + $0x12] sm:$0xff]
    %5047 = vmatpush.bf16.msra.mxu0 %v1200
    %5048 = vmatpush.bf16.msra.mxu0 %v1199
    %5049 = vmatpush.bf16.msra.mxu0 %v1198
    %5050 = vmatpush.bf16.msra.mxu0 %v1197
    %5051 = vmatpush.bf16.msra.mxu0 %v1196
    %5052 = vmatpush.bf16.msra.mxu0 %v1195
    %5053 = vmatpush.bf16.msra.mxu0 %v1194
    %5054 = vmatpush.bf16.msra.mxu0 %v1193
    %5055 = vmatmul.bf16.gmra.mxu0 %v5041
    %v5056 = vpop.f32.mrf.mxu0
    %v5057 = vadd.f32 0.0, %v5056
    %v5058 = vpop.f32.mrf.mxu0
    %5059 = vdwg.mxu0
    %5060 = vmatpush.bf16.msra.mxu0 %v1208
    %5061 = vmatpush.bf16.msra.mxu0 %v1207
    %5062 = vmatpush.bf16.msra.mxu0 %v1206
    %5063 = vmatpush.bf16.msra.mxu0 %v1205
    %5064 = vmatpush.bf16.msra.mxu0 %v1204
    %5065 = vmatpush.bf16.msra.mxu0 %v1203
    %5066 = vmatpush.bf16.msra.mxu0 %v1202
    %5067 = vmatpush.bf16.msra.mxu0 %v1201
    %5068 = vmatmul.bf16.gmra.mxu0 %v5042
    %v5069 = vpop.f32.mrf.mxu0
    %v5070 = vadd.f32 %v5057, %v5069
    %v5071 = vpop.f32.mrf.mxu0
    %5072 = vdwg.mxu0
    %5073 = vmatpush.bf16.msra.mxu0 %v1216
    %5074 = vmatpush.bf16.msra.mxu0 %v1215
    %5075 = vmatpush.bf16.msra.mxu0 %v1214
    %5076 = vmatpush.bf16.msra.mxu0 %v1213
    %5077 = vmatpush.bf16.msra.mxu0 %v1212
    %5078 = vmatpush.bf16.msra.mxu0 %v1211
    %5079 = vmatpush.bf16.msra.mxu0 %v1210
    %5080 = vmatpush.bf16.msra.mxu0 %v1209
    %5081 = vmatmul.bf16.gmra.mxu0 %v5043
    %v5082 = vpop.f32.mrf.mxu0
    %v5083 = vadd.f32 %v5070, %v5082
    %v5084 = vpop.f32.mrf.mxu0
    %5085 = vdwg.mxu0
    %v5086 = vadd.f32 %v5036, %v5083
    %v5087 = vadd.f32 %v5086, %v1282
    %v5088 = vmax.f32 %v5087, 0.0
    %v5089 = vpack.c.bf16 %v5088, %v5088
    %5090 = vmatpush.bf16.msra.mxu0 %v1329
    %5091 = vmatpush.bf16.msra.mxu0 %v1328
    %5092 = vmatpush.bf16.msra.mxu0 %v1327
    %5093 = vmatpush.bf16.msra.mxu0 %v1326
    %5094 = vmatpush.bf16.msra.mxu0 %v1325
    %5095 = vmatpush.bf16.msra.mxu0 %v1324
    %5096 = vmatpush.bf16.msra.mxu0 %v1323
    %5097 = vmatpush.bf16.msra.mxu0 %v1322
    %5098 = vmatmul.bf16.gmra.mxu0 %v5089
    %v5099 = vpop.f32.mrf.mxu0
    %v5100 = vadd.f32 %v1288, %v5099
    %v5101 = vpop.f32.mrf.mxu0
    %5102 = vdwg.mxu0
    %v5103 = vmax.f32 %v5100, 0.0
    %v5104 = vpack.c.bf16 %v5103, %v5103
    %s5105 = scalar_lea.vmem %s5, 384
    %v5106 = vld [vmem:[%s5105] sm:$0xff]
    %v5107 = vld [vmem:[%s5105 + $0x8] sm:$0xff]
    %v5108 = vld [vmem:[%s5105 + $0x10] sm:$0xff]
    %v5109 = vld [vmem:[%s5105 + $0x18] sm:$0xff]
    %v5114 = vunpack.c.l.b16 %v5106
    %v5115 = vunpack.c.h.b16 %v5106
    %v5116 = vunpack.c.l.b16 %v5107
    %v5117 = vunpack.c.h.b16 %v5107
    %v5118 = vunpack.c.l.b16 %v5108
    %v5119 = vunpack.c.h.b16 %v5108
    %v5120 = vunpack.c.l.b16 %v5109
    %v5121 = vunpack.c.h.b16 %v5109
    %v5122 = vpack.c.b16 %v5116, %v5114
    %v5123 = vpack.c.b16 %v5117, %v5115
    %v5124 = vpack.c.b16 %v5120, %v5118
    %v5125 = vpack.c.b16 %v5121, %v5119
    %v5131 = vsel %vm1643, %v5104, 0
    %5133 = vmatpush.bf16.msra.mxu0 0
    %5134 = vmatpush.bf16.msra.mxu0 0
    %5135 = vmatpush.bf16.msra.mxu0 0
    %5136 = vmatpush.bf16.msra.mxu0 0
    %5137 = vmatpush.bf16.msra.mxu0 0
    %5138 = vmatpush.bf16.msra.mxu0 0
    %5139 = vmatpush.bf16.msra.mxu0 %v5124
    %5140 = vmatpush.bf16.msra.mxu0 %v5122
    %5141 = vmatmul.bf16.gmra.mxu0 %v5131
    %v5142 = vpop.f32.mrf.mxu0
    %v5143 = vadd.f32 0.0, %v5142
    %v5144 = vpop.f32.mrf.mxu0
    %5145 = vdwg.mxu0
    %5146 = vmatpush.bf16.msra.mxu0 0
    %5147 = vmatpush.bf16.msra.mxu0 0
    %5148 = vmatpush.bf16.msra.mxu0 0
    %5149 = vmatpush.bf16.msra.mxu0 0
    %5150 = vmatpush.bf16.msra.mxu0 0
    %5151 = vmatpush.bf16.msra.mxu0 0
    %5152 = vmatpush.bf16.msra.mxu0 %v5125
    %5153 = vmatpush.bf16.msra.mxu0 %v5123
    %5154 = vmatmul.bf16.gmra.mxu0 %v5131
    %v5155 = vpop.f32.mrf.mxu0
    %v5156 = vadd.f32 0.0, %v5155
    %v5157 = vpop.f32.mrf.mxu0
    %5158 = vdwg.mxu0
    %v5159 = vadd.f32 %v4846, %v5143
    %v5160 = vadd.f32 %v4847, %v5156
    %5161 = vst [vmem:[#allocation1] ss:$9 sm:$0xff] %v4054
    %v5162 = vld [vmem:[#allocation1] sm:$0xff]
    %v5163 = vld [vmem:[#allocation1 + $0x9] sm:$0xff]
    %v5164 = vld [vmem:[#allocation1 + $0x12] sm:$0xff]
    %5168 = vmatpush.bf16.msra.mxu0 %v281
    %5169 = vmatpush.bf16.msra.mxu0 %v280
    %5170 = vmatpush.bf16.msra.mxu0 %v279
    %5171 = vmatpush.bf16.msra.mxu0 %v278
    %5172 = vmatpush.bf16.msra.mxu0 %v277
    %5173 = vmatpush.bf16.msra.mxu0 %v276
    %5174 = vmatpush.bf16.msra.mxu0 %v275
    %5175 = vmatpush.bf16.msra.mxu0 %v274
    %5176 = vmatmul.bf16.gmra.mxu0 %v5162
    %v5177 = vpop.f32.mrf.mxu0
    %v5178 = vadd.f32 0.0, %v5177
    %v5179 = vpop.f32.mrf.mxu0
    %5180 = vdwg.mxu0
    %5181 = vmatpush.bf16.msra.mxu0 %v289
    %5182 = vmatpush.bf16.msra.mxu0 %v288
    %5183 = vmatpush.bf16.msra.mxu0 %v287
    %5184 = vmatpush.bf16.msra.mxu0 %v286
    %5185 = vmatpush.bf16.msra.mxu0 %v285
    %5186 = vmatpush.bf16.msra.mxu0 %v284
    %5187 = vmatpush.bf16.msra.mxu0 %v283
    %5188 = vmatpush.bf16.msra.mxu0 %v282
    %5189 = vmatmul.bf16.gmra.mxu0 %v5163
    %v5190 = vpop.f32.mrf.mxu0
    %v5191 = vadd.f32 %v5178, %v5190
    %v5192 = vpop.f32.mrf.mxu0
    %5193 = vdwg.mxu0
    %5194 = vmatpush.bf16.msra.mxu0 %v297
    %5195 = vmatpush.bf16.msra.mxu0 %v296
    %5196 = vmatpush.bf16.msra.mxu0 %v295
    %5197 = vmatpush.bf16.msra.mxu0 %v294
    %5198 = vmatpush.bf16.msra.mxu0 %v293
    %5199 = vmatpush.bf16.msra.mxu0 %v292
    %5200 = vmatpush.bf16.msra.mxu0 %v291
    %5201 = vmatpush.bf16.msra.mxu0 %v290
    %5202 = vmatmul.bf16.gmra.mxu0 %v5164
    %v5203 = vpop.f32.mrf.mxu0
    %v5204 = vadd.f32 %v5191, %v5203
    %v5205 = vpop.f32.mrf.mxu0
    %5206 = vdwg.mxu0
    %5207 = vst [vmem:[#allocation1] ss:$9 sm:$0xff] %v2857
    %v5208 = vld [vmem:[#allocation1] sm:$0xff]
    %v5209 = vld [vmem:[#allocation1 + $0x9] sm:$0xff]
    %v5210 = vld [vmem:[#allocation1 + $0x12] sm:$0xff]
    %5214 = vmatpush.bf16.msra.mxu0 %v472
    %5215 = vmatpush.bf16.msra.mxu0 %v471
    %5216 = vmatpush.bf16.msra.mxu0 %v470
    %5217 = vmatpush.bf16.msra.mxu0 %v469
    %5218 = vmatpush.bf16.msra.mxu0 %v468
    %5219 = vmatpush.bf16.msra.mxu0 %v467
    %5220 = vmatpush.bf16.msra.mxu0 %v466
    %5221 = vmatpush.bf16.msra.mxu0 %v465
    %5222 = vmatmul.bf16.gmra.mxu0 %v5208
    %v5223 = vpop.f32.mrf.mxu0
    %v5224 = vadd.f32 %v5204, %v5223
    %v5225 = vpop.f32.mrf.mxu0
    %5226 = vdwg.mxu0
    %5227 = vmatpush.bf16.msra.mxu0 %v480
    %5228 = vmatpush.bf16.msra.mxu0 %v479
    %5229 = vmatpush.bf16.msra.mxu0 %v478
    %5230 = vmatpush.bf16.msra.mxu0 %v477
    %5231 = vmatpush.bf16.msra.mxu0 %v476
    %5232 = vmatpush.bf16.msra.mxu0 %v475
    %5233 = vmatpush.bf16.msra.mxu0 %v474
    %5234 = vmatpush.bf16.msra.mxu0 %v473
    %5235 = vmatmul.bf16.gmra.mxu0 %v5209
    %v5236 = vpop.f32.mrf.mxu0
    %v5237 = vadd.f32 %v5224, %v5236
    %v5238 = vpop.f32.mrf.mxu0
    %5239 = vdwg.mxu0
    %5240 = vmatpush.bf16.msra.mxu0 %v488
    %5241 = vmatpush.bf16.msra.mxu0 %v487
    %5242 = vmatpush.bf16.msra.mxu0 %v486
    %5243 = vmatpush.bf16.msra.mxu0 %v485
    %5244 = vmatpush.bf16.msra.mxu0 %v484
    %5245 = vmatpush.bf16.msra.mxu0 %v483
    %5246 = vmatpush.bf16.msra.mxu0 %v482
    %5247 = vmatpush.bf16.msra.mxu0 %v481
    %5248 = vmatmul.bf16.gmra.mxu0 %v5210
    %v5249 = vpop.f32.mrf.mxu0
    %v5250 = vadd.f32 %v5237, %v5249
    %v5251 = vpop.f32.mrf.mxu0
    %5252 = vdwg.mxu0
    %5253 = vst [vmem:[#allocation1] ss:$9 sm:$0xff] %v4103
    %v5254 = vld [vmem:[#allocation1] sm:$0xff]
    %v5255 = vld [vmem:[#allocation1 + $0x9] sm:$0xff]
    %v5256 = vld [vmem:[#allocation1 + $0x12] sm:$0xff]
    %5260 = vmatpush.bf16.msra.mxu0 %v714
    %5261 = vmatpush.bf16.msra.mxu0 %v713
    %5262 = vmatpush.bf16.msra.mxu0 %v712
    %5263 = vmatpush.bf16.msra.mxu0 %v711
    %5264 = vmatpush.bf16.msra.mxu0 %v710
    %5265 = vmatpush.bf16.msra.mxu0 %v709
    %5266 = vmatpush.bf16.msra.mxu0 %v708
    %5267 = vmatpush.bf16.msra.mxu0 %v707
    %5268 = vmatmul.bf16.gmra.mxu0 %v5254
    %v5269 = vpop.f32.mrf.mxu0
    %v5270 = vadd.f32 0.0, %v5269
    %v5271 = vpop.f32.mrf.mxu0
    %5272 = vdwg.mxu0
    %5273 = vmatpush.bf16.msra.mxu0 %v722
    %5274 = vmatpush.bf16.msra.mxu0 %v721
    %5275 = vmatpush.bf16.msra.mxu0 %v720
    %5276 = vmatpush.bf16.msra.mxu0 %v719
    %5277 = vmatpush.bf16.msra.mxu0 %v718
    %5278 = vmatpush.bf16.msra.mxu0 %v717
    %5279 = vmatpush.bf16.msra.mxu0 %v716
    %5280 = vmatpush.bf16.msra.mxu0 %v715
    %5281 = vmatmul.bf16.gmra.mxu0 %v5255
    %v5282 = vpop.f32.mrf.mxu0
    %v5283 = vadd.f32 %v5270, %v5282
    %v5284 = vpop.f32.mrf.mxu0
    %5285 = vdwg.mxu0
    %5286 = vmatpush.bf16.msra.mxu0 %v730
    %5287 = vmatpush.bf16.msra.mxu0 %v729
    %5288 = vmatpush.bf16.msra.mxu0 %v728
    %5289 = vmatpush.bf16.msra.mxu0 %v727
    %5290 = vmatpush.bf16.msra.mxu0 %v726
    %5291 = vmatpush.bf16.msra.mxu0 %v725
    %5292 = vmatpush.bf16.msra.mxu0 %v724
    %5293 = vmatpush.bf16.msra.mxu0 %v723
    %5294 = vmatmul.bf16.gmra.mxu0 %v5256
    %v5295 = vpop.f32.mrf.mxu0
    %v5296 = vadd.f32 %v5283, %v5295
    %v5297 = vpop.f32.mrf.mxu0
    %5298 = vdwg.mxu0
    %v5299 = vadd.f32 %v5250, %v5296
    %v5300 = vld [vmem:[%s4987 + $0x1] sm:$0x7]
    %5302 = vst [vmem:[#allocation1] ss:$9 sm:$0xff] %v5300
    %v5303 = vld [vmem:[#allocation1] sm:$0xff]
    %v5304 = vld [vmem:[#allocation1 + $0x9] sm:$0xff]
    %v5305 = vld [vmem:[#allocation1 + $0x12] sm:$0xff]
    %5309 = vmatpush.bf16.msra.mxu0 %v957
    %5310 = vmatpush.bf16.msra.mxu0 %v956
    %5311 = vmatpush.bf16.msra.mxu0 %v955
    %5312 = vmatpush.bf16.msra.mxu0 %v954
    %5313 = vmatpush.bf16.msra.mxu0 %v953
    %5314 = vmatpush.bf16.msra.mxu0 %v952
    %5315 = vmatpush.bf16.msra.mxu0 %v951
    %5316 = vmatpush.bf16.msra.mxu0 %v950
    %5317 = vmatmul.bf16.gmra.mxu0 %v5303
    %v5318 = vpop.f32.mrf.mxu0
    %v5319 = vadd.f32 0.0, %v5318
    %v5320 = vpop.f32.mrf.mxu0
    %5321 = vdwg.mxu0
    %5322 = vmatpush.bf16.msra.mxu0 %v965
    %5323 = vmatpush.bf16.msra.mxu0 %v964
    %5324 = vmatpush.bf16.msra.mxu0 %v963
    %5325 = vmatpush.bf16.msra.mxu0 %v962
    %5326 = vmatpush.bf16.msra.mxu0 %v961
    %5327 = vmatpush.bf16.msra.mxu0 %v960
    %5328 = vmatpush.bf16.msra.mxu0 %v959
    %5329 = vmatpush.bf16.msra.mxu0 %v958
    %5330 = vmatmul.bf16.gmra.mxu0 %v5304
    %v5331 = vpop.f32.mrf.mxu0
    %v5332 = vadd.f32 %v5319, %v5331
    %v5333 = vpop.f32.mrf.mxu0
    %5334 = vdwg.mxu0
    %5335 = vmatpush.bf16.msra.mxu0 %v973
    %5336 = vmatpush.bf16.msra.mxu0 %v972
    %5337 = vmatpush.bf16.msra.mxu0 %v971
    %5338 = vmatpush.bf16.msra.mxu0 %v970
    %5339 = vmatpush.bf16.msra.mxu0 %v969
    %5340 = vmatpush.bf16.msra.mxu0 %v968
    %5341 = vmatpush.bf16.msra.mxu0 %v967
    %5342 = vmatpush.bf16.msra.mxu0 %v966
    %5343 = vmatmul.bf16.gmra.mxu0 %v5305
    %v5344 = vpop.f32.mrf.mxu0
    %v5345 = vadd.f32 %v5332, %v5344
    %v5346 = vpop.f32.mrf.mxu0
    %5347 = vdwg.mxu0
    %v5348 = vadd.f32 %v5299, %v5345
    %v5349 = vld [vmem:[%s5037 + $0x1] sm:$0x7]
    %5351 = vst [vmem:[#allocation1] ss:$9 sm:$0xff] %v5349
    %v5352 = vld [vmem:[#allocation1] sm:$0xff]
    %v5353 = vld [vmem:[#allocation1 + $0x9] sm:$0xff]
    %v5354 = vld [vmem:[#allocation1 + $0x12] sm:$0xff]
    %5358 = vmatpush.bf16.msra.mxu0 %v1200
    %5359 = vmatpush.bf16.msra.mxu0 %v1199
    %5360 = vmatpush.bf16.msra.mxu0 %v1198
    %5361 = vmatpush.bf16.msra.mxu0 %v1197
    %5362 = vmatpush.bf16.msra.mxu0 %v1196
    %5363 = vmatpush.bf16.msra.mxu0 %v1195
    %5364 = vmatpush.bf16.msra.mxu0 %v1194
    %5365 = vmatpush.bf16.msra.mxu0 %v1193
    %5366 = vmatmul.bf16.gmra.mxu0 %v5352
    %v5367 = vpop.f32.mrf.mxu0
    %v5368 = vadd.f32 0.0, %v5367
    %v5369 = vpop.f32.mrf.mxu0
    %5370 = vdwg.mxu0
    %5371 = vmatpush.bf16.msra.mxu0 %v1208
    %5372 = vmatpush.bf16.msra.mxu0 %v1207
    %5373 = vmatpush.bf16.msra.mxu0 %v1206
    %5374 = vmatpush.bf16.msra.mxu0 %v1205
    %5375 = vmatpush.bf16.msra.mxu0 %v1204
    %5376 = vmatpush.bf16.msra.mxu0 %v1203
    %5377 = vmatpush.bf16.msra.mxu0 %v1202
    %5378 = vmatpush.bf16.msra.mxu0 %v1201
    %5379 = vmatmul.bf16.gmra.mxu0 %v5353
    %v5380 = vpop.f32.mrf.mxu0
    %v5381 = vadd.f32 %v5368, %v5380
    %v5382 = vpop.f32.mrf.mxu0
    %5383 = vdwg.mxu0
    %5384 = vmatpush.bf16.msra.mxu0 %v1216
    %5385 = vmatpush.bf16.msra.mxu0 %v1215
    %5386 = vmatpush.bf16.msra.mxu0 %v1214
    %5387 = vmatpush.bf16.msra.mxu0 %v1213
    %5388 = vmatpush.bf16.msra.mxu0 %v1212
    %5389 = vmatpush.bf16.msra.mxu0 %v1211
    %5390 = vmatpush.bf16.msra.mxu0 %v1210
    %5391 = vmatpush.bf16.msra.mxu0 %v1209
    %5392 = vmatmul.bf16.gmra.mxu0 %v5354
    %v5393 = vpop.f32.mrf.mxu0
    %v5394 = vadd.f32 %v5381, %v5393
    %v5395 = vpop.f32.mrf.mxu0
    %5396 = vdwg.mxu0
    %v5397 = vadd.f32 %v5348, %v5394
    %v5398 = vadd.f32 %v5397, %v1282
    %v5399 = vmax.f32 %v5398, 0.0
    %v5400 = vpack.c.bf16 %v5399, %v5399
    %5401 = vmatpush.bf16.msra.mxu0 %v1329
    %5402 = vmatpush.bf16.msra.mxu0 %v1328
    %5403 = vmatpush.bf16.msra.mxu0 %v1327
    %5404 = vmatpush.bf16.msra.mxu0 %v1326
    %5405 = vmatpush.bf16.msra.mxu0 %v1325
    %5406 = vmatpush.bf16.msra.mxu0 %v1324
    %5407 = vmatpush.bf16.msra.mxu0 %v1323
    %5408 = vmatpush.bf16.msra.mxu0 %v1322
    %5409 = vmatmul.bf16.gmra.mxu0 %v5400
    %v5410 = vpop.f32.mrf.mxu0
    %v5411 = vadd.f32 %v1288, %v5410
    %v5412 = vpop.f32.mrf.mxu0
    %5413 = vdwg.mxu0
    %v5414 = vmax.f32 %v5411, 0.0
    %v5415 = vpack.c.bf16 %v5414, %v5414
    %s5416 = scalar_lea.vmem %s5, 416
    %v5417 = vld [vmem:[%s5416] sm:$0xff]
    %v5418 = vld [vmem:[%s5416 + $0x8] sm:$0xff]
    %v5419 = vld [vmem:[%s5416 + $0x10] sm:$0xff]
    %v5420 = vld [vmem:[%s5416 + $0x18] sm:$0xff]
    %v5425 = vunpack.c.l.b16 %v5417
    %v5426 = vunpack.c.h.b16 %v5417
    %v5427 = vunpack.c.l.b16 %v5418
    %v5428 = vunpack.c.h.b16 %v5418
    %v5429 = vunpack.c.l.b16 %v5419
    %v5430 = vunpack.c.h.b16 %v5419
    %v5431 = vunpack.c.l.b16 %v5420
    %v5432 = vunpack.c.h.b16 %v5420
    %v5433 = vpack.c.b16 %v5427, %v5425
    %v5434 = vpack.c.b16 %v5428, %v5426
    %v5435 = vpack.c.b16 %v5431, %v5429
    %v5436 = vpack.c.b16 %v5432, %v5430
    %v5442 = vsel %vm1643, %v5415, 0
    %5444 = vmatpush.bf16.msra.mxu0 0
    %5445 = vmatpush.bf16.msra.mxu0 0
    %5446 = vmatpush.bf16.msra.mxu0 0
    %5447 = vmatpush.bf16.msra.mxu0 0
    %5448 = vmatpush.bf16.msra.mxu0 0
    %5449 = vmatpush.bf16.msra.mxu0 0
    %5450 = vmatpush.bf16.msra.mxu0 %v5435
    %5451 = vmatpush.bf16.msra.mxu0 %v5433
    %5452 = vmatmul.bf16.gmra.mxu0 %v5442
    %v5453 = vpop.f32.mrf.mxu0
    %v5454 = vadd.f32 0.0, %v5453
    %v5455 = vpop.f32.mrf.mxu0
    %5456 = vdwg.mxu0
    %5457 = vmatpush.bf16.msra.mxu0 0
    %5458 = vmatpush.bf16.msra.mxu0 0
    %5459 = vmatpush.bf16.msra.mxu0 0
    %5460 = vmatpush.bf16.msra.mxu0 0
    %5461 = vmatpush.bf16.msra.mxu0 0
    %5462 = vmatpush.bf16.msra.mxu0 0
    %5463 = vmatpush.bf16.msra.mxu0 %v5436
    %5464 = vmatpush.bf16.msra.mxu0 %v5434
    %5465 = vmatmul.bf16.gmra.mxu0 %v5442
    %v5466 = vpop.f32.mrf.mxu0
    %v5467 = vadd.f32 0.0, %v5466
    %v5468 = vpop.f32.mrf.mxu0
    %5469 = vdwg.mxu0
    %v5470 = vadd.f32 %v5159, %v5454
    %v5471 = vadd.f32 %v5160, %v5467
    %5472 = vst [vmem:[#allocation1] ss:$9 sm:$0xff] %v4365
    %v5473 = vld [vmem:[#allocation1] sm:$0xff]
    %v5474 = vld [vmem:[#allocation1 + $0x9] sm:$0xff]
    %v5475 = vld [vmem:[#allocation1 + $0x12] sm:$0xff]
    %5479 = vmatpush.bf16.msra.mxu0 %v281
    %5480 = vmatpush.bf16.msra.mxu0 %v280
    %5481 = vmatpush.bf16.msra.mxu0 %v279
    %5482 = vmatpush.bf16.msra.mxu0 %v278
    %5483 = vmatpush.bf16.msra.mxu0 %v277
    %5484 = vmatpush.bf16.msra.mxu0 %v276
    %5485 = vmatpush.bf16.msra.mxu0 %v275
    %5486 = vmatpush.bf16.msra.mxu0 %v274
    %5487 = vmatmul.bf16.gmra.mxu0 %v5473
    %v5488 = vpop.f32.mrf.mxu0
    %v5489 = vadd.f32 0.0, %v5488
    %v5490 = vpop.f32.mrf.mxu0
    %5491 = vdwg.mxu0
    %5492 = vmatpush.bf16.msra.mxu0 %v289
    %5493 = vmatpush.bf16.msra.mxu0 %v288
    %5494 = vmatpush.bf16.msra.mxu0 %v287
    %5495 = vmatpush.bf16.msra.mxu0 %v286
    %5496 = vmatpush.bf16.msra.mxu0 %v285
    %5497 = vmatpush.bf16.msra.mxu0 %v284
    %5498 = vmatpush.bf16.msra.mxu0 %v283
    %5499 = vmatpush.bf16.msra.mxu0 %v282
    %5500 = vmatmul.bf16.gmra.mxu0 %v5474
    %v5501 = vpop.f32.mrf.mxu0
    %v5502 = vadd.f32 %v5489, %v5501
    %v5503 = vpop.f32.mrf.mxu0
    %5504 = vdwg.mxu0
    %5505 = vmatpush.bf16.msra.mxu0 %v297
    %5506 = vmatpush.bf16.msra.mxu0 %v296
    %5507 = vmatpush.bf16.msra.mxu0 %v295
    %5508 = vmatpush.bf16.msra.mxu0 %v294
    %5509 = vmatpush.bf16.msra.mxu0 %v293
    %5510 = vmatpush.bf16.msra.mxu0 %v292
    %5511 = vmatpush.bf16.msra.mxu0 %v291
    %5512 = vmatpush.bf16.msra.mxu0 %v290
    %5513 = vmatmul.bf16.gmra.mxu0 %v5475
    %v5514 = vpop.f32.mrf.mxu0
    %v5515 = vadd.f32 %v5502, %v5514
    %v5516 = vpop.f32.mrf.mxu0
    %5517 = vdwg.mxu0
    %5518 = vst [vmem:[#allocation1] ss:$9 sm:$0xff] %v3168
    %v5519 = vld [vmem:[#allocation1] sm:$0xff]
    %v5520 = vld [vmem:[#allocation1 + $0x9] sm:$0xff]
    %v5521 = vld [vmem:[#allocation1 + $0x12] sm:$0xff]
    %5525 = vmatpush.bf16.msra.mxu0 %v472
    %5526 = vmatpush.bf16.msra.mxu0 %v471
    %5527 = vmatpush.bf16.msra.mxu0 %v470
    %5528 = vmatpush.bf16.msra.mxu0 %v469
    %5529 = vmatpush.bf16.msra.mxu0 %v468
    %5530 = vmatpush.bf16.msra.mxu0 %v467
    %5531 = vmatpush.bf16.msra.mxu0 %v466
    %5532 = vmatpush.bf16.msra.mxu0 %v465
    %5533 = vmatmul.bf16.gmra.mxu0 %v5519
    %v5534 = vpop.f32.mrf.mxu0
    %v5535 = vadd.f32 %v5515, %v5534
    %v5536 = vpop.f32.mrf.mxu0
    %5537 = vdwg.mxu0
    %5538 = vmatpush.bf16.msra.mxu0 %v480
    %5539 = vmatpush.bf16.msra.mxu0 %v479
    %5540 = vmatpush.bf16.msra.mxu0 %v478
    %5541 = vmatpush.bf16.msra.mxu0 %v477
    %5542 = vmatpush.bf16.msra.mxu0 %v476
    %5543 = vmatpush.bf16.msra.mxu0 %v475
    %5544 = vmatpush.bf16.msra.mxu0 %v474
    %5545 = vmatpush.bf16.msra.mxu0 %v473
    %5546 = vmatmul.bf16.gmra.mxu0 %v5520
    %v5547 = vpop.f32.mrf.mxu0
    %v5548 = vadd.f32 %v5535, %v5547
    %v5549 = vpop.f32.mrf.mxu0
    %5550 = vdwg.mxu0
    %5551 = vmatpush.bf16.msra.mxu0 %v488
    %5552 = vmatpush.bf16.msra.mxu0 %v487
    %5553 = vmatpush.bf16.msra.mxu0 %v486
    %5554 = vmatpush.bf16.msra.mxu0 %v485
    %5555 = vmatpush.bf16.msra.mxu0 %v484
    %5556 = vmatpush.bf16.msra.mxu0 %v483
    %5557 = vmatpush.bf16.msra.mxu0 %v482
    %5558 = vmatpush.bf16.msra.mxu0 %v481
    %5559 = vmatmul.bf16.gmra.mxu0 %v5521
    %v5560 = vpop.f32.mrf.mxu0
    %v5561 = vadd.f32 %v5548, %v5560
    %v5562 = vpop.f32.mrf.mxu0
    %5563 = vdwg.mxu0
    %5564 = vst [vmem:[#allocation1] ss:$9 sm:$0xff] %v4414
    %v5565 = vld [vmem:[#allocation1] sm:$0xff]
    %v5566 = vld [vmem:[#allocation1 + $0x9] sm:$0xff]
    %v5567 = vld [vmem:[#allocation1 + $0x12] sm:$0xff]
    %5571 = vmatpush.bf16.msra.mxu0 %v714
    %5572 = vmatpush.bf16.msra.mxu0 %v713
    %5573 = vmatpush.bf16.msra.mxu0 %v712
    %5574 = vmatpush.bf16.msra.mxu0 %v711
    %5575 = vmatpush.bf16.msra.mxu0 %v710
    %5576 = vmatpush.bf16.msra.mxu0 %v709
    %5577 = vmatpush.bf16.msra.mxu0 %v708
    %5578 = vmatpush.bf16.msra.mxu0 %v707
    %5579 = vmatmul.bf16.gmra.mxu0 %v5565
    %v5580 = vpop.f32.mrf.mxu0
    %v5581 = vadd.f32 0.0, %v5580
    %v5582 = vpop.f32.mrf.mxu0
    %5583 = vdwg.mxu0
    %5584 = vmatpush.bf16.msra.mxu0 %v722
    %5585 = vmatpush.bf16.msra.mxu0 %v721
    %5586 = vmatpush.bf16.msra.mxu0 %v720
    %5587 = vmatpush.bf16.msra.mxu0 %v719
    %5588 = vmatpush.bf16.msra.mxu0 %v718
    %5589 = vmatpush.bf16.msra.mxu0 %v717
    %5590 = vmatpush.bf16.msra.mxu0 %v716
    %5591 = vmatpush.bf16.msra.mxu0 %v715
    %5592 = vmatmul.bf16.gmra.mxu0 %v5566
    %v5593 = vpop.f32.mrf.mxu0
    %v5594 = vadd.f32 %v5581, %v5593
    %v5595 = vpop.f32.mrf.mxu0
    %5596 = vdwg.mxu0
    %5597 = vmatpush.bf16.msra.mxu0 %v730
    %5598 = vmatpush.bf16.msra.mxu0 %v729
    %5599 = vmatpush.bf16.msra.mxu0 %v728
    %5600 = vmatpush.bf16.msra.mxu0 %v727
    %5601 = vmatpush.bf16.msra.mxu0 %v726
    %5602 = vmatpush.bf16.msra.mxu0 %v725
    %5603 = vmatpush.bf16.msra.mxu0 %v724
    %5604 = vmatpush.bf16.msra.mxu0 %v723
    %5605 = vmatmul.bf16.gmra.mxu0 %v5567
    %v5606 = vpop.f32.mrf.mxu0
    %v5607 = vadd.f32 %v5594, %v5606
    %v5608 = vpop.f32.mrf.mxu0
    %5609 = vdwg.mxu0
    %v5610 = vadd.f32 %v5561, %v5607
    %v5611 = vld [vmem:[%s4987 + $0x2] sm:$0x7]
    %5613 = vst [vmem:[#allocation1] ss:$9 sm:$0xff] %v5611
    %v5614 = vld [vmem:[#allocation1] sm:$0xff]
    %v5615 = vld [vmem:[#allocation1 + $0x9] sm:$0xff]
    %v5616 = vld [vmem:[#allocation1 + $0x12] sm:$0xff]
    %5620 = vmatpush.bf16.msra.mxu0 %v957
    %5621 = vmatpush.bf16.msra.mxu0 %v956
    %5622 = vmatpush.bf16.msra.mxu0 %v955
    %5623 = vmatpush.bf16.msra.mxu0 %v954
    %5624 = vmatpush.bf16.msra.mxu0 %v953
    %5625 = vmatpush.bf16.msra.mxu0 %v952
    %5626 = vmatpush.bf16.msra.mxu0 %v951
    %5627 = vmatpush.bf16.msra.mxu0 %v950
    %5628 = vmatmul.bf16.gmra.mxu0 %v5614
    %v5629 = vpop.f32.mrf.mxu0
    %v5630 = vadd.f32 0.0, %v5629
    %v5631 = vpop.f32.mrf.mxu0
    %5632 = vdwg.mxu0
    %5633 = vmatpush.bf16.msra.mxu0 %v965
    %5634 = vmatpush.bf16.msra.mxu0 %v964
    %5635 = vmatpush.bf16.msra.mxu0 %v963
    %5636 = vmatpush.bf16.msra.mxu0 %v962
    %5637 = vmatpush.bf16.msra.mxu0 %v961
    %5638 = vmatpush.bf16.msra.mxu0 %v960
    %5639 = vmatpush.bf16.msra.mxu0 %v959
    %5640 = vmatpush.bf16.msra.mxu0 %v958
    %5641 = vmatmul.bf16.gmra.mxu0 %v5615
    %v5642 = vpop.f32.mrf.mxu0
    %v5643 = vadd.f32 %v5630, %v5642
    %v5644 = vpop.f32.mrf.mxu0
    %5645 = vdwg.mxu0
    %5646 = vmatpush.bf16.msra.mxu0 %v973
    %5647 = vmatpush.bf16.msra.mxu0 %v972
    %5648 = vmatpush.bf16.msra.mxu0 %v971
    %5649 = vmatpush.bf16.msra.mxu0 %v970
    %5650 = vmatpush.bf16.msra.mxu0 %v969
    %5651 = vmatpush.bf16.msra.mxu0 %v968
    %5652 = vmatpush.bf16.msra.mxu0 %v967
    %5653 = vmatpush.bf16.msra.mxu0 %v966
    %5654 = vmatmul.bf16.gmra.mxu0 %v5616
    %v5655 = vpop.f32.mrf.mxu0
    %v5656 = vadd.f32 %v5643, %v5655
    %v5657 = vpop.f32.mrf.mxu0
    %5658 = vdwg.mxu0
    %v5659 = vadd.f32 %v5610, %v5656
    %v5660 = vld [vmem:[%s5037 + $0x2] sm:$0x7]
    %5662 = vst [vmem:[#allocation1] ss:$9 sm:$0xff] %v5660
    %v5663 = vld [vmem:[#allocation1] sm:$0xff]
    %v5664 = vld [vmem:[#allocation1 + $0x9] sm:$0xff]
    %v5665 = vld [vmem:[#allocation1 + $0x12] sm:$0xff]
    %5669 = vmatpush.bf16.msra.mxu0 %v1200
    %5670 = vmatpush.bf16.msra.mxu0 %v1199
    %5671 = vmatpush.bf16.msra.mxu0 %v1198
    %5672 = vmatpush.bf16.msra.mxu0 %v1197
    %5673 = vmatpush.bf16.msra.mxu0 %v1196
    %5674 = vmatpush.bf16.msra.mxu0 %v1195
    %5675 = vmatpush.bf16.msra.mxu0 %v1194
    %5676 = vmatpush.bf16.msra.mxu0 %v1193
    %5677 = vmatmul.bf16.gmra.mxu0 %v5663
    %v5678 = vpop.f32.mrf.mxu0
    %v5679 = vadd.f32 0.0, %v5678
    %v5680 = vpop.f32.mrf.mxu0
    %5681 = vdwg.mxu0
    %5682 = vmatpush.bf16.msra.mxu0 %v1208
    %5683 = vmatpush.bf16.msra.mxu0 %v1207
    %5684 = vmatpush.bf16.msra.mxu0 %v1206
    %5685 = vmatpush.bf16.msra.mxu0 %v1205
    %5686 = vmatpush.bf16.msra.mxu0 %v1204
    %5687 = vmatpush.bf16.msra.mxu0 %v1203
    %5688 = vmatpush.bf16.msra.mxu0 %v1202
    %5689 = vmatpush.bf16.msra.mxu0 %v1201
    %5690 = vmatmul.bf16.gmra.mxu0 %v5664
    %v5691 = vpop.f32.mrf.mxu0
    %v5692 = vadd.f32 %v5679, %v5691
    %v5693 = vpop.f32.mrf.mxu0
    %5694 = vdwg.mxu0
    %5695 = vmatpush.bf16.msra.mxu0 %v1216
    %5696 = vmatpush.bf16.msra.mxu0 %v1215
    %5697 = vmatpush.bf16.msra.mxu0 %v1214
    %5698 = vmatpush.bf16.msra.mxu0 %v1213
    %5699 = vmatpush.bf16.msra.mxu0 %v1212
    %5700 = vmatpush.bf16.msra.mxu0 %v1211
    %5701 = vmatpush.bf16.msra.mxu0 %v1210
    %5702 = vmatpush.bf16.msra.mxu0 %v1209
    %5703 = vmatmul.bf16.gmra.mxu0 %v5665
    %v5704 = vpop.f32.mrf.mxu0
    %v5705 = vadd.f32 %v5692, %v5704
    %v5706 = vpop.f32.mrf.mxu0
    %5707 = vdwg.mxu0
    %v5708 = vadd.f32 %v5659, %v5705
    %v5709 = vadd.f32 %v5708, %v1282
    %v5710 = vmax.f32 %v5709, 0.0
    %v5711 = vpack.c.bf16 %v5710, %v5710
    %5712 = vmatpush.bf16.msra.mxu0 %v1329
    %5713 = vmatpush.bf16.msra.mxu0 %v1328
    %5714 = vmatpush.bf16.msra.mxu0 %v1327
    %5715 = vmatpush.bf16.msra.mxu0 %v1326
    %5716 = vmatpush.bf16.msra.mxu0 %v1325
    %5717 = vmatpush.bf16.msra.mxu0 %v1324
    %5718 = vmatpush.bf16.msra.mxu0 %v1323
    %5719 = vmatpush.bf16.msra.mxu0 %v1322
    %5720 = vmatmul.bf16.gmra.mxu0 %v5711
    %v5721 = vpop.f32.mrf.mxu0
    %v5722 = vadd.f32 %v1288, %v5721
    %v5723 = vpop.f32.mrf.mxu0
    %5724 = vdwg.mxu0
    %v5725 = vmax.f32 %v5722, 0.0
    %v5726 = vpack.c.bf16 %v5725, %v5725
    %s5727 = scalar_lea.vmem %s5, 448
    %v5728 = vld [vmem:[%s5727] sm:$0xff]
    %v5729 = vld [vmem:[%s5727 + $0x8] sm:$0xff]
    %v5730 = vld [vmem:[%s5727 + $0x10] sm:$0xff]
    %v5731 = vld [vmem:[%s5727 + $0x18] sm:$0xff]
    %v5736 = vunpack.c.l.b16 %v5728
    %v5737 = vunpack.c.h.b16 %v5728
    %v5738 = vunpack.c.l.b16 %v5729
    %v5739 = vunpack.c.h.b16 %v5729
    %v5740 = vunpack.c.l.b16 %v5730
    %v5741 = vunpack.c.h.b16 %v5730
    %v5742 = vunpack.c.l.b16 %v5731
    %v5743 = vunpack.c.h.b16 %v5731
    %v5744 = vpack.c.b16 %v5738, %v5736
    %v5745 = vpack.c.b16 %v5739, %v5737
    %v5746 = vpack.c.b16 %v5742, %v5740
    %v5747 = vpack.c.b16 %v5743, %v5741
    %v5753 = vsel %vm1643, %v5726, 0
    %5755 = vmatpush.bf16.msra.mxu0 0
    %5756 = vmatpush.bf16.msra.mxu0 0
    %5757 = vmatpush.bf16.msra.mxu0 0
    %5758 = vmatpush.bf16.msra.mxu0 0
    %5759 = vmatpush.bf16.msra.mxu0 0
    %5760 = vmatpush.bf16.msra.mxu0 0
    %5761 = vmatpush.bf16.msra.mxu0 %v5746
    %5762 = vmatpush.bf16.msra.mxu0 %v5744
    %5763 = vmatmul.bf16.gmra.mxu0 %v5753
    %v5764 = vpop.f32.mrf.mxu0
    %v5765 = vadd.f32 0.0, %v5764
    %v5766 = vpop.f32.mrf.mxu0
    %5767 = vdwg.mxu0
    %5768 = vmatpush.bf16.msra.mxu0 0
    %5769 = vmatpush.bf16.msra.mxu0 0
    %5770 = vmatpush.bf16.msra.mxu0 0
    %5771 = vmatpush.bf16.msra.mxu0 0
    %5772 = vmatpush.bf16.msra.mxu0 0
    %5773 = vmatpush.bf16.msra.mxu0 0
    %5774 = vmatpush.bf16.msra.mxu0 %v5747
    %5775 = vmatpush.bf16.msra.mxu0 %v5745
    %5776 = vmatmul.bf16.gmra.mxu0 %v5753
    %v5777 = vpop.f32.mrf.mxu0
    %v5778 = vadd.f32 0.0, %v5777
    %v5779 = vpop.f32.mrf.mxu0
    %5780 = vdwg.mxu0
    %v5781 = vadd.f32 %v5470, %v5765
    %v5782 = vadd.f32 %v5471, %v5778
    %5783 = vst [vmem:[#allocation1] ss:$9 sm:$0xff] %v4676
    %v5784 = vld [vmem:[#allocation1] sm:$0xff]
    %v5785 = vld [vmem:[#allocation1 + $0x9] sm:$0xff]
    %v5786 = vld [vmem:[#allocation1 + $0x12] sm:$0xff]
    %5790 = vmatpush.bf16.msra.mxu0 %v281
    %5791 = vmatpush.bf16.msra.mxu0 %v280
    %5792 = vmatpush.bf16.msra.mxu0 %v279
    %5793 = vmatpush.bf16.msra.mxu0 %v278
    %5794 = vmatpush.bf16.msra.mxu0 %v277
    %5795 = vmatpush.bf16.msra.mxu0 %v276
    %5796 = vmatpush.bf16.msra.mxu0 %v275
    %5797 = vmatpush.bf16.msra.mxu0 %v274
    %5798 = vmatmul.bf16.gmra.mxu0 %v5784
    %v5799 = vpop.f32.mrf.mxu0
    %v5800 = vadd.f32 0.0, %v5799
    %v5801 = vpop.f32.mrf.mxu0
    %5802 = vdwg.mxu0
    %5803 = vmatpush.bf16.msra.mxu0 %v289
    %5804 = vmatpush.bf16.msra.mxu0 %v288
    %5805 = vmatpush.bf16.msra.mxu0 %v287
    %5806 = vmatpush.bf16.msra.mxu0 %v286
    %5807 = vmatpush.bf16.msra.mxu0 %v285
    %5808 = vmatpush.bf16.msra.mxu0 %v284
    %5809 = vmatpush.bf16.msra.mxu0 %v283
    %5810 = vmatpush.bf16.msra.mxu0 %v282
    %5811 = vmatmul.bf16.gmra.mxu0 %v5785
    %v5812 = vpop.f32.mrf.mxu0
    %v5813 = vadd.f32 %v5800, %v5812
    %v5814 = vpop.f32.mrf.mxu0
    %5815 = vdwg.mxu0
    %5816 = vmatpush.bf16.msra.mxu0 %v297
    %5817 = vmatpush.bf16.msra.mxu0 %v296
    %5818 = vmatpush.bf16.msra.mxu0 %v295
    %5819 = vmatpush.bf16.msra.mxu0 %v294
    %5820 = vmatpush.bf16.msra.mxu0 %v293
    %5821 = vmatpush.bf16.msra.mxu0 %v292
    %5822 = vmatpush.bf16.msra.mxu0 %v291
    %5823 = vmatpush.bf16.msra.mxu0 %v290
    %5824 = vmatmul.bf16.gmra.mxu0 %v5786
    %v5825 = vpop.f32.mrf.mxu0
    %v5826 = vadd.f32 %v5813, %v5825
    %v5827 = vpop.f32.mrf.mxu0
    %5828 = vdwg.mxu0
    %5829 = vst [vmem:[#allocation1] ss:$9 sm:$0xff] %v3479
    %v5830 = vld [vmem:[#allocation1] sm:$0xff]
    %v5831 = vld [vmem:[#allocation1 + $0x9] sm:$0xff]
    %v5832 = vld [vmem:[#allocation1 + $0x12] sm:$0xff]
    %5836 = vmatpush.bf16.msra.mxu0 %v472
    %5837 = vmatpush.bf16.msra.mxu0 %v471
    %5838 = vmatpush.bf16.msra.mxu0 %v470
    %5839 = vmatpush.bf16.msra.mxu0 %v469
    %5840 = vmatpush.bf16.msra.mxu0 %v468
    %5841 = vmatpush.bf16.msra.mxu0 %v467
    %5842 = vmatpush.bf16.msra.mxu0 %v466
    %5843 = vmatpush.bf16.msra.mxu0 %v465
    %5844 = vmatmul.bf16.gmra.mxu0 %v5830
    %v5845 = vpop.f32.mrf.mxu0
    %v5846 = vadd.f32 %v5826, %v5845
    %v5847 = vpop.f32.mrf.mxu0
    %5848 = vdwg.mxu0
    %5849 = vmatpush.bf16.msra.mxu0 %v480
    %5850 = vmatpush.bf16.msra.mxu0 %v479
    %5851 = vmatpush.bf16.msra.mxu0 %v478
    %5852 = vmatpush.bf16.msra.mxu0 %v477
    %5853 = vmatpush.bf16.msra.mxu0 %v476
    %5854 = vmatpush.bf16.msra.mxu0 %v475
    %5855 = vmatpush.bf16.msra.mxu0 %v474
    %5856 = vmatpush.bf16.msra.mxu0 %v473
    %5857 = vmatmul.bf16.gmra.mxu0 %v5831
    %v5858 = vpop.f32.mrf.mxu0
    %v5859 = vadd.f32 %v5846, %v5858
    %v5860 = vpop.f32.mrf.mxu0
    %5861 = vdwg.mxu0
    %5862 = vmatpush.bf16.msra.mxu0 %v488
    %5863 = vmatpush.bf16.msra.mxu0 %v487
    %5864 = vmatpush.bf16.msra.mxu0 %v486
    %5865 = vmatpush.bf16.msra.mxu0 %v485
    %5866 = vmatpush.bf16.msra.mxu0 %v484
    %5867 = vmatpush.bf16.msra.mxu0 %v483
    %5868 = vmatpush.bf16.msra.mxu0 %v482
    %5869 = vmatpush.bf16.msra.mxu0 %v481
    %5870 = vmatmul.bf16.gmra.mxu0 %v5832
    %v5871 = vpop.f32.mrf.mxu0
    %v5872 = vadd.f32 %v5859, %v5871
    %v5873 = vpop.f32.mrf.mxu0
    %5874 = vdwg.mxu0
    %5875 = vst [vmem:[#allocation1] ss:$9 sm:$0xff] %v4725
    %v5876 = vld [vmem:[#allocation1] sm:$0xff]
    %v5877 = vld [vmem:[#allocation1 + $0x9] sm:$0xff]
    %v5878 = vld [vmem:[#allocation1 + $0x12] sm:$0xff]
    %5882 = vmatpush.bf16.msra.mxu0 %v714
    %5883 = vmatpush.bf16.msra.mxu0 %v713
    %5884 = vmatpush.bf16.msra.mxu0 %v712
    %5885 = vmatpush.bf16.msra.mxu0 %v711
    %5886 = vmatpush.bf16.msra.mxu0 %v710
    %5887 = vmatpush.bf16.msra.mxu0 %v709
    %5888 = vmatpush.bf16.msra.mxu0 %v708
    %5889 = vmatpush.bf16.msra.mxu0 %v707
    %5890 = vmatmul.bf16.gmra.mxu0 %v5876
    %v5891 = vpop.f32.mrf.mxu0
    %v5892 = vadd.f32 0.0, %v5891
    %v5893 = vpop.f32.mrf.mxu0
    %5894 = vdwg.mxu0
    %5895 = vmatpush.bf16.msra.mxu0 %v722
    %5896 = vmatpush.bf16.msra.mxu0 %v721
    %5897 = vmatpush.bf16.msra.mxu0 %v720
    %5898 = vmatpush.bf16.msra.mxu0 %v719
    %5899 = vmatpush.bf16.msra.mxu0 %v718
    %5900 = vmatpush.bf16.msra.mxu0 %v717
    %5901 = vmatpush.bf16.msra.mxu0 %v716
    %5902 = vmatpush.bf16.msra.mxu0 %v715
    %5903 = vmatmul.bf16.gmra.mxu0 %v5877
    %v5904 = vpop.f32.mrf.mxu0
    %v5905 = vadd.f32 %v5892, %v5904
    %v5906 = vpop.f32.mrf.mxu0
    %5907 = vdwg.mxu0
    %5908 = vmatpush.bf16.msra.mxu0 %v730
    %5909 = vmatpush.bf16.msra.mxu0 %v729
    %5910 = vmatpush.bf16.msra.mxu0 %v728
    %5911 = vmatpush.bf16.msra.mxu0 %v727
    %5912 = vmatpush.bf16.msra.mxu0 %v726
    %5913 = vmatpush.bf16.msra.mxu0 %v725
    %5914 = vmatpush.bf16.msra.mxu0 %v724
    %5915 = vmatpush.bf16.msra.mxu0 %v723
    %5916 = vmatmul.bf16.gmra.mxu0 %v5878
    %v5917 = vpop.f32.mrf.mxu0
    %v5918 = vadd.f32 %v5905, %v5917
    %v5919 = vpop.f32.mrf.mxu0
    %5920 = vdwg.mxu0
    %v5921 = vadd.f32 %v5872, %v5918
    %v5922 = vld [vmem:[%s4987 + $0x3] sm:$0x7]
    %5924 = vst [vmem:[#allocation1] ss:$9 sm:$0xff] %v5922
    %v5925 = vld [vmem:[#allocation1] sm:$0xff]
    %v5926 = vld [vmem:[#allocation1 + $0x9] sm:$0xff]
    %v5927 = vld [vmem:[#allocation1 + $0x12] sm:$0xff]
    %5931 = vmatpush.bf16.msra.mxu0 %v957
    %5932 = vmatpush.bf16.msra.mxu0 %v956
    %5933 = vmatpush.bf16.msra.mxu0 %v955
    %5934 = vmatpush.bf16.msra.mxu0 %v954
    %5935 = vmatpush.bf16.msra.mxu0 %v953
    %5936 = vmatpush.bf16.msra.mxu0 %v952
    %5937 = vmatpush.bf16.msra.mxu0 %v951
    %5938 = vmatpush.bf16.msra.mxu0 %v950
    %5939 = vmatmul.bf16.gmra.mxu0 %v5925
    %v5940 = vpop.f32.mrf.mxu0
    %v5941 = vadd.f32 0.0, %v5940
    %v5942 = vpop.f32.mrf.mxu0
    %5943 = vdwg.mxu0
    %5944 = vmatpush.bf16.msra.mxu0 %v965
    %5945 = vmatpush.bf16.msra.mxu0 %v964
    %5946 = vmatpush.bf16.msra.mxu0 %v963
    %5947 = vmatpush.bf16.msra.mxu0 %v962
    %5948 = vmatpush.bf16.msra.mxu0 %v961
    %5949 = vmatpush.bf16.msra.mxu0 %v960
    %5950 = vmatpush.bf16.msra.mxu0 %v959
    %5951 = vmatpush.bf16.msra.mxu0 %v958
    %5952 = vmatmul.bf16.gmra.mxu0 %v5926
    %v5953 = vpop.f32.mrf.mxu0
    %v5954 = vadd.f32 %v5941, %v5953
    %v5955 = vpop.f32.mrf.mxu0
    %5956 = vdwg.mxu0
    %5957 = vmatpush.bf16.msra.mxu0 %v973
    %5958 = vmatpush.bf16.msra.mxu0 %v972
    %5959 = vmatpush.bf16.msra.mxu0 %v971
    %5960 = vmatpush.bf16.msra.mxu0 %v970
    %5961 = vmatpush.bf16.msra.mxu0 %v969
    %5962 = vmatpush.bf16.msra.mxu0 %v968
    %5963 = vmatpush.bf16.msra.mxu0 %v967
    %5964 = vmatpush.bf16.msra.mxu0 %v966
    %5965 = vmatmul.bf16.gmra.mxu0 %v5927
    %v5966 = vpop.f32.mrf.mxu0
    %v5967 = vadd.f32 %v5954, %v5966
    %v5968 = vpop.f32.mrf.mxu0
    %5969 = vdwg.mxu0
    %v5970 = vadd.f32 %v5921, %v5967
    %v5971 = vld [vmem:[%s5037 + $0x3] sm:$0x7]
    %5973 = vst [vmem:[#allocation1] ss:$9 sm:$0xff] %v5971
    %v5974 = vld [vmem:[#allocation1] sm:$0xff]
    %v5975 = vld [vmem:[#allocation1 + $0x9] sm:$0xff]
    %v5976 = vld [vmem:[#allocation1 + $0x12] sm:$0xff]
    %5980 = vmatpush.bf16.msra.mxu0 %v1200
    %5981 = vmatpush.bf16.msra.mxu0 %v1199
    %5982 = vmatpush.bf16.msra.mxu0 %v1198
    %5983 = vmatpush.bf16.msra.mxu0 %v1197
    %5984 = vmatpush.bf16.msra.mxu0 %v1196
    %5985 = vmatpush.bf16.msra.mxu0 %v1195
    %5986 = vmatpush.bf16.msra.mxu0 %v1194
    %5987 = vmatpush.bf16.msra.mxu0 %v1193
    %5988 = vmatmul.bf16.gmra.mxu0 %v5974
    %v5989 = vpop.f32.mrf.mxu0
    %v5990 = vadd.f32 0.0, %v5989
    %v5991 = vpop.f32.mrf.mxu0
    %5992 = vdwg.mxu0
    %5993 = vmatpush.bf16.msra.mxu0 %v1208
    %5994 = vmatpush.bf16.msra.mxu0 %v1207
    %5995 = vmatpush.bf16.msra.mxu0 %v1206
    %5996 = vmatpush.bf16.msra.mxu0 %v1205
    %5997 = vmatpush.bf16.msra.mxu0 %v1204
    %5998 = vmatpush.bf16.msra.mxu0 %v1203
    %5999 = vmatpush.bf16.msra.mxu0 %v1202
    %6000 = vmatpush.bf16.msra.mxu0 %v1201
    %6001 = vmatmul.bf16.gmra.mxu0 %v5975
    %v6002 = vpop.f32.mrf.mxu0
    %v6003 = vadd.f32 %v5990, %v6002
    %v6004 = vpop.f32.mrf.mxu0
    %6005 = vdwg.mxu0
    %6006 = vmatpush.bf16.msra.mxu0 %v1216
    %6007 = vmatpush.bf16.msra.mxu0 %v1215
    %6008 = vmatpush.bf16.msra.mxu0 %v1214
    %6009 = vmatpush.bf16.msra.mxu0 %v1213
    %6010 = vmatpush.bf16.msra.mxu0 %v1212
    %6011 = vmatpush.bf16.msra.mxu0 %v1211
    %6012 = vmatpush.bf16.msra.mxu0 %v1210
    %6013 = vmatpush.bf16.msra.mxu0 %v1209
    %6014 = vmatmul.bf16.gmra.mxu0 %v5976
    %v6015 = vpop.f32.mrf.mxu0
    %v6016 = vadd.f32 %v6003, %v6015
    %v6017 = vpop.f32.mrf.mxu0
    %6018 = vdwg.mxu0
    %v6019 = vadd.f32 %v5970, %v6016
    %v6020 = vadd.f32 %v6019, %v1282
    %v6021 = vmax.f32 %v6020, 0.0
    %v6022 = vpack.c.bf16 %v6021, %v6021
    %6023 = vmatpush.bf16.msra.mxu0 %v1329
    %6024 = vmatpush.bf16.msra.mxu0 %v1328
    %6025 = vmatpush.bf16.msra.mxu0 %v1327
    %6026 = vmatpush.bf16.msra.mxu0 %v1326
    %6027 = vmatpush.bf16.msra.mxu0 %v1325
    %6028 = vmatpush.bf16.msra.mxu0 %v1324
    %6029 = vmatpush.bf16.msra.mxu0 %v1323
    %6030 = vmatpush.bf16.msra.mxu0 %v1322
    %6031 = vmatmul.bf16.gmra.mxu0 %v6022
    %v6032 = vpop.f32.mrf.mxu0
    %v6033 = vadd.f32 %v1288, %v6032
    %v6034 = vpop.f32.mrf.mxu0
    %6035 = vdwg.mxu0
    %v6036 = vmax.f32 %v6033, 0.0
    %v6037 = vpack.c.bf16 %v6036, %v6036
    %s6038 = scalar_lea.vmem %s5, 480
    %v6039 = vld [vmem:[%s6038] sm:$0xff]
    %v6040 = vld [vmem:[%s6038 + $0x8] sm:$0xff]
    %v6041 = vld [vmem:[%s6038 + $0x10] sm:$0xff]
    %v6042 = vld [vmem:[%s6038 + $0x18] sm:$0xff]
    %v6047 = vunpack.c.l.b16 %v6039
    %v6048 = vunpack.c.h.b16 %v6039
    %v6049 = vunpack.c.l.b16 %v6040
    %v6050 = vunpack.c.h.b16 %v6040
    %v6051 = vunpack.c.l.b16 %v6041
    %v6052 = vunpack.c.h.b16 %v6041
    %v6053 = vunpack.c.l.b16 %v6042
    %v6054 = vunpack.c.h.b16 %v6042
    %v6055 = vpack.c.b16 %v6049, %v6047
    %v6056 = vpack.c.b16 %v6050, %v6048
    %v6057 = vpack.c.b16 %v6053, %v6051
    %v6058 = vpack.c.b16 %v6054, %v6052
    %v6064 = vsel %vm1643, %v6037, 0
    %6066 = vmatpush.bf16.msra.mxu0 0
    %6067 = vmatpush.bf16.msra.mxu0 0
    %6068 = vmatpush.bf16.msra.mxu0 0
    %6069 = vmatpush.bf16.msra.mxu0 0
    %6070 = vmatpush.bf16.msra.mxu0 0
    %6071 = vmatpush.bf16.msra.mxu0 0
    %6072 = vmatpush.bf16.msra.mxu0 %v6057
    %6073 = vmatpush.bf16.msra.mxu0 %v6055
    %6074 = vmatmul.bf16.gmra.mxu0 %v6064
    %v6075 = vpop.f32.mrf.mxu0
    %v6076 = vadd.f32 0.0, %v6075
    %v6077 = vpop.f32.mrf.mxu0
    %6078 = vdwg.mxu0
    %6079 = vmatpush.bf16.msra.mxu0 0
    %6080 = vmatpush.bf16.msra.mxu0 0
    %6081 = vmatpush.bf16.msra.mxu0 0
    %6082 = vmatpush.bf16.msra.mxu0 0
    %6083 = vmatpush.bf16.msra.mxu0 0
    %6084 = vmatpush.bf16.msra.mxu0 0
    %6085 = vmatpush.bf16.msra.mxu0 %v6058
    %6086 = vmatpush.bf16.msra.mxu0 %v6056
    %6087 = vmatmul.bf16.gmra.mxu0 %v6064
    %v6088 = vpop.f32.mrf.mxu0
    %v6089 = vadd.f32 0.0, %v6088
    %v6090 = vpop.f32.mrf.mxu0
    %6091 = vdwg.mxu0
    %v6092 = vadd.f32 %v5781, %v6076
    %v6093 = vadd.f32 %v5782, %v6089
    %v6094 = vld [vmem:[%s6] sm:$0x3]
    %v6096 = vperm.slane %v6094, 0
    %v6097 = vperm.slane %v6094, 1
    %v6100 = vadd.f32 %v6092, %v6096
    %v6101 = vadd.f32 %v6093, %v6097
    %v6102 = vmax.f32 %v6100, 0.0
    %v6103 = vmax.f32 %v6101, 0.0
    %v6104 = vpack.c.bf16 %v6102, %v6102
    %v6105 = vpack.c.bf16 %v6103, %v6103
    %v6106 = vld [vmem:[%s7] sm:$0xf]
    %v6107 = vld [vmem:[%s7 + $0x4] sm:$0xf]
    %v6108 = vld [vmem:[%s7 + $0x8] sm:$0xf]
    %v6109 = vld [vmem:[%s7 + $0xc] sm:$0xf]
    %v6110 = vld [vmem:[%s7 + $0x10] sm:$0xf]
    %v6111 = vld [vmem:[%s7 + $0x14] sm:$0xf]
    %v6112 = vld [vmem:[%s7 + $0x18] sm:$0xf]
    %v6113 = vld [vmem:[%s7 + $0x1c] sm:$0xf]
    %v6114 = vld [vmem:[%s7 + $0x20] sm:$0xf]
    %v6115 = vld [vmem:[%s7 + $0x24] sm:$0xf]
    %v6116 = vld [vmem:[%s7 + $0x28] sm:$0xf]
    %v6117 = vld [vmem:[%s7 + $0x2c] sm:$0xf]
    %v6118 = vld [vmem:[%s7 + $0x30] sm:$0xf]
    %v6119 = vld [vmem:[%s7 + $0x34] sm:$0xf]
    %v6120 = vld [vmem:[%s7 + $0x38] sm:$0xf]
    %v6121 = vld [vmem:[%s7 + $0x3c] sm:$0xf]
    %v6122 = vld [vmem:[%s7 + $0x40] sm:$0xf]
    %v6123 = vld [vmem:[%s7 + $0x44] sm:$0xf]
    %v6124 = vld [vmem:[%s7 + $0x48] sm:$0xf]
    %v6125 = vld [vmem:[%s7 + $0x4c] sm:$0xf]
    %v6126 = vld [vmem:[%s7 + $0x50] sm:$0xf]
    %v6127 = vld [vmem:[%s7 + $0x54] sm:$0xf]
    %v6128 = vld [vmem:[%s7 + $0x58] sm:$0xf]
    %v6129 = vld [vmem:[%s7 + $0x5c] sm:$0xf]
    %v6130 = vld [vmem:[%s7 + $0x60] sm:$0xf]
    %v6131 = vld [vmem:[%s7 + $0x64] sm:$0xf]
    %v6132 = vld [vmem:[%s7 + $0x68] sm:$0xf]
    %v6133 = vld [vmem:[%s7 + $0x6c] sm:$0xf]
    %v6134 = vld [vmem:[%s7 + $0x70] sm:$0xf]
    %v6135 = vld [vmem:[%s7 + $0x74] sm:$0xf]
    %v6136 = vld [vmem:[%s7 + $0x78] sm:$0xf]
    %v6137 = vld [vmem:[%s7 + $0x7c] sm:$0xf]
    %v6138 = vld [vmem:[%s8] sm:$0x1]
    %v6140 = vperm.slane %v6138, 0
    %v6174 = vunpack.c.l.b16 %v6106
    %v6175 = vunpack.c.l.b16 %v6107
    %v6176 = vunpack.c.l.b16 %v6108
    %v6177 = vunpack.c.l.b16 %v6109
    %v6178 = vunpack.c.l.b16 %v6110
    %v6179 = vunpack.c.l.b16 %v6111
    %v6180 = vunpack.c.l.b16 %v6112
    %v6181 = vunpack.c.l.b16 %v6113
    %v6182 = vunpack.c.l.b16 %v6114
    %v6183 = vunpack.c.l.b16 %v6115
    %v6184 = vunpack.c.l.b16 %v6116
    %v6185 = vunpack.c.l.b16 %v6117
    %v6186 = vunpack.c.l.b16 %v6118
    %v6187 = vunpack.c.l.b16 %v6119
    %v6188 = vunpack.c.l.b16 %v6120
    %v6189 = vunpack.c.l.b16 %v6121
    %v6190 = vunpack.c.l.b16 %v6122
    %v6191 = vunpack.c.l.b16 %v6123
    %v6192 = vunpack.c.l.b16 %v6124
    %v6193 = vunpack.c.l.b16 %v6125
    %v6194 = vunpack.c.l.b16 %v6126
    %v6195 = vunpack.c.l.b16 %v6127
    %v6196 = vunpack.c.l.b16 %v6128
    %v6197 = vunpack.c.l.b16 %v6129
    %v6198 = vunpack.c.l.b16 %v6130
    %v6199 = vunpack.c.l.b16 %v6131
    %v6200 = vunpack.c.l.b16 %v6132
    %v6201 = vunpack.c.l.b16 %v6133
    %v6202 = vunpack.c.l.b16 %v6134
    %v6203 = vunpack.c.l.b16 %v6135
    %v6204 = vunpack.c.l.b16 %v6136
    %v6205 = vunpack.c.l.b16 %v6137
    %v6206 = vpack.c.b16 %v6175, %v6174
    %v6207 = vpack.c.b16 %v6177, %v6176
    %v6208 = vpack.c.b16 %v6179, %v6178
    %v6209 = vpack.c.b16 %v6181, %v6180
    %v6210 = vpack.c.b16 %v6183, %v6182
    %v6211 = vpack.c.b16 %v6185, %v6184
    %v6212 = vpack.c.b16 %v6187, %v6186
    %v6213 = vpack.c.b16 %v6189, %v6188
    %v6214 = vpack.c.b16 %v6191, %v6190
    %v6215 = vpack.c.b16 %v6193, %v6192
    %v6216 = vpack.c.b16 %v6195, %v6194
    %v6217 = vpack.c.b16 %v6197, %v6196
    %v6218 = vpack.c.b16 %v6199, %v6198
    %v6219 = vpack.c.b16 %v6201, %v6200
    %v6220 = vpack.c.b16 %v6203, %v6202
    %v6221 = vpack.c.b16 %v6205, %v6204
    %6238 = vmatpush.bf16.msra.mxu0 %v6213
    %6239 = vmatpush.bf16.msra.mxu0 %v6212
    %6240 = vmatpush.bf16.msra.mxu0 %v6211
    %6241 = vmatpush.bf16.msra.mxu0 %v6210
    %6242 = vmatpush.bf16.msra.mxu0 %v6209
    %6243 = vmatpush.bf16.msra.mxu0 %v6208
    %6244 = vmatpush.bf16.msra.mxu0 %v6207
    %6245 = vmatpush.bf16.msra.mxu0 %v6206
    %6246 = vmatmul.bf16.gmra.mxu0 %v6104
    %v6247 = vpop.f32.mrf.mxu0
    %v6248 = vadd.f32 %v6140, %v6247
    %v6249 = vpop.f32.mrf.mxu0
    %6250 = vdwg.mxu0
    %6251 = vmatpush.bf16.msra.mxu0 %v6221
    %6252 = vmatpush.bf16.msra.mxu0 %v6220
    %6253 = vmatpush.bf16.msra.mxu0 %v6219
    %6254 = vmatpush.bf16.msra.mxu0 %v6218
    %6255 = vmatpush.bf16.msra.mxu0 %v6217
    %6256 = vmatpush.bf16.msra.mxu0 %v6216
    %6257 = vmatpush.bf16.msra.mxu0 %v6215
    %6258 = vmatpush.bf16.msra.mxu0 %v6214
    %6259 = vmatmul.bf16.gmra.mxu0 %v6105
    %v6260 = vpop.f32.mrf.mxu0
    %v6261 = vadd.f32 %v6248, %v6260
    %v6262 = vpop.f32.mrf.mxu0
    %6263 = vdwg.mxu0
    %v6264 = vmax.f32 %v6261, 0.0
    %v6265 = vpack.c.bf16 %v6264, %v6264
    %v6266 = vld [vmem:[%s9] sm:$0xf]
    %v6267 = vld [vmem:[%s9 + $0x4] sm:$0xf]
    %v6268 = vld [vmem:[%s9 + $0x8] sm:$0xf]
    %v6269 = vld [vmem:[%s9 + $0xc] sm:$0xf]
    %v6270 = vld [vmem:[%s9 + $0x10] sm:$0xf]
    %v6271 = vld [vmem:[%s9 + $0x14] sm:$0xf]
    %v6272 = vld [vmem:[%s9 + $0x18] sm:$0xf]
    %v6273 = vld [vmem:[%s9 + $0x1c] sm:$0xf]
    %v6274 = vld [vmem:[%s9 + $0x20] sm:$0xf]
    %v6275 = vld [vmem:[%s9 + $0x24] sm:$0xf]
    %v6276 = vld [vmem:[%s9 + $0x28] sm:$0xf]
    %v6277 = vld [vmem:[%s9 + $0x2c] sm:$0xf]
    %v6278 = vld [vmem:[%s9 + $0x30] sm:$0xf]
    %v6279 = vld [vmem:[%s9 + $0x34] sm:$0xf]
    %v6280 = vld [vmem:[%s9 + $0x38] sm:$0xf]
    %v6281 = vld [vmem:[%s9 + $0x3c] sm:$0xf]
    %v6282 = vld [vmem:[%s10] sm:$0x1]
    %v6284 = vperm.slane %v6282, 0
    %v6302 = vunpack.c.l.b16 %v6266
    %v6303 = vunpack.c.l.b16 %v6267
    %v6304 = vunpack.c.l.b16 %v6268
    %v6305 = vunpack.c.l.b16 %v6269
    %v6306 = vunpack.c.l.b16 %v6270
    %v6307 = vunpack.c.l.b16 %v6271
    %v6308 = vunpack.c.l.b16 %v6272
    %v6309 = vunpack.c.l.b16 %v6273
    %v6310 = vunpack.c.l.b16 %v6274
    %v6311 = vunpack.c.l.b16 %v6275
    %v6312 = vunpack.c.l.b16 %v6276
    %v6313 = vunpack.c.l.b16 %v6277
    %v6314 = vunpack.c.l.b16 %v6278
    %v6315 = vunpack.c.l.b16 %v6279
    %v6316 = vunpack.c.l.b16 %v6280
    %v6317 = vunpack.c.l.b16 %v6281
    %v6318 = vpack.c.b16 %v6303, %v6302
    %v6319 = vpack.c.b16 %v6305, %v6304
    %v6320 = vpack.c.b16 %v6307, %v6306
    %v6321 = vpack.c.b16 %v6309, %v6308
    %v6322 = vpack.c.b16 %v6311, %v6310
    %v6323 = vpack.c.b16 %v6313, %v6312
    %v6324 = vpack.c.b16 %v6315, %v6314
    %v6325 = vpack.c.b16 %v6317, %v6316
    %6334 = vmatpush.bf16.msra.mxu0 %v6325
    %6335 = vmatpush.bf16.msra.mxu0 %v6324
    %6336 = vmatpush.bf16.msra.mxu0 %v6323
    %6337 = vmatpush.bf16.msra.mxu0 %v6322
    %6338 = vmatpush.bf16.msra.mxu0 %v6321
    %6339 = vmatpush.bf16.msra.mxu0 %v6320
    %6340 = vmatpush.bf16.msra.mxu0 %v6319
    %6341 = vmatpush.bf16.msra.mxu0 %v6318
    %6342 = vmatmul.bf16.gmra.mxu0 %v6265
    %v6343 = vpop.f32.mrf.mxu0
    %v6344 = vadd.f32 %v6284, %v6343
    %v6345 = vpop.f32.mrf.mxu0
    %6346 = vdwg.mxu0
    %v6347 = vmax.f32 %v6344, 0.0
    %v6348 = vpack.c.bf16 %v6347, %v6347
    %v6349 = vld [vmem:[%s11] sm:$0xf]
    %v6350 = vld [vmem:[%s11 + $0x4] sm:$0xf]
    %v6351 = vld [vmem:[%s11 + $0x8] sm:$0xf]
    %v6352 = vld [vmem:[%s11 + $0xc] sm:$0xf]
    %v6353 = vld [vmem:[%s11 + $0x10] sm:$0xf]
    %v6354 = vld [vmem:[%s11 + $0x14] sm:$0xf]
    %v6355 = vld [vmem:[%s11 + $0x18] sm:$0xf]
    %v6356 = vld [vmem:[%s11 + $0x1c] sm:$0xf]
    %v6357 = vld [vmem:[%s12] sm:$0x1]
    %v6359 = vperm.slane %v6357, 0
    %v6369 = vunpack.c.l.b16 %v6349
    %v6370 = vunpack.c.l.b16 %v6350
    %v6371 = vunpack.c.l.b16 %v6351
    %v6372 = vunpack.c.l.b16 %v6352
    %v6373 = vunpack.c.l.b16 %v6353
    %v6374 = vunpack.c.l.b16 %v6354
    %v6375 = vunpack.c.l.b16 %v6355
    %v6376 = vunpack.c.l.b16 %v6356
    %v6377 = vpack.c.b16 %v6370, %v6369
    %v6378 = vpack.c.b16 %v6372, %v6371
    %v6379 = vpack.c.b16 %v6374, %v6373
    %v6380 = vpack.c.b16 %v6376, %v6375
    %vm6385 = vcmask 523264
    %v6387 = vsel %vm6385, %v6348, 0
    %6389 = vmatpush.bf16.msra.mxu0 0
    %6390 = vmatpush.bf16.msra.mxu0 0
    %6391 = vmatpush.bf16.msra.mxu0 0
    %6392 = vmatpush.bf16.msra.mxu0 0
    %6393 = vmatpush.bf16.msra.mxu0 %v6380
    %6394 = vmatpush.bf16.msra.mxu0 %v6379
    %6395 = vmatpush.bf16.msra.mxu0 %v6378
    %6396 = vmatpush.bf16.msra.mxu0 %v6377
    %6397 = vmatmul.bf16.gmra.mxu0 %v6387
    %v6398 = vpop.f32.mrf.mxu0
    %v6399 = vadd.f32 %v6359, %v6398
    %v6400 = vpop.f32.mrf.mxu0
    %6401 = vdwg.mxu0
    %v6402 = vmax.f32 %v6399, 0.0
    %v6403 = vpack.c.bf16 %v6402, %v6402
    %v6404 = vld [vmem:[%s13] sm:$0xf]
    %v6405 = vld [vmem:[%s13 + $0x4] sm:$0xf]
    %v6406 = vld [vmem:[%s13 + $0x8] sm:$0xf]
    %v6407 = vld [vmem:[%s13 + $0xc] sm:$0xf]
    %v6408 = vld [vmem:[%s14] sm:$0x1]
    %v6410 = vperm.slane %v6408, 0
    %v6416 = vunpack.c.l.b16 %v6404
    %v6417 = vunpack.c.l.b16 %v6405
    %v6418 = vunpack.c.l.b16 %v6406
    %v6419 = vunpack.c.l.b16 %v6407
    %v6420 = vpack.c.b16 %v6417, %v6416
    %v6421 = vpack.c.b16 %v6419, %v6418
    %v6425 = vsel %vm1643, %v6403, 0
    %6427 = vmatpush.bf16.msra.mxu0 0
    %6428 = vmatpush.bf16.msra.mxu0 0
    %6429 = vmatpush.bf16.msra.mxu0 0
    %6430 = vmatpush.bf16.msra.mxu0 0
    %6431 = vmatpush.bf16.msra.mxu0 0
    %6432 = vmatpush.bf16.msra.mxu0 0
    %6433 = vmatpush.bf16.msra.mxu0 %v6421
    %6434 = vmatpush.bf16.msra.mxu0 %v6420
    %6435 = vmatmul.bf16.gmra.mxu0 %v6425
    %v6436 = vpop.f32.mrf.mxu0
    %v6437 = vadd.f32 %v6410, %v6436
    %v6438 = vpop.f32.mrf.mxu0
    %6439 = vdwg.mxu0
    %vm6440 = vcmask 33792
    %6441 = vst.msk [vmem:[#allocation2] sm:$0x3] %vm6440, %v6437
    // Predicated region
    $region62: #{forward.5} parent=1 // pred_check
      _
    $region63: #{forward.5} parent=1 // pred_check_branch
      %6443 = sbr.rel (0) target = $region65
    $region64: #{forward.5} parent=1 // pred_region
      %6445 = vsyncadd [#allocation3], 0
      %s6447 = sshll.u32 [#allocation2], 4
      %s6448 = int_to_ptr.vmem [resolvable:$true] %s6447
      %s6449 = sshll.u32 %s15, 4
      %s6450 = int_to_ptr.hbm [resolvable:$true] %s6449
      %6452 = dma.vmem_to_hbm [thread:$0]  %s6448, 32, %s6450, [#allocation3]
    $region65: #{forward.5} parent=1 // pred_fallthru
      _
    // Predicated region
    $region66: #{forward.5} parent=1 // pred_check
      _
    $region67: #{forward.5} parent=1 // pred_check_branch
      %6454 = sbr.rel (0) target = $region69
    $region68: #{forward.5} parent=1 // pred_region
      %6456 = dma.done [#allocation3], 32
    $region69: #{forward.5} parent=1 // pred_fallthru
      _
    %6457 = vsyncpa [#allocation3], 1

</llo_original>
